<compile_context>
chip_gen: v7x
topology: tpu7x:2x2x1
jax: 0.10.0
libtpu: 0.0.40
codegen_flags: <defaults>
</compile_context>

<pallas_src>
import functools

import jax
import jax.numpy as jnp
from jax import lax
from jax.experimental import pallas as pl
from jax.experimental.pallas import tpu as pltpu

LANES = 128  # channel padding so matmul outputs / loads stay lane-dense


# ---------------------------------------------------------------- fused kernel
def _fused_autoencoder_kernel(lhs1_ref, w1_ref, b1_ref, w2_ref, b2_ref,
                              w3_ref, b3_ref, w4_ref, b4_ref,
                              o_ref,
                              y_scr, s2_ref, s3_ref, s4_ref, *, H, W):
    """Entire forward pass for ONE image; every activation stays in VMEM.

    lhs1_ref: (M1, 16)           im2col LHS for the Cin=1 first conv (padded grid, flat)
    w1_ref:   (16, 128)          enc1 weights   (9 taps padded to 16, 32 cout padded to 128)
    w2_ref:   (9, 128, 128)      enc2 tap matrices  w[t][ci, co]
    w3_ref/w4_ref: (3,3,128,128) transposed-conv weights  w[ki,kj][ci, co]
    b*_ref:   (1, 128)
    o_ref:    (4, M4, 1)         channel-0 of the 4 dec2 sub-pixel phases
    y_scr:    conv-output / phase-staging scratch
    s2/s3/s4: zero-padded flattened input buffers for enc2 / dec1 / dec2
    """
    f32 = jnp.float32

    # static derived sizes
    Hp1, Wp1 = H + 2, W + 2                  # enc1 padded grid
    M1 = Hp1 * Wp1
    Ho1, Wo1 = H // 2, W // 2                # after pool1
    Hp2, Wp2 = Ho1 + 2, Wo1 + 2              # enc2 padded grid
    M2, G2 = Hp2 * Wp2, Wp2 + 1
    Ho2, Wo2 = H // 4, W // 4                # after pool2
    Hp3, Wp3 = Ho2 + 1, Wo2 + 1              # dec1 input grid (pad bottom/right by 1)
    M3 = Hp3 * Wp3
    Hp4, Wp4 = Ho1 + 1, Wo1 + 1              # dec2 input grid
    M4 = Hp4 * Wp4
    S3 = ((M3 + 7) // 8) * 8                 # sublane-aligned staging pitch for dec1 phases

    # padded activation buffers: padding / guard rows must be zero
    s2_ref[...] = jnp.zeros_like(s2_ref)
    s3_ref[...] = jnp.zeros_like(s3_ref)
    s4_ref[...] = jnp.zeros_like(s4_ref)

    # ---------------- encoder 1: Conv2d(1, 32, k3, p1) as ONE im2col matmul
    y_scr[pl.ds(0, M1), :] = jnp.dot(lhs1_ref[...], w1_ref[...],
                                     preferred_element_type=f32)

    # fused bias + ReLU + 2x2 maxpool, written straight into enc2's padded input buffer.
    # relu(max(y) + b) == max(relu(y + b)) since both are monotone.
    b1 = b1_ref[...]
    for i in range(Ho1):
        s = (2 * i + 1) * Wp1 + 1            # conv output (interior row 2i, col 0)
        m = jnp.maximum(
            jnp.maximum(y_scr[pl.ds(s, Wo1, stride=2), :],
                        y_scr[pl.ds(s + 1, Wo1, stride=2), :]),
            jnp.maximum(y_scr[pl.ds(s + Wp1, Wo1, stride=2), :],
                        y_scr[pl.ds(s + Wp1 + 1, Wo1, stride=2), :]))
        s2_ref[pl.ds(G2 + (i + 1) * Wp2 + 1, Wo1), :] = jnp.maximum(m + b1, 0.0)

    # ---------------- encoder 2: Conv2d(32, 16, k3, p1): 9 shifted taps, chained vreg sum
    acc = None
    for t in range(9):
        di, dj = t // 3, t % 3
        off = G2 + (di - 1) * Wp2 + (dj - 1)
        d = jnp.dot(s2_ref[pl.ds(off, M2), :], w2_ref[t],
                    preferred_element_type=f32)
        acc = d if acc is None else acc + d
    y_scr[pl.ds(0, M2), :] = acc             # single store of the conv result

    b2 = b2_ref[...]
    for i in range(Ho2):
        s = (2 * i + 1) * Wp2 + 1
        m = jnp.maximum(
            jnp.maximum(y_scr[pl.ds(s, Wo2, stride=2), :],
                        y_scr[pl.ds(s + 1, Wo2, stride=2), :]),
            jnp.maximum(y_scr[pl.ds(s + Wp2, Wo2, stride=2), :],
                        y_scr[pl.ds(s + Wp2 + 1, Wo2, stride=2), :]))
        s3_ref[pl.ds(i * Wp3, Wo2), :] = jnp.maximum(m + b2, 0.0)

    # ---------------- decoder 1: ConvTranspose2d(16,32,k3,s2,p1,op1) + ReLU, 4 sub-pixel phases
    b3 = b3_ref[...]
    dec1_phase_taps = [
        [(0, 1, 1)],                                             # y[2a,   2b]
        [(0, 1, 2), (1, 1, 0)],                                  # y[2a,   2b+1]
        [(0, 2, 1), (Wp3, 0, 1)],                                # y[2a+1, 2b]
        [(0, 2, 2), (1, 2, 0), (Wp3, 0, 2), (Wp3 + 1, 0, 0)],    # y[2a+1, 2b+1]
    ]
    for k, taps in enumerate(dec1_phase_taps):
        acc = None
        for off, ki, kj in taps:
            d = jnp.dot(s3_ref[pl.ds(off, M3), :], w3_ref[ki, kj],
                        preferred_element_type=f32)
            acc = d if acc is None else acc + d
        y_scr[pl.ds(k * S3, M3), :] = jnp.maximum(acc + b3, 0.0)   # stage phase k

    # interleave the 4 dec1 phases into dec2's padded, row-major flattened input image.
    # Single-row VMEM->VMEM copies: bulletproof lowering and negligible at this size.
    for u in range(2):
        for v in range(2):
            base = (2 * u + v) * S3
            for p in range(Ho2):
                for q in range(Wo2):
                    src = base + p * Wp3 + q
                    dst = (2 * p + u) * Wp4 + (2 * q + v)
                    s4_ref[pl.ds(dst, 1), :] = y_scr[pl.ds(src, 1), :]

    # ---------------- decoder 2: ConvTranspose2d(32,1,k3,s2,p1,op1) + sigmoid, channel 0 only
    b4 = b4_ref[...]
    dec2_phase_taps = [
        [(0, 1, 1)],
        [(0, 1, 2), (1, 1, 0)],
        [(0, 2, 1), (Wp4, 0, 1)],
        [(0, 2, 2), (1, 2, 0), (Wp4, 0, 2), (Wp4 + 1, 0, 0)],
    ]
    for k, taps in enumerate(dec2_phase_taps):
        acc = None
        for off, ki, kj in taps:
            d = jnp.dot(s4_ref[pl.ds(off, M4), :], w4_ref[ki, kj],
                        preferred_element_type=f32)
            acc = d if acc is None else acc + d
        z = (acc + b4)[:, 0:1]                       # only the real output channel
        o_ref[k] = 1.0 / (1.0 + jnp.exp(-z))         # exact sigmoid (EUP exp + divide)


# ---------------------------------------------------------------- wrapper
def _build_enc1_im2col(x):
    """x: (B, 1, H, W) -> (B, (H+2)*(W+2), 16) im2col LHS for the Cin=1 first conv."""
    B, _, H, W = x.shape
    Hp, Wp = H + 2, W + 2
    M, G = Hp * Wp, Wp + 1
    flat = jnp.pad(x[:, 0], ((0, 0), (1, 1), (1, 1))).reshape(B, M)
    flat = jnp.pad(flat, ((0, 0), (G, G)))               # guard zeros for shifted taps
    cols = [flat[:, G + (di - 1) * Wp + (dj - 1): G + (di - 1) * Wp + (dj - 1) + M]
            for di in range(3) for dj in range(3)]
    lhs = jnp.stack(cols, axis=-1)                        # (B, M, 9)
    return jnp.pad(lhs, ((0, 0), (0, 0), (0, 16 - 9)))    # pad taps to 16 lanes (MXU K dim)


@jax.jit
def autoencoder_forward(packed, x):
    """x: (B, 1, H, W) NCHW float32 -> (B, 1, H, W), matching the PyTorch module."""
    B, C, H, W = x.shape
    assert C == 1 and H % 4 == 0 and W % 4 == 0

    Hp1, Wp1 = H + 2, W + 2
    M1 = Hp1 * Wp1
    Ho1, Wo1 = H // 2, W // 2
    Hp2, Wp2 = Ho1 + 2, Wo1 + 2
    M2 = Hp2 * Wp2
    R2 = M2 + 2 * (Wp2 + 1)
    Ho2, Wo2 = H // 4, W // 4
    Hp3, Wp3 = Ho2 + 1, Wo2 + 1
    M3 = Hp3 * Wp3
    R3 = M3 + Wp3 + 1
    Hp4, Wp4 = Ho1 + 1, Wo1 + 1
    M4 = Hp4 * Wp4
    R4 = M4 + Wp4 + 1
    S3 = ((M3 + 7) // 8) * 8
    Y_ROWS = max(M1, M2, 4 * S3)

    lhs1 = _build_enc1_im2col(x)

    phases = pl.pallas_call(
        functools.partial(_fused_autoencoder_kernel, H=H, W=W),
        out_shape=jax.ShapeDtypeStruct((B, 4, M4, 1), jnp.float32),
        grid=(B,),
        in_specs=[
            pl.BlockSpec((None, M1, 16), lambda b: (b, 0, 0)),
            pl.BlockSpec((16, LANES), lambda b: (0, 0)),
            pl.BlockSpec((1, LANES), lambda b: (0, 0)),
            pl.BlockSpec((9, LANES, LANES), lambda b: (0, 0, 0)),
            pl.BlockSpec((1, LANES), lambda b: (0, 0)),
            pl.BlockSpec((3, 3, LANES, LANES), lambda b: (0, 0, 0, 0)),
            pl.BlockSpec((1, LANES), lambda b: (0, 0)),
            pl.BlockSpec((3, 3, LANES, LANES), lambda b: (0, 0, 0, 0)),
            pl.BlockSpec((1, LANES), lambda b: (0, 0)),
        ],
        out_specs=pl.BlockSpec((None, 4, M4, 1), lambda b: (b, 0, 0, 0)),
        scratch_shapes=[
            pltpu.VMEM((Y_ROWS, LANES), jnp.float32),   # conv-output / phase staging
            pltpu.VMEM((R2, LANES), jnp.float32),       # enc2 padded input
            pltpu.VMEM((R3, LANES), jnp.float32),       # dec1 padded input
            pltpu.VMEM((R4, LANES), jnp.float32),       # dec2 padded input
        ],
        compiler_params=pltpu.CompilerParams(dimension_semantics=("parallel",)),
    )(lhs1, packed["w1"], packed["b1"], packed["w2"], packed["b2"],
      packed["w3"], packed["b3"], packed["w4"], packed["b4"])

    # tiny XLA epilogue: interleave the 4 channel-0 sub-pixel phase maps into the final image
    ph = phases.reshape(B, 4, Hp4, Wp4)[:, :, :Ho1, :Wo1]
    ee, eo, oe, oo = ph[:, 0], ph[:, 1], ph[:, 2], ph[:, 3]
    rows_e = jnp.stack([ee, eo], axis=-1).reshape(B, Ho1, 2 * Wo1)   # even output rows
    rows_o = jnp.stack([oe, oo], axis=-1).reshape(B, Ho1, 2 * Wo1)   # odd output rows
    out = jnp.stack([rows_e, rows_o], axis=2).reshape(B, 2 * Ho1, 2 * Wo1)
    return out[:, None, :, :]


# ---------------------------------------------------------------- parameter packing (done ONCE)
def pack_params(params):
    """Pack raw PyTorch-layout weights into MXU-friendly matrices (hoisted out of jit)."""
    w1, b1 = params["enc1"]    # (32, 1, 3, 3), (32,)
    w2, b2 = params["enc2"]    # (16, 32, 3, 3), (16,)
    w3, b3 = params["dec1"]    # (16, 32, 3, 3)  ConvT layout (Cin, Cout, kh, kw)
    w4, b4 = params["dec2"]    # (32, 1, 3, 3)

    # enc1: single (16, 128) matrix, row t = 3*ki+kj holds w1[co, 0, ki, kj] in column co.
    w1m = jnp.pad(w1[:, 0].transpose(1, 2, 0).reshape(9, 32),
                  ((0, 16 - 9), (0, LANES - 32)))
    b1v = jnp.pad(b1, (0, LANES - 32)).reshape(1, LANES)

    # enc2: 9 tap matrices  taps[t][ci, co] = w2[co, ci, ki, kj]
    w2m = jnp.pad(w2.transpose(2, 3, 1, 0).reshape(9, 32, 16),
                  ((0, 0), (0, LANES - 32), (0, LANES - 16)))
    b2v = jnp.pad(b2, (0, LANES - 16)).reshape(1, LANES)

    # transposed convs: w[ki, kj][ci, co]
    w3m = jnp.pad(w3.transpose(2, 3, 0, 1),
                  ((0, 0), (0, 0), (0, LANES - 16), (0, LANES - 32)))
    b3v = jnp.pad(b3, (0, LANES - 32)).reshape(1, LANES)
    w4m = jnp.pad(w4.transpose(2, 3, 0, 1),
                  ((0, 0), (0, 0), (0, LANES - 32), (0, LANES - 1)))
    b4v = jnp.pad(b4, (0, LANES - 1)).reshape(1, LANES)

    return {"w1": w1m, "b1": b1v, "w2": w2m, "b2": b2v,
            "w3": w3m, "b3": b3v, "w4": w4m, "b4": b4v}


def init_params(key):
    def conv_init(key, cout, cin, k):
        kw, kb = jax.random.split(key)
        bound = 1.0 / jnp.sqrt(cin * k * k)
        w = jax.random.uniform(kw, (cout, cin, k, k), jnp.float32, -bound, bound)
        b = jax.random.uniform(kb, (cout,), jnp.float32, -bound, bound)
        return w, b

    def deconv_init(key, cin, cout, k):
        kw, kb = jax.random.split(key)
        bound = 1.0 / jnp.sqrt(cin * k * k)
        w = jax.random.uniform(kw, (cin, cout, k, k), jnp.float32, -bound, bound)
        b = jax.random.uniform(kb, (cout,), jnp.float32, -bound, bound)
        return w, b

    k1, k2, k3, k4 = jax.random.split(key, 4)
    return {
        "enc1": conv_init(k1, 32, 1, 3),      # Conv2d(1, 32)
        "enc2": conv_init(k2, 16, 32, 3),     # Conv2d(32, 16)
        "dec1": deconv_init(k3, 16, 32, 3),   # ConvTranspose2d(16, 32)
        "dec2": deconv_init(k4, 32, 1, 3),    # ConvTranspose2d(32, 1)
    }


# ---------------------------------------------------------------- pure-JAX reference
def reference_forward(params, x):
    dn = ("NCHW", "OIHW", "NCHW")

    def conv(x, w, b):
        y = lax.conv_general_dilated(x, w, (1, 1), ((1, 1), (1, 1)),
                                     dimension_numbers=dn)
        return jax.nn.relu(y + b[None, :, None, None])

    def deconv(x, w, b, act):
        w_eq = jnp.flip(w, axis=(2, 3)).transpose(1, 0, 2, 3)
        y = lax.conv_general_dilated(x, w_eq, (1, 1), ((1, 2), (1, 2)),
                                     lhs_dilation=(2, 2), dimension_numbers=dn)
        y = y + b[None, :, None, None]
        return jax.nn.relu(y) if act == "relu" else jax.nn.sigmoid(y)

    def pool(x):
        B, C, H, W = x.shape
        return x.reshape(B, C, H // 2, 2, W // 2, 2).max(axis=(3, 5))

    h = pool(conv(x, *params["enc1"]))
    h = pool(conv(h, *params["enc2"]))
    h = deconv(h, *params["dec1"], act="relu")
    return deconv(h, *params["dec2"], act="sigmoid")


if __name__ == "__main__":
    key = jax.random.PRNGKey(0)
    kp, kx = jax.random.split(key)
    params = init_params(kp)
    packed = pack_params(params)                              # packed once, outside jit
    x = jax.random.uniform(kx, (2, 1, 16, 16), jnp.float32)   # NCHW, like PyTorch

    out = jax.block_until_ready(autoencoder_forward(packed, x))
    assert out.shape == (2, 1, 16, 16), out.shape

    ref = jax.block_until_ready(reference_forward(params, x))
    err = float(jnp.max(jnp.abs(out - ref)))
    assert jnp.allclose(out, ref, atol=2e-4, rtol=2e-4), err

    print("KERNEL_OK")
</pallas_src>

<mosaic_0001>
module attributes {stable_mosaic.version = 11 : i64} {
  func.func @_fused_autoencoder_kernel(%arg0: i32, %arg1: memref<1x324x16xf32, #tpu.memory_space<vmem>>, %arg2: memref<16x128xf32, #tpu.memory_space<vmem>>, %arg3: memref<1x128xf32, #tpu.memory_space<vmem>>, %arg4: memref<9x128x128xf32, #tpu.memory_space<vmem>>, %arg5: memref<1x128xf32, #tpu.memory_space<vmem>>, %arg6: memref<3x3x128x128xf32, #tpu.memory_space<vmem>>, %arg7: memref<1x128xf32, #tpu.memory_space<vmem>>, %arg8: memref<3x3x128x128xf32, #tpu.memory_space<vmem>>, %arg9: memref<1x128xf32, #tpu.memory_space<vmem>>, %arg10: memref<1x4x81x1xf32, #tpu.memory_space<vmem>>, %arg11: memref<324x128xf32, #tpu.memory_space<vmem>>, %arg12: memref<122x128xf32, #tpu.memory_space<vmem>>, %arg13: memref<31x128xf32, #tpu.memory_space<vmem>>, %arg14: memref<91x128xf32, #tpu.memory_space<vmem>>) attributes {dimension_semantics = [#tpu.dimension_semantics<parallel>], iteration_bounds = array<i64: 2>, scalar_prefetch = 0 : i64, scratch_operands = 4 : i64, tpu.core_type = #tpu.core_type<tc>, window_params = [{transform_indices = @transform_0, window_bounds = array<i64: 1, 324, 16>}, {pipeline_mode = #tpu.pipeline_mode<synchronous>, transform_indices = @transform_1, window_bounds = array<i64: 16, 128>}, {pipeline_mode = #tpu.pipeline_mode<synchronous>, transform_indices = @transform_2, window_bounds = array<i64: 1, 128>}, {pipeline_mode = #tpu.pipeline_mode<synchronous>, transform_indices = @transform_3, window_bounds = array<i64: 9, 128, 128>}, {pipeline_mode = #tpu.pipeline_mode<synchronous>, transform_indices = @transform_4, window_bounds = array<i64: 1, 128>}, {pipeline_mode = #tpu.pipeline_mode<synchronous>, transform_indices = @transform_5, window_bounds = array<i64: 3, 3, 128, 128>}, {pipeline_mode = #tpu.pipeline_mode<synchronous>, transform_indices = @transform_6, window_bounds = array<i64: 1, 128>}, {pipeline_mode = #tpu.pipeline_mode<synchronous>, transform_indices = @transform_7, window_bounds = array<i64: 3, 3, 128, 128>}, {pipeline_mode = #tpu.pipeline_mode<synchronous>, transform_indices = @transform_8, window_bounds = array<i64: 1, 128>}, {transform_indices = @transform_9, window_bounds = array<i64: 1, 4, 81, 1>}]} {
    %cst = arith.constant 0.000000e+00 : f32
    %0 = vector.broadcast %cst : f32 to vector<122x128xf32>
    %c0 = arith.constant 0 : index
    %c0_0 = arith.constant 0 : index
    %1 = vector.load %arg12[%c0, %c0_0] : memref<122x128xf32, #tpu.memory_space<vmem>>, vector<122x128xf32>
    tpu.vector_store %arg12[%c0, %c0_0], %0 {strides = array<i32>} : memref<122x128xf32, #tpu.memory_space<vmem>>, vector<122x128xf32>,
    %cst_1 = arith.constant 0.000000e+00 : f32
    %2 = vector.broadcast %cst_1 : f32 to vector<31x128xf32>
    %c0_2 = arith.constant 0 : index
    %c0_3 = arith.constant 0 : index
    %3 = vector.load %arg13[%c0_2, %c0_3] : memref<31x128xf32, #tpu.memory_space<vmem>>, vector<31x128xf32>
    tpu.vector_store %arg13[%c0_2, %c0_3], %2 {strides = array<i32>} : memref<31x128xf32, #tpu.memory_space<vmem>>, vector<31x128xf32>,
    %cst_4 = arith.constant 0.000000e+00 : f32
    %4 = vector.broadcast %cst_4 : f32 to vector<91x128xf32>
    %c0_5 = arith.constant 0 : index
    %c0_6 = arith.constant 0 : index
    %5 = vector.load %arg14[%c0_5, %c0_6] : memref<91x128xf32, #tpu.memory_space<vmem>>, vector<91x128xf32>
    tpu.vector_store %arg14[%c0_5, %c0_6], %4 {strides = array<i32>} : memref<91x128xf32, #tpu.memory_space<vmem>>, vector<91x128xf32>,
    %c0_7 = arith.constant 0 : index
    %c0_8 = arith.constant 0 : index
    %c0_9 = arith.constant 0 : index
    %6 = vector.load %arg1[%c0_7, %c0_8, %c0_9] : memref<1x324x16xf32, #tpu.memory_space<vmem>>, vector<1x324x16xf32>
    %7 = vector.shape_cast %6 : vector<1x324x16xf32> to vector<324x16xf32>
    %c0_10 = arith.constant 0 : index
    %c0_11 = arith.constant 0 : index
    %8 = vector.load %arg2[%c0_10, %c0_11] : memref<16x128xf32, #tpu.memory_space<vmem>>, vector<16x128xf32>
    %cst_12 = arith.constant dense<0.000000e+00> : vector<324x128xf32>
    %9 = tpu.matmul %7, %8, %cst_12 {dimension_numbers = #tpu.dot_dimension_numbers<[1], [0], [0], [1], [0, 0, 1, 1], [], []>} : vector<324x16xf32>, vector<16x128xf32>, vector<324x128xf32> -> vector<324x128xf32>
    %c0_13 = arith.constant 0 : index
    %c0_14 = arith.constant 0 : index
    %10 = vector.load %arg11[%c0_13, %c0_14] : memref<324x128xf32, #tpu.memory_space<vmem>>, vector<324x128xf32>
    tpu.vector_store %arg11[%c0_13, %c0_14], %9 {strides = array<i32>} : memref<324x128xf32, #tpu.memory_space<vmem>>, vector<324x128xf32>,
    %c0_15 = arith.constant 0 : index
    %c0_16 = arith.constant 0 : index
    %11 = vector.load %arg3[%c0_15, %c0_16] : memref<1x128xf32, #tpu.memory_space<vmem>>, vector<1x128xf32>
    %c19 = arith.constant 19 : index
    %c0_17 = arith.constant 0 : index
    %12 = tpu.strided_load %arg11[%c19, %c0_17] {strides = array<i32: 2, 1>} : memref<324x128xf32, #tpu.memory_space<vmem>>, vector<8x128xf32>
    %c20 = arith.constant 20 : index
    %c0_18 = arith.constant 0 : index
    %13 = tpu.strided_load %arg11[%c20, %c0_18] {strides = array<i32: 2, 1>} : memref<324x128xf32, #tpu.memory_space<vmem>>, vector<8x128xf32>
    %14 = arith.maximumf %12, %13 : vector<8x128xf32>
    %c37 = arith.constant 37 : index
    %c0_19 = arith.constant 0 : index
    %15 = tpu.strided_load %arg11[%c37, %c0_19] {strides = array<i32: 2, 1>} : memref<324x128xf32, #tpu.memory_space<vmem>>, vector<8x128xf32>
    %c38 = arith.constant 38 : index
    %c0_20 = arith.constant 0 : index
    %16 = tpu.strided_load %arg11[%c38, %c0_20] {strides = array<i32: 2, 1>} : memref<324x128xf32, #tpu.memory_space<vmem>>, vector<8x128xf32>
    %17 = arith.maximumf %15, %16 : vector<8x128xf32>
    %18 = arith.maximumf %14, %17 : vector<8x128xf32>
    %19 = vector.broadcast %11 : vector<1x128xf32> to vector<8x128xf32>
    %20 = arith.addf %18, %19 : vector<8x128xf32>
    %cst_21 = arith.constant 0.000000e+00 : f32
    %21 = vector.broadcast %cst_21 : f32 to vector<8x128xf32>
    %22 = arith.maximumf %20, %21 : vector<8x128xf32>
    %c22 = arith.constant 22 : index
    %c0_22 = arith.constant 0 : index
    %23 = vector.load %arg12[%c22, %c0_22] : memref<122x128xf32, #tpu.memory_space<vmem>>, vector<8x128xf32>
    tpu.vector_store %arg12[%c22, %c0_22], %22 {strides = array<i32>} : memref<122x128xf32, #tpu.memory_space<vmem>>, vector<8x128xf32>,
    %c55 = arith.constant 55 : index
    %c0_23 = arith.constant 0 : index
    %24 = tpu.strided_load %arg11[%c55, %c0_23] {strides = array<i32: 2, 1>} : memref<324x128xf32, #tpu.memory_space<vmem>>, vector<8x128xf32>
    %c56 = arith.constant 56 : index
    %c0_24 = arith.constant 0 : index
    %25 = tpu.strided_load %arg11[%c56, %c0_24] {strides = array<i32: 2, 1>} : memref<324x128xf32, #tpu.memory_space<vmem>>, vector<8x128xf32>
    %26 = arith.maximumf %24, %25 : vector<8x128xf32>
    %c73 = arith.constant 73 : index
    %c0_25 = arith.constant 0 : index
    %27 = tpu.strided_load %arg11[%c73, %c0_25] {strides = array<i32: 2, 1>} : memref<324x128xf32, #tpu.memory_space<vmem>>, vector<8x128xf32>
    %c74 = arith.constant 74 : index
    %c0_26 = arith.constant 0 : index
    %28 = tpu.strided_load %arg11[%c74, %c0_26] {strides = array<i32: 2, 1>} : memref<324x128xf32, #tpu.memory_space<vmem>>, vector<8x128xf32>
    %29 = arith.maximumf %27, %28 : vector<8x128xf32>
    %30 = arith.maximumf %26, %29 : vector<8x128xf32>
    %31 = vector.broadcast %11 : vector<1x128xf32> to vector<8x128xf32>
    %32 = arith.addf %30, %31 : vector<8x128xf32>
    %cst_27 = arith.constant 0.000000e+00 : f32
    %33 = vector.broadcast %cst_27 : f32 to vector<8x128xf32>
    %34 = arith.maximumf %32, %33 : vector<8x128xf32>
    %c32 = arith.constant 32 : index
    %c0_28 = arith.constant 0 : index
    %35 = vector.load %arg12[%c32, %c0_28] : memref<122x128xf32, #tpu.memory_space<vmem>>, vector<8x128xf32>
    tpu.vector_store %arg12[%c32, %c0_28], %34 {strides = array<i32>} : memref<122x128xf32, #tpu.memory_space<vmem>>, vector<8x128xf32>,
    %c91 = arith.constant 91 : index
    %c0_29 = arith.constant 0 : index
    %36 = tpu.strided_load %arg11[%c91, %c0_29] {strides = array<i32: 2, 1>} : memref<324x128xf32, #tpu.memory_space<vmem>>, vector<8x128xf32>
    %c92 = arith.constant 92 : index
    %c0_30 = arith.constant 0 : index
    %37 = tpu.strided_load %arg11[%c92, %c0_30] {strides = array<i32: 2, 1>} : memref<324x128xf32, #tpu.memory_space<vmem>>, vector<8x128xf32>
    %38 = arith.maximumf %36, %37 : vector<8x128xf32>
    %c109 = arith.constant 109 : index
    %c0_31 = arith.constant 0 : index
    %39 = tpu.strided_load %arg11[%c109, %c0_31] {strides = array<i32: 2, 1>} : memref<324x128xf32, #tpu.memory_space<vmem>>, vector<8x128xf32>
    %c110 = arith.constant 110 : index
    %c0_32 = arith.constant 0 : index
    %40 = tpu.strided_load %arg11[%c110, %c0_32] {strides = array<i32: 2, 1>} : memref<324x128xf32, #tpu.memory_space<vmem>>, vector<8x128xf32>
    %41 = arith.maximumf %39, %40 : vector<8x128xf32>
    %42 = arith.maximumf %38, %41 : vector<8x128xf32>
    %43 = vector.broadcast %11 : vector<1x128xf32> to vector<8x128xf32>
    %44 = arith.addf %42, %43 : vector<8x128xf32>
    %cst_33 = arith.constant 0.000000e+00 : f32
    %45 = vector.broadcast %cst_33 : f32 to vector<8x128xf32>
    %46 = arith.maximumf %44, %45 : vector<8x128xf32>
    %c42 = arith.constant 42 : index
    %c0_34 = arith.constant 0 : index
    %47 = vector.load %arg12[%c42, %c0_34] : memref<122x128xf32, #tpu.memory_space<vmem>>, vector<8x128xf32>
    tpu.vector_store %arg12[%c42, %c0_34], %46 {strides = array<i32>} : memref<122x128xf32, #tpu.memory_space<vmem>>, vector<8x128xf32>,
    %c127 = arith.constant 127 : index
    %c0_35 = arith.constant 0 : index
    %48 = tpu.strided_load %arg11[%c127, %c0_35] {strides = array<i32: 2, 1>} : memref<324x128xf32, #tpu.memory_space<vmem>>, vector<8x128xf32>
    %c128 = arith.constant 128 : index
    %c0_36 = arith.constant 0 : index
    %49 = tpu.strided_load %arg11[%c128, %c0_36] {strides = array<i32: 2, 1>} : memref<324x128xf32, #tpu.memory_space<vmem>>, vector<8x128xf32>
    %50 = arith.maximumf %48, %49 : vector<8x128xf32>
    %c145 = arith.constant 145 : index
    %c0_37 = arith.constant 0 : index
    %51 = tpu.strided_load %arg11[%c145, %c0_37] {strides = array<i32: 2, 1>} : memref<324x128xf32, #tpu.memory_space<vmem>>, vector<8x128xf32>
    %c146 = arith.constant 146 : index
    %c0_38 = arith.constant 0 : index
    %52 = tpu.strided_load %arg11[%c146, %c0_38] {strides = array<i32: 2, 1>} : memref<324x128xf32, #tpu.memory_space<vmem>>, vector<8x128xf32>
    %53 = arith.maximumf %51, %52 : vector<8x128xf32>
    %54 = arith.maximumf %50, %53 : vector<8x128xf32>
    %55 = vector.broadcast %11 : vector<1x128xf32> to vector<8x128xf32>
    %56 = arith.addf %54, %55 : vector<8x128xf32>
    %cst_39 = arith.constant 0.000000e+00 : f32
    %57 = vector.broadcast %cst_39 : f32 to vector<8x128xf32>
    %58 = arith.maximumf %56, %57 : vector<8x128xf32>
    %c52 = arith.constant 52 : index
    %c0_40 = arith.constant 0 : index
    %59 = vector.load %arg12[%c52, %c0_40] : memref<122x128xf32, #tpu.memory_space<vmem>>, vector<8x128xf32>
    tpu.vector_store %arg12[%c52, %c0_40], %58 {strides = array<i32>} : memref<122x128xf32, #tpu.memory_space<vmem>>, vector<8x128xf32>,
    %c163 = arith.constant 163 : index
    %c0_41 = arith.constant 0 : index
    %60 = tpu.strided_load %arg11[%c163, %c0_41] {strides = array<i32: 2, 1>} : memref<324x128xf32, #tpu.memory_space<vmem>>, vector<8x128xf32>
    %c164 = arith.constant 164 : index
    %c0_42 = arith.constant 0 : index
    %61 = tpu.strided_load %arg11[%c164, %c0_42] {strides = array<i32: 2, 1>} : memref<324x128xf32, #tpu.memory_space<vmem>>, vector<8x128xf32>
    %62 = arith.maximumf %60, %61 : vector<8x128xf32>
    %c181 = arith.constant 181 : index
    %c0_43 = arith.constant 0 : index
    %63 = tpu.strided_load %arg11[%c181, %c0_43] {strides = array<i32: 2, 1>} : memref<324x128xf32, #tpu.memory_space<vmem>>, vector<8x128xf32>
    %c182 = arith.constant 182 : index
    %c0_44 = arith.constant 0 : index
    %64 = tpu.strided_load %arg11[%c182, %c0_44] {strides = array<i32: 2, 1>} : memref<324x128xf32, #tpu.memory_space<vmem>>, vector<8x128xf32>
    %65 = arith.maximumf %63, %64 : vector<8x128xf32>
    %66 = arith.maximumf %62, %65 : vector<8x128xf32>
    %67 = vector.broadcast %11 : vector<1x128xf32> to vector<8x128xf32>
    %68 = arith.addf %66, %67 : vector<8x128xf32>
    %cst_45 = arith.constant 0.000000e+00 : f32
    %69 = vector.broadcast %cst_45 : f32 to vector<8x128xf32>
    %70 = arith.maximumf %68, %69 : vector<8x128xf32>
    %c62 = arith.constant 62 : index
    %c0_46 = arith.constant 0 : index
    %71 = vector.load %arg12[%c62, %c0_46] : memref<122x128xf32, #tpu.memory_space<vmem>>, vector<8x128xf32>
    tpu.vector_store %arg12[%c62, %c0_46], %70 {strides = array<i32>} : memref<122x128xf32, #tpu.memory_space<vmem>>, vector<8x128xf32>,
    %c199 = arith.constant 199 : index
    %c0_47 = arith.constant 0 : index
    %72 = tpu.strided_load %arg11[%c199, %c0_47] {strides = array<i32: 2, 1>} : memref<324x128xf32, #tpu.memory_space<vmem>>, vector<8x128xf32>
    %c200 = arith.constant 200 : index
    %c0_48 = arith.constant 0 : index
    %73 = tpu.strided_load %arg11[%c200, %c0_48] {strides = array<i32: 2, 1>} : memref<324x128xf32, #tpu.memory_space<vmem>>, vector<8x128xf32>
    %74 = arith.maximumf %72, %73 : vector<8x128xf32>
    %c217 = arith.constant 217 : index
    %c0_49 = arith.constant 0 : index
    %75 = tpu.strided_load %arg11[%c217, %c0_49] {strides = array<i32: 2, 1>} : memref<324x128xf32, #tpu.memory_space<vmem>>, vector<8x128xf32>
    %c218 = arith.constant 218 : index
    %c0_50 = arith.constant 0 : index
    %76 = tpu.strided_load %arg11[%c218, %c0_50] {strides = array<i32: 2, 1>} : memref<324x128xf32, #tpu.memory_space<vmem>>, vector<8x128xf32>
    %77 = arith.maximumf %75, %76 : vector<8x128xf32>
    %78 = arith.maximumf %74, %77 : vector<8x128xf32>
    %79 = vector.broadcast %11 : vector<1x128xf32> to vector<8x128xf32>
    %80 = arith.addf %78, %79 : vector<8x128xf32>
    %cst_51 = arith.constant 0.000000e+00 : f32
    %81 = vector.broadcast %cst_51 : f32 to vector<8x128xf32>
    %82 = arith.maximumf %80, %81 : vector<8x128xf32>
    %c72 = arith.constant 72 : index
    %c0_52 = arith.constant 0 : index
    %83 = vector.load %arg12[%c72, %c0_52] : memref<122x128xf32, #tpu.memory_space<vmem>>, vector<8x128xf32>
    tpu.vector_store %arg12[%c72, %c0_52], %82 {strides = array<i32>} : memref<122x128xf32, #tpu.memory_space<vmem>>, vector<8x128xf32>,
    %c235 = arith.constant 235 : index
    %c0_53 = arith.constant 0 : index
    %84 = tpu.strided_load %arg11[%c235, %c0_53] {strides = array<i32: 2, 1>} : memref<324x128xf32, #tpu.memory_space<vmem>>, vector<8x128xf32>
    %c236 = arith.constant 236 : index
    %c0_54 = arith.constant 0 : index
    %85 = tpu.strided_load %arg11[%c236, %c0_54] {strides = array<i32: 2, 1>} : memref<324x128xf32, #tpu.memory_space<vmem>>, vector<8x128xf32>
    %86 = arith.maximumf %84, %85 : vector<8x128xf32>
    %c253 = arith.constant 253 : index
    %c0_55 = arith.constant 0 : index
    %87 = tpu.strided_load %arg11[%c253, %c0_55] {strides = array<i32: 2, 1>} : memref<324x128xf32, #tpu.memory_space<vmem>>, vector<8x128xf32>
    %c254 = arith.constant 254 : index
    %c0_56 = arith.constant 0 : index
    %88 = tpu.strided_load %arg11[%c254, %c0_56] {strides = array<i32: 2, 1>} : memref<324x128xf32, #tpu.memory_space<vmem>>, vector<8x128xf32>
    %89 = arith.maximumf %87, %88 : vector<8x128xf32>
    %90 = arith.maximumf %86, %89 : vector<8x128xf32>
    %91 = vector.broadcast %11 : vector<1x128xf32> to vector<8x128xf32>
    %92 = arith.addf %90, %91 : vector<8x128xf32>
    %cst_57 = arith.constant 0.000000e+00 : f32
    %93 = vector.broadcast %cst_57 : f32 to vector<8x128xf32>
    %94 = arith.maximumf %92, %93 : vector<8x128xf32>
    %c82 = arith.constant 82 : index
    %c0_58 = arith.constant 0 : index
    %95 = vector.load %arg12[%c82, %c0_58] : memref<122x128xf32, #tpu.memory_space<vmem>>, vector<8x128xf32>
    tpu.vector_store %arg12[%c82, %c0_58], %94 {strides = array<i32>} : memref<122x128xf32, #tpu.memory_space<vmem>>, vector<8x128xf32>,
    %c271 = arith.constant 271 : index
    %c0_59 = arith.constant 0 : index
    %96 = tpu.strided_load %arg11[%c271, %c0_59] {strides = array<i32: 2, 1>} : memref<324x128xf32, #tpu.memory_space<vmem>>, vector<8x128xf32>
    %c272 = arith.constant 272 : index
    %c0_60 = arith.constant 0 : index
    %97 = tpu.strided_load %arg11[%c272, %c0_60] {strides = array<i32: 2, 1>} : memref<324x128xf32, #tpu.memory_space<vmem>>, vector<8x128xf32>
    %98 = arith.maximumf %96, %97 : vector<8x128xf32>
    %c289 = arith.constant 289 : index
    %c0_61 = arith.constant 0 : index
    %99 = tpu.strided_load %arg11[%c289, %c0_61] {strides = array<i32: 2, 1>} : memref<324x128xf32, #tpu.memory_space<vmem>>, vector<8x128xf32>
    %c290 = arith.constant 290 : index
    %c0_62 = arith.constant 0 : index
    %100 = tpu.strided_load %arg11[%c290, %c0_62] {strides = array<i32: 2, 1>} : memref<324x128xf32, #tpu.memory_space<vmem>>, vector<8x128xf32>
    %101 = arith.maximumf %99, %100 : vector<8x128xf32>
    %102 = arith.maximumf %98, %101 : vector<8x128xf32>
    %103 = vector.broadcast %11 : vector<1x128xf32> to vector<8x128xf32>
    %104 = arith.addf %102, %103 : vector<8x128xf32>
    %cst_63 = arith.constant 0.000000e+00 : f32
    %105 = vector.broadcast %cst_63 : f32 to vector<8x128xf32>
    %106 = arith.maximumf %104, %105 : vector<8x128xf32>
    %c92_64 = arith.constant 92 : index
    %c0_65 = arith.constant 0 : index
    %107 = vector.load %arg12[%c92_64, %c0_65] : memref<122x128xf32, #tpu.memory_space<vmem>>, vector<8x128xf32>
    tpu.vector_store %arg12[%c92_64, %c0_65], %106 {strides = array<i32>} : memref<122x128xf32, #tpu.memory_space<vmem>>, vector<8x128xf32>,
    %c0_66 = arith.constant 0 : index
    %c0_67 = arith.constant 0 : index
    %108 = vector.load %arg12[%c0_66, %c0_67] : memref<122x128xf32, #tpu.memory_space<vmem>>, vector<100x128xf32>
    %c0_68 = arith.constant 0 : index
    %c0_69 = arith.constant 0 : index
    %c0_70 = arith.constant 0 : index
    %109 = vector.load %arg4[%c0_68, %c0_69, %c0_70] : memref<9x128x128xf32, #tpu.memory_space<vmem>>, vector<1x128x128xf32>
    %110 = vector.shape_cast %109 : vector<1x128x128xf32> to vector<128x128xf32>
    %cst_71 = arith.constant dense<0.000000e+00> : vector<100x128xf32>
    %111 = tpu.matmul %108, %110, %cst_71 {dimension_numbers = #tpu.dot_dimension_numbers<[1], [0], [0], [1], [0, 0, 1, 1], [], []>} : vector<100x128xf32>, vector<128x128xf32>, vector<100x128xf32> -> vector<100x128xf32>
    %c1 = arith.constant 1 : index
    %c0_72 = arith.constant 0 : index
    %112 = vector.load %arg12[%c1, %c0_72] : memref<122x128xf32, #tpu.memory_space<vmem>>, vector<100x128xf32>
    %c1_73 = arith.constant 1 : index
    %c0_74 = arith.constant 0 : index
    %c0_75 = arith.constant 0 : index
    %113 = vector.load %arg4[%c1_73, %c0_74, %c0_75] : memref<9x128x128xf32, #tpu.memory_space<vmem>>, vector<1x128x128xf32>
    %114 = vector.shape_cast %113 : vector<1x128x128xf32> to vector<128x128xf32>
    %cst_76 = arith.constant dense<0.000000e+00> : vector<100x128xf32>
    %115 = tpu.matmul %112, %114, %cst_76 {dimension_numbers = #tpu.dot_dimension_numbers<[1], [0], [0], [1], [0, 0, 1, 1], [], []>} : vector<100x128xf32>, vector<128x128xf32>, vector<100x128xf32> -> vector<100x128xf32>
    %116 = arith.addf %111, %115 : vector<100x128xf32>
    %c2 = arith.constant 2 : index
    %c0_77 = arith.constant 0 : index
    %117 = vector.load %arg12[%c2, %c0_77] : memref<122x128xf32, #tpu.memory_space<vmem>>, vector<100x128xf32>
    %c2_78 = arith.constant 2 : index
    %c0_79 = arith.constant 0 : index
    %c0_80 = arith.constant 0 : index
    %118 = vector.load %arg4[%c2_78, %c0_79, %c0_80] : memref<9x128x128xf32, #tpu.memory_space<vmem>>, vector<1x128x128xf32>
    %119 = vector.shape_cast %118 : vector<1x128x128xf32> to vector<128x128xf32>
    %cst_81 = arith.constant dense<0.000000e+00> : vector<100x128xf32>
    %120 = tpu.matmul %117, %119, %cst_81 {dimension_numbers = #tpu.dot_dimension_numbers<[1], [0], [0], [1], [0, 0, 1, 1], [], []>} : vector<100x128xf32>, vector<128x128xf32>, vector<100x128xf32> -> vector<100x128xf32>
    %121 = arith.addf %116, %120 : vector<100x128xf32>
    %c10 = arith.constant 10 : index
    %c0_82 = arith.constant 0 : index
    %122 = vector.load %arg12[%c10, %c0_82] : memref<122x128xf32, #tpu.memory_space<vmem>>, vector<100x128xf32>
    %c3 = arith.constant 3 : index
    %c0_83 = arith.constant 0 : index
    %c0_84 = arith.constant 0 : index
    %123 = vector.load %arg4[%c3, %c0_83, %c0_84] : memref<9x128x128xf32, #tpu.memory_space<vmem>>, vector<1x128x128xf32>
    %124 = vector.shape_cast %123 : vector<1x128x128xf32> to vector<128x128xf32>
    %cst_85 = arith.constant dense<0.000000e+00> : vector<100x128xf32>
    %125 = tpu.matmul %122, %124, %cst_85 {dimension_numbers = #tpu.dot_dimension_numbers<[1], [0], [0], [1], [0, 0, 1, 1], [], []>} : vector<100x128xf32>, vector<128x128xf32>, vector<100x128xf32> -> vector<100x128xf32>
    %126 = arith.addf %121, %125 : vector<100x128xf32>
    %c11 = arith.constant 11 : index
    %c0_86 = arith.constant 0 : index
    %127 = vector.load %arg12[%c11, %c0_86] : memref<122x128xf32, #tpu.memory_space<vmem>>, vector<100x128xf32>
    %c4 = arith.constant 4 : index
    %c0_87 = arith.constant 0 : index
    %c0_88 = arith.constant 0 : index
    %128 = vector.load %arg4[%c4, %c0_87, %c0_88] : memref<9x128x128xf32, #tpu.memory_space<vmem>>, vector<1x128x128xf32>
    %129 = vector.shape_cast %128 : vector<1x128x128xf32> to vector<128x128xf32>
    %cst_89 = arith.constant dense<0.000000e+00> : vector<100x128xf32>
    %130 = tpu.matmul %127, %129, %cst_89 {dimension_numbers = #tpu.dot_dimension_numbers<[1], [0], [0], [1], [0, 0, 1, 1], [], []>} : vector<100x128xf32>, vector<128x128xf32>, vector<100x128xf32> -> vector<100x128xf32>
    %131 = arith.addf %126, %130 : vector<100x128xf32>
    %c12 = arith.constant 12 : index
    %c0_90 = arith.constant 0 : index
    %132 = vector.load %arg12[%c12, %c0_90] : memref<122x128xf32, #tpu.memory_space<vmem>>, vector<100x128xf32>
    %c5 = arith.constant 5 : index
    %c0_91 = arith.constant 0 : index
    %c0_92 = arith.constant 0 : index
    %133 = vector.load %arg4[%c5, %c0_91, %c0_92] : memref<9x128x128xf32, #tpu.memory_space<vmem>>, vector<1x128x128xf32>
    %134 = vector.shape_cast %133 : vector<1x128x128xf32> to vector<128x128xf32>
    %cst_93 = arith.constant dense<0.000000e+00> : vector<100x128xf32>
    %135 = tpu.matmul %132, %134, %cst_93 {dimension_numbers = #tpu.dot_dimension_numbers<[1], [0], [0], [1], [0, 0, 1, 1], [], []>} : vector<100x128xf32>, vector<128x128xf32>, vector<100x128xf32> -> vector<100x128xf32>
    %136 = arith.addf %131, %135 : vector<100x128xf32>
    %c20_94 = arith.constant 20 : index
    %c0_95 = arith.constant 0 : index
    %137 = vector.load %arg12[%c20_94, %c0_95] : memref<122x128xf32, #tpu.memory_space<vmem>>, vector<100x128xf32>
    %c6 = arith.constant 6 : index
    %c0_96 = arith.constant 0 : index
    %c0_97 = arith.constant 0 : index
    %138 = vector.load %arg4[%c6, %c0_96, %c0_97] : memref<9x128x128xf32, #tpu.memory_space<vmem>>, vector<1x128x128xf32>
    %139 = vector.shape_cast %138 : vector<1x128x128xf32> to vector<128x128xf32>
    %cst_98 = arith.constant dense<0.000000e+00> : vector<100x128xf32>
    %140 = tpu.matmul %137, %139, %cst_98 {dimension_numbers = #tpu.dot_dimension_numbers<[1], [0], [0], [1], [0, 0, 1, 1], [], []>} : vector<100x128xf32>, vector<128x128xf32>, vector<100x128xf32> -> vector<100x128xf32>
    %141 = arith.addf %136, %140 : vector<100x128xf32>
    %c21 = arith.constant 21 : index
    %c0_99 = arith.constant 0 : index
    %142 = vector.load %arg12[%c21, %c0_99] : memref<122x128xf32, #tpu.memory_space<vmem>>, vector<100x128xf32>
    %c7 = arith.constant 7 : index
    %c0_100 = arith.constant 0 : index
    %c0_101 = arith.constant 0 : index
    %143 = vector.load %arg4[%c7, %c0_100, %c0_101] : memref<9x128x128xf32, #tpu.memory_space<vmem>>, vector<1x128x128xf32>
    %144 = vector.shape_cast %143 : vector<1x128x128xf32> to vector<128x128xf32>
    %cst_102 = arith.constant dense<0.000000e+00> : vector<100x128xf32>
    %145 = tpu.matmul %142, %144, %cst_102 {dimension_numbers = #tpu.dot_dimension_numbers<[1], [0], [0], [1], [0, 0, 1, 1], [], []>} : vector<100x128xf32>, vector<128x128xf32>, vector<100x128xf32> -> vector<100x128xf32>
    %146 = arith.addf %141, %145 : vector<100x128xf32>
    %c22_103 = arith.constant 22 : index
    %c0_104 = arith.constant 0 : index
    %147 = vector.load %arg12[%c22_103, %c0_104] : memref<122x128xf32, #tpu.memory_space<vmem>>, vector<100x128xf32>
    %c8 = arith.constant 8 : index
    %c0_105 = arith.constant 0 : index
    %c0_106 = arith.constant 0 : index
    %148 = vector.load %arg4[%c8, %c0_105, %c0_106] : memref<9x128x128xf32, #tpu.memory_space<vmem>>, vector<1x128x128xf32>
    %149 = vector.shape_cast %148 : vector<1x128x128xf32> to vector<128x128xf32>
    %cst_107 = arith.constant dense<0.000000e+00> : vector<100x128xf32>
    %150 = tpu.matmul %147, %149, %cst_107 {dimension_numbers = #tpu.dot_dimension_numbers<[1], [0], [0], [1], [0, 0, 1, 1], [], []>} : vector<100x128xf32>, vector<128x128xf32>, vector<100x128xf32> -> vector<100x128xf32>
    %151 = arith.addf %146, %150 : vector<100x128xf32>
    %c0_108 = arith.constant 0 : index
    %c0_109 = arith.constant 0 : index
    %152 = vector.load %arg11[%c0_108, %c0_109] : memref<324x128xf32, #tpu.memory_space<vmem>>, vector<100x128xf32>
    tpu.vector_store %arg11[%c0_108, %c0_109], %151 {strides = array<i32>} : memref<324x128xf32, #tpu.memory_space<vmem>>, vector<100x128xf32>,
    %c0_110 = arith.constant 0 : index
    %c0_111 = arith.constant 0 : index
    %153 = vector.load %arg5[%c0_110, %c0_111] : memref<1x128xf32, #tpu.memory_space<vmem>>, vector<1x128xf32>
    %c11_112 = arith.constant 11 : index
    %c0_113 = arith.constant 0 : index
    %154 = tpu.strided_load %arg11[%c11_112, %c0_113] {strides = array<i32: 2, 1>} : memref<324x128xf32, #tpu.memory_space<vmem>>, vector<4x128xf32>
    %c12_114 = arith.constant 12 : index
    %c0_115 = arith.constant 0 : index
    %155 = tpu.strided_load %arg11[%c12_114, %c0_115] {strides = array<i32: 2, 1>} : memref<324x128xf32, #tpu.memory_space<vmem>>, vector<4x128xf32>
    %156 = arith.maximumf %154, %155 : vector<4x128xf32>
    %c21_116 = arith.constant 21 : index
    %c0_117 = arith.constant 0 : index
    %157 = tpu.strided_load %arg11[%c21_116, %c0_117] {strides = array<i32: 2, 1>} : memref<324x128xf32, #tpu.memory_space<vmem>>, vector<4x128xf32>
    %c22_118 = arith.constant 22 : index
    %c0_119 = arith.constant 0 : index
    %158 = tpu.strided_load %arg11[%c22_118, %c0_119] {strides = array<i32: 2, 1>} : memref<324x128xf32, #tpu.memory_space<vmem>>, vector<4x128xf32>
    %159 = arith.maximumf %157, %158 : vector<4x128xf32>
    %160 = arith.maximumf %156, %159 : vector<4x128xf32>
    %161 = vector.broadcast %153 : vector<1x128xf32> to vector<4x128xf32>
    %162 = arith.addf %160, %161 : vector<4x128xf32>
    %cst_120 = arith.constant 0.000000e+00 : f32
    %163 = vector.broadcast %cst_120 : f32 to vector<4x128xf32>
    %164 = arith.maximumf %162, %163 : vector<4x128xf32>
    %c0_121 = arith.constant 0 : index
    %c0_122 = arith.constant 0 : index
    %165 = vector.load %arg13[%c0_121, %c0_122] : memref<31x128xf32, #tpu.memory_space<vmem>>, vector<4x128xf32>
    tpu.vector_store %arg13[%c0_121, %c0_122], %164 {strides = array<i32>} : memref<31x128xf32, #tpu.memory_space<vmem>>, vector<4x128xf32>,
    %c31 = arith.constant 31 : index
    %c0_123 = arith.constant 0 : index
    %166 = tpu.strided_load %arg11[%c31, %c0_123] {strides = array<i32: 2, 1>} : memref<324x128xf32, #tpu.memory_space<vmem>>, vector<4x128xf32>
    %c32_124 = arith.constant 32 : index
    %c0_125 = arith.constant 0 : index
    %167 = tpu.strided_load %arg11[%c32_124, %c0_125] {strides = array<i32: 2, 1>} : memref<324x128xf32, #tpu.memory_space<vmem>>, vector<4x128xf32>
    %168 = arith.maximumf %166, %167 : vector<4x128xf32>
    %c41 = arith.constant 41 : index
    %c0_126 = arith.constant 0 : index
    %169 = tpu.strided_load %arg11[%c41, %c0_126] {strides = array<i32: 2, 1>} : memref<324x128xf32, #tpu.memory_space<vmem>>, vector<4x128xf32>
    %c42_127 = arith.constant 42 : index
    %c0_128 = arith.constant 0 : index
    %170 = tpu.strided_load %arg11[%c42_127, %c0_128] {strides = array<i32: 2, 1>} : memref<324x128xf32, #tpu.memory_space<vmem>>, vector<4x128xf32>
    %171 = arith.maximumf %169, %170 : vector<4x128xf32>
    %172 = arith.maximumf %168, %171 : vector<4x128xf32>
    %173 = vector.broadcast %153 : vector<1x128xf32> to vector<4x128xf32>
    %174 = arith.addf %172, %173 : vector<4x128xf32>
    %cst_129 = arith.constant 0.000000e+00 : f32
    %175 = vector.broadcast %cst_129 : f32 to vector<4x128xf32>
    %176 = arith.maximumf %174, %175 : vector<4x128xf32>
    %c5_130 = arith.constant 5 : index
    %c0_131 = arith.constant 0 : index
    %177 = vector.load %arg13[%c5_130, %c0_131] : memref<31x128xf32, #tpu.memory_space<vmem>>, vector<4x128xf32>
    tpu.vector_store %arg13[%c5_130, %c0_131], %176 {strides = array<i32>} : memref<31x128xf32, #tpu.memory_space<vmem>>, vector<4x128xf32>,
    %c51 = arith.constant 51 : index
    %c0_132 = arith.constant 0 : index
    %178 = tpu.strided_load %arg11[%c51, %c0_132] {strides = array<i32: 2, 1>} : memref<324x128xf32, #tpu.memory_space<vmem>>, vector<4x128xf32>
    %c52_133 = arith.constant 52 : index
    %c0_134 = arith.constant 0 : index
    %179 = tpu.strided_load %arg11[%c52_133, %c0_134] {strides = array<i32: 2, 1>} : memref<324x128xf32, #tpu.memory_space<vmem>>, vector<4x128xf32>
    %180 = arith.maximumf %178, %179 : vector<4x128xf32>
    %c61 = arith.constant 61 : index
    %c0_135 = arith.constant 0 : index
    %181 = tpu.strided_load %arg11[%c61, %c0_135] {strides = array<i32: 2, 1>} : memref<324x128xf32, #tpu.memory_space<vmem>>, vector<4x128xf32>
    %c62_136 = arith.constant 62 : index
    %c0_137 = arith.constant 0 : index
    %182 = tpu.strided_load %arg11[%c62_136, %c0_137] {strides = array<i32: 2, 1>} : memref<324x128xf32, #tpu.memory_space<vmem>>, vector<4x128xf32>
    %183 = arith.maximumf %181, %182 : vector<4x128xf32>
    %184 = arith.maximumf %180, %183 : vector<4x128xf32>
    %185 = vector.broadcast %153 : vector<1x128xf32> to vector<4x128xf32>
    %186 = arith.addf %184, %185 : vector<4x128xf32>
    %cst_138 = arith.constant 0.000000e+00 : f32
    %187 = vector.broadcast %cst_138 : f32 to vector<4x128xf32>
    %188 = arith.maximumf %186, %187 : vector<4x128xf32>
    %c10_139 = arith.constant 10 : index
    %c0_140 = arith.constant 0 : index
    %189 = vector.load %arg13[%c10_139, %c0_140] : memref<31x128xf32, #tpu.memory_space<vmem>>, vector<4x128xf32>
    tpu.vector_store %arg13[%c10_139, %c0_140], %188 {strides = array<i32>} : memref<31x128xf32, #tpu.memory_space<vmem>>, vector<4x128xf32>,
    %c71 = arith.constant 71 : index
    %c0_141 = arith.constant 0 : index
    %190 = tpu.strided_load %arg11[%c71, %c0_141] {strides = array<i32: 2, 1>} : memref<324x128xf32, #tpu.memory_space<vmem>>, vector<4x128xf32>
    %c72_142 = arith.constant 72 : index
    %c0_143 = arith.constant 0 : index
    %191 = tpu.strided_load %arg11[%c72_142, %c0_143] {strides = array<i32: 2, 1>} : memref<324x128xf32, #tpu.memory_space<vmem>>, vector<4x128xf32>
    %192 = arith.maximumf %190, %191 : vector<4x128xf32>
    %c81 = arith.constant 81 : index
    %c0_144 = arith.constant 0 : index
    %193 = tpu.strided_load %arg11[%c81, %c0_144] {strides = array<i32: 2, 1>} : memref<324x128xf32, #tpu.memory_space<vmem>>, vector<4x128xf32>
    %c82_145 = arith.constant 82 : index
    %c0_146 = arith.constant 0 : index
    %194 = tpu.strided_load %arg11[%c82_145, %c0_146] {strides = array<i32: 2, 1>} : memref<324x128xf32, #tpu.memory_space<vmem>>, vector<4x128xf32>
    %195 = arith.maximumf %193, %194 : vector<4x128xf32>
    %196 = arith.maximumf %192, %195 : vector<4x128xf32>
    %197 = vector.broadcast %153 : vector<1x128xf32> to vector<4x128xf32>
    %198 = arith.addf %196, %197 : vector<4x128xf32>
    %cst_147 = arith.constant 0.000000e+00 : f32
    %199 = vector.broadcast %cst_147 : f32 to vector<4x128xf32>
    %200 = arith.maximumf %198, %199 : vector<4x128xf32>
    %c15 = arith.constant 15 : index
    %c0_148 = arith.constant 0 : index
    %201 = vector.load %arg13[%c15, %c0_148] : memref<31x128xf32, #tpu.memory_space<vmem>>, vector<4x128xf32>
    tpu.vector_store %arg13[%c15, %c0_148], %200 {strides = array<i32>} : memref<31x128xf32, #tpu.memory_space<vmem>>, vector<4x128xf32>,
    %c0_149 = arith.constant 0 : index
    %c0_150 = arith.constant 0 : index
    %202 = vector.load %arg7[%c0_149, %c0_150] : memref<1x128xf32, #tpu.memory_space<vmem>>, vector<1x128xf32>
    %c0_151 = arith.constant 0 : index
    %c0_152 = arith.constant 0 : index
    %203 = vector.load %arg13[%c0_151, %c0_152] : memref<31x128xf32, #tpu.memory_space<vmem>>, vector<25x128xf32>
    %c1_153 = arith.constant 1 : index
    %c1_154 = arith.constant 1 : index
    %c0_155 = arith.constant 0 : index
    %c0_156 = arith.constant 0 : index
    %204 = vector.load %arg6[%c1_153, %c1_154, %c0_155, %c0_156] : memref<3x3x128x128xf32, #tpu.memory_space<vmem>>, vector<1x1x128x128xf32>
    %205 = vector.shape_cast %204 : vector<1x1x128x128xf32> to vector<128x128xf32>
    %cst_157 = arith.constant dense<0.000000e+00> : vector<25x128xf32>
    %206 = tpu.matmul %203, %205, %cst_157 {dimension_numbers = #tpu.dot_dimension_numbers<[1], [0], [0], [1], [0, 0, 1, 1], [], []>} : vector<25x128xf32>, vector<128x128xf32>, vector<25x128xf32> -> vector<25x128xf32>
    %207 = vector.broadcast %202 : vector<1x128xf32> to vector<25x128xf32>
    %208 = arith.addf %206, %207 : vector<25x128xf32>
    %cst_158 = arith.constant 0.000000e+00 : f32
    %209 = vector.broadcast %cst_158 : f32 to vector<25x128xf32>
    %210 = arith.maximumf %208, %209 : vector<25x128xf32>
    %c0_159 = arith.constant 0 : index
    %c0_160 = arith.constant 0 : index
    %211 = vector.load %arg11[%c0_159, %c0_160] : memref<324x128xf32, #tpu.memory_space<vmem>>, vector<25x128xf32>
    tpu.vector_store %arg11[%c0_159, %c0_160], %210 {strides = array<i32>} : memref<324x128xf32, #tpu.memory_space<vmem>>, vector<25x128xf32>,
    %c0_161 = arith.constant 0 : index
    %c0_162 = arith.constant 0 : index
    %212 = vector.load %arg13[%c0_161, %c0_162] : memref<31x128xf32, #tpu.memory_space<vmem>>, vector<25x128xf32>
    %c1_163 = arith.constant 1 : index
    %c2_164 = arith.constant 2 : index
    %c0_165 = arith.constant 0 : index
    %c0_166 = arith.constant 0 : index
    %213 = vector.load %arg6[%c1_163, %c2_164, %c0_165, %c0_166] : memref<3x3x128x128xf32, #tpu.memory_space<vmem>>, vector<1x1x128x128xf32>
    %214 = vector.shape_cast %213 : vector<1x1x128x128xf32> to vector<128x128xf32>
    %cst_167 = arith.constant dense<0.000000e+00> : vector<25x128xf32>
    %215 = tpu.matmul %212, %214, %cst_167 {dimension_numbers = #tpu.dot_dimension_numbers<[1], [0], [0], [1], [0, 0, 1, 1], [], []>} : vector<25x128xf32>, vector<128x128xf32>, vector<25x128xf32> -> vector<25x128xf32>
    %c1_168 = arith.constant 1 : index
    %c0_169 = arith.constant 0 : index
    %216 = vector.load %arg13[%c1_168, %c0_169] : memref<31x128xf32, #tpu.memory_space<vmem>>, vector<25x128xf32>
    %c1_170 = arith.constant 1 : index
    %c0_171 = arith.constant 0 : index
    %c0_172 = arith.constant 0 : index
    %c0_173 = arith.constant 0 : index
    %217 = vector.load %arg6[%c1_170, %c0_171, %c0_172, %c0_173] : memref<3x3x128x128xf32, #tpu.memory_space<vmem>>, vector<1x1x128x128xf32>
    %218 = vector.shape_cast %217 : vector<1x1x128x128xf32> to vector<128x128xf32>
    %cst_174 = arith.constant dense<0.000000e+00> : vector<25x128xf32>
    %219 = tpu.matmul %216, %218, %cst_174 {dimension_numbers = #tpu.dot_dimension_numbers<[1], [0], [0], [1], [0, 0, 1, 1], [], []>} : vector<25x128xf32>, vector<128x128xf32>, vector<25x128xf32> -> vector<25x128xf32>
    %220 = arith.addf %215, %219 : vector<25x128xf32>
    %221 = vector.broadcast %202 : vector<1x128xf32> to vector<25x128xf32>
    %222 = arith.addf %220, %221 : vector<25x128xf32>
    %cst_175 = arith.constant 0.000000e+00 : f32
    %223 = vector.broadcast %cst_175 : f32 to vector<25x128xf32>
    %224 = arith.maximumf %222, %223 : vector<25x128xf32>
    %c32_176 = arith.constant 32 : index
    %c0_177 = arith.constant 0 : index
    %225 = vector.load %arg11[%c32_176, %c0_177] : memref<324x128xf32, #tpu.memory_space<vmem>>, vector<25x128xf32>
    tpu.vector_store %arg11[%c32_176, %c0_177], %224 {strides = array<i32>} : memref<324x128xf32, #tpu.memory_space<vmem>>, vector<25x128xf32>,
    %c0_178 = arith.constant 0 : index
    %c0_179 = arith.constant 0 : index
    %226 = vector.load %arg13[%c0_178, %c0_179] : memref<31x128xf32, #tpu.memory_space<vmem>>, vector<25x128xf32>
    %c2_180 = arith.constant 2 : index
    %c1_181 = arith.constant 1 : index
    %c0_182 = arith.constant 0 : index
    %c0_183 = arith.constant 0 : index
    %227 = vector.load %arg6[%c2_180, %c1_181, %c0_182, %c0_183] : memref<3x3x128x128xf32, #tpu.memory_space<vmem>>, vector<1x1x128x128xf32>
    %228 = vector.shape_cast %227 : vector<1x1x128x128xf32> to vector<128x128xf32>
    %cst_184 = arith.constant dense<0.000000e+00> : vector<25x128xf32>
    %229 = tpu.matmul %226, %228, %cst_184 {dimension_numbers = #tpu.dot_dimension_numbers<[1], [0], [0], [1], [0, 0, 1, 1], [], []>} : vector<25x128xf32>, vector<128x128xf32>, vector<25x128xf32> -> vector<25x128xf32>
    %c5_185 = arith.constant 5 : index
    %c0_186 = arith.constant 0 : index
    %230 = vector.load %arg13[%c5_185, %c0_186] : memref<31x128xf32, #tpu.memory_space<vmem>>, vector<25x128xf32>
    %c0_187 = arith.constant 0 : index
    %c1_188 = arith.constant 1 : index
    %c0_189 = arith.constant 0 : index
    %c0_190 = arith.constant 0 : index
    %231 = vector.load %arg6[%c0_187, %c1_188, %c0_189, %c0_190] : memref<3x3x128x128xf32, #tpu.memory_space<vmem>>, vector<1x1x128x128xf32>
    %232 = vector.shape_cast %231 : vector<1x1x128x128xf32> to vector<128x128xf32>
    %cst_191 = arith.constant dense<0.000000e+00> : vector<25x128xf32>
    %233 = tpu.matmul %230, %232, %cst_191 {dimension_numbers = #tpu.dot_dimension_numbers<[1], [0], [0], [1], [0, 0, 1, 1], [], []>} : vector<25x128xf32>, vector<128x128xf32>, vector<25x128xf32> -> vector<25x128xf32>
    %234 = arith.addf %229, %233 : vector<25x128xf32>
    %235 = vector.broadcast %202 : vector<1x128xf32> to vector<25x128xf32>
    %236 = arith.addf %234, %235 : vector<25x128xf32>
    %cst_192 = arith.constant 0.000000e+00 : f32
    %237 = vector.broadcast %cst_192 : f32 to vector<25x128xf32>
    %238 = arith.maximumf %236, %237 : vector<25x128xf32>
    %c64 = arith.constant 64 : index
    %c0_193 = arith.constant 0 : index
    %239 = vector.load %arg11[%c64, %c0_193] : memref<324x128xf32, #tpu.memory_space<vmem>>, vector<25x128xf32>
    tpu.vector_store %arg11[%c64, %c0_193], %238 {strides = array<i32>} : memref<324x128xf32, #tpu.memory_space<vmem>>, vector<25x128xf32>,
    %c0_194 = arith.constant 0 : index
    %c0_195 = arith.constant 0 : index
    %240 = vector.load %arg13[%c0_194, %c0_195] : memref<31x128xf32, #tpu.memory_space<vmem>>, vector<25x128xf32>
    %c2_196 = arith.constant 2 : index
    %c2_197 = arith.constant 2 : index
    %c0_198 = arith.constant 0 : index
    %c0_199 = arith.constant 0 : index
    %241 = vector.load %arg6[%c2_196, %c2_197, %c0_198, %c0_199] : memref<3x3x128x128xf32, #tpu.memory_space<vmem>>, vector<1x1x128x128xf32>
    %242 = vector.shape_cast %241 : vector<1x1x128x128xf32> to vector<128x128xf32>
    %cst_200 = arith.constant dense<0.000000e+00> : vector<25x128xf32>
    %243 = tpu.matmul %240, %242, %cst_200 {dimension_numbers = #tpu.dot_dimension_numbers<[1], [0], [0], [1], [0, 0, 1, 1], [], []>} : vector<25x128xf32>, vector<128x128xf32>, vector<25x128xf32> -> vector<25x128xf32>
    %c1_201 = arith.constant 1 : index
    %c0_202 = arith.constant 0 : index
    %244 = vector.load %arg13[%c1_201, %c0_202] : memref<31x128xf32, #tpu.memory_space<vmem>>, vector<25x128xf32>
    %c2_203 = arith.constant 2 : index
    %c0_204 = arith.constant 0 : index
    %c0_205 = arith.constant 0 : index
    %c0_206 = arith.constant 0 : index
    %245 = vector.load %arg6[%c2_203, %c0_204, %c0_205, %c0_206] : memref<3x3x128x128xf32, #tpu.memory_space<vmem>>, vector<1x1x128x128xf32>
    %246 = vector.shape_cast %245 : vector<1x1x128x128xf32> to vector<128x128xf32>
    %cst_207 = arith.constant dense<0.000000e+00> : vector<25x128xf32>
    %247 = tpu.matmul %244, %246, %cst_207 {dimension_numbers = #tpu.dot_dimension_numbers<[1], [0], [0], [1], [0, 0, 1, 1], [], []>} : vector<25x128xf32>, vector<128x128xf32>, vector<25x128xf32> -> vector<25x128xf32>
    %248 = arith.addf %243, %247 : vector<25x128xf32>
    %c5_208 = arith.constant 5 : index
    %c0_209 = arith.constant 0 : index
    %249 = vector.load %arg13[%c5_208, %c0_209] : memref<31x128xf32, #tpu.memory_space<vmem>>, vector<25x128xf32>
    %c0_210 = arith.constant 0 : index
    %c2_211 = arith.constant 2 : index
    %c0_212 = arith.constant 0 : index
    %c0_213 = arith.constant 0 : index
    %250 = vector.load %arg6[%c0_210, %c2_211, %c0_212, %c0_213] : memref<3x3x128x128xf32, #tpu.memory_space<vmem>>, vector<1x1x128x128xf32>
    %251 = vector.shape_cast %250 : vector<1x1x128x128xf32> to vector<128x128xf32>
    %cst_214 = arith.constant dense<0.000000e+00> : vector<25x128xf32>
    %252 = tpu.matmul %249, %251, %cst_214 {dimension_numbers = #tpu.dot_dimension_numbers<[1], [0], [0], [1], [0, 0, 1, 1], [], []>} : vector<25x128xf32>, vector<128x128xf32>, vector<25x128xf32> -> vector<25x128xf32>
    %253 = arith.addf %248, %252 : vector<25x128xf32>
    %c6_215 = arith.constant 6 : index
    %c0_216 = arith.constant 0 : index
    %254 = vector.load %arg13[%c6_215, %c0_216] : memref<31x128xf32, #tpu.memory_space<vmem>>, vector<25x128xf32>
    %c0_217 = arith.constant 0 : index
    %c0_218 = arith.constant 0 : index
    %c0_219 = arith.constant 0 : index
    %c0_220 = arith.constant 0 : index
    %255 = vector.load %arg6[%c0_217, %c0_218, %c0_219, %c0_220] : memref<3x3x128x128xf32, #tpu.memory_space<vmem>>, vector<1x1x128x128xf32>
    %256 = vector.shape_cast %255 : vector<1x1x128x128xf32> to vector<128x128xf32>
    %cst_221 = arith.constant dense<0.000000e+00> : vector<25x128xf32>
    %257 = tpu.matmul %254, %256, %cst_221 {dimension_numbers = #tpu.dot_dimension_numbers<[1], [0], [0], [1], [0, 0, 1, 1], [], []>} : vector<25x128xf32>, vector<128x128xf32>, vector<25x128xf32> -> vector<25x128xf32>
    %258 = arith.addf %253, %257 : vector<25x128xf32>
    %259 = vector.broadcast %202 : vector<1x128xf32> to vector<25x128xf32>
    %260 = arith.addf %258, %259 : vector<25x128xf32>
    %cst_222 = arith.constant 0.000000e+00 : f32
    %261 = vector.broadcast %cst_222 : f32 to vector<25x128xf32>
    %262 = arith.maximumf %260, %261 : vector<25x128xf32>
    %c96 = arith.constant 96 : index
    %c0_223 = arith.constant 0 : index
    %263 = vector.load %arg11[%c96, %c0_223] : memref<324x128xf32, #tpu.memory_space<vmem>>, vector<25x128xf32>
    tpu.vector_store %arg11[%c96, %c0_223], %262 {strides = array<i32>} : memref<324x128xf32, #tpu.memory_space<vmem>>, vector<25x128xf32>,
    %c0_224 = arith.constant 0 : index
    %c0_225 = arith.constant 0 : index
    %264 = vector.load %arg11[%c0_224, %c0_225] : memref<324x128xf32, #tpu.memory_space<vmem>>, vector<1x128xf32>
    %c0_226 = arith.constant 0 : index
    %c0_227 = arith.constant 0 : index
    %265 = vector.load %arg14[%c0_226, %c0_227] : memref<91x128xf32, #tpu.memory_space<vmem>>, vector<1x128xf32>
    tpu.vector_store %arg14[%c0_226, %c0_227], %264 {strides = array<i32>} : memref<91x128xf32, #tpu.memory_space<vmem>>, vector<1x128xf32>,
    %c1_228 = arith.constant 1 : index
    %c0_229 = arith.constant 0 : index
    %266 = vector.load %arg11[%c1_228, %c0_229] : memref<324x128xf32, #tpu.memory_space<vmem>>, vector<1x128xf32>
    %c2_230 = arith.constant 2 : index
    %c0_231 = arith.constant 0 : index
    %267 = vector.load %arg14[%c2_230, %c0_231] : memref<91x128xf32, #tpu.memory_space<vmem>>, vector<1x128xf32>
    tpu.vector_store %arg14[%c2_230, %c0_231], %266 {strides = array<i32>} : memref<91x128xf32, #tpu.memory_space<vmem>>, vector<1x128xf32>,
    %c2_232 = arith.constant 2 : index
    %c0_233 = arith.constant 0 : index
    %268 = vector.load %arg11[%c2_232, %c0_233] : memref<324x128xf32, #tpu.memory_space<vmem>>, vector<1x128xf32>
    %c4_234 = arith.constant 4 : index
    %c0_235 = arith.constant 0 : index
    %269 = vector.load %arg14[%c4_234, %c0_235] : memref<91x128xf32, #tpu.memory_space<vmem>>, vector<1x128xf32>
    tpu.vector_store %arg14[%c4_234, %c0_235], %268 {strides = array<i32>} : memref<91x128xf32, #tpu.memory_space<vmem>>, vector<1x128xf32>,
    %c3_236 = arith.constant 3 : index
    %c0_237 = arith.constant 0 : index
    %270 = vector.load %arg11[%c3_236, %c0_237] : memref<324x128xf32, #tpu.memory_space<vmem>>, vector<1x128xf32>
    %c6_238 = arith.constant 6 : index
    %c0_239 = arith.constant 0 : index
    %271 = vector.load %arg14[%c6_238, %c0_239] : memref<91x128xf32, #tpu.memory_space<vmem>>, vector<1x128xf32>
    tpu.vector_store %arg14[%c6_238, %c0_239], %270 {strides = array<i32>} : memref<91x128xf32, #tpu.memory_space<vmem>>, vector<1x128xf32>,
    %c5_240 = arith.constant 5 : index
    %c0_241 = arith.constant 0 : index
    %272 = vector.load %arg11[%c5_240, %c0_241] : memref<324x128xf32, #tpu.memory_space<vmem>>, vector<1x128xf32>
    %c18 = arith.constant 18 : index
    %c0_242 = arith.constant 0 : index
    %273 = vector.load %arg14[%c18, %c0_242] : memref<91x128xf32, #tpu.memory_space<vmem>>, vector<1x128xf32>
    tpu.vector_store %arg14[%c18, %c0_242], %272 {strides = array<i32>} : memref<91x128xf32, #tpu.memory_space<vmem>>, vector<1x128xf32>,
    %c6_243 = arith.constant 6 : index
    %c0_244 = arith.constant 0 : index
    %274 = vector.load %arg11[%c6_243, %c0_244] : memref<324x128xf32, #tpu.memory_space<vmem>>, vector<1x128xf32>
    %c20_245 = arith.constant 20 : index
    %c0_246 = arith.constant 0 : index
    %275 = vector.load %arg14[%c20_245, %c0_246] : memref<91x128xf32, #tpu.memory_space<vmem>>, vector<1x128xf32>
    tpu.vector_store %arg14[%c20_245, %c0_246], %274 {strides = array<i32>} : memref<91x128xf32, #tpu.memory_space<vmem>>, vector<1x128xf32>,
    %c7_247 = arith.constant 7 : index
    %c0_248 = arith.constant 0 : index
    %276 = vector.load %arg11[%c7_247, %c0_248] : memref<324x128xf32, #tpu.memory_space<vmem>>, vector<1x128xf32>
    %c22_249 = arith.constant 22 : index
    %c0_250 = arith.constant 0 : index
    %277 = vector.load %arg14[%c22_249, %c0_250] : memref<91x128xf32, #tpu.memory_space<vmem>>, vector<1x128xf32>
    tpu.vector_store %arg14[%c22_249, %c0_250], %276 {strides = array<i32>} : memref<91x128xf32, #tpu.memory_space<vmem>>, vector<1x128xf32>,
    %c8_251 = arith.constant 8 : index
    %c0_252 = arith.constant 0 : index
    %278 = vector.load %arg11[%c8_251, %c0_252] : memref<324x128xf32, #tpu.memory_space<vmem>>, vector<1x128xf32>
    %c24 = arith.constant 24 : index
    %c0_253 = arith.constant 0 : index
    %279 = vector.load %arg14[%c24, %c0_253] : memref<91x128xf32, #tpu.memory_space<vmem>>, vector<1x128xf32>
    tpu.vector_store %arg14[%c24, %c0_253], %278 {strides = array<i32>} : memref<91x128xf32, #tpu.memory_space<vmem>>, vector<1x128xf32>,
    %c10_254 = arith.constant 10 : index
    %c0_255 = arith.constant 0 : index
    %280 = vector.load %arg11[%c10_254, %c0_255] : memref<324x128xf32, #tpu.memory_space<vmem>>, vector<1x128xf32>
    %c36 = arith.constant 36 : index
    %c0_256 = arith.constant 0 : index
    %281 = vector.load %arg14[%c36, %c0_256] : memref<91x128xf32, #tpu.memory_space<vmem>>, vector<1x128xf32>
    tpu.vector_store %arg14[%c36, %c0_256], %280 {strides = array<i32>} : memref<91x128xf32, #tpu.memory_space<vmem>>, vector<1x128xf32>,
    %c11_257 = arith.constant 11 : index
    %c0_258 = arith.constant 0 : index
    %282 = vector.load %arg11[%c11_257, %c0_258] : memref<324x128xf32, #tpu.memory_space<vmem>>, vector<1x128xf32>
    %c38_259 = arith.constant 38 : index
    %c0_260 = arith.constant 0 : index
    %283 = vector.load %arg14[%c38_259, %c0_260] : memref<91x128xf32, #tpu.memory_space<vmem>>, vector<1x128xf32>
    tpu.vector_store %arg14[%c38_259, %c0_260], %282 {strides = array<i32>} : memref<91x128xf32, #tpu.memory_space<vmem>>, vector<1x128xf32>,
    %c12_261 = arith.constant 12 : index
    %c0_262 = arith.constant 0 : index
    %284 = vector.load %arg11[%c12_261, %c0_262] : memref<324x128xf32, #tpu.memory_space<vmem>>, vector<1x128xf32>
    %c40 = arith.constant 40 : index
    %c0_263 = arith.constant 0 : index
    %285 = vector.load %arg14[%c40, %c0_263] : memref<91x128xf32, #tpu.memory_space<vmem>>, vector<1x128xf32>
    tpu.vector_store %arg14[%c40, %c0_263], %284 {strides = array<i32>} : memref<91x128xf32, #tpu.memory_space<vmem>>, vector<1x128xf32>,
    %c13 = arith.constant 13 : index
    %c0_264 = arith.constant 0 : index
    %286 = vector.load %arg11[%c13, %c0_264] : memref<324x128xf32, #tpu.memory_space<vmem>>, vector<1x128xf32>
    %c42_265 = arith.constant 42 : index
    %c0_266 = arith.constant 0 : index
    %287 = vector.load %arg14[%c42_265, %c0_266] : memref<91x128xf32, #tpu.memory_space<vmem>>, vector<1x128xf32>
    tpu.vector_store %arg14[%c42_265, %c0_266], %286 {strides = array<i32>} : memref<91x128xf32, #tpu.memory_space<vmem>>, vector<1x128xf32>,
    %c15_267 = arith.constant 15 : index
    %c0_268 = arith.constant 0 : index
    %288 = vector.load %arg11[%c15_267, %c0_268] : memref<324x128xf32, #tpu.memory_space<vmem>>, vector<1x128xf32>
    %c54 = arith.constant 54 : index
    %c0_269 = arith.constant 0 : index
    %289 = vector.load %arg14[%c54, %c0_269] : memref<91x128xf32, #tpu.memory_space<vmem>>, vector<1x128xf32>
    tpu.vector_store %arg14[%c54, %c0_269], %288 {strides = array<i32>} : memref<91x128xf32, #tpu.memory_space<vmem>>, vector<1x128xf32>,
    %c16 = arith.constant 16 : index
    %c0_270 = arith.constant 0 : index
    %290 = vector.load %arg11[%c16, %c0_270] : memref<324x128xf32, #tpu.memory_space<vmem>>, vector<1x128xf32>
    %c56_271 = arith.constant 56 : index
    %c0_272 = arith.constant 0 : index
    %291 = vector.load %arg14[%c56_271, %c0_272] : memref<91x128xf32, #tpu.memory_space<vmem>>, vector<1x128xf32>
    tpu.vector_store %arg14[%c56_271, %c0_272], %290 {strides = array<i32>} : memref<91x128xf32, #tpu.memory_space<vmem>>, vector<1x128xf32>,
    %c17 = arith.constant 17 : index
    %c0_273 = arith.constant 0 : index
    %292 = vector.load %arg11[%c17, %c0_273] : memref<324x128xf32, #tpu.memory_space<vmem>>, vector<1x128xf32>
    %c58 = arith.constant 58 : index
    %c0_274 = arith.constant 0 : index
    %293 = vector.load %arg14[%c58, %c0_274] : memref<91x128xf32, #tpu.memory_space<vmem>>, vector<1x128xf32>
    tpu.vector_store %arg14[%c58, %c0_274], %292 {strides = array<i32>} : memref<91x128xf32, #tpu.memory_space<vmem>>, vector<1x128xf32>,
    %c18_275 = arith.constant 18 : index
    %c0_276 = arith.constant 0 : index
    %294 = vector.load %arg11[%c18_275, %c0_276] : memref<324x128xf32, #tpu.memory_space<vmem>>, vector<1x128xf32>
    %c60 = arith.constant 60 : index
    %c0_277 = arith.constant 0 : index
    %295 = vector.load %arg14[%c60, %c0_277] : memref<91x128xf32, #tpu.memory_space<vmem>>, vector<1x128xf32>
    tpu.vector_store %arg14[%c60, %c0_277], %294 {strides = array<i32>} : memref<91x128xf32, #tpu.memory_space<vmem>>, vector<1x128xf32>,
    %c32_278 = arith.constant 32 : index
    %c0_279 = arith.constant 0 : index
    %296 = vector.load %arg11[%c32_278, %c0_279] : memref<324x128xf32, #tpu.memory_space<vmem>>, vector<1x128xf32>
    %c1_280 = arith.constant 1 : index
    %c0_281 = arith.constant 0 : index
    %297 = vector.load %arg14[%c1_280, %c0_281] : memref<91x128xf32, #tpu.memory_space<vmem>>, vector<1x128xf32>
    tpu.vector_store %arg14[%c1_280, %c0_281], %296 {strides = array<i32>} : memref<91x128xf32, #tpu.memory_space<vmem>>, vector<1x128xf32>,
    %c33 = arith.constant 33 : index
    %c0_282 = arith.constant 0 : index
    %298 = vector.load %arg11[%c33, %c0_282] : memref<324x128xf32, #tpu.memory_space<vmem>>, vector<1x128xf32>
    %c3_283 = arith.constant 3 : index
    %c0_284 = arith.constant 0 : index
    %299 = vector.load %arg14[%c3_283, %c0_284] : memref<91x128xf32, #tpu.memory_space<vmem>>, vector<1x128xf32>
    tpu.vector_store %arg14[%c3_283, %c0_284], %298 {strides = array<i32>} : memref<91x128xf32, #tpu.memory_space<vmem>>, vector<1x128xf32>,
    %c34 = arith.constant 34 : index
    %c0_285 = arith.constant 0 : index
    %300 = vector.load %arg11[%c34, %c0_285] : memref<324x128xf32, #tpu.memory_space<vmem>>, vector<1x128xf32>
    %c5_286 = arith.constant 5 : index
    %c0_287 = arith.constant 0 : index
    %301 = vector.load %arg14[%c5_286, %c0_287] : memref<91x128xf32, #tpu.memory_space<vmem>>, vector<1x128xf32>
    tpu.vector_store %arg14[%c5_286, %c0_287], %300 {strides = array<i32>} : memref<91x128xf32, #tpu.memory_space<vmem>>, vector<1x128xf32>,
    %c35 = arith.constant 35 : index
    %c0_288 = arith.constant 0 : index
    %302 = vector.load %arg11[%c35, %c0_288] : memref<324x128xf32, #tpu.memory_space<vmem>>, vector<1x128xf32>
    %c7_289 = arith.constant 7 : index
    %c0_290 = arith.constant 0 : index
    %303 = vector.load %arg14[%c7_289, %c0_290] : memref<91x128xf32, #tpu.memory_space<vmem>>, vector<1x128xf32>
    tpu.vector_store %arg14[%c7_289, %c0_290], %302 {strides = array<i32>} : memref<91x128xf32, #tpu.memory_space<vmem>>, vector<1x128xf32>,
    %c37_291 = arith.constant 37 : index
    %c0_292 = arith.constant 0 : index
    %304 = vector.load %arg11[%c37_291, %c0_292] : memref<324x128xf32, #tpu.memory_space<vmem>>, vector<1x128xf32>
    %c19_293 = arith.constant 19 : index
    %c0_294 = arith.constant 0 : index
    %305 = vector.load %arg14[%c19_293, %c0_294] : memref<91x128xf32, #tpu.memory_space<vmem>>, vector<1x128xf32>
    tpu.vector_store %arg14[%c19_293, %c0_294], %304 {strides = array<i32>} : memref<91x128xf32, #tpu.memory_space<vmem>>, vector<1x128xf32>,
    %c38_295 = arith.constant 38 : index
    %c0_296 = arith.constant 0 : index
    %306 = vector.load %arg11[%c38_295, %c0_296] : memref<324x128xf32, #tpu.memory_space<vmem>>, vector<1x128xf32>
    %c21_297 = arith.constant 21 : index
    %c0_298 = arith.constant 0 : index
    %307 = vector.load %arg14[%c21_297, %c0_298] : memref<91x128xf32, #tpu.memory_space<vmem>>, vector<1x128xf32>
    tpu.vector_store %arg14[%c21_297, %c0_298], %306 {strides = array<i32>} : memref<91x128xf32, #tpu.memory_space<vmem>>, vector<1x128xf32>,
    %c39 = arith.constant 39 : index
    %c0_299 = arith.constant 0 : index
    %308 = vector.load %arg11[%c39, %c0_299] : memref<324x128xf32, #tpu.memory_space<vmem>>, vector<1x128xf32>
    %c23 = arith.constant 23 : index
    %c0_300 = arith.constant 0 : index
    %309 = vector.load %arg14[%c23, %c0_300] : memref<91x128xf32, #tpu.memory_space<vmem>>, vector<1x128xf32>
    tpu.vector_store %arg14[%c23, %c0_300], %308 {strides = array<i32>} : memref<91x128xf32, #tpu.memory_space<vmem>>, vector<1x128xf32>,
    %c40_301 = arith.constant 40 : index
    %c0_302 = arith.constant 0 : index
    %310 = vector.load %arg11[%c40_301, %c0_302] : memref<324x128xf32, #tpu.memory_space<vmem>>, vector<1x128xf32>
    %c25 = arith.constant 25 : index
    %c0_303 = arith.constant 0 : index
    %311 = vector.load %arg14[%c25, %c0_303] : memref<91x128xf32, #tpu.memory_space<vmem>>, vector<1x128xf32>
    tpu.vector_store %arg14[%c25, %c0_303], %310 {strides = array<i32>} : memref<91x128xf32, #tpu.memory_space<vmem>>, vector<1x128xf32>,
    %c42_304 = arith.constant 42 : index
    %c0_305 = arith.constant 0 : index
    %312 = vector.load %arg11[%c42_304, %c0_305] : memref<324x128xf32, #tpu.memory_space<vmem>>, vector<1x128xf32>
    %c37_306 = arith.constant 37 : index
    %c0_307 = arith.constant 0 : index
    %313 = vector.load %arg14[%c37_306, %c0_307] : memref<91x128xf32, #tpu.memory_space<vmem>>, vector<1x128xf32>
    tpu.vector_store %arg14[%c37_306, %c0_307], %312 {strides = array<i32>} : memref<91x128xf32, #tpu.memory_space<vmem>>, vector<1x128xf32>,
    %c43 = arith.constant 43 : index
    %c0_308 = arith.constant 0 : index
    %314 = vector.load %arg11[%c43, %c0_308] : memref<324x128xf32, #tpu.memory_space<vmem>>, vector<1x128xf32>
    %c39_309 = arith.constant 39 : index
    %c0_310 = arith.constant 0 : index
    %315 = vector.load %arg14[%c39_309, %c0_310] : memref<91x128xf32, #tpu.memory_space<vmem>>, vector<1x128xf32>
    tpu.vector_store %arg14[%c39_309, %c0_310], %314 {strides = array<i32>} : memref<91x128xf32, #tpu.memory_space<vmem>>, vector<1x128xf32>,
    %c44 = arith.constant 44 : index
    %c0_311 = arith.constant 0 : index
    %316 = vector.load %arg11[%c44, %c0_311] : memref<324x128xf32, #tpu.memory_space<vmem>>, vector<1x128xf32>
    %c41_312 = arith.constant 41 : index
    %c0_313 = arith.constant 0 : index
    %317 = vector.load %arg14[%c41_312, %c0_313] : memref<91x128xf32, #tpu.memory_space<vmem>>, vector<1x128xf32>
    tpu.vector_store %arg14[%c41_312, %c0_313], %316 {strides = array<i32>} : memref<91x128xf32, #tpu.memory_space<vmem>>, vector<1x128xf32>,
    %c45 = arith.constant 45 : index
    %c0_314 = arith.constant 0 : index
    %318 = vector.load %arg11[%c45, %c0_314] : memref<324x128xf32, #tpu.memory_space<vmem>>, vector<1x128xf32>
    %c43_315 = arith.constant 43 : index
    %c0_316 = arith.constant 0 : index
    %319 = vector.load %arg14[%c43_315, %c0_316] : memref<91x128xf32, #tpu.memory_space<vmem>>, vector<1x128xf32>
    tpu.vector_store %arg14[%c43_315, %c0_316], %318 {strides = array<i32>} : memref<91x128xf32, #tpu.memory_space<vmem>>, vector<1x128xf32>,
    %c47 = arith.constant 47 : index
    %c0_317 = arith.constant 0 : index
    %320 = vector.load %arg11[%c47, %c0_317] : memref<324x128xf32, #tpu.memory_space<vmem>>, vector<1x128xf32>
    %c55_318 = arith.constant 55 : index
    %c0_319 = arith.constant 0 : index
    %321 = vector.load %arg14[%c55_318, %c0_319] : memref<91x128xf32, #tpu.memory_space<vmem>>, vector<1x128xf32>
    tpu.vector_store %arg14[%c55_318, %c0_319], %320 {strides = array<i32>} : memref<91x128xf32, #tpu.memory_space<vmem>>, vector<1x128xf32>,
    %c48 = arith.constant 48 : index
    %c0_320 = arith.constant 0 : index
    %322 = vector.load %arg11[%c48, %c0_320] : memref<324x128xf32, #tpu.memory_space<vmem>>, vector<1x128xf32>
    %c57 = arith.constant 57 : index
    %c0_321 = arith.constant 0 : index
    %323 = vector.load %arg14[%c57, %c0_321] : memref<91x128xf32, #tpu.memory_space<vmem>>, vector<1x128xf32>
    tpu.vector_store %arg14[%c57, %c0_321], %322 {strides = array<i32>} : memref<91x128xf32, #tpu.memory_space<vmem>>, vector<1x128xf32>,
    %c49 = arith.constant 49 : index
    %c0_322 = arith.constant 0 : index
    %324 = vector.load %arg11[%c49, %c0_322] : memref<324x128xf32, #tpu.memory_space<vmem>>, vector<1x128xf32>
    %c59 = arith.constant 59 : index
    %c0_323 = arith.constant 0 : index
    %325 = vector.load %arg14[%c59, %c0_323] : memref<91x128xf32, #tpu.memory_space<vmem>>, vector<1x128xf32>
    tpu.vector_store %arg14[%c59, %c0_323], %324 {strides = array<i32>} : memref<91x128xf32, #tpu.memory_space<vmem>>, vector<1x128xf32>,
    %c50 = arith.constant 50 : index
    %c0_324 = arith.constant 0 : index
    %326 = vector.load %arg11[%c50, %c0_324] : memref<324x128xf32, #tpu.memory_space<vmem>>, vector<1x128xf32>
    %c61_325 = arith.constant 61 : index
    %c0_326 = arith.constant 0 : index
    %327 = vector.load %arg14[%c61_325, %c0_326] : memref<91x128xf32, #tpu.memory_space<vmem>>, vector<1x128xf32>
    tpu.vector_store %arg14[%c61_325, %c0_326], %326 {strides = array<i32>} : memref<91x128xf32, #tpu.memory_space<vmem>>, vector<1x128xf32>,
    %c64_327 = arith.constant 64 : index
    %c0_328 = arith.constant 0 : index
    %328 = vector.load %arg11[%c64_327, %c0_328] : memref<324x128xf32, #tpu.memory_space<vmem>>, vector<1x128xf32>
    %c9 = arith.constant 9 : index
    %c0_329 = arith.constant 0 : index
    %329 = vector.load %arg14[%c9, %c0_329] : memref<91x128xf32, #tpu.memory_space<vmem>>, vector<1x128xf32>
    tpu.vector_store %arg14[%c9, %c0_329], %328 {strides = array<i32>} : memref<91x128xf32, #tpu.memory_space<vmem>>, vector<1x128xf32>,
    %c65 = arith.constant 65 : index
    %c0_330 = arith.constant 0 : index
    %330 = vector.load %arg11[%c65, %c0_330] : memref<324x128xf32, #tpu.memory_space<vmem>>, vector<1x128xf32>
    %c11_331 = arith.constant 11 : index
    %c0_332 = arith.constant 0 : index
    %331 = vector.load %arg14[%c11_331, %c0_332] : memref<91x128xf32, #tpu.memory_space<vmem>>, vector<1x128xf32>
    tpu.vector_store %arg14[%c11_331, %c0_332], %330 {strides = array<i32>} : memref<91x128xf32, #tpu.memory_space<vmem>>, vector<1x128xf32>,
    %c66 = arith.constant 66 : index
    %c0_333 = arith.constant 0 : index
    %332 = vector.load %arg11[%c66, %c0_333] : memref<324x128xf32, #tpu.memory_space<vmem>>, vector<1x128xf32>
    %c13_334 = arith.constant 13 : index
    %c0_335 = arith.constant 0 : index
    %333 = vector.load %arg14[%c13_334, %c0_335] : memref<91x128xf32, #tpu.memory_space<vmem>>, vector<1x128xf32>
    tpu.vector_store %arg14[%c13_334, %c0_335], %332 {strides = array<i32>} : memref<91x128xf32, #tpu.memory_space<vmem>>, vector<1x128xf32>,
    %c67 = arith.constant 67 : index
    %c0_336 = arith.constant 0 : index
    %334 = vector.load %arg11[%c67, %c0_336] : memref<324x128xf32, #tpu.memory_space<vmem>>, vector<1x128xf32>
    %c15_337 = arith.constant 15 : index
    %c0_338 = arith.constant 0 : index
    %335 = vector.load %arg14[%c15_337, %c0_338] : memref<91x128xf32, #tpu.memory_space<vmem>>, vector<1x128xf32>
    tpu.vector_store %arg14[%c15_337, %c0_338], %334 {strides = array<i32>} : memref<91x128xf32, #tpu.memory_space<vmem>>, vector<1x128xf32>,
    %c69 = arith.constant 69 : index
    %c0_339 = arith.constant 0 : index
    %336 = vector.load %arg11[%c69, %c0_339] : memref<324x128xf32, #tpu.memory_space<vmem>>, vector<1x128xf32>
    %c27 = arith.constant 27 : index
    %c0_340 = arith.constant 0 : index
    %337 = vector.load %arg14[%c27, %c0_340] : memref<91x128xf32, #tpu.memory_space<vmem>>, vector<1x128xf32>
    tpu.vector_store %arg14[%c27, %c0_340], %336 {strides = array<i32>} : memref<91x128xf32, #tpu.memory_space<vmem>>, vector<1x128xf32>,
    %c70 = arith.constant 70 : index
    %c0_341 = arith.constant 0 : index
    %338 = vector.load %arg11[%c70, %c0_341] : memref<324x128xf32, #tpu.memory_space<vmem>>, vector<1x128xf32>
    %c29 = arith.constant 29 : index
    %c0_342 = arith.constant 0 : index
    %339 = vector.load %arg14[%c29, %c0_342] : memref<91x128xf32, #tpu.memory_space<vmem>>, vector<1x128xf32>
    tpu.vector_store %arg14[%c29, %c0_342], %338 {strides = array<i32>} : memref<91x128xf32, #tpu.memory_space<vmem>>, vector<1x128xf32>,
    %c71_343 = arith.constant 71 : index
    %c0_344 = arith.constant 0 : index
    %340 = vector.load %arg11[%c71_343, %c0_344] : memref<324x128xf32, #tpu.memory_space<vmem>>, vector<1x128xf32>
    %c31_345 = arith.constant 31 : index
    %c0_346 = arith.constant 0 : index
    %341 = vector.load %arg14[%c31_345, %c0_346] : memref<91x128xf32, #tpu.memory_space<vmem>>, vector<1x128xf32>
    tpu.vector_store %arg14[%c31_345, %c0_346], %340 {strides = array<i32>} : memref<91x128xf32, #tpu.memory_space<vmem>>, vector<1x128xf32>,
    %c72_347 = arith.constant 72 : index
    %c0_348 = arith.constant 0 : index
    %342 = vector.load %arg11[%c72_347, %c0_348] : memref<324x128xf32, #tpu.memory_space<vmem>>, vector<1x128xf32>
    %c33_349 = arith.constant 33 : index
    %c0_350 = arith.constant 0 : index
    %343 = vector.load %arg14[%c33_349, %c0_350] : memref<91x128xf32, #tpu.memory_space<vmem>>, vector<1x128xf32>
    tpu.vector_store %arg14[%c33_349, %c0_350], %342 {strides = array<i32>} : memref<91x128xf32, #tpu.memory_space<vmem>>, vector<1x128xf32>,
    %c74_351 = arith.constant 74 : index
    %c0_352 = arith.constant 0 : index
    %344 = vector.load %arg11[%c74_351, %c0_352] : memref<324x128xf32, #tpu.memory_space<vmem>>, vector<1x128xf32>
    %c45_353 = arith.constant 45 : index
    %c0_354 = arith.constant 0 : index
    %345 = vector.load %arg14[%c45_353, %c0_354] : memref<91x128xf32, #tpu.memory_space<vmem>>, vector<1x128xf32>
    tpu.vector_store %arg14[%c45_353, %c0_354], %344 {strides = array<i32>} : memref<91x128xf32, #tpu.memory_space<vmem>>, vector<1x128xf32>,
    %c75 = arith.constant 75 : index
    %c0_355 = arith.constant 0 : index
    %346 = vector.load %arg11[%c75, %c0_355] : memref<324x128xf32, #tpu.memory_space<vmem>>, vector<1x128xf32>
    %c47_356 = arith.constant 47 : index
    %c0_357 = arith.constant 0 : index
    %347 = vector.load %arg14[%c47_356, %c0_357] : memref<91x128xf32, #tpu.memory_space<vmem>>, vector<1x128xf32>
    tpu.vector_store %arg14[%c47_356, %c0_357], %346 {strides = array<i32>} : memref<91x128xf32, #tpu.memory_space<vmem>>, vector<1x128xf32>,
    %c76 = arith.constant 76 : index
    %c0_358 = arith.constant 0 : index
    %348 = vector.load %arg11[%c76, %c0_358] : memref<324x128xf32, #tpu.memory_space<vmem>>, vector<1x128xf32>
    %c49_359 = arith.constant 49 : index
    %c0_360 = arith.constant 0 : index
    %349 = vector.load %arg14[%c49_359, %c0_360] : memref<91x128xf32, #tpu.memory_space<vmem>>, vector<1x128xf32>
    tpu.vector_store %arg14[%c49_359, %c0_360], %348 {strides = array<i32>} : memref<91x128xf32, #tpu.memory_space<vmem>>, vector<1x128xf32>,
    %c77 = arith.constant 77 : index
    %c0_361 = arith.constant 0 : index
    %350 = vector.load %arg11[%c77, %c0_361] : memref<324x128xf32, #tpu.memory_space<vmem>>, vector<1x128xf32>
    %c51_362 = arith.constant 51 : index
    %c0_363 = arith.constant 0 : index
    %351 = vector.load %arg14[%c51_362, %c0_363] : memref<91x128xf32, #tpu.memory_space<vmem>>, vector<1x128xf32>
    tpu.vector_store %arg14[%c51_362, %c0_363], %350 {strides = array<i32>} : memref<91x128xf32, #tpu.memory_space<vmem>>, vector<1x128xf32>,
    %c79 = arith.constant 79 : index
    %c0_364 = arith.constant 0 : index
    %352 = vector.load %arg11[%c79, %c0_364] : memref<324x128xf32, #tpu.memory_space<vmem>>, vector<1x128xf32>
    %c63 = arith.constant 63 : index
    %c0_365 = arith.constant 0 : index
    %353 = vector.load %arg14[%c63, %c0_365] : memref<91x128xf32, #tpu.memory_space<vmem>>, vector<1x128xf32>
    tpu.vector_store %arg14[%c63, %c0_365], %352 {strides = array<i32>} : memref<91x128xf32, #tpu.memory_space<vmem>>, vector<1x128xf32>,
    %c80 = arith.constant 80 : index
    %c0_366 = arith.constant 0 : index
    %354 = vector.load %arg11[%c80, %c0_366] : memref<324x128xf32, #tpu.memory_space<vmem>>, vector<1x128xf32>
    %c65_367 = arith.constant 65 : index
    %c0_368 = arith.constant 0 : index
    %355 = vector.load %arg14[%c65_367, %c0_368] : memref<91x128xf32, #tpu.memory_space<vmem>>, vector<1x128xf32>
    tpu.vector_store %arg14[%c65_367, %c0_368], %354 {strides = array<i32>} : memref<91x128xf32, #tpu.memory_space<vmem>>, vector<1x128xf32>,
    %c81_369 = arith.constant 81 : index
    %c0_370 = arith.constant 0 : index
    %356 = vector.load %arg11[%c81_369, %c0_370] : memref<324x128xf32, #tpu.memory_space<vmem>>, vector<1x128xf32>
    %c67_371 = arith.constant 67 : index
    %c0_372 = arith.constant 0 : index
    %357 = vector.load %arg14[%c67_371, %c0_372] : memref<91x128xf32, #tpu.memory_space<vmem>>, vector<1x128xf32>
    tpu.vector_store %arg14[%c67_371, %c0_372], %356 {strides = array<i32>} : memref<91x128xf32, #tpu.memory_space<vmem>>, vector<1x128xf32>,
    %c82_373 = arith.constant 82 : index
    %c0_374 = arith.constant 0 : index
    %358 = vector.load %arg11[%c82_373, %c0_374] : memref<324x128xf32, #tpu.memory_space<vmem>>, vector<1x128xf32>
    %c69_375 = arith.constant 69 : index
    %c0_376 = arith.constant 0 : index
    %359 = vector.load %arg14[%c69_375, %c0_376] : memref<91x128xf32, #tpu.memory_space<vmem>>, vector<1x128xf32>
    tpu.vector_store %arg14[%c69_375, %c0_376], %358 {strides = array<i32>} : memref<91x128xf32, #tpu.memory_space<vmem>>, vector<1x128xf32>,
    %c96_377 = arith.constant 96 : index
    %c0_378 = arith.constant 0 : index
    %360 = vector.load %arg11[%c96_377, %c0_378] : memref<324x128xf32, #tpu.memory_space<vmem>>, vector<1x128xf32>
    %c10_379 = arith.constant 10 : index
    %c0_380 = arith.constant 0 : index
    %361 = vector.load %arg14[%c10_379, %c0_380] : memref<91x128xf32, #tpu.memory_space<vmem>>, vector<1x128xf32>
    tpu.vector_store %arg14[%c10_379, %c0_380], %360 {strides = array<i32>} : memref<91x128xf32, #tpu.memory_space<vmem>>, vector<1x128xf32>,
    %c97 = arith.constant 97 : index
    %c0_381 = arith.constant 0 : index
    %362 = vector.load %arg11[%c97, %c0_381] : memref<324x128xf32, #tpu.memory_space<vmem>>, vector<1x128xf32>
    %c12_382 = arith.constant 12 : index
    %c0_383 = arith.constant 0 : index
    %363 = vector.load %arg14[%c12_382, %c0_383] : memref<91x128xf32, #tpu.memory_space<vmem>>, vector<1x128xf32>
    tpu.vector_store %arg14[%c12_382, %c0_383], %362 {strides = array<i32>} : memref<91x128xf32, #tpu.memory_space<vmem>>, vector<1x128xf32>,
    %c98 = arith.constant 98 : index
    %c0_384 = arith.constant 0 : index
    %364 = vector.load %arg11[%c98, %c0_384] : memref<324x128xf32, #tpu.memory_space<vmem>>, vector<1x128xf32>
    %c14 = arith.constant 14 : index
    %c0_385 = arith.constant 0 : index
    %365 = vector.load %arg14[%c14, %c0_385] : memref<91x128xf32, #tpu.memory_space<vmem>>, vector<1x128xf32>
    tpu.vector_store %arg14[%c14, %c0_385], %364 {strides = array<i32>} : memref<91x128xf32, #tpu.memory_space<vmem>>, vector<1x128xf32>,
    %c99 = arith.constant 99 : index
    %c0_386 = arith.constant 0 : index
    %366 = vector.load %arg11[%c99, %c0_386] : memref<324x128xf32, #tpu.memory_space<vmem>>, vector<1x128xf32>
    %c16_387 = arith.constant 16 : index
    %c0_388 = arith.constant 0 : index
    %367 = vector.load %arg14[%c16_387, %c0_388] : memref<91x128xf32, #tpu.memory_space<vmem>>, vector<1x128xf32>
    tpu.vector_store %arg14[%c16_387, %c0_388], %366 {strides = array<i32>} : memref<91x128xf32, #tpu.memory_space<vmem>>, vector<1x128xf32>,
    %c101 = arith.constant 101 : index
    %c0_389 = arith.constant 0 : index
    %368 = vector.load %arg11[%c101, %c0_389] : memref<324x128xf32, #tpu.memory_space<vmem>>, vector<1x128xf32>
    %c28 = arith.constant 28 : index
    %c0_390 = arith.constant 0 : index
    %369 = vector.load %arg14[%c28, %c0_390] : memref<91x128xf32, #tpu.memory_space<vmem>>, vector<1x128xf32>
    tpu.vector_store %arg14[%c28, %c0_390], %368 {strides = array<i32>} : memref<91x128xf32, #tpu.memory_space<vmem>>, vector<1x128xf32>,
    %c102 = arith.constant 102 : index
    %c0_391 = arith.constant 0 : index
    %370 = vector.load %arg11[%c102, %c0_391] : memref<324x128xf32, #tpu.memory_space<vmem>>, vector<1x128xf32>
    %c30 = arith.constant 30 : index
    %c0_392 = arith.constant 0 : index
    %371 = vector.load %arg14[%c30, %c0_392] : memref<91x128xf32, #tpu.memory_space<vmem>>, vector<1x128xf32>
    tpu.vector_store %arg14[%c30, %c0_392], %370 {strides = array<i32>} : memref<91x128xf32, #tpu.memory_space<vmem>>, vector<1x128xf32>,
    %c103 = arith.constant 103 : index
    %c0_393 = arith.constant 0 : index
    %372 = vector.load %arg11[%c103, %c0_393] : memref<324x128xf32, #tpu.memory_space<vmem>>, vector<1x128xf32>
    %c32_394 = arith.constant 32 : index
    %c0_395 = arith.constant 0 : index
    %373 = vector.load %arg14[%c32_394, %c0_395] : memref<91x128xf32, #tpu.memory_space<vmem>>, vector<1x128xf32>
    tpu.vector_store %arg14[%c32_394, %c0_395], %372 {strides = array<i32>} : memref<91x128xf32, #tpu.memory_space<vmem>>, vector<1x128xf32>,
    %c104 = arith.constant 104 : index
    %c0_396 = arith.constant 0 : index
    %374 = vector.load %arg11[%c104, %c0_396] : memref<324x128xf32, #tpu.memory_space<vmem>>, vector<1x128xf32>
    %c34_397 = arith.constant 34 : index
    %c0_398 = arith.constant 0 : index
    %375 = vector.load %arg14[%c34_397, %c0_398] : memref<91x128xf32, #tpu.memory_space<vmem>>, vector<1x128xf32>
    tpu.vector_store %arg14[%c34_397, %c0_398], %374 {strides = array<i32>} : memref<91x128xf32, #tpu.memory_space<vmem>>, vector<1x128xf32>,
    %c106 = arith.constant 106 : index
    %c0_399 = arith.constant 0 : index
    %376 = vector.load %arg11[%c106, %c0_399] : memref<324x128xf32, #tpu.memory_space<vmem>>, vector<1x128xf32>
    %c46 = arith.constant 46 : index
    %c0_400 = arith.constant 0 : index
    %377 = vector.load %arg14[%c46, %c0_400] : memref<91x128xf32, #tpu.memory_space<vmem>>, vector<1x128xf32>
    tpu.vector_store %arg14[%c46, %c0_400], %376 {strides = array<i32>} : memref<91x128xf32, #tpu.memory_space<vmem>>, vector<1x128xf32>,
    %c107 = arith.constant 107 : index
    %c0_401 = arith.constant 0 : index
    %378 = vector.load %arg11[%c107, %c0_401] : memref<324x128xf32, #tpu.memory_space<vmem>>, vector<1x128xf32>
    %c48_402 = arith.constant 48 : index
    %c0_403 = arith.constant 0 : index
    %379 = vector.load %arg14[%c48_402, %c0_403] : memref<91x128xf32, #tpu.memory_space<vmem>>, vector<1x128xf32>
    tpu.vector_store %arg14[%c48_402, %c0_403], %378 {strides = array<i32>} : memref<91x128xf32, #tpu.memory_space<vmem>>, vector<1x128xf32>,
    %c108 = arith.constant 108 : index
    %c0_404 = arith.constant 0 : index
    %380 = vector.load %arg11[%c108, %c0_404] : memref<324x128xf32, #tpu.memory_space<vmem>>, vector<1x128xf32>
    %c50_405 = arith.constant 50 : index
    %c0_406 = arith.constant 0 : index
    %381 = vector.load %arg14[%c50_405, %c0_406] : memref<91x128xf32, #tpu.memory_space<vmem>>, vector<1x128xf32>
    tpu.vector_store %arg14[%c50_405, %c0_406], %380 {strides = array<i32>} : memref<91x128xf32, #tpu.memory_space<vmem>>, vector<1x128xf32>,
    %c109_407 = arith.constant 109 : index
    %c0_408 = arith.constant 0 : index
    %382 = vector.load %arg11[%c109_407, %c0_408] : memref<324x128xf32, #tpu.memory_space<vmem>>, vector<1x128xf32>
    %c52_409 = arith.constant 52 : index
    %c0_410 = arith.constant 0 : index
    %383 = vector.load %arg14[%c52_409, %c0_410] : memref<91x128xf32, #tpu.memory_space<vmem>>, vector<1x128xf32>
    tpu.vector_store %arg14[%c52_409, %c0_410], %382 {strides = array<i32>} : memref<91x128xf32, #tpu.memory_space<vmem>>, vector<1x128xf32>,
    %c111 = arith.constant 111 : index
    %c0_411 = arith.constant 0 : index
    %384 = vector.load %arg11[%c111, %c0_411] : memref<324x128xf32, #tpu.memory_space<vmem>>, vector<1x128xf32>
    %c64_412 = arith.constant 64 : index
    %c0_413 = arith.constant 0 : index
    %385 = vector.load %arg14[%c64_412, %c0_413] : memref<91x128xf32, #tpu.memory_space<vmem>>, vector<1x128xf32>
    tpu.vector_store %arg14[%c64_412, %c0_413], %384 {strides = array<i32>} : memref<91x128xf32, #tpu.memory_space<vmem>>, vector<1x128xf32>,
    %c112 = arith.constant 112 : index
    %c0_414 = arith.constant 0 : index
    %386 = vector.load %arg11[%c112, %c0_414] : memref<324x128xf32, #tpu.memory_space<vmem>>, vector<1x128xf32>
    %c66_415 = arith.constant 66 : index
    %c0_416 = arith.constant 0 : index
    %387 = vector.load %arg14[%c66_415, %c0_416] : memref<91x128xf32, #tpu.memory_space<vmem>>, vector<1x128xf32>
    tpu.vector_store %arg14[%c66_415, %c0_416], %386 {strides = array<i32>} : memref<91x128xf32, #tpu.memory_space<vmem>>, vector<1x128xf32>,
    %c113 = arith.constant 113 : index
    %c0_417 = arith.constant 0 : index
    %388 = vector.load %arg11[%c113, %c0_417] : memref<324x128xf32, #tpu.memory_space<vmem>>, vector<1x128xf32>
    %c68 = arith.constant 68 : index
    %c0_418 = arith.constant 0 : index
    %389 = vector.load %arg14[%c68, %c0_418] : memref<91x128xf32, #tpu.memory_space<vmem>>, vector<1x128xf32>
    tpu.vector_store %arg14[%c68, %c0_418], %388 {strides = array<i32>} : memref<91x128xf32, #tpu.memory_space<vmem>>, vector<1x128xf32>,
    %c114 = arith.constant 114 : index
    %c0_419 = arith.constant 0 : index
    %390 = vector.load %arg11[%c114, %c0_419] : memref<324x128xf32, #tpu.memory_space<vmem>>, vector<1x128xf32>
    %c70_420 = arith.constant 70 : index
    %c0_421 = arith.constant 0 : index
    %391 = vector.load %arg14[%c70_420, %c0_421] : memref<91x128xf32, #tpu.memory_space<vmem>>, vector<1x128xf32>
    tpu.vector_store %arg14[%c70_420, %c0_421], %390 {strides = array<i32>} : memref<91x128xf32, #tpu.memory_space<vmem>>, vector<1x128xf32>,
    %c0_422 = arith.constant 0 : index
    %c0_423 = arith.constant 0 : index
    %392 = vector.load %arg9[%c0_422, %c0_423] : memref<1x128xf32, #tpu.memory_space<vmem>>, vector<1x128xf32>
    %c0_424 = arith.constant 0 : index
    %c0_425 = arith.constant 0 : index
    %393 = vector.load %arg14[%c0_424, %c0_425] : memref<91x128xf32, #tpu.memory_space<vmem>>, vector<81x128xf32>
    %c1_426 = arith.constant 1 : index
    %c1_427 = arith.constant 1 : index
    %c0_428 = arith.constant 0 : index
    %c0_429 = arith.constant 0 : index
    %394 = vector.load %arg8[%c1_426, %c1_427, %c0_428, %c0_429] : memref<3x3x128x128xf32, #tpu.memory_space<vmem>>, vector<1x1x128x128xf32>
    %395 = vector.shape_cast %394 : vector<1x1x128x128xf32> to vector<128x128xf32>
    %cst_430 = arith.constant dense<0.000000e+00> : vector<81x128xf32>
    %396 = tpu.matmul %393, %395, %cst_430 {dimension_numbers = #tpu.dot_dimension_numbers<[1], [0], [0], [1], [0, 0, 1, 1], [], []>} : vector<81x128xf32>, vector<128x128xf32>, vector<81x128xf32> -> vector<81x128xf32>
    %397 = vector.broadcast %392 : vector<1x128xf32> to vector<81x128xf32>
    %398 = arith.addf %396, %397 : vector<81x128xf32>
    %399 = vector.extract_strided_slice %398 {offsets = [0, 0], sizes = [81, 1], strides = [1, 1]} : vector<81x128xf32> to vector<81x1xf32>
    %cst_431 = arith.constant 0.000000e+00 : f32
    %400 = vector.broadcast %cst_431 : f32 to vector<81x1xf32>
    %401 = arith.subf %400, %399 : vector<81x1xf32>
    %402 = math.exp %401 : vector<81x1xf32>
    %cst_432 = arith.constant 1.000000e+00 : f32
    %403 = vector.broadcast %cst_432 : f32 to vector<81x1xf32>
    %404 = arith.addf %403, %402 : vector<81x1xf32>
    %cst_433 = arith.constant 1.000000e+00 : f32
    %405 = vector.broadcast %cst_433 : f32 to vector<81x1xf32>
    %406 = arith.divf %405, %404 : vector<81x1xf32>
    %c0_434 = arith.constant 0 : index
    %c0_435 = arith.constant 0 : index
    %c0_436 = arith.constant 0 : index
    %c0_437 = arith.constant 0 : index
    %407 = vector.load %arg10[%c0_434, %c0_435, %c0_436, %c0_437] : memref<1x4x81x1xf32, #tpu.memory_space<vmem>>, vector<1x1x81x1xf32>
    %408 = vector.shape_cast %407 : vector<1x1x81x1xf32> to vector<81x1xf32>
    %409 = vector.shape_cast %406 : vector<81x1xf32> to vector<1x1x81x1xf32>
    tpu.vector_store %arg10[%c0_434, %c0_435, %c0_436, %c0_437], %409 {strides = array<i32>} : memref<1x4x81x1xf32, #tpu.memory_space<vmem>>, vector<1x1x81x1xf32>,
    %c0_438 = arith.constant 0 : index
    %c0_439 = arith.constant 0 : index
    %410 = vector.load %arg14[%c0_438, %c0_439] : memref<91x128xf32, #tpu.memory_space<vmem>>, vector<81x128xf32>
    %c1_440 = arith.constant 1 : index
    %c2_441 = arith.constant 2 : index
    %c0_442 = arith.constant 0 : index
    %c0_443 = arith.constant 0 : index
    %411 = vector.load %arg8[%c1_440, %c2_441, %c0_442, %c0_443] : memref<3x3x128x128xf32, #tpu.memory_space<vmem>>, vector<1x1x128x128xf32>
    %412 = vector.shape_cast %411 : vector<1x1x128x128xf32> to vector<128x128xf32>
    %cst_444 = arith.constant dense<0.000000e+00> : vector<81x128xf32>
    %413 = tpu.matmul %410, %412, %cst_444 {dimension_numbers = #tpu.dot_dimension_numbers<[1], [0], [0], [1], [0, 0, 1, 1], [], []>} : vector<81x128xf32>, vector<128x128xf32>, vector<81x128xf32> -> vector<81x128xf32>
    %c1_445 = arith.constant 1 : index
    %c0_446 = arith.constant 0 : index
    %414 = vector.load %arg14[%c1_445, %c0_446] : memref<91x128xf32, #tpu.memory_space<vmem>>, vector<81x128xf32>
    %c1_447 = arith.constant 1 : index
    %c0_448 = arith.constant 0 : index
    %c0_449 = arith.constant 0 : index
    %c0_450 = arith.constant 0 : index
    %415 = vector.load %arg8[%c1_447, %c0_448, %c0_449, %c0_450] : memref<3x3x128x128xf32, #tpu.memory_space<vmem>>, vector<1x1x128x128xf32>
    %416 = vector.shape_cast %415 : vector<1x1x128x128xf32> to vector<128x128xf32>
    %cst_451 = arith.constant dense<0.000000e+00> : vector<81x128xf32>
    %417 = tpu.matmul %414, %416, %cst_451 {dimension_numbers = #tpu.dot_dimension_numbers<[1], [0], [0], [1], [0, 0, 1, 1], [], []>} : vector<81x128xf32>, vector<128x128xf32>, vector<81x128xf32> -> vector<81x128xf32>
    %418 = arith.addf %413, %417 : vector<81x128xf32>
    %419 = vector.broadcast %392 : vector<1x128xf32> to vector<81x128xf32>
    %420 = arith.addf %418, %419 : vector<81x128xf32>
    %421 = vector.extract_strided_slice %420 {offsets = [0, 0], sizes = [81, 1], strides = [1, 1]} : vector<81x128xf32> to vector<81x1xf32>
    %cst_452 = arith.constant 0.000000e+00 : f32
    %422 = vector.broadcast %cst_452 : f32 to vector<81x1xf32>
    %423 = arith.subf %422, %421 : vector<81x1xf32>
    %424 = math.exp %423 : vector<81x1xf32>
    %cst_453 = arith.constant 1.000000e+00 : f32
    %425 = vector.broadcast %cst_453 : f32 to vector<81x1xf32>
    %426 = arith.addf %425, %424 : vector<81x1xf32>
    %cst_454 = arith.constant 1.000000e+00 : f32
    %427 = vector.broadcast %cst_454 : f32 to vector<81x1xf32>
    %428 = arith.divf %427, %426 : vector<81x1xf32>
    %c0_455 = arith.constant 0 : index
    %c1_456 = arith.constant 1 : index
    %c0_457 = arith.constant 0 : index
    %c0_458 = arith.constant 0 : index
    %429 = vector.load %arg10[%c0_455, %c1_456, %c0_457, %c0_458] : memref<1x4x81x1xf32, #tpu.memory_space<vmem>>, vector<1x1x81x1xf32>
    %430 = vector.shape_cast %429 : vector<1x1x81x1xf32> to vector<81x1xf32>
    %431 = vector.shape_cast %428 : vector<81x1xf32> to vector<1x1x81x1xf32>
    tpu.vector_store %arg10[%c0_455, %c1_456, %c0_457, %c0_458], %431 {strides = array<i32>} : memref<1x4x81x1xf32, #tpu.memory_space<vmem>>, vector<1x1x81x1xf32>,
    %c0_459 = arith.constant 0 : index
    %c0_460 = arith.constant 0 : index
    %432 = vector.load %arg14[%c0_459, %c0_460] : memref<91x128xf32, #tpu.memory_space<vmem>>, vector<81x128xf32>
    %c2_461 = arith.constant 2 : index
    %c1_462 = arith.constant 1 : index
    %c0_463 = arith.constant 0 : index
    %c0_464 = arith.constant 0 : index
    %433 = vector.load %arg8[%c2_461, %c1_462, %c0_463, %c0_464] : memref<3x3x128x128xf32, #tpu.memory_space<vmem>>, vector<1x1x128x128xf32>
    %434 = vector.shape_cast %433 : vector<1x1x128x128xf32> to vector<128x128xf32>
    %cst_465 = arith.constant dense<0.000000e+00> : vector<81x128xf32>
    %435 = tpu.matmul %432, %434, %cst_465 {dimension_numbers = #tpu.dot_dimension_numbers<[1], [0], [0], [1], [0, 0, 1, 1], [], []>} : vector<81x128xf32>, vector<128x128xf32>, vector<81x128xf32> -> vector<81x128xf32>
    %c9_466 = arith.constant 9 : index
    %c0_467 = arith.constant 0 : index
    %436 = vector.load %arg14[%c9_466, %c0_467] : memref<91x128xf32, #tpu.memory_space<vmem>>, vector<81x128xf32>
    %c0_468 = arith.constant 0 : index
    %c1_469 = arith.constant 1 : index
    %c0_470 = arith.constant 0 : index
    %c0_471 = arith.constant 0 : index
    %437 = vector.load %arg8[%c0_468, %c1_469, %c0_470, %c0_471] : memref<3x3x128x128xf32, #tpu.memory_space<vmem>>, vector<1x1x128x128xf32>
    %438 = vector.shape_cast %437 : vector<1x1x128x128xf32> to vector<128x128xf32>
    %cst_472 = arith.constant dense<0.000000e+00> : vector<81x128xf32>
    %439 = tpu.matmul %436, %438, %cst_472 {dimension_numbers = #tpu.dot_dimension_numbers<[1], [0], [0], [1], [0, 0, 1, 1], [], []>} : vector<81x128xf32>, vector<128x128xf32>, vector<81x128xf32> -> vector<81x128xf32>
    %440 = arith.addf %435, %439 : vector<81x128xf32>
    %441 = vector.broadcast %392 : vector<1x128xf32> to vector<81x128xf32>
    %442 = arith.addf %440, %441 : vector<81x128xf32>
    %443 = vector.extract_strided_slice %442 {offsets = [0, 0], sizes = [81, 1], strides = [1, 1]} : vector<81x128xf32> to vector<81x1xf32>
    %cst_473 = arith.constant 0.000000e+00 : f32
    %444 = vector.broadcast %cst_473 : f32 to vector<81x1xf32>
    %445 = arith.subf %444, %443 : vector<81x1xf32>
    %446 = math.exp %445 : vector<81x1xf32>
    %cst_474 = arith.constant 1.000000e+00 : f32
    %447 = vector.broadcast %cst_474 : f32 to vector<81x1xf32>
    %448 = arith.addf %447, %446 : vector<81x1xf32>
    %cst_475 = arith.constant 1.000000e+00 : f32
    %449 = vector.broadcast %cst_475 : f32 to vector<81x1xf32>
    %450 = arith.divf %449, %448 : vector<81x1xf32>
    %c0_476 = arith.constant 0 : index
    %c2_477 = arith.constant 2 : index
    %c0_478 = arith.constant 0 : index
    %c0_479 = arith.constant 0 : index
    %451 = vector.load %arg10[%c0_476, %c2_477, %c0_478, %c0_479] : memref<1x4x81x1xf32, #tpu.memory_space<vmem>>, vector<1x1x81x1xf32>
    %452 = vector.shape_cast %451 : vector<1x1x81x1xf32> to vector<81x1xf32>
    %453 = vector.shape_cast %450 : vector<81x1xf32> to vector<1x1x81x1xf32>
    tpu.vector_store %arg10[%c0_476, %c2_477, %c0_478, %c0_479], %453 {strides = array<i32>} : memref<1x4x81x1xf32, #tpu.memory_space<vmem>>, vector<1x1x81x1xf32>,
    %c0_480 = arith.constant 0 : index
    %c0_481 = arith.constant 0 : index
    %454 = vector.load %arg14[%c0_480, %c0_481] : memref<91x128xf32, #tpu.memory_space<vmem>>, vector<81x128xf32>
    %c2_482 = arith.constant 2 : index
    %c2_483 = arith.constant 2 : index
    %c0_484 = arith.constant 0 : index
    %c0_485 = arith.constant 0 : index
    %455 = vector.load %arg8[%c2_482, %c2_483, %c0_484, %c0_485] : memref<3x3x128x128xf32, #tpu.memory_space<vmem>>, vector<1x1x128x128xf32>
    %456 = vector.shape_cast %455 : vector<1x1x128x128xf32> to vector<128x128xf32>
    %cst_486 = arith.constant dense<0.000000e+00> : vector<81x128xf32>
    %457 = tpu.matmul %454, %456, %cst_486 {dimension_numbers = #tpu.dot_dimension_numbers<[1], [0], [0], [1], [0, 0, 1, 1], [], []>} : vector<81x128xf32>, vector<128x128xf32>, vector<81x128xf32> -> vector<81x128xf32>
    %c1_487 = arith.constant 1 : index
    %c0_488 = arith.constant 0 : index
    %458 = vector.load %arg14[%c1_487, %c0_488] : memref<91x128xf32, #tpu.memory_space<vmem>>, vector<81x128xf32>
    %c2_489 = arith.constant 2 : index
    %c0_490 = arith.constant 0 : index
    %c0_491 = arith.constant 0 : index
    %c0_492 = arith.constant 0 : index
    %459 = vector.load %arg8[%c2_489, %c0_490, %c0_491, %c0_492] : memref<3x3x128x128xf32, #tpu.memory_space<vmem>>, vector<1x1x128x128xf32>
    %460 = vector.shape_cast %459 : vector<1x1x128x128xf32> to vector<128x128xf32>
    %cst_493 = arith.constant dense<0.000000e+00> : vector<81x128xf32>
    %461 = tpu.matmul %458, %460, %cst_493 {dimension_numbers = #tpu.dot_dimension_numbers<[1], [0], [0], [1], [0, 0, 1, 1], [], []>} : vector<81x128xf32>, vector<128x128xf32>, vector<81x128xf32> -> vector<81x128xf32>
    %462 = arith.addf %457, %461 : vector<81x128xf32>
    %c9_494 = arith.constant 9 : index
    %c0_495 = arith.constant 0 : index
    %463 = vector.load %arg14[%c9_494, %c0_495] : memref<91x128xf32, #tpu.memory_space<vmem>>, vector<81x128xf32>
    %c0_496 = arith.constant 0 : index
    %c2_497 = arith.constant 2 : index
    %c0_498 = arith.constant 0 : index
    %c0_499 = arith.constant 0 : index
    %464 = vector.load %arg8[%c0_496, %c2_497, %c0_498, %c0_499] : memref<3x3x128x128xf32, #tpu.memory_space<vmem>>, vector<1x1x128x128xf32>
    %465 = vector.shape_cast %464 : vector<1x1x128x128xf32> to vector<128x128xf32>
    %cst_500 = arith.constant dense<0.000000e+00> : vector<81x128xf32>
    %466 = tpu.matmul %463, %465, %cst_500 {dimension_numbers = #tpu.dot_dimension_numbers<[1], [0], [0], [1], [0, 0, 1, 1], [], []>} : vector<81x128xf32>, vector<128x128xf32>, vector<81x128xf32> -> vector<81x128xf32>
    %467 = arith.addf %462, %466 : vector<81x128xf32>
    %c10_501 = arith.constant 10 : index
    %c0_502 = arith.constant 0 : index
    %468 = vector.load %arg14[%c10_501, %c0_502] : memref<91x128xf32, #tpu.memory_space<vmem>>, vector<81x128xf32>
    %c0_503 = arith.constant 0 : index
    %c0_504 = arith.constant 0 : index
    %c0_505 = arith.constant 0 : index
    %c0_506 = arith.constant 0 : index
    %469 = vector.load %arg8[%c0_503, %c0_504, %c0_505, %c0_506] : memref<3x3x128x128xf32, #tpu.memory_space<vmem>>, vector<1x1x128x128xf32>
    %470 = vector.shape_cast %469 : vector<1x1x128x128xf32> to vector<128x128xf32>
    %cst_507 = arith.constant dense<0.000000e+00> : vector<81x128xf32>
    %471 = tpu.matmul %468, %470, %cst_507 {dimension_numbers = #tpu.dot_dimension_numbers<[1], [0], [0], [1], [0, 0, 1, 1], [], []>} : vector<81x128xf32>, vector<128x128xf32>, vector<81x128xf32> -> vector<81x128xf32>
    %472 = arith.addf %467, %471 : vector<81x128xf32>
    %473 = vector.broadcast %392 : vector<1x128xf32> to vector<81x128xf32>
    %474 = arith.addf %472, %473 : vector<81x128xf32>
    %475 = vector.extract_strided_slice %474 {offsets = [0, 0], sizes = [81, 1], strides = [1, 1]} : vector<81x128xf32> to vector<81x1xf32>
    %cst_508 = arith.constant 0.000000e+00 : f32
    %476 = vector.broadcast %cst_508 : f32 to vector<81x1xf32>
    %477 = arith.subf %476, %475 : vector<81x1xf32>
    %478 = math.exp %477 : vector<81x1xf32>
    %cst_509 = arith.constant 1.000000e+00 : f32
    %479 = vector.broadcast %cst_509 : f32 to vector<81x1xf32>
    %480 = arith.addf %479, %478 : vector<81x1xf32>
    %cst_510 = arith.constant 1.000000e+00 : f32
    %481 = vector.broadcast %cst_510 : f32 to vector<81x1xf32>
    %482 = arith.divf %481, %480 : vector<81x1xf32>
    %c0_511 = arith.constant 0 : index
    %c3_512 = arith.constant 3 : index
    %c0_513 = arith.constant 0 : index
    %c0_514 = arith.constant 0 : index
    %483 = vector.load %arg10[%c0_511, %c3_512, %c0_513, %c0_514] : memref<1x4x81x1xf32, #tpu.memory_space<vmem>>, vector<1x1x81x1xf32>
    %484 = vector.shape_cast %483 : vector<1x1x81x1xf32> to vector<81x1xf32>
    %485 = vector.shape_cast %482 : vector<81x1xf32> to vector<1x1x81x1xf32>
    tpu.vector_store %arg10[%c0_511, %c3_512, %c0_513, %c0_514], %485 {strides = array<i32>} : memref<1x4x81x1xf32, #tpu.memory_space<vmem>>, vector<1x1x81x1xf32>,
    return
  }
  func.func @transform_0(%arg0: i32) -> (i32, i32, i32) {
    %c0_i32 = arith.constant 0 : i32
    %c0_i32_0 = arith.constant 0 : i32
    %c0_i32_1 = arith.constant 0 : i32
    return %arg0, %c0_i32, %c0_i32_0 : i32, i32, i32
  }
  func.func @transform_1(%arg0: i32) -> (i32, i32) {
    %c0_i32 = arith.constant 0 : i32
    %c0_i32_0 = arith.constant 0 : i32
    %c0_i32_1 = arith.constant 0 : i32
    return %c0_i32, %c0_i32_0 : i32, i32
  }
  func.func @transform_2(%arg0: i32) -> (i32, i32) {
    %c0_i32 = arith.constant 0 : i32
    %c0_i32_0 = arith.constant 0 : i32
    %c0_i32_1 = arith.constant 0 : i32
    return %c0_i32, %c0_i32_0 : i32, i32
  }
  func.func @transform_3(%arg0: i32) -> (i32, i32, i32) {
    %c0_i32 = arith.constant 0 : i32
    %c0_i32_0 = arith.constant 0 : i32
    %c0_i32_1 = arith.constant 0 : i32
    %c0_i32_2 = arith.constant 0 : i32
    return %c0_i32, %c0_i32_0, %c0_i32_1 : i32, i32, i32
  }
  func.func @transform_4(%arg0: i32) -> (i32, i32) {
    %c0_i32 = arith.constant 0 : i32
    %c0_i32_0 = arith.constant 0 : i32
    %c0_i32_1 = arith.constant 0 : i32
    return %c0_i32, %c0_i32_0 : i32, i32
  }
  func.func @transform_5(%arg0: i32) -> (i32, i32, i32, i32) {
    %c0_i32 = arith.constant 0 : i32
    %c0_i32_0 = arith.constant 0 : i32
    %c0_i32_1 = arith.constant 0 : i32
    %c0_i32_2 = arith.constant 0 : i32
    %c0_i32_3 = arith.constant 0 : i32
    return %c0_i32, %c0_i32_0, %c0_i32_1, %c0_i32_2 : i32, i32, i32, i32
  }
  func.func @transform_6(%arg0: i32) -> (i32, i32) {
    %c0_i32 = arith.constant 0 : i32
    %c0_i32_0 = arith.constant 0 : i32
    %c0_i32_1 = arith.constant 0 : i32
    return %c0_i32, %c0_i32_0 : i32, i32
  }
  func.func @transform_7(%arg0: i32) -> (i32, i32, i32, i32) {
    %c0_i32 = arith.constant 0 : i32
    %c0_i32_0 = arith.constant 0 : i32
    %c0_i32_1 = arith.constant 0 : i32
    %c0_i32_2 = arith.constant 0 : i32
    %c0_i32_3 = arith.constant 0 : i32
    return %c0_i32, %c0_i32_0, %c0_i32_1, %c0_i32_2 : i32, i32, i32, i32
  }
  func.func @transform_8(%arg0: i32) -> (i32, i32) {
    %c0_i32 = arith.constant 0 : i32
    %c0_i32_0 = arith.constant 0 : i32
    %c0_i32_1 = arith.constant 0 : i32
    return %c0_i32, %c0_i32_0 : i32, i32
  }
  func.func @transform_9(%arg0: i32) -> (i32, i32, i32, i32) {
    %c0_i32 = arith.constant 0 : i32
    %c0_i32_0 = arith.constant 0 : i32
    %c0_i32_1 = arith.constant 0 : i32
    %c0_i32_2 = arith.constant 0 : i32
    return %arg0, %c0_i32, %c0_i32_0, %c0_i32_1 : i32, i32, i32, i32
  }
}

</mosaic_0001>

<llo_original>
// kernel: autoencoder_forward.1
$region0: #{autoencoder_forward.1}
  #allocation0 [shape = 'u32[]', space=smem, size = 0x4, offset = 0x4, fixed_abs, tag = 'smem constant byte address 0x4 - core index']
  #allocation1 [shape = 'u32[144,128]{1,0:T(1,128)}', space=vmem, size = 0x12000, scoped, tag = 'internal scratch']
  #allocation2 [shape = 'f32[324,128]{1,0:T(8,128)}', space=vmem, size = 0x29000, scoped, tag = 'scratch operand']
  #allocation3 [shape = 'f32[122,128]{1,0:T(8,128)}', space=vmem, size = 0x10000, scoped, tag = 'scratch operand']
  #allocation4 [shape = 'f32[31,128]{1,0:T(8,128)}', space=vmem, size = 0x4000, scoped, tag = 'scratch operand']
  #allocation5 [shape = 'f32[91,128]{1,0:T(8,128)}', space=vmem, size = 0xc000, scoped, tag = 'scratch operand']
  %s0 = inlined_call_operand.vmem [shape: f32[2,324,16], index: 0, kind: input, shape index: {}]
  %s1 = inlined_call_operand.hbm [shape: f32[16,128], index: 1, kind: input, shape index: {}]
  %s2 = inlined_call_operand.vmem [shape: f32[1,128], index: 2, kind: input, shape index: {}]
  %s3 = inlined_call_operand.vmem [shape: f32[9,128,128], index: 3, kind: input, shape index: {}]
  %s4 = inlined_call_operand.vmem [shape: f32[1,128], index: 4, kind: input, shape index: {}]
  %s5 = inlined_call_operand.vmem [shape: f32[3,3,128,128], index: 5, kind: input, shape index: {}]
  %s6 = inlined_call_operand.vmem [shape: f32[1,128], index: 6, kind: input, shape index: {}]
  %s7 = inlined_call_operand.hbm [shape: f32[3,3,128,128], index: 7, kind: input, shape index: {}]
  %s8 = inlined_call_operand.vmem [shape: f32[1,128], index: 8, kind: input, shape index: {}]
  %s9 = inlined_call_operand.vmem [shape: f32[2,4,81,1], index: 9, kind: output, shape index: {}]
  %s10 = sld [smem:[#allocation0]]
  $region77: #{autoencoder_forward.1} parent=0
    _
  %s12 = ssub.s32 1, %s10
  %s13 = scalar_select 0, %s12, %s10
  $region1: #{autoencoder_forward.1} parent=0
    #allocation6 [shape = 'u8[8192]{0}', space=vmem, size = 0x2000, scoped, tag = 'input window, operand 1, single buffered']
    #allocation7 [shape = 's32[2]{0}', space=sflag, size = 0x8, scoped, tag = 'scoped memory for autoencoder_forward.1']
    #allocation8 [shape = 'u8[589824]{0}', space=vmem, size = 0x90000, scoped, tag = 'input window, operand 7, single buffered']
    #allocation9 [shape = 's32[1]{0}', space=sflag, size = 0x4, scoped, tag = 'scoped memory for autoencoder_forward.1']
    %14 = vsyncpa [#allocation7], 0
    %15 = vsyncpa [#allocation9], 0
    loop: start=0, step=1, limit=4
    $region2: #{autoencoder_forward.1} parent=1 // loop_pre_header
      _
    $region3: #{autoencoder_forward.1} parent=1 // loop_header
      %s17 = sphi 0, %s21
      %p18 = scmp.ge.s32.totalorder %s17, 4
      %s27 = sphi 0, %s29
      %s30 = sphi 0, %s27
      %s31 = sphi 0, %s30
      %s47 = sphi 0, %s31
      %s51 = sphi 0, %s51
      %s53 = sphi 0, %s51
      %s54 = sphi 0, %s53
      %s68 = sphi 0, %s54
      %s72 = sphi 0, %s72
      %s74 = sphi 0, %s72
      %s75 = sphi 0, %s74
      %s89 = sphi 0, %s75
      %s93 = sphi 0, %s93
      %s95 = sphi 0, %s93
      %s96 = sphi 0, %s95
      %s110 = sphi 0, %s96
      %s114 = sphi 0, %s114
      %s116 = sphi 0, %s114
      %s117 = sphi 0, %s116
      %s131 = sphi 0, %s117
      %s135 = sphi 0, %s135
      %s137 = sphi 0, %s135
      %s138 = sphi 0, %s137
      %s152 = sphi 0, %s138
      %s156 = sphi 0, %s156
      %s158 = sphi 0, %s156
      %s159 = sphi 0, %s158
      %s173 = sphi 0, %s159
      %s177 = sphi 0, %s177
      %s179 = sphi 0, %s177
      %s180 = sphi 0, %s179
      %s194 = sphi 0, %s180
      %s198 = sphi 0, %s198
      %s200 = sphi 0, %s198
      %s201 = sphi 0, %s200
      %s215 = sphi 0, %s201
      %s221 = sphi 0, %s223
      %s224 = sphi 0, %s221
      %s225 = sphi 0, %s224
      %s241 = sphi 0, %s225
    $region4: #{autoencoder_forward.1} parent=1 // loop_header_branch
      %20 = sbr.rel (%p18) target = $region8
    $region5: #{autoencoder_forward.1} parent=1 // loop_body
      %s22 = ssub.s32 %s17, 1
      %s23 = ssub.s32 %s17, 2
      %s24 = sadd.s32 %s17, 1
      %s25 = ssub.s32 %s17, %s24
      %p26 = scmp.eq.s32.totalorder %s25, 0
      %s28 = sadd.s32 %s27, 1
      %s29 = scalar_select %p26, %s27, %s28
      %p32 = pneg %p26
      %p33 = scmp.eq.s32.totalorder %s17, 1
      %p34 = por %p32, %p33
      %p35 = scmp.ne.s32.totalorder %s27, %s30
      %p36 = scmp.eq.s32.totalorder %s17, 0
      %p37 = por %p35, %p36
      %p38 = scmp.ne.s32.totalorder %s27, %s30
      %p39 = scmp.eq.s32.totalorder %s22, 1
      %p40 = por %p38, %p39
      %p41 = scmp.ne.s32.totalorder %s30, %s31
      %p42 = scmp.eq.s32.totalorder %s22, 0
      %p43 = por %p41, %p42
      %p44 = scmp.ne.s32.totalorder %s30, %s31
      %p45 = scmp.eq.s32.totalorder %s23, 1
      %p46 = por %p44, %p45
      %p48 = scmp.ne.s32.totalorder %s31, %s47
      %p49 = scmp.eq.s32.totalorder %s23, 0
      %p50 = por %p48, %p49
      %s52 = sadd.s32 %s51, 1
      %p55 = scmp.eq.s32.totalorder %s17, 1
      %p56 = scmp.ne.s32.totalorder %s51, %s53
      %p57 = scmp.eq.s32.totalorder %s17, 0
      %p58 = por %p56, %p57
      %p59 = scmp.ne.s32.totalorder %s51, %s53
      %p60 = scmp.eq.s32.totalorder %s22, 1
      %p61 = por %p59, %p60
      %p62 = scmp.ne.s32.totalorder %s53, %s54
      %p63 = scmp.eq.s32.totalorder %s22, 0
      %p64 = por %p62, %p63
      %p65 = scmp.ne.s32.totalorder %s53, %s54
      %p66 = scmp.eq.s32.totalorder %s23, 1
      %p67 = por %p65, %p66
      %p69 = scmp.ne.s32.totalorder %s54, %s68
      %p70 = scmp.eq.s32.totalorder %s23, 0
      %p71 = por %p69, %p70
      %s73 = sadd.s32 %s72, 1
      %p76 = scmp.eq.s32.totalorder %s17, 1
      %p77 = scmp.ne.s32.totalorder %s72, %s74
      %p78 = scmp.eq.s32.totalorder %s17, 0
      %p79 = por %p77, %p78
      %p80 = scmp.ne.s32.totalorder %s72, %s74
      %p81 = scmp.eq.s32.totalorder %s22, 1
      %p82 = por %p80, %p81
      %p83 = scmp.ne.s32.totalorder %s74, %s75
      %p84 = scmp.eq.s32.totalorder %s22, 0
      %p85 = por %p83, %p84
      %p86 = scmp.ne.s32.totalorder %s74, %s75
      %p87 = scmp.eq.s32.totalorder %s23, 1
      %p88 = por %p86, %p87
      %p90 = scmp.ne.s32.totalorder %s75, %s89
      %p91 = scmp.eq.s32.totalorder %s23, 0
      %p92 = por %p90, %p91
      %s94 = sadd.s32 %s93, 1
      %p97 = scmp.eq.s32.totalorder %s17, 1
      %p98 = scmp.ne.s32.totalorder %s93, %s95
      %p99 = scmp.eq.s32.totalorder %s17, 0
      %p100 = por %p98, %p99
      %p101 = scmp.ne.s32.totalorder %s93, %s95
      %p102 = scmp.eq.s32.totalorder %s22, 1
      %p103 = por %p101, %p102
      %p104 = scmp.ne.s32.totalorder %s95, %s96
      %p105 = scmp.eq.s32.totalorder %s22, 0
      %p106 = por %p104, %p105
      %p107 = scmp.ne.s32.totalorder %s95, %s96
      %p108 = scmp.eq.s32.totalorder %s23, 1
      %p109 = por %p107, %p108
      %p111 = scmp.ne.s32.totalorder %s96, %s110
      %p112 = scmp.eq.s32.totalorder %s23, 0
      %p113 = por %p111, %p112
      %s115 = sadd.s32 %s114, 1
      %p118 = scmp.eq.s32.totalorder %s17, 1
      %p119 = scmp.ne.s32.totalorder %s114, %s116
      %p120 = scmp.eq.s32.totalorder %s17, 0
      %p121 = por %p119, %p120
      %p122 = scmp.ne.s32.totalorder %s114, %s116
      %p123 = scmp.eq.s32.totalorder %s22, 1
      %p124 = por %p122, %p123
      %p125 = scmp.ne.s32.totalorder %s116, %s117
      %p126 = scmp.eq.s32.totalorder %s22, 0
      %p127 = por %p125, %p126
      %p128 = scmp.ne.s32.totalorder %s116, %s117
      %p129 = scmp.eq.s32.totalorder %s23, 1
      %p130 = por %p128, %p129
      %p132 = scmp.ne.s32.totalorder %s117, %s131
      %p133 = scmp.eq.s32.totalorder %s23, 0
      %p134 = por %p132, %p133
      %s136 = sadd.s32 %s135, 1
      %p139 = scmp.eq.s32.totalorder %s17, 1
      %p140 = scmp.ne.s32.totalorder %s135, %s137
      %p141 = scmp.eq.s32.totalorder %s17, 0
      %p142 = por %p140, %p141
      %p143 = scmp.ne.s32.totalorder %s135, %s137
      %p144 = scmp.eq.s32.totalorder %s22, 1
      %p145 = por %p143, %p144
      %p146 = scmp.ne.s32.totalorder %s137, %s138
      %p147 = scmp.eq.s32.totalorder %s22, 0
      %p148 = por %p146, %p147
      %p149 = scmp.ne.s32.totalorder %s137, %s138
      %p150 = scmp.eq.s32.totalorder %s23, 1
      %p151 = por %p149, %p150
      %p153 = scmp.ne.s32.totalorder %s138, %s152
      %p154 = scmp.eq.s32.totalorder %s23, 0
      %p155 = por %p153, %p154
      %s157 = sadd.s32 %s156, 1
      %p160 = scmp.eq.s32.totalorder %s17, 1
      %p161 = scmp.ne.s32.totalorder %s156, %s158
      %p162 = scmp.eq.s32.totalorder %s17, 0
      %p163 = por %p161, %p162
      %p164 = scmp.ne.s32.totalorder %s156, %s158
      %p165 = scmp.eq.s32.totalorder %s22, 1
      %p166 = por %p164, %p165
      %p167 = scmp.ne.s32.totalorder %s158, %s159
      %p168 = scmp.eq.s32.totalorder %s22, 0
      %p169 = por %p167, %p168
      %p170 = scmp.ne.s32.totalorder %s158, %s159
      %p171 = scmp.eq.s32.totalorder %s23, 1
      %p172 = por %p170, %p171
      %p174 = scmp.ne.s32.totalorder %s159, %s173
      %p175 = scmp.eq.s32.totalorder %s23, 0
      %p176 = por %p174, %p175
      %s178 = sadd.s32 %s177, 1
      %p181 = scmp.eq.s32.totalorder %s17, 1
      %p182 = scmp.ne.s32.totalorder %s177, %s179
      %p183 = scmp.eq.s32.totalorder %s17, 0
      %p184 = por %p182, %p183
      %p185 = scmp.ne.s32.totalorder %s177, %s179
      %p186 = scmp.eq.s32.totalorder %s22, 1
      %p187 = por %p185, %p186
      %p188 = scmp.ne.s32.totalorder %s179, %s180
      %p189 = scmp.eq.s32.totalorder %s22, 0
      %p190 = por %p188, %p189
      %p191 = scmp.ne.s32.totalorder %s179, %s180
      %p192 = scmp.eq.s32.totalorder %s23, 1
      %p193 = por %p191, %p192
      %p195 = scmp.ne.s32.totalorder %s180, %s194
      %p196 = scmp.eq.s32.totalorder %s23, 0
      %p197 = por %p195, %p196
      %s199 = sadd.s32 %s198, 1
      %p202 = scmp.eq.s32.totalorder %s17, 1
      %p203 = scmp.ne.s32.totalorder %s198, %s200
      %p204 = scmp.eq.s32.totalorder %s17, 0
      %p205 = por %p203, %p204
      %p206 = scmp.ne.s32.totalorder %s198, %s200
      %p207 = scmp.eq.s32.totalorder %s22, 1
      %p208 = por %p206, %p207
      %p209 = scmp.ne.s32.totalorder %s200, %s201
      %p210 = scmp.eq.s32.totalorder %s22, 0
      %p211 = por %p209, %p210
      %p212 = scmp.ne.s32.totalorder %s200, %s201
      %p213 = scmp.eq.s32.totalorder %s23, 1
      %p214 = por %p212, %p213
      %p216 = scmp.ne.s32.totalorder %s201, %s215
      %p217 = scmp.eq.s32.totalorder %s23, 0
      %p218 = por %p216, %p217
      %s219 = ssub.s32 %s17, %s24
      %p220 = scmp.eq.s32.totalorder %s219, 0
      %s222 = sadd.s32 %s221, 1
      %s223 = scalar_select %p220, %s221, %s222
      %p226 = pneg %p220
      %p227 = scmp.eq.s32.totalorder %s17, 1
      %p228 = por %p226, %p227
      %p229 = scmp.ne.s32.totalorder %s221, %s224
      %p230 = scmp.eq.s32.totalorder %s17, 0
      %p231 = por %p229, %p230
      %p232 = scmp.ne.s32.totalorder %s221, %s224
      %p233 = scmp.eq.s32.totalorder %s22, 1
      %p234 = por %p232, %p233
      %p235 = scmp.ne.s32.totalorder %s224, %s225
      %p236 = scmp.eq.s32.totalorder %s22, 0
      %p237 = por %p235, %p236
      %p238 = scmp.ne.s32.totalorder %s224, %s225
      %p239 = scmp.eq.s32.totalorder %s23, 1
      %p240 = por %p238, %p239
      %p242 = scmp.ne.s32.totalorder %s225, %s241
      %p243 = scmp.eq.s32.totalorder %s23, 0
      %p244 = por %p242, %p243
      %p245 = scmp.le.s32.totalorder 1, %s17
      %p246 = scmp.lt.s32.totalorder %s17, 3
      %p247 = pnand %p245, %p246
      %p248 = pneg %p247
      // Predicated region
      $region9: #{autoencoder_forward.1} parent=5 // pred_check
        _
      $region10: #{autoencoder_forward.1} parent=5 // pred_check_branch
        %250 = sbr.rel (%p247) target = $region12
      $region11: #{autoencoder_forward.1} parent=5 // pred_region
        %s251 = ssub.s32 %s17, 1
        // Predicated region
        $region13: #{autoencoder_forward.1} parent=11 // pred_check
          %p252 = pneg %p64
        $region14: #{autoencoder_forward.1} parent=11 // pred_check_branch
          %254 = sbr.rel (%p252) target = $region16
        $region15: #{autoencoder_forward.1} parent=11 // pred_region
          %s256 = ssub.s32 256, 256
          %257 = vsyncadd [#allocation7], %s256
          %s258 = sshll.u32 [#allocation6], 4
          %s259 = int_to_ptr.vmem [resolvable:$true] %s258
          %264 = dma.hbm_to_vmem [thread:$0]  %s1, 256, %s259, [#allocation7], 128, 128, 8
        $region16: #{autoencoder_forward.1} parent=11 // pred_fallthru
          _
        // Predicated region
        $region17: #{autoencoder_forward.1} parent=11 // pred_check
          %p265 = pneg %p85
        $region18: #{autoencoder_forward.1} parent=11 // pred_check_branch
          %267 = sbr.rel (%p265) target = $region20
        $region19: #{autoencoder_forward.1} parent=11 // pred_region
          _
        $region20: #{autoencoder_forward.1} parent=11 // pred_fallthru
          _
        // Predicated region
        $region21: #{autoencoder_forward.1} parent=11 // pred_check
          %p268 = pneg %p106
        $region22: #{autoencoder_forward.1} parent=11 // pred_check_branch
          %270 = sbr.rel (%p268) target = $region24
        $region23: #{autoencoder_forward.1} parent=11 // pred_region
          _
        $region24: #{autoencoder_forward.1} parent=11 // pred_fallthru
          _
        // Predicated region
        $region25: #{autoencoder_forward.1} parent=11 // pred_check
          %p271 = pneg %p127
        $region26: #{autoencoder_forward.1} parent=11 // pred_check_branch
          %273 = sbr.rel (%p271) target = $region28
        $region27: #{autoencoder_forward.1} parent=11 // pred_region
          _
        $region28: #{autoencoder_forward.1} parent=11 // pred_fallthru
          _
        // Predicated region
        $region29: #{autoencoder_forward.1} parent=11 // pred_check
          %p274 = pneg %p148
        $region30: #{autoencoder_forward.1} parent=11 // pred_check_branch
          %276 = sbr.rel (%p274) target = $region32
        $region31: #{autoencoder_forward.1} parent=11 // pred_region
          _
        $region32: #{autoencoder_forward.1} parent=11 // pred_fallthru
          _
        // Predicated region
        $region33: #{autoencoder_forward.1} parent=11 // pred_check
          %p277 = pneg %p169
        $region34: #{autoencoder_forward.1} parent=11 // pred_check_branch
          %279 = sbr.rel (%p277) target = $region36
        $region35: #{autoencoder_forward.1} parent=11 // pred_region
          _
        $region36: #{autoencoder_forward.1} parent=11 // pred_fallthru
          _
        // Predicated region
        $region37: #{autoencoder_forward.1} parent=11 // pred_check
          %p280 = pneg %p190
        $region38: #{autoencoder_forward.1} parent=11 // pred_check_branch
          %282 = sbr.rel (%p280) target = $region40
        $region39: #{autoencoder_forward.1} parent=11 // pred_region
          %s284 = ssub.s32 18432, 18432
          %285 = vsyncadd [#allocation9], %s284
          %s286 = sshll.u32 [#allocation8], 4
          %s287 = int_to_ptr.vmem [resolvable:$true] %s286
          %292 = dma.hbm_to_vmem [thread:$0]  %s7, 18432, %s287, [#allocation9], 128, 128, 8
        $region40: #{autoencoder_forward.1} parent=11 // pred_fallthru
          _
        // Predicated region
        $region41: #{autoencoder_forward.1} parent=11 // pred_check
          %p293 = pneg %p211
        $region42: #{autoencoder_forward.1} parent=11 // pred_check_branch
          %295 = sbr.rel (%p293) target = $region44
        $region43: #{autoencoder_forward.1} parent=11 // pred_region
          _
        $region44: #{autoencoder_forward.1} parent=11 // pred_fallthru
          _
      $region12: #{autoencoder_forward.1} parent=5 // pred_fallthru
        _
      %p296 = scmp.lt.s32.totalorder %s17, 2
      // Predicated region
      $region45: #{autoencoder_forward.1} parent=5 // pred_check
        %p297 = pneg %p296
      $region46: #{autoencoder_forward.1} parent=5 // pred_check_branch
        %299 = sbr.rel (%p297) target = $region48
      $region47: #{autoencoder_forward.1} parent=5 // pred_region
        // Predicated region
        $region49: #{autoencoder_forward.1} parent=47 // pred_check
          %p300 = pneg %p37
        $region50: #{autoencoder_forward.1} parent=47 // pred_check_branch
          %302 = sbr.rel (%p300) target = $region52
        $region51: #{autoencoder_forward.1} parent=47 // pred_region
          %p303 = scmp.lt.s32.totalorder %s17, 1
          %s304 = scalar_select %p303, %s17, 1
          %s305 = smul.addr %s304, 41
          %s306 = smul.addr %s305, 8
          %s307 = scalar_lea.vmem %s0, %s306
        $region52: #{autoencoder_forward.1} parent=47 // pred_fallthru
          _
      $region48: #{autoencoder_forward.1} parent=5 // pred_fallthru
        _
      %p308 = scmp.le.s32.totalorder 1, %s17
      %p309 = scmp.lt.s32.totalorder %s17, 3
      %p310 = pnand %p308, %p309
      %p311 = pneg %p310
      // Predicated region
      $region53: #{autoencoder_forward.1} parent=5 // pred_check
        _
      $region54: #{autoencoder_forward.1} parent=5 // pred_check_branch
        %313 = sbr.rel (%p310) target = $region56
      $region55: #{autoencoder_forward.1} parent=5 // pred_region
        %s314 = ssub.s32 %s17, 1
        // Predicated region
        $region57: #{autoencoder_forward.1} parent=55 // pred_check
          %p315 = pneg %p64
        $region58: #{autoencoder_forward.1} parent=55 // pred_check_branch
          %317 = sbr.rel (%p315) target = $region60
        $region59: #{autoencoder_forward.1} parent=55 // pred_region
          %318 = dma.done [#allocation7], 256
        $region60: #{autoencoder_forward.1} parent=55 // pred_fallthru
          _
        // Predicated region
        $region61: #{autoencoder_forward.1} parent=55 // pred_check
          %p319 = pneg %p190
        $region62: #{autoencoder_forward.1} parent=55 // pred_check_branch
          %321 = sbr.rel (%p319) target = $region64
        $region63: #{autoencoder_forward.1} parent=55 // pred_region
          %322 = dma.done [#allocation9], 18432
        $region64: #{autoencoder_forward.1} parent=55 // pred_fallthru
          _
        %p323 = scmp.lt.s32.totalorder %s22, 1
        %s324 = scalar_select %p323, %s22, 1
        %s325 = smul.addr %s324, 41
        %s326 = smul.addr %s325, 8
        %s327 = scalar_lea.vmem %s0, %s326
        %p328 = pneg %p43
        %p329 = pneg %p40
        %p330 = pneg %p64
        %p331 = pneg %p61
        %p332 = pneg %p85
        %p333 = pneg %p82
        %p334 = pneg %p106
        %p335 = pneg %p103
        %p336 = pneg %p127
        %p337 = pneg %p124
        %p338 = pneg %p148
        %p339 = pneg %p145
        %p340 = pneg %p169
        %p341 = pneg %p166
        %p342 = pneg %p190
        %p343 = pneg %p187
        %p344 = pneg %p211
        %p345 = pneg %p208
        %p346 = pneg %p237
        %p347 = pneg %p234
        %p348 = scmp.lt.s32.totalorder %s22, 1
        %s349 = scalar_select %p348, %s22, 1
        %s350 = smul.addr %s349, 44
        %s351 = smul.addr %s350, 8
        %s352 = scalar_lea.vmem %s9, %s351
        %p353 = scmp.lt.s32.totalorder %s22, 1
        %s354 = scalar_select %p353, %s22, 1
        %s355 = smul.addr %s354, 41
        %s356 = smul.addr %s355, 8
        %s357 = scalar_lea.vmem %s0, %s356
        %p358 = scmp.lt.s32.totalorder %s22, 1
        %s359 = scalar_select %p358, %s22, 1
        %s360 = smul.addr %s359, 44
        %s361 = smul.addr %s360, 8
        %s362 = scalar_lea.vmem %s9, %s361
        %363 = vst [vmem:[#allocation3] sm:$0xff] 0.0
        %364 = vst [vmem:[#allocation3 + $0x8] sm:$0xff] 0.0
        %365 = vst [vmem:[#allocation3 + $0x10] sm:$0xff] 0.0
        %366 = vst [vmem:[#allocation3 + $0x18] sm:$0xff] 0.0
        %367 = vst [vmem:[#allocation3 + $0x20] sm:$0xff] 0.0
        %368 = vst [vmem:[#allocation3 + $0x28] sm:$0xff] 0.0
        %369 = vst [vmem:[#allocation3 + $0x30] sm:$0xff] 0.0
        %370 = vst [vmem:[#allocation3 + $0x38] sm:$0xff] 0.0
        %371 = vst [vmem:[#allocation3 + $0x40] sm:$0xff] 0.0
        %372 = vst [vmem:[#allocation3 + $0x48] sm:$0xff] 0.0
        %373 = vst [vmem:[#allocation3 + $0x50] sm:$0xff] 0.0
        %374 = vst [vmem:[#allocation3 + $0x58] sm:$0xff] 0.0
        %375 = vst [vmem:[#allocation3 + $0x60] sm:$0xff] 0.0
        %376 = vst [vmem:[#allocation3 + $0x68] sm:$0xff] 0.0
        %377 = vst [vmem:[#allocation3 + $0x70] sm:$0xff] 0.0
        %378 = vst [vmem:[#allocation3 + $0x78] sm:$0x3] 0.0
        %379 = vst [vmem:[#allocation4] sm:$0xff] 0.0
        %380 = vst [vmem:[#allocation4 + $0x8] sm:$0xff] 0.0
        %381 = vst [vmem:[#allocation4 + $0x10] sm:$0xff] 0.0
        %382 = vst [vmem:[#allocation4 + $0x18] sm:$0x7f] 0.0
        %383 = vst [vmem:[#allocation5] sm:$0xff] 0.0
        %384 = vst [vmem:[#allocation5 + $0x8] sm:$0xff] 0.0
        %385 = vst [vmem:[#allocation5 + $0x10] sm:$0xff] 0.0
        %386 = vst [vmem:[#allocation5 + $0x18] sm:$0xff] 0.0
        %387 = vst [vmem:[#allocation5 + $0x20] sm:$0xff] 0.0
        %388 = vst [vmem:[#allocation5 + $0x28] sm:$0xff] 0.0
        %389 = vst [vmem:[#allocation5 + $0x30] sm:$0xff] 0.0
        %390 = vst [vmem:[#allocation5 + $0x38] sm:$0xff] 0.0
        %391 = vst [vmem:[#allocation5 + $0x40] sm:$0xff] 0.0
        %392 = vst [vmem:[#allocation5 + $0x48] sm:$0xff] 0.0
        %393 = vst [vmem:[#allocation5 + $0x50] sm:$0xff] 0.0
        %394 = vst [vmem:[#allocation5 + $0x58] sm:$0x7] 0.0
        %v395 = vld [vmem:[%s357] sm:$0xff]
        %v396 = vld [vmem:[%s357 + $0x8] sm:$0xff]
        %v397 = vld [vmem:[%s357 + $0x10] sm:$0xff]
        %v398 = vld [vmem:[%s357 + $0x18] sm:$0xff]
        %v399 = vld [vmem:[%s357 + $0x20] sm:$0xff]
        %v400 = vld [vmem:[%s357 + $0x28] sm:$0xff]
        %v401 = vld [vmem:[%s357 + $0x30] sm:$0xff]
        %v402 = vld [vmem:[%s357 + $0x38] sm:$0xff]
        %v403 = vld [vmem:[%s357 + $0x40] sm:$0xff]
        %v404 = vld [vmem:[%s357 + $0x48] sm:$0xff]
        %v405 = vld [vmem:[%s357 + $0x50] sm:$0xff]
        %v406 = vld [vmem:[%s357 + $0x58] sm:$0xff]
        %v407 = vld [vmem:[%s357 + $0x60] sm:$0xff]
        %v408 = vld [vmem:[%s357 + $0x68] sm:$0xff]
        %v409 = vld [vmem:[%s357 + $0x70] sm:$0xff]
        %v410 = vld [vmem:[%s357 + $0x78] sm:$0xff]
        %v411 = vld [vmem:[%s357 + $0x80] sm:$0xff]
        %v412 = vld [vmem:[%s357 + $0x88] sm:$0xff]
        %v413 = vld [vmem:[%s357 + $0x90] sm:$0xff]
        %v414 = vld [vmem:[%s357 + $0x98] sm:$0xff]
        %v415 = vld [vmem:[%s357 + $0xa0] sm:$0xff]
        %v416 = vld [vmem:[%s357 + $0xa8] sm:$0xff]
        %v417 = vld [vmem:[%s357 + $0xb0] sm:$0xff]
        %v418 = vld [vmem:[%s357 + $0xb8] sm:$0xff]
        %v419 = vld [vmem:[%s357 + $0xc0] sm:$0xff]
        %v420 = vld [vmem:[%s357 + $0xc8] sm:$0xff]
        %v421 = vld [vmem:[%s357 + $0xd0] sm:$0xff]
        %v422 = vld [vmem:[%s357 + $0xd8] sm:$0xff]
        %v423 = vld [vmem:[%s357 + $0xe0] sm:$0xff]
        %v424 = vld [vmem:[%s357 + $0xe8] sm:$0xff]
        %v425 = vld [vmem:[%s357 + $0xf0] sm:$0xff]
        %v426 = vld [vmem:[%s357 + $0xf8] sm:$0xff]
        %v427 = vld [vmem:[%s357 + $0x100] sm:$0xff]
        %v428 = vld [vmem:[%s357 + $0x108] sm:$0xff]
        %v429 = vld [vmem:[%s357 + $0x110] sm:$0xff]
        %v430 = vld [vmem:[%s357 + $0x118] sm:$0xff]
        %v431 = vld [vmem:[%s357 + $0x120] sm:$0xff]
        %v432 = vld [vmem:[%s357 + $0x128] sm:$0xff]
        %v433 = vld [vmem:[%s357 + $0x130] sm:$0xff]
        %v434 = vld [vmem:[%s357 + $0x138] sm:$0xff]
        %v435 = vld [vmem:[%s357 + $0x140] sm:$0xf]
        %v436 = vld [vmem:[#allocation6] sm:$0xff]
        %v437 = vld [vmem:[#allocation6 + $0x8] sm:$0xff]
        %vm438 = vcmask 130048
        %v440 = vsel %vm438, %v395, 0
        %v443 = vsel %vm438, %v396, 0
        %v446 = vsel %vm438, %v397, 0
        %v449 = vsel %vm438, %v398, 0
        %v452 = vsel %vm438, %v399, 0
        %v455 = vsel %vm438, %v400, 0
        %v458 = vsel %vm438, %v401, 0
        %v461 = vsel %vm438, %v402, 0
        %v464 = vsel %vm438, %v403, 0
        %v467 = vsel %vm438, %v404, 0
        %v470 = vsel %vm438, %v405, 0
        %v473 = vsel %vm438, %v406, 0
        %v476 = vsel %vm438, %v407, 0
        %v479 = vsel %vm438, %v408, 0
        %v482 = vsel %vm438, %v409, 0
        %v485 = vsel %vm438, %v410, 0
        %v488 = vsel %vm438, %v411, 0
        %v491 = vsel %vm438, %v412, 0
        %v494 = vsel %vm438, %v413, 0
        %v497 = vsel %vm438, %v414, 0
        %v500 = vsel %vm438, %v415, 0
        %v503 = vsel %vm438, %v416, 0
        %v506 = vsel %vm438, %v417, 0
        %v509 = vsel %vm438, %v418, 0
        %v512 = vsel %vm438, %v419, 0
        %v515 = vsel %vm438, %v420, 0
        %v518 = vsel %vm438, %v421, 0
        %v521 = vsel %vm438, %v422, 0
        %v524 = vsel %vm438, %v423, 0
        %v527 = vsel %vm438, %v424, 0
        %v530 = vsel %vm438, %v425, 0
        %v533 = vsel %vm438, %v426, 0
        %v536 = vsel %vm438, %v427, 0
        %v539 = vsel %vm438, %v428, 0
        %v542 = vsel %vm438, %v429, 0
        %v545 = vsel %vm438, %v430, 0
        %v548 = vsel %vm438, %v431, 0
        %v551 = vsel %vm438, %v432, 0
        %v554 = vsel %vm438, %v433, 0
        %v557 = vsel %vm438, %v434, 0
        %v560 = vsel %vm438, %v435, 0
        %562 = vmatprep.subr.mxu0 0.0
        %563 = vmatpush1.msra.mxu0 %v436
        %564 = vmatprep.subr.mxu0 0.0
        %565 = vmatpush1.msra.mxu0 %v437
        %566 = vmatprep.subr.mxu0 0.0
        %567 = vmatpush1.msra.mxu0 0.0
        %568 = vmatprep.subr.mxu0 0.0
        %569 = vmatpush1.msra.mxu0 0.0
        %570 = vmatprep.subr.mxu0 0.0
        %571 = vmatpush1.msra.mxu0 0.0
        %572 = vmatprep.subr.mxu0 0.0
        %573 = vmatpush1.msra.mxu0 0.0
        %574 = vmatprep.subr.mxu0 0.0
        %575 = vmatpush1.msra.mxu0 0.0
        %576 = vmatprep.subr.mxu0 0.0
        %577 = vmatpush1.msra.mxu0 0.0
        %578 = vmatprep.subr.mxu0 0.0
        %579 = vmatpush1.msra.mxu0 0.0
        %580 = vmatprep.subr.mxu0 0.0
        %581 = vmatpush1.msra.mxu0 0.0
        %582 = vmatprep.subr.mxu0 0.0
        %583 = vmatpush1.msra.mxu0 0.0
        %584 = vmatprep.subr.mxu0 0.0
        %585 = vmatpush1.msra.mxu0 0.0
        %586 = vmatprep.subr.mxu0 0.0
        %587 = vmatpush1.msra.mxu0 0.0
        %588 = vmatprep.subr.mxu0 0.0
        %589 = vmatpush1.msra.mxu0 0.0
        %590 = vmatprep.subr.mxu0 0.0
        %591 = vmatpush1.msra.mxu0 0.0
        %592 = vmatprep.subr.mxu0 0.0
        %593 = vmatpush1.msra.mxu0 0.0
        %594 = vmatprep.subr.mxu0 0.0
        %595 = vmatpush1.msra.mxu0 0.0
        %596 = vmatprep.subr.mxu0 0.0
        %597 = vmatpush1.msra.mxu0 0.0
        %598 = vmatprep.subr.mxu0 0.0
        %599 = vmatpush1.msra.mxu0 0.0
        %600 = vmatprep.subr.mxu0 0.0
        %601 = vmatpush1.msra.mxu0 0.0
        %602 = vmatprep.subr.mxu0 0.0
        %603 = vmatpush1.msra.mxu0 0.0
        %604 = vmatprep.subr.mxu0 0.0
        %605 = vmatpush1.msra.mxu0 0.0
        %606 = vmatprep.subr.mxu0 0.0
        %607 = vmatpush1.msra.mxu0 0.0
        %608 = vmatprep.subr.mxu0 0.0
        %609 = vmatpush1.msra.mxu0 0.0
        %610 = vmatprep.subr.mxu0 0.0
        %611 = vmatpush1.msra.mxu0 0.0
        %612 = vmatprep.subr.mxu0 0.0
        %613 = vmatpush1.msra.mxu0 0.0
        %614 = vmatprep.subr.mxu0 0.0
        %615 = vmatpush1.msra.mxu0 0.0
        %616 = vmatprep.subr.mxu0 0.0
        %617 = vmatpush1.msra.mxu0 0.0
        %618 = vmatprep.subr.mxu0 0.0
        %619 = vmatpush1.msra.mxu0 0.0
        %620 = vmatprep.subr.mxu0 0.0
        %621 = vmatpush1.msra.mxu0 0.0
        %622 = vmatprep.subr.mxu0 0.0
        %623 = vmatpush1.msra.mxu0 0.0
        %624 = vmatprep.subr.mxu0 0.0
        %625 = vmatpush1.msra.mxu0 0.0
        %626 = vmatprep.mubr.f32.mxu0 0.0
        %627 = vmatmul.mubr.f32.gmra.mrb[0].mxu0 %v440
        %v628 = vpop.f32.mrb[0].mxu0
        %v629 = vadd.f32 0.0, %v628
        %v630 = vpop.f32.mrb[0].mxu0
        %631 = vmatprep.mubr.f32.mxu0 0.0
        %632 = vmatmul.mubr.f32.gmra.mrb[0].mxu0 %v443
        %v633 = vpop.f32.mrb[0].mxu0
        %v634 = vadd.f32 0.0, %v633
        %v635 = vpop.f32.mrb[0].mxu0
        %636 = vmatprep.mubr.f32.mxu0 0.0
        %637 = vmatmul.mubr.f32.gmra.mrb[0].mxu0 %v446
        %v638 = vpop.f32.mrb[0].mxu0
        %v639 = vadd.f32 0.0, %v638
        %v640 = vpop.f32.mrb[0].mxu0
        %641 = vmatprep.mubr.f32.mxu0 0.0
        %642 = vmatmul.mubr.f32.gmra.mrb[0].mxu0 %v449
        %v643 = vpop.f32.mrb[0].mxu0
        %v644 = vadd.f32 0.0, %v643
        %v645 = vpop.f32.mrb[0].mxu0
        %646 = vmatprep.mubr.f32.mxu0 0.0
        %647 = vmatmul.mubr.f32.gmra.mrb[0].mxu0 %v452
        %v648 = vpop.f32.mrb[0].mxu0
        %v649 = vadd.f32 0.0, %v648
        %v650 = vpop.f32.mrb[0].mxu0
        %651 = vmatprep.mubr.f32.mxu0 0.0
        %652 = vmatmul.mubr.f32.gmra.mrb[0].mxu0 %v455
        %v653 = vpop.f32.mrb[0].mxu0
        %v654 = vadd.f32 0.0, %v653
        %v655 = vpop.f32.mrb[0].mxu0
        %656 = vmatprep.mubr.f32.mxu0 0.0
        %657 = vmatmul.mubr.f32.gmra.mrb[0].mxu0 %v458
        %v658 = vpop.f32.mrb[0].mxu0
        %v659 = vadd.f32 0.0, %v658
        %v660 = vpop.f32.mrb[0].mxu0
        %661 = vmatprep.mubr.f32.mxu0 0.0
        %662 = vmatmul.mubr.f32.gmra.mrb[0].mxu0 %v461
        %v663 = vpop.f32.mrb[0].mxu0
        %v664 = vadd.f32 0.0, %v663
        %v665 = vpop.f32.mrb[0].mxu0
        %666 = vmatprep.mubr.f32.mxu0 0.0
        %667 = vmatmul.mubr.f32.gmra.mrb[0].mxu0 %v464
        %v668 = vpop.f32.mrb[0].mxu0
        %v669 = vadd.f32 0.0, %v668
        %v670 = vpop.f32.mrb[0].mxu0
        %671 = vmatprep.mubr.f32.mxu0 0.0
        %672 = vmatmul.mubr.f32.gmra.mrb[0].mxu0 %v467
        %v673 = vpop.f32.mrb[0].mxu0
        %v674 = vadd.f32 0.0, %v673
        %v675 = vpop.f32.mrb[0].mxu0
        %676 = vmatprep.mubr.f32.mxu0 0.0
        %677 = vmatmul.mubr.f32.gmra.mrb[0].mxu0 %v470
        %v678 = vpop.f32.mrb[0].mxu0
        %v679 = vadd.f32 0.0, %v678
        %v680 = vpop.f32.mrb[0].mxu0
        %681 = vmatprep.mubr.f32.mxu0 0.0
        %682 = vmatmul.mubr.f32.gmra.mrb[0].mxu0 %v473
        %v683 = vpop.f32.mrb[0].mxu0
        %v684 = vadd.f32 0.0, %v683
        %v685 = vpop.f32.mrb[0].mxu0
        %686 = vmatprep.mubr.f32.mxu0 0.0
        %687 = vmatmul.mubr.f32.gmra.mrb[0].mxu0 %v476
        %v688 = vpop.f32.mrb[0].mxu0
        %v689 = vadd.f32 0.0, %v688
        %v690 = vpop.f32.mrb[0].mxu0
        %691 = vmatprep.mubr.f32.mxu0 0.0
        %692 = vmatmul.mubr.f32.gmra.mrb[0].mxu0 %v479
        %v693 = vpop.f32.mrb[0].mxu0
        %v694 = vadd.f32 0.0, %v693
        %v695 = vpop.f32.mrb[0].mxu0
        %696 = vmatprep.mubr.f32.mxu0 0.0
        %697 = vmatmul.mubr.f32.gmra.mrb[0].mxu0 %v482
        %v698 = vpop.f32.mrb[0].mxu0
        %v699 = vadd.f32 0.0, %v698
        %v700 = vpop.f32.mrb[0].mxu0
        %701 = vmatprep.mubr.f32.mxu0 0.0
        %702 = vmatmul.mubr.f32.gmra.mrb[0].mxu0 %v485
        %v703 = vpop.f32.mrb[0].mxu0
        %v704 = vadd.f32 0.0, %v703
        %v705 = vpop.f32.mrb[0].mxu0
        %706 = vmatprep.mubr.f32.mxu0 0.0
        %707 = vmatmul.mubr.f32.gmra.mrb[0].mxu0 %v488
        %v708 = vpop.f32.mrb[0].mxu0
        %v709 = vadd.f32 0.0, %v708
        %v710 = vpop.f32.mrb[0].mxu0
        %711 = vmatprep.mubr.f32.mxu0 0.0
        %712 = vmatmul.mubr.f32.gmra.mrb[0].mxu0 %v491
        %v713 = vpop.f32.mrb[0].mxu0
        %v714 = vadd.f32 0.0, %v713
        %v715 = vpop.f32.mrb[0].mxu0
        %716 = vmatprep.mubr.f32.mxu0 0.0
        %717 = vmatmul.mubr.f32.gmra.mrb[0].mxu0 %v494
        %v718 = vpop.f32.mrb[0].mxu0
        %v719 = vadd.f32 0.0, %v718
        %v720 = vpop.f32.mrb[0].mxu0
        %721 = vmatprep.mubr.f32.mxu0 0.0
        %722 = vmatmul.mubr.f32.gmra.mrb[0].mxu0 %v497
        %v723 = vpop.f32.mrb[0].mxu0
        %v724 = vadd.f32 0.0, %v723
        %v725 = vpop.f32.mrb[0].mxu0
        %726 = vmatprep.mubr.f32.mxu0 0.0
        %727 = vmatmul.mubr.f32.gmra.mrb[0].mxu0 %v500
        %v728 = vpop.f32.mrb[0].mxu0
        %v729 = vadd.f32 0.0, %v728
        %v730 = vpop.f32.mrb[0].mxu0
        %731 = vmatprep.mubr.f32.mxu0 0.0
        %732 = vmatmul.mubr.f32.gmra.mrb[0].mxu0 %v503
        %v733 = vpop.f32.mrb[0].mxu0
        %v734 = vadd.f32 0.0, %v733
        %v735 = vpop.f32.mrb[0].mxu0
        %736 = vmatprep.mubr.f32.mxu0 0.0
        %737 = vmatmul.mubr.f32.gmra.mrb[0].mxu0 %v506
        %v738 = vpop.f32.mrb[0].mxu0
        %v739 = vadd.f32 0.0, %v738
        %v740 = vpop.f32.mrb[0].mxu0
        %741 = vmatprep.mubr.f32.mxu0 0.0
        %742 = vmatmul.mubr.f32.gmra.mrb[0].mxu0 %v509
        %v743 = vpop.f32.mrb[0].mxu0
        %v744 = vadd.f32 0.0, %v743
        %v745 = vpop.f32.mrb[0].mxu0
        %746 = vmatprep.mubr.f32.mxu0 0.0
        %747 = vmatmul.mubr.f32.gmra.mrb[0].mxu0 %v512
        %v748 = vpop.f32.mrb[0].mxu0
        %v749 = vadd.f32 0.0, %v748
        %v750 = vpop.f32.mrb[0].mxu0
        %751 = vmatprep.mubr.f32.mxu0 0.0
        %752 = vmatmul.mubr.f32.gmra.mrb[0].mxu0 %v515
        %v753 = vpop.f32.mrb[0].mxu0
        %v754 = vadd.f32 0.0, %v753
        %v755 = vpop.f32.mrb[0].mxu0
        %756 = vmatprep.mubr.f32.mxu0 0.0
        %757 = vmatmul.mubr.f32.gmra.mrb[0].mxu0 %v518
        %v758 = vpop.f32.mrb[0].mxu0
        %v759 = vadd.f32 0.0, %v758
        %v760 = vpop.f32.mrb[0].mxu0
        %761 = vmatprep.mubr.f32.mxu0 0.0
        %762 = vmatmul.mubr.f32.gmra.mrb[0].mxu0 %v521
        %v763 = vpop.f32.mrb[0].mxu0
        %v764 = vadd.f32 0.0, %v763
        %v765 = vpop.f32.mrb[0].mxu0
        %766 = vmatprep.mubr.f32.mxu0 0.0
        %767 = vmatmul.mubr.f32.gmra.mrb[0].mxu0 %v524
        %v768 = vpop.f32.mrb[0].mxu0
        %v769 = vadd.f32 0.0, %v768
        %v770 = vpop.f32.mrb[0].mxu0
        %771 = vmatprep.mubr.f32.mxu0 0.0
        %772 = vmatmul.mubr.f32.gmra.mrb[0].mxu0 %v527
        %v773 = vpop.f32.mrb[0].mxu0
        %v774 = vadd.f32 0.0, %v773
        %v775 = vpop.f32.mrb[0].mxu0
        %776 = vmatprep.mubr.f32.mxu0 0.0
        %777 = vmatmul.mubr.f32.gmra.mrb[0].mxu0 %v530
        %v778 = vpop.f32.mrb[0].mxu0
        %v779 = vadd.f32 0.0, %v778
        %v780 = vpop.f32.mrb[0].mxu0
        %781 = vmatprep.mubr.f32.mxu0 0.0
        %782 = vmatmul.mubr.f32.gmra.mrb[0].mxu0 %v533
        %v783 = vpop.f32.mrb[0].mxu0
        %v784 = vadd.f32 0.0, %v783
        %v785 = vpop.f32.mrb[0].mxu0
        %786 = vmatprep.mubr.f32.mxu0 0.0
        %787 = vmatmul.mubr.f32.gmra.mrb[0].mxu0 %v536
        %v788 = vpop.f32.mrb[0].mxu0
        %v789 = vadd.f32 0.0, %v788
        %v790 = vpop.f32.mrb[0].mxu0
        %791 = vmatprep.mubr.f32.mxu0 0.0
        %792 = vmatmul.mubr.f32.gmra.mrb[0].mxu0 %v539
        %v793 = vpop.f32.mrb[0].mxu0
        %v794 = vadd.f32 0.0, %v793
        %v795 = vpop.f32.mrb[0].mxu0
        %796 = vmatprep.mubr.f32.mxu0 0.0
        %797 = vmatmul.mubr.f32.gmra.mrb[0].mxu0 %v542
        %v798 = vpop.f32.mrb[0].mxu0
        %v799 = vadd.f32 0.0, %v798
        %v800 = vpop.f32.mrb[0].mxu0
        %801 = vmatprep.mubr.f32.mxu0 0.0
        %802 = vmatmul.mubr.f32.gmra.mrb[0].mxu0 %v545
        %v803 = vpop.f32.mrb[0].mxu0
        %v804 = vadd.f32 0.0, %v803
        %v805 = vpop.f32.mrb[0].mxu0
        %806 = vmatprep.mubr.f32.mxu0 0.0
        %807 = vmatmul.mubr.f32.gmra.mrb[0].mxu0 %v548
        %v808 = vpop.f32.mrb[0].mxu0
        %v809 = vadd.f32 0.0, %v808
        %v810 = vpop.f32.mrb[0].mxu0
        %811 = vmatprep.mubr.f32.mxu0 0.0
        %812 = vmatmul.mubr.f32.gmra.mrb[0].mxu0 %v551
        %v813 = vpop.f32.mrb[0].mxu0
        %v814 = vadd.f32 0.0, %v813
        %v815 = vpop.f32.mrb[0].mxu0
        %816 = vmatprep.mubr.f32.mxu0 0.0
        %817 = vmatmul.mubr.f32.gmra.mrb[0].mxu0 %v554
        %v818 = vpop.f32.mrb[0].mxu0
        %v819 = vadd.f32 0.0, %v818
        %v820 = vpop.f32.mrb[0].mxu0
        %821 = vmatprep.mubr.f32.mxu0 0.0
        %822 = vmatmul.mubr.f32.gmra.mrb[0].mxu0 %v557
        %v823 = vpop.f32.mrb[0].mxu0
        %v824 = vadd.f32 0.0, %v823
        %v825 = vpop.f32.mrb[0].mxu0
        %826 = vmatprep.mubr.f32.mxu0 0.0
        %827 = vmatmul.mubr.f32.gmra.mrb[0].mxu0 %v560
        %v828 = vpop.f32.mrb[0].mxu0
        %v829 = vadd.f32 0.0, %v828
        %v830 = vpop.f32.mrb[0].mxu0
        %831 = vdwg.mxu0
        %832 = vst [vmem:[#allocation2] sm:$0xff] %v629
        %833 = vst [vmem:[#allocation2 + $0x8] sm:$0xff] %v634
        %834 = vst [vmem:[#allocation2 + $0x10] sm:$0xff] %v639
        %835 = vst [vmem:[#allocation2 + $0x18] sm:$0xff] %v644
        %836 = vst [vmem:[#allocation2 + $0x20] sm:$0xff] %v649
        %837 = vst [vmem:[#allocation2 + $0x28] sm:$0xff] %v654
        %838 = vst [vmem:[#allocation2 + $0x30] sm:$0xff] %v659
        %839 = vst [vmem:[#allocation2 + $0x38] sm:$0xff] %v664
        %840 = vst [vmem:[#allocation2 + $0x40] sm:$0xff] %v669
        %841 = vst [vmem:[#allocation2 + $0x48] sm:$0xff] %v674
        %842 = vst [vmem:[#allocation2 + $0x50] sm:$0xff] %v679
        %843 = vst [vmem:[#allocation2 + $0x58] sm:$0xff] %v684
        %844 = vst [vmem:[#allocation2 + $0x60] sm:$0xff] %v689
        %845 = vst [vmem:[#allocation2 + $0x68] sm:$0xff] %v694
        %846 = vst [vmem:[#allocation2 + $0x70] sm:$0xff] %v699
        %847 = vst [vmem:[#allocation2 + $0x78] sm:$0xff] %v704
        %848 = vst [vmem:[#allocation2 + $0x80] sm:$0xff] %v709
        %849 = vst [vmem:[#allocation2 + $0x88] sm:$0xff] %v714
        %850 = vst [vmem:[#allocation2 + $0x90] sm:$0xff] %v719
        %851 = vst [vmem:[#allocation2 + $0x98] sm:$0xff] %v724
        %852 = vst [vmem:[#allocation2 + $0xa0] sm:$0xff] %v729
        %853 = vst [vmem:[#allocation2 + $0xa8] sm:$0xff] %v734
        %854 = vst [vmem:[#allocation2 + $0xb0] sm:$0xff] %v739
        %855 = vst [vmem:[#allocation2 + $0xb8] sm:$0xff] %v744
        %856 = vst [vmem:[#allocation2 + $0xc0] sm:$0xff] %v749
        %857 = vst [vmem:[#allocation2 + $0xc8] sm:$0xff] %v754
        %858 = vst [vmem:[#allocation2 + $0xd0] sm:$0xff] %v759
        %859 = vst [vmem:[#allocation2 + $0xd8] sm:$0xff] %v764
        %860 = vst [vmem:[#allocation2 + $0xe0] sm:$0xff] %v769
        %861 = vst [vmem:[#allocation2 + $0xe8] sm:$0xff] %v774
        %862 = vst [vmem:[#allocation2 + $0xf0] sm:$0xff] %v779
        %863 = vst [vmem:[#allocation2 + $0xf8] sm:$0xff] %v784
        %864 = vst [vmem:[#allocation2 + $0x100] sm:$0xff] %v789
        %865 = vst [vmem:[#allocation2 + $0x108] sm:$0xff] %v794
        %866 = vst [vmem:[#allocation2 + $0x110] sm:$0xff] %v799
        %867 = vst [vmem:[#allocation2 + $0x118] sm:$0xff] %v804
        %868 = vst [vmem:[#allocation2 + $0x120] sm:$0xff] %v809
        %869 = vst [vmem:[#allocation2 + $0x128] sm:$0xff] %v814
        %870 = vst [vmem:[#allocation2 + $0x130] sm:$0xff] %v819
        %871 = vst [vmem:[#allocation2 + $0x138] sm:$0xff] %v824
        %872 = vst [vmem:[#allocation2 + $0x140] sm:$0xf] %v829
        %v873 = vld [vmem:[%s2] sm:$0x1]
        %s874 = scalar_lea.vmem [#allocation2], 19
        %v875 = vld [vmem:[%s874] ss:$2 sm:$0xff]
        %s876 = scalar_lea.vmem [#allocation2], 20
        %v877 = vld [vmem:[%s876] ss:$2 sm:$0xff]
        %v878 = vmax.f32 %v875, %v877
        %s879 = scalar_lea.vmem [#allocation2], 37
        %v880 = vld [vmem:[%s879] ss:$2 sm:$0xff]
        %s881 = scalar_lea.vmem [#allocation2], 38
        %v882 = vld [vmem:[%s881] ss:$2 sm:$0xff]
        %v883 = vmax.f32 %v880, %v882
        %v884 = vmax.f32 %v878, %v883
        %v886 = vlaneseq
        %v887 = vshrl.u32 %v886, 7
        %v888 = vsub.s32 0, %v887
        %v889 = vrot.slane %v873, %v888
        %v891 = vadd.f32 %v884, %v889
        %v892 = vmax.f32 %v891, 0.0
        %893 = vst [vmem:[#allocation3 + $0x16] sm:$0xff] %v892
        %s894 = scalar_lea.vmem [#allocation2], 55
        %v895 = vld [vmem:[%s894] ss:$2 sm:$0xff]
        %s896 = scalar_lea.vmem [#allocation2], 56
        %v897 = vld [vmem:[%s896] ss:$2 sm:$0xff]
        %v898 = vmax.f32 %v895, %v897
        %s899 = scalar_lea.vmem [#allocation2], 73
        %v900 = vld [vmem:[%s899] ss:$2 sm:$0xff]
        %s901 = scalar_lea.vmem [#allocation2], 74
        %v902 = vld [vmem:[%s901] ss:$2 sm:$0xff]
        %v903 = vmax.f32 %v900, %v902
        %v904 = vmax.f32 %v898, %v903
        %v905 = vadd.f32 %v904, %v889
        %v906 = vmax.f32 %v905, 0.0
        %907 = vst [vmem:[#allocation3 + $0x20] sm:$0xff] %v906
        %s908 = scalar_lea.vmem [#allocation2], 91
        %v909 = vld [vmem:[%s908] ss:$2 sm:$0xff]
        %s910 = scalar_lea.vmem [#allocation2], 92
        %v911 = vld [vmem:[%s910] ss:$2 sm:$0xff]
        %v912 = vmax.f32 %v909, %v911
        %s913 = scalar_lea.vmem [#allocation2], 109
        %v914 = vld [vmem:[%s913] ss:$2 sm:$0xff]
        %s915 = scalar_lea.vmem [#allocation2], 110
        %v916 = vld [vmem:[%s915] ss:$2 sm:$0xff]
        %v917 = vmax.f32 %v914, %v916
        %v918 = vmax.f32 %v912, %v917
        %v919 = vadd.f32 %v918, %v889
        %v920 = vmax.f32 %v919, 0.0
        %921 = vst [vmem:[#allocation3 + $0x2a] sm:$0xff] %v920
        %s922 = scalar_lea.vmem [#allocation2], 127
        %v923 = vld [vmem:[%s922] ss:$2 sm:$0xff]
        %s924 = scalar_lea.vmem [#allocation2], 128
        %v925 = vld [vmem:[%s924] ss:$2 sm:$0xff]
        %v926 = vmax.f32 %v923, %v925
        %s927 = scalar_lea.vmem [#allocation2], 145
        %v928 = vld [vmem:[%s927] ss:$2 sm:$0xff]
        %s929 = scalar_lea.vmem [#allocation2], 146
        %v930 = vld [vmem:[%s929] ss:$2 sm:$0xff]
        %v931 = vmax.f32 %v928, %v930
        %v932 = vmax.f32 %v926, %v931
        %v933 = vadd.f32 %v932, %v889
        %v934 = vmax.f32 %v933, 0.0
        %935 = vst [vmem:[#allocation3 + $0x34] sm:$0xff] %v934
        %s936 = scalar_lea.vmem [#allocation2], 163
        %v937 = vld [vmem:[%s936] ss:$2 sm:$0xff]
        %s938 = scalar_lea.vmem [#allocation2], 164
        %v939 = vld [vmem:[%s938] ss:$2 sm:$0xff]
        %v940 = vmax.f32 %v937, %v939
        %s941 = scalar_lea.vmem [#allocation2], 181
        %v942 = vld [vmem:[%s941] ss:$2 sm:$0xff]
        %s943 = scalar_lea.vmem [#allocation2], 182
        %v944 = vld [vmem:[%s943] ss:$2 sm:$0xff]
        %v945 = vmax.f32 %v942, %v944
        %v946 = vmax.f32 %v940, %v945
        %v947 = vadd.f32 %v946, %v889
        %v948 = vmax.f32 %v947, 0.0
        %949 = vst [vmem:[#allocation3 + $0x3e] sm:$0xff] %v948
        %s950 = scalar_lea.vmem [#allocation2], 199
        %v951 = vld [vmem:[%s950] ss:$2 sm:$0xff]
        %s952 = scalar_lea.vmem [#allocation2], 200
        %v953 = vld [vmem:[%s952] ss:$2 sm:$0xff]
        %v954 = vmax.f32 %v951, %v953
        %s955 = scalar_lea.vmem [#allocation2], 217
        %v956 = vld [vmem:[%s955] ss:$2 sm:$0xff]
        %s957 = scalar_lea.vmem [#allocation2], 218
        %v958 = vld [vmem:[%s957] ss:$2 sm:$0xff]
        %v959 = vmax.f32 %v956, %v958
        %v960 = vmax.f32 %v954, %v959
        %v961 = vadd.f32 %v960, %v889
        %v962 = vmax.f32 %v961, 0.0
        %963 = vst [vmem:[#allocation3 + $0x48] sm:$0xff] %v962
        %s964 = scalar_lea.vmem [#allocation2], 235
        %v965 = vld [vmem:[%s964] ss:$2 sm:$0xff]
        %s966 = scalar_lea.vmem [#allocation2], 236
        %v967 = vld [vmem:[%s966] ss:$2 sm:$0xff]
        %v968 = vmax.f32 %v965, %v967
        %s969 = scalar_lea.vmem [#allocation2], 253
        %v970 = vld [vmem:[%s969] ss:$2 sm:$0xff]
        %s971 = scalar_lea.vmem [#allocation2], 254
        %v972 = vld [vmem:[%s971] ss:$2 sm:$0xff]
        %v973 = vmax.f32 %v970, %v972
        %v974 = vmax.f32 %v968, %v973
        %v975 = vadd.f32 %v974, %v889
        %v976 = vmax.f32 %v975, 0.0
        %977 = vst [vmem:[#allocation3 + $0x52] sm:$0xff] %v976
        %s978 = scalar_lea.vmem [#allocation2], 271
        %v979 = vld [vmem:[%s978] ss:$2 sm:$0xff]
        %s980 = scalar_lea.vmem [#allocation2], 272
        %v981 = vld [vmem:[%s980] ss:$2 sm:$0xff]
        %v982 = vmax.f32 %v979, %v981
        %s983 = scalar_lea.vmem [#allocation2], 289
        %v984 = vld [vmem:[%s983] ss:$2 sm:$0xff]
        %s985 = scalar_lea.vmem [#allocation2], 290
        %v986 = vld [vmem:[%s985] ss:$2 sm:$0xff]
        %v987 = vmax.f32 %v984, %v986
        %v988 = vmax.f32 %v982, %v987
        %v989 = vadd.f32 %v988, %v889
        %v990 = vmax.f32 %v989, 0.0
        %991 = vst [vmem:[#allocation3 + $0x5c] sm:$0xff] %v990
        %v992 = vld [vmem:[#allocation3] sm:$0xff]
        %v993 = vld [vmem:[#allocation3 + $0x8] sm:$0xff]
        %v994 = vld [vmem:[#allocation3 + $0x10] sm:$0xff]
        %v995 = vld [vmem:[#allocation3 + $0x18] sm:$0xff]
        %v996 = vld [vmem:[#allocation3 + $0x20] sm:$0xff]
        %v997 = vld [vmem:[#allocation3 + $0x28] sm:$0xff]
        %v998 = vld [vmem:[#allocation3 + $0x30] sm:$0xff]
        %v999 = vld [vmem:[#allocation3 + $0x38] sm:$0xff]
        %v1000 = vld [vmem:[#allocation3 + $0x40] sm:$0xff]
        %v1001 = vld [vmem:[#allocation3 + $0x48] sm:$0xff]
        %v1002 = vld [vmem:[#allocation3 + $0x50] sm:$0xff]
        %v1003 = vld [vmem:[#allocation3 + $0x58] sm:$0xff]
        %v1004 = vld [vmem:[#allocation3 + $0x60] sm:$0xf]
        %v1005 = vld [vmem:[%s3] sm:$0xff]
        %v1006 = vld [vmem:[%s3 + $0x8] sm:$0xff]
        %v1007 = vld [vmem:[%s3 + $0x10] sm:$0xff]
        %v1008 = vld [vmem:[%s3 + $0x18] sm:$0xff]
        %v1009 = vld [vmem:[%s3 + $0x20] sm:$0xff]
        %v1010 = vld [vmem:[%s3 + $0x28] sm:$0xff]
        %v1011 = vld [vmem:[%s3 + $0x30] sm:$0xff]
        %v1012 = vld [vmem:[%s3 + $0x38] sm:$0xff]
        %v1013 = vld [vmem:[%s3 + $0x40] sm:$0xff]
        %v1014 = vld [vmem:[%s3 + $0x48] sm:$0xff]
        %v1015 = vld [vmem:[%s3 + $0x50] sm:$0xff]
        %v1016 = vld [vmem:[%s3 + $0x58] sm:$0xff]
        %v1017 = vld [vmem:[%s3 + $0x60] sm:$0xff]
        %v1018 = vld [vmem:[%s3 + $0x68] sm:$0xff]
        %v1019 = vld [vmem:[%s3 + $0x70] sm:$0xff]
        %v1020 = vld [vmem:[%s3 + $0x78] sm:$0xff]
        %v1021 = vld [vmem:[#allocation3 + $0x1] sm:$0xff]
        %v1022 = vld [vmem:[#allocation3 + $0x9] sm:$0xff]
        %v1023 = vld [vmem:[#allocation3 + $0x11] sm:$0xff]
        %v1024 = vld [vmem:[#allocation3 + $0x19] sm:$0xff]
        %v1025 = vld [vmem:[#allocation3 + $0x21] sm:$0xff]
        %v1026 = vld [vmem:[#allocation3 + $0x29] sm:$0xff]
        %v1027 = vld [vmem:[#allocation3 + $0x31] sm:$0xff]
        %v1028 = vld [vmem:[#allocation3 + $0x39] sm:$0xff]
        %v1029 = vld [vmem:[#allocation3 + $0x41] sm:$0xff]
        %v1030 = vld [vmem:[#allocation3 + $0x49] sm:$0xff]
        %v1031 = vld [vmem:[#allocation3 + $0x51] sm:$0xff]
        %v1032 = vld [vmem:[#allocation3 + $0x59] sm:$0xff]
        %v1033 = vld [vmem:[#allocation3 + $0x61] sm:$0xf]
        %s1034 = scalar_lea.vmem %s3, 128
        %v1035 = vld [vmem:[%s1034] sm:$0xff]
        %v1036 = vld [vmem:[%s1034 + $0x8] sm:$0xff]
        %v1037 = vld [vmem:[%s1034 + $0x10] sm:$0xff]
        %v1038 = vld [vmem:[%s1034 + $0x18] sm:$0xff]
        %v1039 = vld [vmem:[%s1034 + $0x20] sm:$0xff]
        %v1040 = vld [vmem:[%s1034 + $0x28] sm:$0xff]
        %v1041 = vld [vmem:[%s1034 + $0x30] sm:$0xff]
        %v1042 = vld [vmem:[%s1034 + $0x38] sm:$0xff]
        %v1043 = vld [vmem:[%s1034 + $0x40] sm:$0xff]
        %v1044 = vld [vmem:[%s1034 + $0x48] sm:$0xff]
        %v1045 = vld [vmem:[%s1034 + $0x50] sm:$0xff]
        %v1046 = vld [vmem:[%s1034 + $0x58] sm:$0xff]
        %v1047 = vld [vmem:[%s1034 + $0x60] sm:$0xff]
        %v1048 = vld [vmem:[%s1034 + $0x68] sm:$0xff]
        %v1049 = vld [vmem:[%s1034 + $0x70] sm:$0xff]
        %v1050 = vld [vmem:[%s1034 + $0x78] sm:$0xff]
        %1051 = vmatprep.subr.mxu0 0.0
        %1052 = vmatpush1.msra.mxu0 %v1035
        %1053 = vmatprep.subr.mxu0 0.0
        %1054 = vmatpush1.msra.mxu0 %v1036
        %1055 = vmatprep.subr.mxu0 0.0
        %1056 = vmatpush1.msra.mxu0 %v1037
        %1057 = vmatprep.subr.mxu0 0.0
        %1058 = vmatpush1.msra.mxu0 %v1038
        %1059 = vmatprep.subr.mxu0 0.0
        %1060 = vmatpush1.msra.mxu0 %v1039
        %1061 = vmatprep.subr.mxu0 0.0
        %1062 = vmatpush1.msra.mxu0 %v1040
        %1063 = vmatprep.subr.mxu0 0.0
        %1064 = vmatpush1.msra.mxu0 %v1041
        %1065 = vmatprep.subr.mxu0 0.0
        %1066 = vmatpush1.msra.mxu0 %v1042
        %1067 = vmatprep.subr.mxu0 0.0
        %1068 = vmatpush1.msra.mxu0 %v1043
        %1069 = vmatprep.subr.mxu0 0.0
        %1070 = vmatpush1.msra.mxu0 %v1044
        %1071 = vmatprep.subr.mxu0 0.0
        %1072 = vmatpush1.msra.mxu0 %v1045
        %1073 = vmatprep.subr.mxu0 0.0
        %1074 = vmatpush1.msra.mxu0 %v1046
        %1075 = vmatprep.subr.mxu0 0.0
        %1076 = vmatpush1.msra.mxu0 %v1047
        %1077 = vmatprep.subr.mxu0 0.0
        %1078 = vmatpush1.msra.mxu0 %v1048
        %1079 = vmatprep.subr.mxu0 0.0
        %1080 = vmatpush1.msra.mxu0 %v1049
        %1081 = vmatprep.subr.mxu0 0.0
        %1082 = vmatpush1.msra.mxu0 %v1050
        %1083 = vmatprep.subr.mxu0 0.0
        %1084 = vmatpush1.msra.mxu0 0.0
        %1085 = vmatprep.subr.mxu0 0.0
        %1086 = vmatpush1.msra.mxu0 0.0
        %1087 = vmatprep.subr.mxu0 0.0
        %1088 = vmatpush1.msra.mxu0 0.0
        %1089 = vmatprep.subr.mxu0 0.0
        %1090 = vmatpush1.msra.mxu0 0.0
        %1091 = vmatprep.subr.mxu0 0.0
        %1092 = vmatpush1.msra.mxu0 0.0
        %1093 = vmatprep.subr.mxu0 0.0
        %1094 = vmatpush1.msra.mxu0 0.0
        %1095 = vmatprep.subr.mxu0 0.0
        %1096 = vmatpush1.msra.mxu0 0.0
        %1097 = vmatprep.subr.mxu0 0.0
        %1098 = vmatpush1.msra.mxu0 0.0
        %1099 = vmatprep.subr.mxu0 0.0
        %1100 = vmatpush1.msra.mxu0 0.0
        %1101 = vmatprep.subr.mxu0 0.0
        %1102 = vmatpush1.msra.mxu0 0.0
        %1103 = vmatprep.subr.mxu0 0.0
        %1104 = vmatpush1.msra.mxu0 0.0
        %1105 = vmatprep.subr.mxu0 0.0
        %1106 = vmatpush1.msra.mxu0 0.0
        %1107 = vmatprep.subr.mxu0 0.0
        %1108 = vmatpush1.msra.mxu0 0.0
        %1109 = vmatprep.subr.mxu0 0.0
        %1110 = vmatpush1.msra.mxu0 0.0
        %1111 = vmatprep.subr.mxu0 0.0
        %1112 = vmatpush1.msra.mxu0 0.0
        %1113 = vmatprep.subr.mxu0 0.0
        %1114 = vmatpush1.msra.mxu0 0.0
        %1115 = vmatprep.mubr.f32.mxu0 0.0
        %1116 = vmatmul.mubr.f32.gmra.mrb[0].mxu0 %v1021
        %v1117 = vpop.f32.mrb[0].mxu0
        %v1118 = vadd.f32 0.0, %v1117
        %v1119 = vpop.f32.mrb[0].mxu0
        %1120 = vmatprep.mubr.f32.mxu0 0.0
        %1121 = vmatmul.mubr.f32.gmra.mrb[0].mxu0 %v1022
        %v1122 = vpop.f32.mrb[0].mxu0
        %v1123 = vadd.f32 0.0, %v1122
        %v1124 = vpop.f32.mrb[0].mxu0
        %1125 = vmatprep.mubr.f32.mxu0 0.0
        %1126 = vmatmul.mubr.f32.gmra.mrb[0].mxu0 %v1023
        %v1127 = vpop.f32.mrb[0].mxu0
        %v1128 = vadd.f32 0.0, %v1127
        %v1129 = vpop.f32.mrb[0].mxu0
        %1130 = vmatprep.mubr.f32.mxu0 0.0
        %1131 = vmatmul.mubr.f32.gmra.mrb[0].mxu0 %v1024
        %v1132 = vpop.f32.mrb[0].mxu0
        %v1133 = vadd.f32 0.0, %v1132
        %v1134 = vpop.f32.mrb[0].mxu0
        %1135 = vmatprep.mubr.f32.mxu0 0.0
        %1136 = vmatmul.mubr.f32.gmra.mrb[0].mxu0 %v1025
        %v1137 = vpop.f32.mrb[0].mxu0
        %v1138 = vadd.f32 0.0, %v1137
        %v1139 = vpop.f32.mrb[0].mxu0
        %1140 = vmatprep.mubr.f32.mxu0 0.0
        %1141 = vmatmul.mubr.f32.gmra.mrb[0].mxu0 %v1026
        %v1142 = vpop.f32.mrb[0].mxu0
        %v1143 = vadd.f32 0.0, %v1142
        %v1144 = vpop.f32.mrb[0].mxu0
        %1145 = vmatprep.mubr.f32.mxu0 0.0
        %1146 = vmatmul.mubr.f32.gmra.mrb[0].mxu0 %v1027
        %v1147 = vpop.f32.mrb[0].mxu0
        %v1148 = vadd.f32 0.0, %v1147
        %v1149 = vpop.f32.mrb[0].mxu0
        %1150 = vmatprep.mubr.f32.mxu0 0.0
        %1151 = vmatmul.mubr.f32.gmra.mrb[0].mxu0 %v1028
        %v1152 = vpop.f32.mrb[0].mxu0
        %v1153 = vadd.f32 0.0, %v1152
        %v1154 = vpop.f32.mrb[0].mxu0
        %1155 = vmatprep.mubr.f32.mxu0 0.0
        %1156 = vmatmul.mubr.f32.gmra.mrb[0].mxu0 %v1029
        %v1157 = vpop.f32.mrb[0].mxu0
        %v1158 = vadd.f32 0.0, %v1157
        %v1159 = vpop.f32.mrb[0].mxu0
        %1160 = vmatprep.mubr.f32.mxu0 0.0
        %1161 = vmatmul.mubr.f32.gmra.mrb[0].mxu0 %v1030
        %v1162 = vpop.f32.mrb[0].mxu0
        %v1163 = vadd.f32 0.0, %v1162
        %v1164 = vpop.f32.mrb[0].mxu0
        %1165 = vmatprep.mubr.f32.mxu0 0.0
        %1166 = vmatmul.mubr.f32.gmra.mrb[0].mxu0 %v1031
        %v1167 = vpop.f32.mrb[0].mxu0
        %v1168 = vadd.f32 0.0, %v1167
        %v1169 = vpop.f32.mrb[0].mxu0
        %1170 = vmatprep.mubr.f32.mxu0 0.0
        %1171 = vmatmul.mubr.f32.gmra.mrb[0].mxu0 %v1032
        %v1172 = vpop.f32.mrb[0].mxu0
        %v1173 = vadd.f32 0.0, %v1172
        %v1174 = vpop.f32.mrb[0].mxu0
        %1175 = vmatprep.mubr.f32.mxu0 0.0
        %1176 = vmatmul.mubr.f32.gmra.mrb[0].mxu0 %v1033
        %v1177 = vpop.f32.mrb[0].mxu0
        %v1178 = vadd.f32 0.0, %v1177
        %v1179 = vpop.f32.mrb[0].mxu0
        %1180 = vdwg.mxu0
        %1181 = vmatprep.subr.mxu0 0.0
        %1182 = vmatpush1.msra.mxu0 %v1005
        %1183 = vmatprep.subr.mxu0 0.0
        %1184 = vmatpush1.msra.mxu0 %v1006
        %1185 = vmatprep.subr.mxu0 0.0
        %1186 = vmatpush1.msra.mxu0 %v1007
        %1187 = vmatprep.subr.mxu0 0.0
        %1188 = vmatpush1.msra.mxu0 %v1008
        %1189 = vmatprep.subr.mxu0 0.0
        %1190 = vmatpush1.msra.mxu0 %v1009
        %1191 = vmatprep.subr.mxu0 0.0
        %1192 = vmatpush1.msra.mxu0 %v1010
        %1193 = vmatprep.subr.mxu0 0.0
        %1194 = vmatpush1.msra.mxu0 %v1011
        %1195 = vmatprep.subr.mxu0 0.0
        %1196 = vmatpush1.msra.mxu0 %v1012
        %1197 = vmatprep.subr.mxu0 0.0
        %1198 = vmatpush1.msra.mxu0 %v1013
        %1199 = vmatprep.subr.mxu0 0.0
        %1200 = vmatpush1.msra.mxu0 %v1014
        %1201 = vmatprep.subr.mxu0 0.0
        %1202 = vmatpush1.msra.mxu0 %v1015
        %1203 = vmatprep.subr.mxu0 0.0
        %1204 = vmatpush1.msra.mxu0 %v1016
        %1205 = vmatprep.subr.mxu0 0.0
        %1206 = vmatpush1.msra.mxu0 %v1017
        %1207 = vmatprep.subr.mxu0 0.0
        %1208 = vmatpush1.msra.mxu0 %v1018
        %1209 = vmatprep.subr.mxu0 0.0
        %1210 = vmatpush1.msra.mxu0 %v1019
        %1211 = vmatprep.subr.mxu0 0.0
        %1212 = vmatpush1.msra.mxu0 %v1020
        %1213 = vmatprep.subr.mxu0 0.0
        %1214 = vmatpush1.msra.mxu0 0.0
        %1215 = vmatprep.subr.mxu0 0.0
        %1216 = vmatpush1.msra.mxu0 0.0
        %1217 = vmatprep.subr.mxu0 0.0
        %1218 = vmatpush1.msra.mxu0 0.0
        %1219 = vmatprep.subr.mxu0 0.0
        %1220 = vmatpush1.msra.mxu0 0.0
        %1221 = vmatprep.subr.mxu0 0.0
        %1222 = vmatpush1.msra.mxu0 0.0
        %1223 = vmatprep.subr.mxu0 0.0
        %1224 = vmatpush1.msra.mxu0 0.0
        %1225 = vmatprep.subr.mxu0 0.0
        %1226 = vmatpush1.msra.mxu0 0.0
        %1227 = vmatprep.subr.mxu0 0.0
        %1228 = vmatpush1.msra.mxu0 0.0
        %1229 = vmatprep.subr.mxu0 0.0
        %1230 = vmatpush1.msra.mxu0 0.0
        %1231 = vmatprep.subr.mxu0 0.0
        %1232 = vmatpush1.msra.mxu0 0.0
        %1233 = vmatprep.subr.mxu0 0.0
        %1234 = vmatpush1.msra.mxu0 0.0
        %1235 = vmatprep.subr.mxu0 0.0
        %1236 = vmatpush1.msra.mxu0 0.0
        %1237 = vmatprep.subr.mxu0 0.0
        %1238 = vmatpush1.msra.mxu0 0.0
        %1239 = vmatprep.subr.mxu0 0.0
        %1240 = vmatpush1.msra.mxu0 0.0
        %1241 = vmatprep.subr.mxu0 0.0
        %1242 = vmatpush1.msra.mxu0 0.0
        %1243 = vmatprep.subr.mxu0 0.0
        %1244 = vmatpush1.msra.mxu0 0.0
        %1245 = vmatprep.mubr.f32.mxu0 0.0
        %1246 = vmatmul.mubr.f32.gmra.mrb[0].mxu0 %v992
        %v1247 = vpop.f32.mrb[0].mxu0
        %v1248 = vadd.f32 %v1118, %v1247
        %v1249 = vpop.f32.mrb[0].mxu0
        %1250 = vmatprep.mubr.f32.mxu0 0.0
        %1251 = vmatmul.mubr.f32.gmra.mrb[0].mxu0 %v993
        %v1252 = vpop.f32.mrb[0].mxu0
        %v1253 = vadd.f32 %v1123, %v1252
        %v1254 = vpop.f32.mrb[0].mxu0
        %1255 = vmatprep.mubr.f32.mxu0 0.0
        %1256 = vmatmul.mubr.f32.gmra.mrb[0].mxu0 %v994
        %v1257 = vpop.f32.mrb[0].mxu0
        %v1258 = vadd.f32 %v1128, %v1257
        %v1259 = vpop.f32.mrb[0].mxu0
        %1260 = vmatprep.mubr.f32.mxu0 0.0
        %1261 = vmatmul.mubr.f32.gmra.mrb[0].mxu0 %v995
        %v1262 = vpop.f32.mrb[0].mxu0
        %v1263 = vadd.f32 %v1133, %v1262
        %v1264 = vpop.f32.mrb[0].mxu0
        %1265 = vmatprep.mubr.f32.mxu0 0.0
        %1266 = vmatmul.mubr.f32.gmra.mrb[0].mxu0 %v996
        %v1267 = vpop.f32.mrb[0].mxu0
        %v1268 = vadd.f32 %v1138, %v1267
        %v1269 = vpop.f32.mrb[0].mxu0
        %1270 = vmatprep.mubr.f32.mxu0 0.0
        %1271 = vmatmul.mubr.f32.gmra.mrb[0].mxu0 %v997
        %v1272 = vpop.f32.mrb[0].mxu0
        %v1273 = vadd.f32 %v1143, %v1272
        %v1274 = vpop.f32.mrb[0].mxu0
        %1275 = vmatprep.mubr.f32.mxu0 0.0
        %1276 = vmatmul.mubr.f32.gmra.mrb[0].mxu0 %v998
        %v1277 = vpop.f32.mrb[0].mxu0
        %v1278 = vadd.f32 %v1148, %v1277
        %v1279 = vpop.f32.mrb[0].mxu0
        %1280 = vmatprep.mubr.f32.mxu0 0.0
        %1281 = vmatmul.mubr.f32.gmra.mrb[0].mxu0 %v999
        %v1282 = vpop.f32.mrb[0].mxu0
        %v1283 = vadd.f32 %v1153, %v1282
        %v1284 = vpop.f32.mrb[0].mxu0
        %1285 = vmatprep.mubr.f32.mxu0 0.0
        %1286 = vmatmul.mubr.f32.gmra.mrb[0].mxu0 %v1000
        %v1287 = vpop.f32.mrb[0].mxu0
        %v1288 = vadd.f32 %v1158, %v1287
        %v1289 = vpop.f32.mrb[0].mxu0
        %1290 = vmatprep.mubr.f32.mxu0 0.0
        %1291 = vmatmul.mubr.f32.gmra.mrb[0].mxu0 %v1001
        %v1292 = vpop.f32.mrb[0].mxu0
        %v1293 = vadd.f32 %v1163, %v1292
        %v1294 = vpop.f32.mrb[0].mxu0
        %1295 = vmatprep.mubr.f32.mxu0 0.0
        %1296 = vmatmul.mubr.f32.gmra.mrb[0].mxu0 %v1002
        %v1297 = vpop.f32.mrb[0].mxu0
        %v1298 = vadd.f32 %v1168, %v1297
        %v1299 = vpop.f32.mrb[0].mxu0
        %1300 = vmatprep.mubr.f32.mxu0 0.0
        %1301 = vmatmul.mubr.f32.gmra.mrb[0].mxu0 %v1003
        %v1302 = vpop.f32.mrb[0].mxu0
        %v1303 = vadd.f32 %v1173, %v1302
        %v1304 = vpop.f32.mrb[0].mxu0
        %1305 = vmatprep.mubr.f32.mxu0 0.0
        %1306 = vmatmul.mubr.f32.gmra.mrb[0].mxu0 %v1004
        %v1307 = vpop.f32.mrb[0].mxu0
        %v1308 = vadd.f32 %v1178, %v1307
        %v1309 = vpop.f32.mrb[0].mxu0
        %1310 = vdwg.mxu0
        %v1311 = vld [vmem:[#allocation3 + $0x2] sm:$0xff]
        %v1312 = vld [vmem:[#allocation3 + $0xa] sm:$0xff]
        %v1313 = vld [vmem:[#allocation3 + $0x12] sm:$0xff]
        %v1314 = vld [vmem:[#allocation3 + $0x1a] sm:$0xff]
        %v1315 = vld [vmem:[#allocation3 + $0x22] sm:$0xff]
        %v1316 = vld [vmem:[#allocation3 + $0x2a] sm:$0xff]
        %v1317 = vld [vmem:[#allocation3 + $0x32] sm:$0xff]
        %v1318 = vld [vmem:[#allocation3 + $0x3a] sm:$0xff]
        %v1319 = vld [vmem:[#allocation3 + $0x42] sm:$0xff]
        %v1320 = vld [vmem:[#allocation3 + $0x4a] sm:$0xff]
        %v1321 = vld [vmem:[#allocation3 + $0x52] sm:$0xff]
        %v1322 = vld [vmem:[#allocation3 + $0x5a] sm:$0xff]
        %v1323 = vld [vmem:[#allocation3 + $0x62] sm:$0xf]
        %s1324 = scalar_lea.vmem %s3, 256
        %v1325 = vld [vmem:[%s1324] sm:$0xff]
        %v1326 = vld [vmem:[%s1324 + $0x8] sm:$0xff]
        %v1327 = vld [vmem:[%s1324 + $0x10] sm:$0xff]
        %v1328 = vld [vmem:[%s1324 + $0x18] sm:$0xff]
        %v1329 = vld [vmem:[%s1324 + $0x20] sm:$0xff]
        %v1330 = vld [vmem:[%s1324 + $0x28] sm:$0xff]
        %v1331 = vld [vmem:[%s1324 + $0x30] sm:$0xff]
        %v1332 = vld [vmem:[%s1324 + $0x38] sm:$0xff]
        %v1333 = vld [vmem:[%s1324 + $0x40] sm:$0xff]
        %v1334 = vld [vmem:[%s1324 + $0x48] sm:$0xff]
        %v1335 = vld [vmem:[%s1324 + $0x50] sm:$0xff]
        %v1336 = vld [vmem:[%s1324 + $0x58] sm:$0xff]
        %v1337 = vld [vmem:[%s1324 + $0x60] sm:$0xff]
        %v1338 = vld [vmem:[%s1324 + $0x68] sm:$0xff]
        %v1339 = vld [vmem:[%s1324 + $0x70] sm:$0xff]
        %v1340 = vld [vmem:[%s1324 + $0x78] sm:$0xff]
        %1341 = vmatprep.subr.mxu0 0.0
        %1342 = vmatpush1.msra.mxu0 %v1325
        %1343 = vmatprep.subr.mxu0 0.0
        %1344 = vmatpush1.msra.mxu0 %v1326
        %1345 = vmatprep.subr.mxu0 0.0
        %1346 = vmatpush1.msra.mxu0 %v1327
        %1347 = vmatprep.subr.mxu0 0.0
        %1348 = vmatpush1.msra.mxu0 %v1328
        %1349 = vmatprep.subr.mxu0 0.0
        %1350 = vmatpush1.msra.mxu0 %v1329
        %1351 = vmatprep.subr.mxu0 0.0
        %1352 = vmatpush1.msra.mxu0 %v1330
        %1353 = vmatprep.subr.mxu0 0.0
        %1354 = vmatpush1.msra.mxu0 %v1331
        %1355 = vmatprep.subr.mxu0 0.0
        %1356 = vmatpush1.msra.mxu0 %v1332
        %1357 = vmatprep.subr.mxu0 0.0
        %1358 = vmatpush1.msra.mxu0 %v1333
        %1359 = vmatprep.subr.mxu0 0.0
        %1360 = vmatpush1.msra.mxu0 %v1334
        %1361 = vmatprep.subr.mxu0 0.0
        %1362 = vmatpush1.msra.mxu0 %v1335
        %1363 = vmatprep.subr.mxu0 0.0
        %1364 = vmatpush1.msra.mxu0 %v1336
        %1365 = vmatprep.subr.mxu0 0.0
        %1366 = vmatpush1.msra.mxu0 %v1337
        %1367 = vmatprep.subr.mxu0 0.0
        %1368 = vmatpush1.msra.mxu0 %v1338
        %1369 = vmatprep.subr.mxu0 0.0
        %1370 = vmatpush1.msra.mxu0 %v1339
        %1371 = vmatprep.subr.mxu0 0.0
        %1372 = vmatpush1.msra.mxu0 %v1340
        %1373 = vmatprep.subr.mxu0 0.0
        %1374 = vmatpush1.msra.mxu0 0.0
        %1375 = vmatprep.subr.mxu0 0.0
        %1376 = vmatpush1.msra.mxu0 0.0
        %1377 = vmatprep.subr.mxu0 0.0
        %1378 = vmatpush1.msra.mxu0 0.0
        %1379 = vmatprep.subr.mxu0 0.0
        %1380 = vmatpush1.msra.mxu0 0.0
        %1381 = vmatprep.subr.mxu0 0.0
        %1382 = vmatpush1.msra.mxu0 0.0
        %1383 = vmatprep.subr.mxu0 0.0
        %1384 = vmatpush1.msra.mxu0 0.0
        %1385 = vmatprep.subr.mxu0 0.0
        %1386 = vmatpush1.msra.mxu0 0.0
        %1387 = vmatprep.subr.mxu0 0.0
        %1388 = vmatpush1.msra.mxu0 0.0
        %1389 = vmatprep.subr.mxu0 0.0
        %1390 = vmatpush1.msra.mxu0 0.0
        %1391 = vmatprep.subr.mxu0 0.0
        %1392 = vmatpush1.msra.mxu0 0.0
        %1393 = vmatprep.subr.mxu0 0.0
        %1394 = vmatpush1.msra.mxu0 0.0
        %1395 = vmatprep.subr.mxu0 0.0
        %1396 = vmatpush1.msra.mxu0 0.0
        %1397 = vmatprep.subr.mxu0 0.0
        %1398 = vmatpush1.msra.mxu0 0.0
        %1399 = vmatprep.subr.mxu0 0.0
        %1400 = vmatpush1.msra.mxu0 0.0
        %1401 = vmatprep.subr.mxu0 0.0
        %1402 = vmatpush1.msra.mxu0 0.0
        %1403 = vmatprep.subr.mxu0 0.0
        %1404 = vmatpush1.msra.mxu0 0.0
        %1405 = vmatprep.mubr.f32.mxu0 0.0
        %1406 = vmatmul.mubr.f32.gmra.mrb[0].mxu0 %v1311
        %v1407 = vpop.f32.mrb[0].mxu0
        %v1408 = vadd.f32 0.0, %v1407
        %v1409 = vpop.f32.mrb[0].mxu0
        %1410 = vmatprep.mubr.f32.mxu0 0.0
        %1411 = vmatmul.mubr.f32.gmra.mrb[0].mxu0 %v1312
        %v1412 = vpop.f32.mrb[0].mxu0
        %v1413 = vadd.f32 0.0, %v1412
        %v1414 = vpop.f32.mrb[0].mxu0
        %1415 = vmatprep.mubr.f32.mxu0 0.0
        %1416 = vmatmul.mubr.f32.gmra.mrb[0].mxu0 %v1313
        %v1417 = vpop.f32.mrb[0].mxu0
        %v1418 = vadd.f32 0.0, %v1417
        %v1419 = vpop.f32.mrb[0].mxu0
        %1420 = vmatprep.mubr.f32.mxu0 0.0
        %1421 = vmatmul.mubr.f32.gmra.mrb[0].mxu0 %v1314
        %v1422 = vpop.f32.mrb[0].mxu0
        %v1423 = vadd.f32 0.0, %v1422
        %v1424 = vpop.f32.mrb[0].mxu0
        %1425 = vmatprep.mubr.f32.mxu0 0.0
        %1426 = vmatmul.mubr.f32.gmra.mrb[0].mxu0 %v1315
        %v1427 = vpop.f32.mrb[0].mxu0
        %v1428 = vadd.f32 0.0, %v1427
        %v1429 = vpop.f32.mrb[0].mxu0
        %1430 = vmatprep.mubr.f32.mxu0 0.0
        %1431 = vmatmul.mubr.f32.gmra.mrb[0].mxu0 %v1316
        %v1432 = vpop.f32.mrb[0].mxu0
        %v1433 = vadd.f32 0.0, %v1432
        %v1434 = vpop.f32.mrb[0].mxu0
        %1435 = vmatprep.mubr.f32.mxu0 0.0
        %1436 = vmatmul.mubr.f32.gmra.mrb[0].mxu0 %v1317
        %v1437 = vpop.f32.mrb[0].mxu0
        %v1438 = vadd.f32 0.0, %v1437
        %v1439 = vpop.f32.mrb[0].mxu0
        %1440 = vmatprep.mubr.f32.mxu0 0.0
        %1441 = vmatmul.mubr.f32.gmra.mrb[0].mxu0 %v1318
        %v1442 = vpop.f32.mrb[0].mxu0
        %v1443 = vadd.f32 0.0, %v1442
        %v1444 = vpop.f32.mrb[0].mxu0
        %1445 = vmatprep.mubr.f32.mxu0 0.0
        %1446 = vmatmul.mubr.f32.gmra.mrb[0].mxu0 %v1319
        %v1447 = vpop.f32.mrb[0].mxu0
        %v1448 = vadd.f32 0.0, %v1447
        %v1449 = vpop.f32.mrb[0].mxu0
        %1450 = vmatprep.mubr.f32.mxu0 0.0
        %1451 = vmatmul.mubr.f32.gmra.mrb[0].mxu0 %v1320
        %v1452 = vpop.f32.mrb[0].mxu0
        %v1453 = vadd.f32 0.0, %v1452
        %v1454 = vpop.f32.mrb[0].mxu0
        %1455 = vmatprep.mubr.f32.mxu0 0.0
        %1456 = vmatmul.mubr.f32.gmra.mrb[0].mxu0 %v1321
        %v1457 = vpop.f32.mrb[0].mxu0
        %v1458 = vadd.f32 0.0, %v1457
        %v1459 = vpop.f32.mrb[0].mxu0
        %1460 = vmatprep.mubr.f32.mxu0 0.0
        %1461 = vmatmul.mubr.f32.gmra.mrb[0].mxu0 %v1322
        %v1462 = vpop.f32.mrb[0].mxu0
        %v1463 = vadd.f32 0.0, %v1462
        %v1464 = vpop.f32.mrb[0].mxu0
        %1465 = vmatprep.mubr.f32.mxu0 0.0
        %1466 = vmatmul.mubr.f32.gmra.mrb[0].mxu0 %v1323
        %v1467 = vpop.f32.mrb[0].mxu0
        %v1468 = vadd.f32 0.0, %v1467
        %v1469 = vpop.f32.mrb[0].mxu0
        %1470 = vdwg.mxu0
        %v1471 = vadd.f32 %v1248, %v1408
        %v1472 = vadd.f32 %v1253, %v1413
        %v1473 = vadd.f32 %v1258, %v1418
        %v1474 = vadd.f32 %v1263, %v1423
        %v1475 = vadd.f32 %v1268, %v1428
        %v1476 = vadd.f32 %v1273, %v1433
        %v1477 = vadd.f32 %v1278, %v1438
        %v1478 = vadd.f32 %v1283, %v1443
        %v1479 = vadd.f32 %v1288, %v1448
        %v1480 = vadd.f32 %v1293, %v1453
        %v1481 = vadd.f32 %v1298, %v1458
        %v1482 = vadd.f32 %v1303, %v1463
        %v1483 = vadd.f32 %v1308, %v1468
        %v1484 = vld [vmem:[#allocation3 + $0xa] sm:$0xff]
        %v1485 = vld [vmem:[#allocation3 + $0x12] sm:$0xff]
        %v1486 = vld [vmem:[#allocation3 + $0x1a] sm:$0xff]
        %v1487 = vld [vmem:[#allocation3 + $0x22] sm:$0xff]
        %v1488 = vld [vmem:[#allocation3 + $0x2a] sm:$0xff]
        %v1489 = vld [vmem:[#allocation3 + $0x32] sm:$0xff]
        %v1490 = vld [vmem:[#allocation3 + $0x3a] sm:$0xff]
        %v1491 = vld [vmem:[#allocation3 + $0x42] sm:$0xff]
        %v1492 = vld [vmem:[#allocation3 + $0x4a] sm:$0xff]
        %v1493 = vld [vmem:[#allocation3 + $0x52] sm:$0xff]
        %v1494 = vld [vmem:[#allocation3 + $0x5a] sm:$0xff]
        %v1495 = vld [vmem:[#allocation3 + $0x62] sm:$0xff]
        %v1496 = vld [vmem:[#allocation3 + $0x6a] sm:$0xf]
        %s1497 = scalar_lea.vmem %s3, 384
        %v1498 = vld [vmem:[%s1497] sm:$0xff]
        %v1499 = vld [vmem:[%s1497 + $0x8] sm:$0xff]
        %v1500 = vld [vmem:[%s1497 + $0x10] sm:$0xff]
        %v1501 = vld [vmem:[%s1497 + $0x18] sm:$0xff]
        %v1502 = vld [vmem:[%s1497 + $0x20] sm:$0xff]
        %v1503 = vld [vmem:[%s1497 + $0x28] sm:$0xff]
        %v1504 = vld [vmem:[%s1497 + $0x30] sm:$0xff]
        %v1505 = vld [vmem:[%s1497 + $0x38] sm:$0xff]
        %v1506 = vld [vmem:[%s1497 + $0x40] sm:$0xff]
        %v1507 = vld [vmem:[%s1497 + $0x48] sm:$0xff]
        %v1508 = vld [vmem:[%s1497 + $0x50] sm:$0xff]
        %v1509 = vld [vmem:[%s1497 + $0x58] sm:$0xff]
        %v1510 = vld [vmem:[%s1497 + $0x60] sm:$0xff]
        %v1511 = vld [vmem:[%s1497 + $0x68] sm:$0xff]
        %v1512 = vld [vmem:[%s1497 + $0x70] sm:$0xff]
        %v1513 = vld [vmem:[%s1497 + $0x78] sm:$0xff]
        %1514 = vmatprep.subr.mxu0 0.0
        %1515 = vmatpush1.msra.mxu0 %v1498
        %1516 = vmatprep.subr.mxu0 0.0
        %1517 = vmatpush1.msra.mxu0 %v1499
        %1518 = vmatprep.subr.mxu0 0.0
        %1519 = vmatpush1.msra.mxu0 %v1500
        %1520 = vmatprep.subr.mxu0 0.0
        %1521 = vmatpush1.msra.mxu0 %v1501
        %1522 = vmatprep.subr.mxu0 0.0
        %1523 = vmatpush1.msra.mxu0 %v1502
        %1524 = vmatprep.subr.mxu0 0.0
        %1525 = vmatpush1.msra.mxu0 %v1503
        %1526 = vmatprep.subr.mxu0 0.0
        %1527 = vmatpush1.msra.mxu0 %v1504
        %1528 = vmatprep.subr.mxu0 0.0
        %1529 = vmatpush1.msra.mxu0 %v1505
        %1530 = vmatprep.subr.mxu0 0.0
        %1531 = vmatpush1.msra.mxu0 %v1506
        %1532 = vmatprep.subr.mxu0 0.0
        %1533 = vmatpush1.msra.mxu0 %v1507
        %1534 = vmatprep.subr.mxu0 0.0
        %1535 = vmatpush1.msra.mxu0 %v1508
        %1536 = vmatprep.subr.mxu0 0.0
        %1537 = vmatpush1.msra.mxu0 %v1509
        %1538 = vmatprep.subr.mxu0 0.0
        %1539 = vmatpush1.msra.mxu0 %v1510
        %1540 = vmatprep.subr.mxu0 0.0
        %1541 = vmatpush1.msra.mxu0 %v1511
        %1542 = vmatprep.subr.mxu0 0.0
        %1543 = vmatpush1.msra.mxu0 %v1512
        %1544 = vmatprep.subr.mxu0 0.0
        %1545 = vmatpush1.msra.mxu0 %v1513
        %1546 = vmatprep.subr.mxu0 0.0
        %1547 = vmatpush1.msra.mxu0 0.0
        %1548 = vmatprep.subr.mxu0 0.0
        %1549 = vmatpush1.msra.mxu0 0.0
        %1550 = vmatprep.subr.mxu0 0.0
        %1551 = vmatpush1.msra.mxu0 0.0
        %1552 = vmatprep.subr.mxu0 0.0
        %1553 = vmatpush1.msra.mxu0 0.0
        %1554 = vmatprep.subr.mxu0 0.0
        %1555 = vmatpush1.msra.mxu0 0.0
        %1556 = vmatprep.subr.mxu0 0.0
        %1557 = vmatpush1.msra.mxu0 0.0
        %1558 = vmatprep.subr.mxu0 0.0
        %1559 = vmatpush1.msra.mxu0 0.0
        %1560 = vmatprep.subr.mxu0 0.0
        %1561 = vmatpush1.msra.mxu0 0.0
        %1562 = vmatprep.subr.mxu0 0.0
        %1563 = vmatpush1.msra.mxu0 0.0
        %1564 = vmatprep.subr.mxu0 0.0
        %1565 = vmatpush1.msra.mxu0 0.0
        %1566 = vmatprep.subr.mxu0 0.0
        %1567 = vmatpush1.msra.mxu0 0.0
        %1568 = vmatprep.subr.mxu0 0.0
        %1569 = vmatpush1.msra.mxu0 0.0
        %1570 = vmatprep.subr.mxu0 0.0
        %1571 = vmatpush1.msra.mxu0 0.0
        %1572 = vmatprep.subr.mxu0 0.0
        %1573 = vmatpush1.msra.mxu0 0.0
        %1574 = vmatprep.subr.mxu0 0.0
        %1575 = vmatpush1.msra.mxu0 0.0
        %1576 = vmatprep.subr.mxu0 0.0
        %1577 = vmatpush1.msra.mxu0 0.0
        %1578 = vmatprep.mubr.f32.mxu0 0.0
        %1579 = vmatmul.mubr.f32.gmra.mrb[0].mxu0 %v1484
        %v1580 = vpop.f32.mrb[0].mxu0
        %v1581 = vadd.f32 0.0, %v1580
        %v1582 = vpop.f32.mrb[0].mxu0
        %1583 = vmatprep.mubr.f32.mxu0 0.0
        %1584 = vmatmul.mubr.f32.gmra.mrb[0].mxu0 %v1485
        %v1585 = vpop.f32.mrb[0].mxu0
        %v1586 = vadd.f32 0.0, %v1585
        %v1587 = vpop.f32.mrb[0].mxu0
        %1588 = vmatprep.mubr.f32.mxu0 0.0
        %1589 = vmatmul.mubr.f32.gmra.mrb[0].mxu0 %v1486
        %v1590 = vpop.f32.mrb[0].mxu0
        %v1591 = vadd.f32 0.0, %v1590
        %v1592 = vpop.f32.mrb[0].mxu0
        %1593 = vmatprep.mubr.f32.mxu0 0.0
        %1594 = vmatmul.mubr.f32.gmra.mrb[0].mxu0 %v1487
        %v1595 = vpop.f32.mrb[0].mxu0
        %v1596 = vadd.f32 0.0, %v1595
        %v1597 = vpop.f32.mrb[0].mxu0
        %1598 = vmatprep.mubr.f32.mxu0 0.0
        %1599 = vmatmul.mubr.f32.gmra.mrb[0].mxu0 %v1488
        %v1600 = vpop.f32.mrb[0].mxu0
        %v1601 = vadd.f32 0.0, %v1600
        %v1602 = vpop.f32.mrb[0].mxu0
        %1603 = vmatprep.mubr.f32.mxu0 0.0
        %1604 = vmatmul.mubr.f32.gmra.mrb[0].mxu0 %v1489
        %v1605 = vpop.f32.mrb[0].mxu0
        %v1606 = vadd.f32 0.0, %v1605
        %v1607 = vpop.f32.mrb[0].mxu0
        %1608 = vmatprep.mubr.f32.mxu0 0.0
        %1609 = vmatmul.mubr.f32.gmra.mrb[0].mxu0 %v1490
        %v1610 = vpop.f32.mrb[0].mxu0
        %v1611 = vadd.f32 0.0, %v1610
        %v1612 = vpop.f32.mrb[0].mxu0
        %1613 = vmatprep.mubr.f32.mxu0 0.0
        %1614 = vmatmul.mubr.f32.gmra.mrb[0].mxu0 %v1491
        %v1615 = vpop.f32.mrb[0].mxu0
        %v1616 = vadd.f32 0.0, %v1615
        %v1617 = vpop.f32.mrb[0].mxu0
        %1618 = vmatprep.mubr.f32.mxu0 0.0
        %1619 = vmatmul.mubr.f32.gmra.mrb[0].mxu0 %v1492
        %v1620 = vpop.f32.mrb[0].mxu0
        %v1621 = vadd.f32 0.0, %v1620
        %v1622 = vpop.f32.mrb[0].mxu0
        %1623 = vmatprep.mubr.f32.mxu0 0.0
        %1624 = vmatmul.mubr.f32.gmra.mrb[0].mxu0 %v1493
        %v1625 = vpop.f32.mrb[0].mxu0
        %v1626 = vadd.f32 0.0, %v1625
        %v1627 = vpop.f32.mrb[0].mxu0
        %1628 = vmatprep.mubr.f32.mxu0 0.0
        %1629 = vmatmul.mubr.f32.gmra.mrb[0].mxu0 %v1494
        %v1630 = vpop.f32.mrb[0].mxu0
        %v1631 = vadd.f32 0.0, %v1630
        %v1632 = vpop.f32.mrb[0].mxu0
        %1633 = vmatprep.mubr.f32.mxu0 0.0
        %1634 = vmatmul.mubr.f32.gmra.mrb[0].mxu0 %v1495
        %v1635 = vpop.f32.mrb[0].mxu0
        %v1636 = vadd.f32 0.0, %v1635
        %v1637 = vpop.f32.mrb[0].mxu0
        %1638 = vmatprep.mubr.f32.mxu0 0.0
        %1639 = vmatmul.mubr.f32.gmra.mrb[0].mxu0 %v1496
        %v1640 = vpop.f32.mrb[0].mxu0
        %v1641 = vadd.f32 0.0, %v1640
        %v1642 = vpop.f32.mrb[0].mxu0
        %1643 = vdwg.mxu0
        %v1644 = vadd.f32 %v1471, %v1581
        %v1645 = vadd.f32 %v1472, %v1586
        %v1646 = vadd.f32 %v1473, %v1591
        %v1647 = vadd.f32 %v1474, %v1596
        %v1648 = vadd.f32 %v1475, %v1601
        %v1649 = vadd.f32 %v1476, %v1606
        %v1650 = vadd.f32 %v1477, %v1611
        %v1651 = vadd.f32 %v1478, %v1616
        %v1652 = vadd.f32 %v1479, %v1621
        %v1653 = vadd.f32 %v1480, %v1626
        %v1654 = vadd.f32 %v1481, %v1631
        %v1655 = vadd.f32 %v1482, %v1636
        %v1656 = vadd.f32 %v1483, %v1641
        %v1657 = vld [vmem:[#allocation3 + $0xb] sm:$0xff]
        %v1658 = vld [vmem:[#allocation3 + $0x13] sm:$0xff]
        %v1659 = vld [vmem:[#allocation3 + $0x1b] sm:$0xff]
        %v1660 = vld [vmem:[#allocation3 + $0x23] sm:$0xff]
        %v1661 = vld [vmem:[#allocation3 + $0x2b] sm:$0xff]
        %v1662 = vld [vmem:[#allocation3 + $0x33] sm:$0xff]
        %v1663 = vld [vmem:[#allocation3 + $0x3b] sm:$0xff]
        %v1664 = vld [vmem:[#allocation3 + $0x43] sm:$0xff]
        %v1665 = vld [vmem:[#allocation3 + $0x4b] sm:$0xff]
        %v1666 = vld [vmem:[#allocation3 + $0x53] sm:$0xff]
        %v1667 = vld [vmem:[#allocation3 + $0x5b] sm:$0xff]
        %v1668 = vld [vmem:[#allocation3 + $0x63] sm:$0xff]
        %v1669 = vld [vmem:[#allocation3 + $0x6b] sm:$0xf]
        %s1670 = scalar_lea.vmem %s3, 512
        %v1671 = vld [vmem:[%s1670] sm:$0xff]
        %v1672 = vld [vmem:[%s1670 + $0x8] sm:$0xff]
        %v1673 = vld [vmem:[%s1670 + $0x10] sm:$0xff]
        %v1674 = vld [vmem:[%s1670 + $0x18] sm:$0xff]
        %v1675 = vld [vmem:[%s1670 + $0x20] sm:$0xff]
        %v1676 = vld [vmem:[%s1670 + $0x28] sm:$0xff]
        %v1677 = vld [vmem:[%s1670 + $0x30] sm:$0xff]
        %v1678 = vld [vmem:[%s1670 + $0x38] sm:$0xff]
        %v1679 = vld [vmem:[%s1670 + $0x40] sm:$0xff]
        %v1680 = vld [vmem:[%s1670 + $0x48] sm:$0xff]
        %v1681 = vld [vmem:[%s1670 + $0x50] sm:$0xff]
        %v1682 = vld [vmem:[%s1670 + $0x58] sm:$0xff]
        %v1683 = vld [vmem:[%s1670 + $0x60] sm:$0xff]
        %v1684 = vld [vmem:[%s1670 + $0x68] sm:$0xff]
        %v1685 = vld [vmem:[%s1670 + $0x70] sm:$0xff]
        %v1686 = vld [vmem:[%s1670 + $0x78] sm:$0xff]
        %1687 = vmatprep.subr.mxu0 0.0
        %1688 = vmatpush1.msra.mxu0 %v1671
        %1689 = vmatprep.subr.mxu0 0.0
        %1690 = vmatpush1.msra.mxu0 %v1672
        %1691 = vmatprep.subr.mxu0 0.0
        %1692 = vmatpush1.msra.mxu0 %v1673
        %1693 = vmatprep.subr.mxu0 0.0
        %1694 = vmatpush1.msra.mxu0 %v1674
        %1695 = vmatprep.subr.mxu0 0.0
        %1696 = vmatpush1.msra.mxu0 %v1675
        %1697 = vmatprep.subr.mxu0 0.0
        %1698 = vmatpush1.msra.mxu0 %v1676
        %1699 = vmatprep.subr.mxu0 0.0
        %1700 = vmatpush1.msra.mxu0 %v1677
        %1701 = vmatprep.subr.mxu0 0.0
        %1702 = vmatpush1.msra.mxu0 %v1678
        %1703 = vmatprep.subr.mxu0 0.0
        %1704 = vmatpush1.msra.mxu0 %v1679
        %1705 = vmatprep.subr.mxu0 0.0
        %1706 = vmatpush1.msra.mxu0 %v1680
        %1707 = vmatprep.subr.mxu0 0.0
        %1708 = vmatpush1.msra.mxu0 %v1681
        %1709 = vmatprep.subr.mxu0 0.0
        %1710 = vmatpush1.msra.mxu0 %v1682
        %1711 = vmatprep.subr.mxu0 0.0
        %1712 = vmatpush1.msra.mxu0 %v1683
        %1713 = vmatprep.subr.mxu0 0.0
        %1714 = vmatpush1.msra.mxu0 %v1684
        %1715 = vmatprep.subr.mxu0 0.0
        %1716 = vmatpush1.msra.mxu0 %v1685
        %1717 = vmatprep.subr.mxu0 0.0
        %1718 = vmatpush1.msra.mxu0 %v1686
        %1719 = vmatprep.subr.mxu0 0.0
        %1720 = vmatpush1.msra.mxu0 0.0
        %1721 = vmatprep.subr.mxu0 0.0
        %1722 = vmatpush1.msra.mxu0 0.0
        %1723 = vmatprep.subr.mxu0 0.0
        %1724 = vmatpush1.msra.mxu0 0.0
        %1725 = vmatprep.subr.mxu0 0.0
        %1726 = vmatpush1.msra.mxu0 0.0
        %1727 = vmatprep.subr.mxu0 0.0
        %1728 = vmatpush1.msra.mxu0 0.0
        %1729 = vmatprep.subr.mxu0 0.0
        %1730 = vmatpush1.msra.mxu0 0.0
        %1731 = vmatprep.subr.mxu0 0.0
        %1732 = vmatpush1.msra.mxu0 0.0
        %1733 = vmatprep.subr.mxu0 0.0
        %1734 = vmatpush1.msra.mxu0 0.0
        %1735 = vmatprep.subr.mxu0 0.0
        %1736 = vmatpush1.msra.mxu0 0.0
        %1737 = vmatprep.subr.mxu0 0.0
        %1738 = vmatpush1.msra.mxu0 0.0
        %1739 = vmatprep.subr.mxu0 0.0
        %1740 = vmatpush1.msra.mxu0 0.0
        %1741 = vmatprep.subr.mxu0 0.0
        %1742 = vmatpush1.msra.mxu0 0.0
        %1743 = vmatprep.subr.mxu0 0.0
        %1744 = vmatpush1.msra.mxu0 0.0
        %1745 = vmatprep.subr.mxu0 0.0
        %1746 = vmatpush1.msra.mxu0 0.0
        %1747 = vmatprep.subr.mxu0 0.0
        %1748 = vmatpush1.msra.mxu0 0.0
        %1749 = vmatprep.subr.mxu0 0.0
        %1750 = vmatpush1.msra.mxu0 0.0
        %1751 = vmatprep.mubr.f32.mxu0 0.0
        %1752 = vmatmul.mubr.f32.gmra.mrb[0].mxu0 %v1657
        %v1753 = vpop.f32.mrb[0].mxu0
        %v1754 = vadd.f32 0.0, %v1753
        %v1755 = vpop.f32.mrb[0].mxu0
        %1756 = vmatprep.mubr.f32.mxu0 0.0
        %1757 = vmatmul.mubr.f32.gmra.mrb[0].mxu0 %v1658
        %v1758 = vpop.f32.mrb[0].mxu0
        %v1759 = vadd.f32 0.0, %v1758
        %v1760 = vpop.f32.mrb[0].mxu0
        %1761 = vmatprep.mubr.f32.mxu0 0.0
        %1762 = vmatmul.mubr.f32.gmra.mrb[0].mxu0 %v1659
        %v1763 = vpop.f32.mrb[0].mxu0
        %v1764 = vadd.f32 0.0, %v1763
        %v1765 = vpop.f32.mrb[0].mxu0
        %1766 = vmatprep.mubr.f32.mxu0 0.0
        %1767 = vmatmul.mubr.f32.gmra.mrb[0].mxu0 %v1660
        %v1768 = vpop.f32.mrb[0].mxu0
        %v1769 = vadd.f32 0.0, %v1768
        %v1770 = vpop.f32.mrb[0].mxu0
        %1771 = vmatprep.mubr.f32.mxu0 0.0
        %1772 = vmatmul.mubr.f32.gmra.mrb[0].mxu0 %v1661
        %v1773 = vpop.f32.mrb[0].mxu0
        %v1774 = vadd.f32 0.0, %v1773
        %v1775 = vpop.f32.mrb[0].mxu0
        %1776 = vmatprep.mubr.f32.mxu0 0.0
        %1777 = vmatmul.mubr.f32.gmra.mrb[0].mxu0 %v1662
        %v1778 = vpop.f32.mrb[0].mxu0
        %v1779 = vadd.f32 0.0, %v1778
        %v1780 = vpop.f32.mrb[0].mxu0
        %1781 = vmatprep.mubr.f32.mxu0 0.0
        %1782 = vmatmul.mubr.f32.gmra.mrb[0].mxu0 %v1663
        %v1783 = vpop.f32.mrb[0].mxu0
        %v1784 = vadd.f32 0.0, %v1783
        %v1785 = vpop.f32.mrb[0].mxu0
        %1786 = vmatprep.mubr.f32.mxu0 0.0
        %1787 = vmatmul.mubr.f32.gmra.mrb[0].mxu0 %v1664
        %v1788 = vpop.f32.mrb[0].mxu0
        %v1789 = vadd.f32 0.0, %v1788
        %v1790 = vpop.f32.mrb[0].mxu0
        %1791 = vmatprep.mubr.f32.mxu0 0.0
        %1792 = vmatmul.mubr.f32.gmra.mrb[0].mxu0 %v1665
        %v1793 = vpop.f32.mrb[0].mxu0
        %v1794 = vadd.f32 0.0, %v1793
        %v1795 = vpop.f32.mrb[0].mxu0
        %1796 = vmatprep.mubr.f32.mxu0 0.0
        %1797 = vmatmul.mubr.f32.gmra.mrb[0].mxu0 %v1666
        %v1798 = vpop.f32.mrb[0].mxu0
        %v1799 = vadd.f32 0.0, %v1798
        %v1800 = vpop.f32.mrb[0].mxu0
        %1801 = vmatprep.mubr.f32.mxu0 0.0
        %1802 = vmatmul.mubr.f32.gmra.mrb[0].mxu0 %v1667
        %v1803 = vpop.f32.mrb[0].mxu0
        %v1804 = vadd.f32 0.0, %v1803
        %v1805 = vpop.f32.mrb[0].mxu0
        %1806 = vmatprep.mubr.f32.mxu0 0.0
        %1807 = vmatmul.mubr.f32.gmra.mrb[0].mxu0 %v1668
        %v1808 = vpop.f32.mrb[0].mxu0
        %v1809 = vadd.f32 0.0, %v1808
        %v1810 = vpop.f32.mrb[0].mxu0
        %1811 = vmatprep.mubr.f32.mxu0 0.0
        %1812 = vmatmul.mubr.f32.gmra.mrb[0].mxu0 %v1669
        %v1813 = vpop.f32.mrb[0].mxu0
        %v1814 = vadd.f32 0.0, %v1813
        %v1815 = vpop.f32.mrb[0].mxu0
        %1816 = vdwg.mxu0
        %v1817 = vadd.f32 %v1644, %v1754
        %v1818 = vadd.f32 %v1645, %v1759
        %v1819 = vadd.f32 %v1646, %v1764
        %v1820 = vadd.f32 %v1647, %v1769
        %v1821 = vadd.f32 %v1648, %v1774
        %v1822 = vadd.f32 %v1649, %v1779
        %v1823 = vadd.f32 %v1650, %v1784
        %v1824 = vadd.f32 %v1651, %v1789
        %v1825 = vadd.f32 %v1652, %v1794
        %v1826 = vadd.f32 %v1653, %v1799
        %v1827 = vadd.f32 %v1654, %v1804
        %v1828 = vadd.f32 %v1655, %v1809
        %v1829 = vadd.f32 %v1656, %v1814
        %v1830 = vld [vmem:[#allocation3 + $0xc] sm:$0xff]
        %v1831 = vld [vmem:[#allocation3 + $0x14] sm:$0xff]
        %v1832 = vld [vmem:[#allocation3 + $0x1c] sm:$0xff]
        %v1833 = vld [vmem:[#allocation3 + $0x24] sm:$0xff]
        %v1834 = vld [vmem:[#allocation3 + $0x2c] sm:$0xff]
        %v1835 = vld [vmem:[#allocation3 + $0x34] sm:$0xff]
        %v1836 = vld [vmem:[#allocation3 + $0x3c] sm:$0xff]
        %v1837 = vld [vmem:[#allocation3 + $0x44] sm:$0xff]
        %v1838 = vld [vmem:[#allocation3 + $0x4c] sm:$0xff]
        %v1839 = vld [vmem:[#allocation3 + $0x54] sm:$0xff]
        %v1840 = vld [vmem:[#allocation3 + $0x5c] sm:$0xff]
        %v1841 = vld [vmem:[#allocation3 + $0x64] sm:$0xff]
        %v1842 = vld [vmem:[#allocation3 + $0x6c] sm:$0xf]
        %s1843 = scalar_lea.vmem %s3, 640
        %v1844 = vld [vmem:[%s1843] sm:$0xff]
        %v1845 = vld [vmem:[%s1843 + $0x8] sm:$0xff]
        %v1846 = vld [vmem:[%s1843 + $0x10] sm:$0xff]
        %v1847 = vld [vmem:[%s1843 + $0x18] sm:$0xff]
        %v1848 = vld [vmem:[%s1843 + $0x20] sm:$0xff]
        %v1849 = vld [vmem:[%s1843 + $0x28] sm:$0xff]
        %v1850 = vld [vmem:[%s1843 + $0x30] sm:$0xff]
        %v1851 = vld [vmem:[%s1843 + $0x38] sm:$0xff]
        %v1852 = vld [vmem:[%s1843 + $0x40] sm:$0xff]
        %v1853 = vld [vmem:[%s1843 + $0x48] sm:$0xff]
        %v1854 = vld [vmem:[%s1843 + $0x50] sm:$0xff]
        %v1855 = vld [vmem:[%s1843 + $0x58] sm:$0xff]
        %v1856 = vld [vmem:[%s1843 + $0x60] sm:$0xff]
        %v1857 = vld [vmem:[%s1843 + $0x68] sm:$0xff]
        %v1858 = vld [vmem:[%s1843 + $0x70] sm:$0xff]
        %v1859 = vld [vmem:[%s1843 + $0x78] sm:$0xff]
        %1860 = vmatprep.subr.mxu0 0.0
        %1861 = vmatpush1.msra.mxu0 %v1844
        %1862 = vmatprep.subr.mxu0 0.0
        %1863 = vmatpush1.msra.mxu0 %v1845
        %1864 = vmatprep.subr.mxu0 0.0
        %1865 = vmatpush1.msra.mxu0 %v1846
        %1866 = vmatprep.subr.mxu0 0.0
        %1867 = vmatpush1.msra.mxu0 %v1847
        %1868 = vmatprep.subr.mxu0 0.0
        %1869 = vmatpush1.msra.mxu0 %v1848
        %1870 = vmatprep.subr.mxu0 0.0
        %1871 = vmatpush1.msra.mxu0 %v1849
        %1872 = vmatprep.subr.mxu0 0.0
        %1873 = vmatpush1.msra.mxu0 %v1850
        %1874 = vmatprep.subr.mxu0 0.0
        %1875 = vmatpush1.msra.mxu0 %v1851
        %1876 = vmatprep.subr.mxu0 0.0
        %1877 = vmatpush1.msra.mxu0 %v1852
        %1878 = vmatprep.subr.mxu0 0.0
        %1879 = vmatpush1.msra.mxu0 %v1853
        %1880 = vmatprep.subr.mxu0 0.0
        %1881 = vmatpush1.msra.mxu0 %v1854
        %1882 = vmatprep.subr.mxu0 0.0
        %1883 = vmatpush1.msra.mxu0 %v1855
        %1884 = vmatprep.subr.mxu0 0.0
        %1885 = vmatpush1.msra.mxu0 %v1856
        %1886 = vmatprep.subr.mxu0 0.0
        %1887 = vmatpush1.msra.mxu0 %v1857
        %1888 = vmatprep.subr.mxu0 0.0
        %1889 = vmatpush1.msra.mxu0 %v1858
        %1890 = vmatprep.subr.mxu0 0.0
        %1891 = vmatpush1.msra.mxu0 %v1859
        %1892 = vmatprep.subr.mxu0 0.0
        %1893 = vmatpush1.msra.mxu0 0.0
        %1894 = vmatprep.subr.mxu0 0.0
        %1895 = vmatpush1.msra.mxu0 0.0
        %1896 = vmatprep.subr.mxu0 0.0
        %1897 = vmatpush1.msra.mxu0 0.0
        %1898 = vmatprep.subr.mxu0 0.0
        %1899 = vmatpush1.msra.mxu0 0.0
        %1900 = vmatprep.subr.mxu0 0.0
        %1901 = vmatpush1.msra.mxu0 0.0
        %1902 = vmatprep.subr.mxu0 0.0
        %1903 = vmatpush1.msra.mxu0 0.0
        %1904 = vmatprep.subr.mxu0 0.0
        %1905 = vmatpush1.msra.mxu0 0.0
        %1906 = vmatprep.subr.mxu0 0.0
        %1907 = vmatpush1.msra.mxu0 0.0
        %1908 = vmatprep.subr.mxu0 0.0
        %1909 = vmatpush1.msra.mxu0 0.0
        %1910 = vmatprep.subr.mxu0 0.0
        %1911 = vmatpush1.msra.mxu0 0.0
        %1912 = vmatprep.subr.mxu0 0.0
        %1913 = vmatpush1.msra.mxu0 0.0
        %1914 = vmatprep.subr.mxu0 0.0
        %1915 = vmatpush1.msra.mxu0 0.0
        %1916 = vmatprep.subr.mxu0 0.0
        %1917 = vmatpush1.msra.mxu0 0.0
        %1918 = vmatprep.subr.mxu0 0.0
        %1919 = vmatpush1.msra.mxu0 0.0
        %1920 = vmatprep.subr.mxu0 0.0
        %1921 = vmatpush1.msra.mxu0 0.0
        %1922 = vmatprep.subr.mxu0 0.0
        %1923 = vmatpush1.msra.mxu0 0.0
        %1924 = vmatprep.mubr.f32.mxu0 0.0
        %1925 = vmatmul.mubr.f32.gmra.mrb[0].mxu0 %v1830
        %v1926 = vpop.f32.mrb[0].mxu0
        %v1927 = vadd.f32 0.0, %v1926
        %v1928 = vpop.f32.mrb[0].mxu0
        %1929 = vmatprep.mubr.f32.mxu0 0.0
        %1930 = vmatmul.mubr.f32.gmra.mrb[0].mxu0 %v1831
        %v1931 = vpop.f32.mrb[0].mxu0
        %v1932 = vadd.f32 0.0, %v1931
        %v1933 = vpop.f32.mrb[0].mxu0
        %1934 = vmatprep.mubr.f32.mxu0 0.0
        %1935 = vmatmul.mubr.f32.gmra.mrb[0].mxu0 %v1832
        %v1936 = vpop.f32.mrb[0].mxu0
        %v1937 = vadd.f32 0.0, %v1936
        %v1938 = vpop.f32.mrb[0].mxu0
        %1939 = vmatprep.mubr.f32.mxu0 0.0
        %1940 = vmatmul.mubr.f32.gmra.mrb[0].mxu0 %v1833
        %v1941 = vpop.f32.mrb[0].mxu0
        %v1942 = vadd.f32 0.0, %v1941
        %v1943 = vpop.f32.mrb[0].mxu0
        %1944 = vmatprep.mubr.f32.mxu0 0.0
        %1945 = vmatmul.mubr.f32.gmra.mrb[0].mxu0 %v1834
        %v1946 = vpop.f32.mrb[0].mxu0
        %v1947 = vadd.f32 0.0, %v1946
        %v1948 = vpop.f32.mrb[0].mxu0
        %1949 = vmatprep.mubr.f32.mxu0 0.0
        %1950 = vmatmul.mubr.f32.gmra.mrb[0].mxu0 %v1835
        %v1951 = vpop.f32.mrb[0].mxu0
        %v1952 = vadd.f32 0.0, %v1951
        %v1953 = vpop.f32.mrb[0].mxu0
        %1954 = vmatprep.mubr.f32.mxu0 0.0
        %1955 = vmatmul.mubr.f32.gmra.mrb[0].mxu0 %v1836
        %v1956 = vpop.f32.mrb[0].mxu0
        %v1957 = vadd.f32 0.0, %v1956
        %v1958 = vpop.f32.mrb[0].mxu0
        %1959 = vmatprep.mubr.f32.mxu0 0.0
        %1960 = vmatmul.mubr.f32.gmra.mrb[0].mxu0 %v1837
        %v1961 = vpop.f32.mrb[0].mxu0
        %v1962 = vadd.f32 0.0, %v1961
        %v1963 = vpop.f32.mrb[0].mxu0
        %1964 = vmatprep.mubr.f32.mxu0 0.0
        %1965 = vmatmul.mubr.f32.gmra.mrb[0].mxu0 %v1838
        %v1966 = vpop.f32.mrb[0].mxu0
        %v1967 = vadd.f32 0.0, %v1966
        %v1968 = vpop.f32.mrb[0].mxu0
        %1969 = vmatprep.mubr.f32.mxu0 0.0
        %1970 = vmatmul.mubr.f32.gmra.mrb[0].mxu0 %v1839
        %v1971 = vpop.f32.mrb[0].mxu0
        %v1972 = vadd.f32 0.0, %v1971
        %v1973 = vpop.f32.mrb[0].mxu0
        %1974 = vmatprep.mubr.f32.mxu0 0.0
        %1975 = vmatmul.mubr.f32.gmra.mrb[0].mxu0 %v1840
        %v1976 = vpop.f32.mrb[0].mxu0
        %v1977 = vadd.f32 0.0, %v1976
        %v1978 = vpop.f32.mrb[0].mxu0
        %1979 = vmatprep.mubr.f32.mxu0 0.0
        %1980 = vmatmul.mubr.f32.gmra.mrb[0].mxu0 %v1841
        %v1981 = vpop.f32.mrb[0].mxu0
        %v1982 = vadd.f32 0.0, %v1981
        %v1983 = vpop.f32.mrb[0].mxu0
        %1984 = vmatprep.mubr.f32.mxu0 0.0
        %1985 = vmatmul.mubr.f32.gmra.mrb[0].mxu0 %v1842
        %v1986 = vpop.f32.mrb[0].mxu0
        %v1987 = vadd.f32 0.0, %v1986
        %v1988 = vpop.f32.mrb[0].mxu0
        %1989 = vdwg.mxu0
        %v1990 = vadd.f32 %v1817, %v1927
        %v1991 = vadd.f32 %v1818, %v1932
        %v1992 = vadd.f32 %v1819, %v1937
        %v1993 = vadd.f32 %v1820, %v1942
        %v1994 = vadd.f32 %v1821, %v1947
        %v1995 = vadd.f32 %v1822, %v1952
        %v1996 = vadd.f32 %v1823, %v1957
        %v1997 = vadd.f32 %v1824, %v1962
        %v1998 = vadd.f32 %v1825, %v1967
        %v1999 = vadd.f32 %v1826, %v1972
        %v2000 = vadd.f32 %v1827, %v1977
        %v2001 = vadd.f32 %v1828, %v1982
        %v2002 = vadd.f32 %v1829, %v1987
        %v2003 = vld [vmem:[#allocation3 + $0x14] sm:$0xff]
        %v2004 = vld [vmem:[#allocation3 + $0x1c] sm:$0xff]
        %v2005 = vld [vmem:[#allocation3 + $0x24] sm:$0xff]
        %v2006 = vld [vmem:[#allocation3 + $0x2c] sm:$0xff]
        %v2007 = vld [vmem:[#allocation3 + $0x34] sm:$0xff]
        %v2008 = vld [vmem:[#allocation3 + $0x3c] sm:$0xff]
        %v2009 = vld [vmem:[#allocation3 + $0x44] sm:$0xff]
        %v2010 = vld [vmem:[#allocation3 + $0x4c] sm:$0xff]
        %v2011 = vld [vmem:[#allocation3 + $0x54] sm:$0xff]
        %v2012 = vld [vmem:[#allocation3 + $0x5c] sm:$0xff]
        %v2013 = vld [vmem:[#allocation3 + $0x64] sm:$0xff]
        %v2014 = vld [vmem:[#allocation3 + $0x6c] sm:$0xff]
        %v2015 = vld [vmem:[#allocation3 + $0x74] sm:$0xf]
        %s2016 = scalar_lea.vmem %s3, 768
        %v2017 = vld [vmem:[%s2016] sm:$0xff]
        %v2018 = vld [vmem:[%s2016 + $0x8] sm:$0xff]
        %v2019 = vld [vmem:[%s2016 + $0x10] sm:$0xff]
        %v2020 = vld [vmem:[%s2016 + $0x18] sm:$0xff]
        %v2021 = vld [vmem:[%s2016 + $0x20] sm:$0xff]
        %v2022 = vld [vmem:[%s2016 + $0x28] sm:$0xff]
        %v2023 = vld [vmem:[%s2016 + $0x30] sm:$0xff]
        %v2024 = vld [vmem:[%s2016 + $0x38] sm:$0xff]
        %v2025 = vld [vmem:[%s2016 + $0x40] sm:$0xff]
        %v2026 = vld [vmem:[%s2016 + $0x48] sm:$0xff]
        %v2027 = vld [vmem:[%s2016 + $0x50] sm:$0xff]
        %v2028 = vld [vmem:[%s2016 + $0x58] sm:$0xff]
        %v2029 = vld [vmem:[%s2016 + $0x60] sm:$0xff]
        %v2030 = vld [vmem:[%s2016 + $0x68] sm:$0xff]
        %v2031 = vld [vmem:[%s2016 + $0x70] sm:$0xff]
        %v2032 = vld [vmem:[%s2016 + $0x78] sm:$0xff]
        %2033 = vmatprep.subr.mxu0 0.0
        %2034 = vmatpush1.msra.mxu0 %v2017
        %2035 = vmatprep.subr.mxu0 0.0
        %2036 = vmatpush1.msra.mxu0 %v2018
        %2037 = vmatprep.subr.mxu0 0.0
        %2038 = vmatpush1.msra.mxu0 %v2019
        %2039 = vmatprep.subr.mxu0 0.0
        %2040 = vmatpush1.msra.mxu0 %v2020
        %2041 = vmatprep.subr.mxu0 0.0
        %2042 = vmatpush1.msra.mxu0 %v2021
        %2043 = vmatprep.subr.mxu0 0.0
        %2044 = vmatpush1.msra.mxu0 %v2022
        %2045 = vmatprep.subr.mxu0 0.0
        %2046 = vmatpush1.msra.mxu0 %v2023
        %2047 = vmatprep.subr.mxu0 0.0
        %2048 = vmatpush1.msra.mxu0 %v2024
        %2049 = vmatprep.subr.mxu0 0.0
        %2050 = vmatpush1.msra.mxu0 %v2025
        %2051 = vmatprep.subr.mxu0 0.0
        %2052 = vmatpush1.msra.mxu0 %v2026
        %2053 = vmatprep.subr.mxu0 0.0
        %2054 = vmatpush1.msra.mxu0 %v2027
        %2055 = vmatprep.subr.mxu0 0.0
        %2056 = vmatpush1.msra.mxu0 %v2028
        %2057 = vmatprep.subr.mxu0 0.0
        %2058 = vmatpush1.msra.mxu0 %v2029
        %2059 = vmatprep.subr.mxu0 0.0
        %2060 = vmatpush1.msra.mxu0 %v2030
        %2061 = vmatprep.subr.mxu0 0.0
        %2062 = vmatpush1.msra.mxu0 %v2031
        %2063 = vmatprep.subr.mxu0 0.0
        %2064 = vmatpush1.msra.mxu0 %v2032
        %2065 = vmatprep.subr.mxu0 0.0
        %2066 = vmatpush1.msra.mxu0 0.0
        %2067 = vmatprep.subr.mxu0 0.0
        %2068 = vmatpush1.msra.mxu0 0.0
        %2069 = vmatprep.subr.mxu0 0.0
        %2070 = vmatpush1.msra.mxu0 0.0
        %2071 = vmatprep.subr.mxu0 0.0
        %2072 = vmatpush1.msra.mxu0 0.0
        %2073 = vmatprep.subr.mxu0 0.0
        %2074 = vmatpush1.msra.mxu0 0.0
        %2075 = vmatprep.subr.mxu0 0.0
        %2076 = vmatpush1.msra.mxu0 0.0
        %2077 = vmatprep.subr.mxu0 0.0
        %2078 = vmatpush1.msra.mxu0 0.0
        %2079 = vmatprep.subr.mxu0 0.0
        %2080 = vmatpush1.msra.mxu0 0.0
        %2081 = vmatprep.subr.mxu0 0.0
        %2082 = vmatpush1.msra.mxu0 0.0
        %2083 = vmatprep.subr.mxu0 0.0
        %2084 = vmatpush1.msra.mxu0 0.0
        %2085 = vmatprep.subr.mxu0 0.0
        %2086 = vmatpush1.msra.mxu0 0.0
        %2087 = vmatprep.subr.mxu0 0.0
        %2088 = vmatpush1.msra.mxu0 0.0
        %2089 = vmatprep.subr.mxu0 0.0
        %2090 = vmatpush1.msra.mxu0 0.0
        %2091 = vmatprep.subr.mxu0 0.0
        %2092 = vmatpush1.msra.mxu0 0.0
        %2093 = vmatprep.subr.mxu0 0.0
        %2094 = vmatpush1.msra.mxu0 0.0
        %2095 = vmatprep.subr.mxu0 0.0
        %2096 = vmatpush1.msra.mxu0 0.0
        %2097 = vmatprep.mubr.f32.mxu0 0.0
        %2098 = vmatmul.mubr.f32.gmra.mrb[0].mxu0 %v2003
        %v2099 = vpop.f32.mrb[0].mxu0
        %v2100 = vadd.f32 0.0, %v2099
        %v2101 = vpop.f32.mrb[0].mxu0
        %2102 = vmatprep.mubr.f32.mxu0 0.0
        %2103 = vmatmul.mubr.f32.gmra.mrb[0].mxu0 %v2004
        %v2104 = vpop.f32.mrb[0].mxu0
        %v2105 = vadd.f32 0.0, %v2104
        %v2106 = vpop.f32.mrb[0].mxu0
        %2107 = vmatprep.mubr.f32.mxu0 0.0
        %2108 = vmatmul.mubr.f32.gmra.mrb[0].mxu0 %v2005
        %v2109 = vpop.f32.mrb[0].mxu0
        %v2110 = vadd.f32 0.0, %v2109
        %v2111 = vpop.f32.mrb[0].mxu0
        %2112 = vmatprep.mubr.f32.mxu0 0.0
        %2113 = vmatmul.mubr.f32.gmra.mrb[0].mxu0 %v2006
        %v2114 = vpop.f32.mrb[0].mxu0
        %v2115 = vadd.f32 0.0, %v2114
        %v2116 = vpop.f32.mrb[0].mxu0
        %2117 = vmatprep.mubr.f32.mxu0 0.0
        %2118 = vmatmul.mubr.f32.gmra.mrb[0].mxu0 %v2007
        %v2119 = vpop.f32.mrb[0].mxu0
        %v2120 = vadd.f32 0.0, %v2119
        %v2121 = vpop.f32.mrb[0].mxu0
        %2122 = vmatprep.mubr.f32.mxu0 0.0
        %2123 = vmatmul.mubr.f32.gmra.mrb[0].mxu0 %v2008
        %v2124 = vpop.f32.mrb[0].mxu0
        %v2125 = vadd.f32 0.0, %v2124
        %v2126 = vpop.f32.mrb[0].mxu0
        %2127 = vmatprep.mubr.f32.mxu0 0.0
        %2128 = vmatmul.mubr.f32.gmra.mrb[0].mxu0 %v2009
        %v2129 = vpop.f32.mrb[0].mxu0
        %v2130 = vadd.f32 0.0, %v2129
        %v2131 = vpop.f32.mrb[0].mxu0
        %2132 = vmatprep.mubr.f32.mxu0 0.0
        %2133 = vmatmul.mubr.f32.gmra.mrb[0].mxu0 %v2010
        %v2134 = vpop.f32.mrb[0].mxu0
        %v2135 = vadd.f32 0.0, %v2134
        %v2136 = vpop.f32.mrb[0].mxu0
        %2137 = vmatprep.mubr.f32.mxu0 0.0
        %2138 = vmatmul.mubr.f32.gmra.mrb[0].mxu0 %v2011
        %v2139 = vpop.f32.mrb[0].mxu0
        %v2140 = vadd.f32 0.0, %v2139
        %v2141 = vpop.f32.mrb[0].mxu0
        %2142 = vmatprep.mubr.f32.mxu0 0.0
        %2143 = vmatmul.mubr.f32.gmra.mrb[0].mxu0 %v2012
        %v2144 = vpop.f32.mrb[0].mxu0
        %v2145 = vadd.f32 0.0, %v2144
        %v2146 = vpop.f32.mrb[0].mxu0
        %2147 = vmatprep.mubr.f32.mxu0 0.0
        %2148 = vmatmul.mubr.f32.gmra.mrb[0].mxu0 %v2013
        %v2149 = vpop.f32.mrb[0].mxu0
        %v2150 = vadd.f32 0.0, %v2149
        %v2151 = vpop.f32.mrb[0].mxu0
        %2152 = vmatprep.mubr.f32.mxu0 0.0
        %2153 = vmatmul.mubr.f32.gmra.mrb[0].mxu0 %v2014
        %v2154 = vpop.f32.mrb[0].mxu0
        %v2155 = vadd.f32 0.0, %v2154
        %v2156 = vpop.f32.mrb[0].mxu0
        %2157 = vmatprep.mubr.f32.mxu0 0.0
        %2158 = vmatmul.mubr.f32.gmra.mrb[0].mxu0 %v2015
        %v2159 = vpop.f32.mrb[0].mxu0
        %v2160 = vadd.f32 0.0, %v2159
        %v2161 = vpop.f32.mrb[0].mxu0
        %2162 = vdwg.mxu0
        %v2163 = vadd.f32 %v1990, %v2100
        %v2164 = vadd.f32 %v1991, %v2105
        %v2165 = vadd.f32 %v1992, %v2110
        %v2166 = vadd.f32 %v1993, %v2115
        %v2167 = vadd.f32 %v1994, %v2120
        %v2168 = vadd.f32 %v1995, %v2125
        %v2169 = vadd.f32 %v1996, %v2130
        %v2170 = vadd.f32 %v1997, %v2135
        %v2171 = vadd.f32 %v1998, %v2140
        %v2172 = vadd.f32 %v1999, %v2145
        %v2173 = vadd.f32 %v2000, %v2150
        %v2174 = vadd.f32 %v2001, %v2155
        %v2175 = vadd.f32 %v2002, %v2160
        %v2176 = vld [vmem:[#allocation3 + $0x15] sm:$0xff]
        %v2177 = vld [vmem:[#allocation3 + $0x1d] sm:$0xff]
        %v2178 = vld [vmem:[#allocation3 + $0x25] sm:$0xff]
        %v2179 = vld [vmem:[#allocation3 + $0x2d] sm:$0xff]
        %v2180 = vld [vmem:[#allocation3 + $0x35] sm:$0xff]
        %v2181 = vld [vmem:[#allocation3 + $0x3d] sm:$0xff]
        %v2182 = vld [vmem:[#allocation3 + $0x45] sm:$0xff]
        %v2183 = vld [vmem:[#allocation3 + $0x4d] sm:$0xff]
        %v2184 = vld [vmem:[#allocation3 + $0x55] sm:$0xff]
        %v2185 = vld [vmem:[#allocation3 + $0x5d] sm:$0xff]
        %v2186 = vld [vmem:[#allocation3 + $0x65] sm:$0xff]
        %v2187 = vld [vmem:[#allocation3 + $0x6d] sm:$0xff]
        %v2188 = vld [vmem:[#allocation3 + $0x75] sm:$0xf]
        %s2189 = scalar_lea.vmem %s3, 896
        %v2190 = vld [vmem:[%s2189] sm:$0xff]
        %v2191 = vld [vmem:[%s2189 + $0x8] sm:$0xff]
        %v2192 = vld [vmem:[%s2189 + $0x10] sm:$0xff]
        %v2193 = vld [vmem:[%s2189 + $0x18] sm:$0xff]
        %v2194 = vld [vmem:[%s2189 + $0x20] sm:$0xff]
        %v2195 = vld [vmem:[%s2189 + $0x28] sm:$0xff]
        %v2196 = vld [vmem:[%s2189 + $0x30] sm:$0xff]
        %v2197 = vld [vmem:[%s2189 + $0x38] sm:$0xff]
        %v2198 = vld [vmem:[%s2189 + $0x40] sm:$0xff]
        %v2199 = vld [vmem:[%s2189 + $0x48] sm:$0xff]
        %v2200 = vld [vmem:[%s2189 + $0x50] sm:$0xff]
        %v2201 = vld [vmem:[%s2189 + $0x58] sm:$0xff]
        %v2202 = vld [vmem:[%s2189 + $0x60] sm:$0xff]
        %v2203 = vld [vmem:[%s2189 + $0x68] sm:$0xff]
        %v2204 = vld [vmem:[%s2189 + $0x70] sm:$0xff]
        %v2205 = vld [vmem:[%s2189 + $0x78] sm:$0xff]
        %2206 = vmatprep.subr.mxu0 0.0
        %2207 = vmatpush1.msra.mxu0 %v2190
        %2208 = vmatprep.subr.mxu0 0.0
        %2209 = vmatpush1.msra.mxu0 %v2191
        %2210 = vmatprep.subr.mxu0 0.0
        %2211 = vmatpush1.msra.mxu0 %v2192
        %2212 = vmatprep.subr.mxu0 0.0
        %2213 = vmatpush1.msra.mxu0 %v2193
        %2214 = vmatprep.subr.mxu0 0.0
        %2215 = vmatpush1.msra.mxu0 %v2194
        %2216 = vmatprep.subr.mxu0 0.0
        %2217 = vmatpush1.msra.mxu0 %v2195
        %2218 = vmatprep.subr.mxu0 0.0
        %2219 = vmatpush1.msra.mxu0 %v2196
        %2220 = vmatprep.subr.mxu0 0.0
        %2221 = vmatpush1.msra.mxu0 %v2197
        %2222 = vmatprep.subr.mxu0 0.0
        %2223 = vmatpush1.msra.mxu0 %v2198
        %2224 = vmatprep.subr.mxu0 0.0
        %2225 = vmatpush1.msra.mxu0 %v2199
        %2226 = vmatprep.subr.mxu0 0.0
        %2227 = vmatpush1.msra.mxu0 %v2200
        %2228 = vmatprep.subr.mxu0 0.0
        %2229 = vmatpush1.msra.mxu0 %v2201
        %2230 = vmatprep.subr.mxu0 0.0
        %2231 = vmatpush1.msra.mxu0 %v2202
        %2232 = vmatprep.subr.mxu0 0.0
        %2233 = vmatpush1.msra.mxu0 %v2203
        %2234 = vmatprep.subr.mxu0 0.0
        %2235 = vmatpush1.msra.mxu0 %v2204
        %2236 = vmatprep.subr.mxu0 0.0
        %2237 = vmatpush1.msra.mxu0 %v2205
        %2238 = vmatprep.subr.mxu0 0.0
        %2239 = vmatpush1.msra.mxu0 0.0
        %2240 = vmatprep.subr.mxu0 0.0
        %2241 = vmatpush1.msra.mxu0 0.0
        %2242 = vmatprep.subr.mxu0 0.0
        %2243 = vmatpush1.msra.mxu0 0.0
        %2244 = vmatprep.subr.mxu0 0.0
        %2245 = vmatpush1.msra.mxu0 0.0
        %2246 = vmatprep.subr.mxu0 0.0
        %2247 = vmatpush1.msra.mxu0 0.0
        %2248 = vmatprep.subr.mxu0 0.0
        %2249 = vmatpush1.msra.mxu0 0.0
        %2250 = vmatprep.subr.mxu0 0.0
        %2251 = vmatpush1.msra.mxu0 0.0
        %2252 = vmatprep.subr.mxu0 0.0
        %2253 = vmatpush1.msra.mxu0 0.0
        %2254 = vmatprep.subr.mxu0 0.0
        %2255 = vmatpush1.msra.mxu0 0.0
        %2256 = vmatprep.subr.mxu0 0.0
        %2257 = vmatpush1.msra.mxu0 0.0
        %2258 = vmatprep.subr.mxu0 0.0
        %2259 = vmatpush1.msra.mxu0 0.0
        %2260 = vmatprep.subr.mxu0 0.0
        %2261 = vmatpush1.msra.mxu0 0.0
        %2262 = vmatprep.subr.mxu0 0.0
        %2263 = vmatpush1.msra.mxu0 0.0
        %2264 = vmatprep.subr.mxu0 0.0
        %2265 = vmatpush1.msra.mxu0 0.0
        %2266 = vmatprep.subr.mxu0 0.0
        %2267 = vmatpush1.msra.mxu0 0.0
        %2268 = vmatprep.subr.mxu0 0.0
        %2269 = vmatpush1.msra.mxu0 0.0
        %2270 = vmatprep.mubr.f32.mxu0 0.0
        %2271 = vmatmul.mubr.f32.gmra.mrb[0].mxu0 %v2176
        %v2272 = vpop.f32.mrb[0].mxu0
        %v2273 = vadd.f32 0.0, %v2272
        %v2274 = vpop.f32.mrb[0].mxu0
        %2275 = vmatprep.mubr.f32.mxu0 0.0
        %2276 = vmatmul.mubr.f32.gmra.mrb[0].mxu0 %v2177
        %v2277 = vpop.f32.mrb[0].mxu0
        %v2278 = vadd.f32 0.0, %v2277
        %v2279 = vpop.f32.mrb[0].mxu0
        %2280 = vmatprep.mubr.f32.mxu0 0.0
        %2281 = vmatmul.mubr.f32.gmra.mrb[0].mxu0 %v2178
        %v2282 = vpop.f32.mrb[0].mxu0
        %v2283 = vadd.f32 0.0, %v2282
        %v2284 = vpop.f32.mrb[0].mxu0
        %2285 = vmatprep.mubr.f32.mxu0 0.0
        %2286 = vmatmul.mubr.f32.gmra.mrb[0].mxu0 %v2179
        %v2287 = vpop.f32.mrb[0].mxu0
        %v2288 = vadd.f32 0.0, %v2287
        %v2289 = vpop.f32.mrb[0].mxu0
        %2290 = vmatprep.mubr.f32.mxu0 0.0
        %2291 = vmatmul.mubr.f32.gmra.mrb[0].mxu0 %v2180
        %v2292 = vpop.f32.mrb[0].mxu0
        %v2293 = vadd.f32 0.0, %v2292
        %v2294 = vpop.f32.mrb[0].mxu0
        %2295 = vmatprep.mubr.f32.mxu0 0.0
        %2296 = vmatmul.mubr.f32.gmra.mrb[0].mxu0 %v2181
        %v2297 = vpop.f32.mrb[0].mxu0
        %v2298 = vadd.f32 0.0, %v2297
        %v2299 = vpop.f32.mrb[0].mxu0
        %2300 = vmatprep.mubr.f32.mxu0 0.0
        %2301 = vmatmul.mubr.f32.gmra.mrb[0].mxu0 %v2182
        %v2302 = vpop.f32.mrb[0].mxu0
        %v2303 = vadd.f32 0.0, %v2302
        %v2304 = vpop.f32.mrb[0].mxu0
        %2305 = vmatprep.mubr.f32.mxu0 0.0
        %2306 = vmatmul.mubr.f32.gmra.mrb[0].mxu0 %v2183
        %v2307 = vpop.f32.mrb[0].mxu0
        %v2308 = vadd.f32 0.0, %v2307
        %v2309 = vpop.f32.mrb[0].mxu0
        %2310 = vmatprep.mubr.f32.mxu0 0.0
        %2311 = vmatmul.mubr.f32.gmra.mrb[0].mxu0 %v2184
        %v2312 = vpop.f32.mrb[0].mxu0
        %v2313 = vadd.f32 0.0, %v2312
        %v2314 = vpop.f32.mrb[0].mxu0
        %2315 = vmatprep.mubr.f32.mxu0 0.0
        %2316 = vmatmul.mubr.f32.gmra.mrb[0].mxu0 %v2185
        %v2317 = vpop.f32.mrb[0].mxu0
        %v2318 = vadd.f32 0.0, %v2317
        %v2319 = vpop.f32.mrb[0].mxu0
        %2320 = vmatprep.mubr.f32.mxu0 0.0
        %2321 = vmatmul.mubr.f32.gmra.mrb[0].mxu0 %v2186
        %v2322 = vpop.f32.mrb[0].mxu0
        %v2323 = vadd.f32 0.0, %v2322
        %v2324 = vpop.f32.mrb[0].mxu0
        %2325 = vmatprep.mubr.f32.mxu0 0.0
        %2326 = vmatmul.mubr.f32.gmra.mrb[0].mxu0 %v2187
        %v2327 = vpop.f32.mrb[0].mxu0
        %v2328 = vadd.f32 0.0, %v2327
        %v2329 = vpop.f32.mrb[0].mxu0
        %2330 = vmatprep.mubr.f32.mxu0 0.0
        %2331 = vmatmul.mubr.f32.gmra.mrb[0].mxu0 %v2188
        %v2332 = vpop.f32.mrb[0].mxu0
        %v2333 = vadd.f32 0.0, %v2332
        %v2334 = vpop.f32.mrb[0].mxu0
        %2335 = vdwg.mxu0
        %v2336 = vadd.f32 %v2163, %v2273
        %v2337 = vadd.f32 %v2164, %v2278
        %v2338 = vadd.f32 %v2165, %v2283
        %v2339 = vadd.f32 %v2166, %v2288
        %v2340 = vadd.f32 %v2167, %v2293
        %v2341 = vadd.f32 %v2168, %v2298
        %v2342 = vadd.f32 %v2169, %v2303
        %v2343 = vadd.f32 %v2170, %v2308
        %v2344 = vadd.f32 %v2171, %v2313
        %v2345 = vadd.f32 %v2172, %v2318
        %v2346 = vadd.f32 %v2173, %v2323
        %v2347 = vadd.f32 %v2174, %v2328
        %v2348 = vadd.f32 %v2175, %v2333
        %v2349 = vld [vmem:[#allocation3 + $0x16] sm:$0xff]
        %v2350 = vld [vmem:[#allocation3 + $0x1e] sm:$0xff]
        %v2351 = vld [vmem:[#allocation3 + $0x26] sm:$0xff]
        %v2352 = vld [vmem:[#allocation3 + $0x2e] sm:$0xff]
        %v2353 = vld [vmem:[#allocation3 + $0x36] sm:$0xff]
        %v2354 = vld [vmem:[#allocation3 + $0x3e] sm:$0xff]
        %v2355 = vld [vmem:[#allocation3 + $0x46] sm:$0xff]
        %v2356 = vld [vmem:[#allocation3 + $0x4e] sm:$0xff]
        %v2357 = vld [vmem:[#allocation3 + $0x56] sm:$0xff]
        %v2358 = vld [vmem:[#allocation3 + $0x5e] sm:$0xff]
        %v2359 = vld [vmem:[#allocation3 + $0x66] sm:$0xff]
        %v2360 = vld [vmem:[#allocation3 + $0x6e] sm:$0xff]
        %v2361 = vld [vmem:[#allocation3 + $0x76] sm:$0xf]
        %s2362 = scalar_lea.vmem %s3, 1024
        %v2363 = vld [vmem:[%s2362] sm:$0xff]
        %v2364 = vld [vmem:[%s2362 + $0x8] sm:$0xff]
        %v2365 = vld [vmem:[%s2362 + $0x10] sm:$0xff]
        %v2366 = vld [vmem:[%s2362 + $0x18] sm:$0xff]
        %v2367 = vld [vmem:[%s2362 + $0x20] sm:$0xff]
        %v2368 = vld [vmem:[%s2362 + $0x28] sm:$0xff]
        %v2369 = vld [vmem:[%s2362 + $0x30] sm:$0xff]
        %v2370 = vld [vmem:[%s2362 + $0x38] sm:$0xff]
        %v2371 = vld [vmem:[%s2362 + $0x40] sm:$0xff]
        %v2372 = vld [vmem:[%s2362 + $0x48] sm:$0xff]
        %v2373 = vld [vmem:[%s2362 + $0x50] sm:$0xff]
        %v2374 = vld [vmem:[%s2362 + $0x58] sm:$0xff]
        %v2375 = vld [vmem:[%s2362 + $0x60] sm:$0xff]
        %v2376 = vld [vmem:[%s2362 + $0x68] sm:$0xff]
        %v2377 = vld [vmem:[%s2362 + $0x70] sm:$0xff]
        %v2378 = vld [vmem:[%s2362 + $0x78] sm:$0xff]
        %2379 = vmatprep.subr.mxu0 0.0
        %2380 = vmatpush1.msra.mxu0 %v2363
        %2381 = vmatprep.subr.mxu0 0.0
        %2382 = vmatpush1.msra.mxu0 %v2364
        %2383 = vmatprep.subr.mxu0 0.0
        %2384 = vmatpush1.msra.mxu0 %v2365
        %2385 = vmatprep.subr.mxu0 0.0
        %2386 = vmatpush1.msra.mxu0 %v2366
        %2387 = vmatprep.subr.mxu0 0.0
        %2388 = vmatpush1.msra.mxu0 %v2367
        %2389 = vmatprep.subr.mxu0 0.0
        %2390 = vmatpush1.msra.mxu0 %v2368
        %2391 = vmatprep.subr.mxu0 0.0
        %2392 = vmatpush1.msra.mxu0 %v2369
        %2393 = vmatprep.subr.mxu0 0.0
        %2394 = vmatpush1.msra.mxu0 %v2370
        %2395 = vmatprep.subr.mxu0 0.0
        %2396 = vmatpush1.msra.mxu0 %v2371
        %2397 = vmatprep.subr.mxu0 0.0
        %2398 = vmatpush1.msra.mxu0 %v2372
        %2399 = vmatprep.subr.mxu0 0.0
        %2400 = vmatpush1.msra.mxu0 %v2373
        %2401 = vmatprep.subr.mxu0 0.0
        %2402 = vmatpush1.msra.mxu0 %v2374
        %2403 = vmatprep.subr.mxu0 0.0
        %2404 = vmatpush1.msra.mxu0 %v2375
        %2405 = vmatprep.subr.mxu0 0.0
        %2406 = vmatpush1.msra.mxu0 %v2376
        %2407 = vmatprep.subr.mxu0 0.0
        %2408 = vmatpush1.msra.mxu0 %v2377
        %2409 = vmatprep.subr.mxu0 0.0
        %2410 = vmatpush1.msra.mxu0 %v2378
        %2411 = vmatprep.subr.mxu0 0.0
        %2412 = vmatpush1.msra.mxu0 0.0
        %2413 = vmatprep.subr.mxu0 0.0
        %2414 = vmatpush1.msra.mxu0 0.0
        %2415 = vmatprep.subr.mxu0 0.0
        %2416 = vmatpush1.msra.mxu0 0.0
        %2417 = vmatprep.subr.mxu0 0.0
        %2418 = vmatpush1.msra.mxu0 0.0
        %2419 = vmatprep.subr.mxu0 0.0
        %2420 = vmatpush1.msra.mxu0 0.0
        %2421 = vmatprep.subr.mxu0 0.0
        %2422 = vmatpush1.msra.mxu0 0.0
        %2423 = vmatprep.subr.mxu0 0.0
        %2424 = vmatpush1.msra.mxu0 0.0
        %2425 = vmatprep.subr.mxu0 0.0
        %2426 = vmatpush1.msra.mxu0 0.0
        %2427 = vmatprep.subr.mxu0 0.0
        %2428 = vmatpush1.msra.mxu0 0.0
        %2429 = vmatprep.subr.mxu0 0.0
        %2430 = vmatpush1.msra.mxu0 0.0
        %2431 = vmatprep.subr.mxu0 0.0
        %2432 = vmatpush1.msra.mxu0 0.0
        %2433 = vmatprep.subr.mxu0 0.0
        %2434 = vmatpush1.msra.mxu0 0.0
        %2435 = vmatprep.subr.mxu0 0.0
        %2436 = vmatpush1.msra.mxu0 0.0
        %2437 = vmatprep.subr.mxu0 0.0
        %2438 = vmatpush1.msra.mxu0 0.0
        %2439 = vmatprep.subr.mxu0 0.0
        %2440 = vmatpush1.msra.mxu0 0.0
        %2441 = vmatprep.subr.mxu0 0.0
        %2442 = vmatpush1.msra.mxu0 0.0
        %2443 = vmatprep.mubr.f32.mxu0 0.0
        %2444 = vmatmul.mubr.f32.gmra.mrb[0].mxu0 %v2349
        %v2445 = vpop.f32.mrb[0].mxu0
        %v2446 = vadd.f32 0.0, %v2445
        %v2447 = vpop.f32.mrb[0].mxu0
        %2448 = vmatprep.mubr.f32.mxu0 0.0
        %2449 = vmatmul.mubr.f32.gmra.mrb[0].mxu0 %v2350
        %v2450 = vpop.f32.mrb[0].mxu0
        %v2451 = vadd.f32 0.0, %v2450
        %v2452 = vpop.f32.mrb[0].mxu0
        %2453 = vmatprep.mubr.f32.mxu0 0.0
        %2454 = vmatmul.mubr.f32.gmra.mrb[0].mxu0 %v2351
        %v2455 = vpop.f32.mrb[0].mxu0
        %v2456 = vadd.f32 0.0, %v2455
        %v2457 = vpop.f32.mrb[0].mxu0
        %2458 = vmatprep.mubr.f32.mxu0 0.0
        %2459 = vmatmul.mubr.f32.gmra.mrb[0].mxu0 %v2352
        %v2460 = vpop.f32.mrb[0].mxu0
        %v2461 = vadd.f32 0.0, %v2460
        %v2462 = vpop.f32.mrb[0].mxu0
        %2463 = vmatprep.mubr.f32.mxu0 0.0
        %2464 = vmatmul.mubr.f32.gmra.mrb[0].mxu0 %v2353
        %v2465 = vpop.f32.mrb[0].mxu0
        %v2466 = vadd.f32 0.0, %v2465
        %v2467 = vpop.f32.mrb[0].mxu0
        %2468 = vmatprep.mubr.f32.mxu0 0.0
        %2469 = vmatmul.mubr.f32.gmra.mrb[0].mxu0 %v2354
        %v2470 = vpop.f32.mrb[0].mxu0
        %v2471 = vadd.f32 0.0, %v2470
        %v2472 = vpop.f32.mrb[0].mxu0
        %2473 = vmatprep.mubr.f32.mxu0 0.0
        %2474 = vmatmul.mubr.f32.gmra.mrb[0].mxu0 %v2355
        %v2475 = vpop.f32.mrb[0].mxu0
        %v2476 = vadd.f32 0.0, %v2475
        %v2477 = vpop.f32.mrb[0].mxu0
        %2478 = vmatprep.mubr.f32.mxu0 0.0
        %2479 = vmatmul.mubr.f32.gmra.mrb[0].mxu0 %v2356
        %v2480 = vpop.f32.mrb[0].mxu0
        %v2481 = vadd.f32 0.0, %v2480
        %v2482 = vpop.f32.mrb[0].mxu0
        %2483 = vmatprep.mubr.f32.mxu0 0.0
        %2484 = vmatmul.mubr.f32.gmra.mrb[0].mxu0 %v2357
        %v2485 = vpop.f32.mrb[0].mxu0
        %v2486 = vadd.f32 0.0, %v2485
        %v2487 = vpop.f32.mrb[0].mxu0
        %2488 = vmatprep.mubr.f32.mxu0 0.0
        %2489 = vmatmul.mubr.f32.gmra.mrb[0].mxu0 %v2358
        %v2490 = vpop.f32.mrb[0].mxu0
        %v2491 = vadd.f32 0.0, %v2490
        %v2492 = vpop.f32.mrb[0].mxu0
        %2493 = vmatprep.mubr.f32.mxu0 0.0
        %2494 = vmatmul.mubr.f32.gmra.mrb[0].mxu0 %v2359
        %v2495 = vpop.f32.mrb[0].mxu0
        %v2496 = vadd.f32 0.0, %v2495
        %v2497 = vpop.f32.mrb[0].mxu0
        %2498 = vmatprep.mubr.f32.mxu0 0.0
        %2499 = vmatmul.mubr.f32.gmra.mrb[0].mxu0 %v2360
        %v2500 = vpop.f32.mrb[0].mxu0
        %v2501 = vadd.f32 0.0, %v2500
        %v2502 = vpop.f32.mrb[0].mxu0
        %2503 = vmatprep.mubr.f32.mxu0 0.0
        %2504 = vmatmul.mubr.f32.gmra.mrb[0].mxu0 %v2361
        %v2505 = vpop.f32.mrb[0].mxu0
        %v2506 = vadd.f32 0.0, %v2505
        %v2507 = vpop.f32.mrb[0].mxu0
        %2508 = vdwg.mxu0
        %v2509 = vadd.f32 %v2336, %v2446
        %v2510 = vadd.f32 %v2337, %v2451
        %v2511 = vadd.f32 %v2338, %v2456
        %v2512 = vadd.f32 %v2339, %v2461
        %v2513 = vadd.f32 %v2340, %v2466
        %v2514 = vadd.f32 %v2341, %v2471
        %v2515 = vadd.f32 %v2342, %v2476
        %v2516 = vadd.f32 %v2343, %v2481
        %v2517 = vadd.f32 %v2344, %v2486
        %v2518 = vadd.f32 %v2345, %v2491
        %v2519 = vadd.f32 %v2346, %v2496
        %v2520 = vadd.f32 %v2347, %v2501
        %v2521 = vadd.f32 %v2348, %v2506
        %2522 = vst [vmem:[#allocation2] sm:$0xff] %v2509
        %2523 = vst [vmem:[#allocation2 + $0x8] sm:$0xff] %v2510
        %2524 = vst [vmem:[#allocation2 + $0x10] sm:$0xff] %v2511
        %2525 = vst [vmem:[#allocation2 + $0x18] sm:$0xff] %v2512
        %2526 = vst [vmem:[#allocation2 + $0x20] sm:$0xff] %v2513
        %2527 = vst [vmem:[#allocation2 + $0x28] sm:$0xff] %v2514
        %2528 = vst [vmem:[#allocation2 + $0x30] sm:$0xff] %v2515
        %2529 = vst [vmem:[#allocation2 + $0x38] sm:$0xff] %v2516
        %2530 = vst [vmem:[#allocation2 + $0x40] sm:$0xff] %v2517
        %2531 = vst [vmem:[#allocation2 + $0x48] sm:$0xff] %v2518
        %2532 = vst [vmem:[#allocation2 + $0x50] sm:$0xff] %v2519
        %2533 = vst [vmem:[#allocation2 + $0x58] sm:$0xff] %v2520
        %2534 = vst [vmem:[#allocation2 + $0x60] sm:$0xf] %v2521
        %v2535 = vld [vmem:[%s4] sm:$0x1]
        %s2536 = scalar_lea.vmem [#allocation2], 11
        %v2537 = vld [vmem:[%s2536] ss:$2 sm:$0xf]
        %s2538 = scalar_lea.vmem [#allocation2], 12
        %v2539 = vld [vmem:[%s2538] ss:$2 sm:$0xf]
        %v2540 = vmax.f32 %v2537, %v2539
        %s2541 = scalar_lea.vmem [#allocation2], 21
        %v2542 = vld [vmem:[%s2541] ss:$2 sm:$0xf]
        %s2543 = scalar_lea.vmem [#allocation2], 22
        %v2544 = vld [vmem:[%s2543] ss:$2 sm:$0xf]
        %v2545 = vmax.f32 %v2542, %v2544
        %v2546 = vmax.f32 %v2540, %v2545
        %v2548 = vlaneseq
        %v2549 = vshrl.u32 %v2548, 7
        %v2550 = vsub.s32 0, %v2549
        %v2551 = vrot.slane %v2535, %v2550
        %v2553 = vadd.f32 %v2546, %v2551
        %v2554 = vmax.f32 %v2553, 0.0
        %2555 = vst [vmem:[#allocation4] sm:$0xf] %v2554
        %s2556 = scalar_lea.vmem [#allocation2], 31
        %v2557 = vld [vmem:[%s2556] ss:$2 sm:$0xf]
        %s2558 = scalar_lea.vmem [#allocation2], 32
        %v2559 = vld [vmem:[%s2558] ss:$2 sm:$0xf]
        %v2560 = vmax.f32 %v2557, %v2559
        %s2561 = scalar_lea.vmem [#allocation2], 41
        %v2562 = vld [vmem:[%s2561] ss:$2 sm:$0xf]
        %s2563 = scalar_lea.vmem [#allocation2], 42
        %v2564 = vld [vmem:[%s2563] ss:$2 sm:$0xf]
        %v2565 = vmax.f32 %v2562, %v2564
        %v2566 = vmax.f32 %v2560, %v2565
        %v2567 = vadd.f32 %v2566, %v2551
        %v2568 = vmax.f32 %v2567, 0.0
        %2569 = vst [vmem:[#allocation4 + $0x5] sm:$0xf] %v2568
        %s2570 = scalar_lea.vmem [#allocation2], 51
        %v2571 = vld [vmem:[%s2570] ss:$2 sm:$0xf]
        %s2572 = scalar_lea.vmem [#allocation2], 52
        %v2573 = vld [vmem:[%s2572] ss:$2 sm:$0xf]
        %v2574 = vmax.f32 %v2571, %v2573
        %s2575 = scalar_lea.vmem [#allocation2], 61
        %v2576 = vld [vmem:[%s2575] ss:$2 sm:$0xf]
        %s2577 = scalar_lea.vmem [#allocation2], 62
        %v2578 = vld [vmem:[%s2577] ss:$2 sm:$0xf]
        %v2579 = vmax.f32 %v2576, %v2578
        %v2580 = vmax.f32 %v2574, %v2579
        %v2581 = vadd.f32 %v2580, %v2551
        %v2582 = vmax.f32 %v2581, 0.0
        %2583 = vst [vmem:[#allocation4 + $0xa] sm:$0xf] %v2582
        %s2584 = scalar_lea.vmem [#allocation2], 71
        %v2585 = vld [vmem:[%s2584] ss:$2 sm:$0xf]
        %s2586 = scalar_lea.vmem [#allocation2], 72
        %v2587 = vld [vmem:[%s2586] ss:$2 sm:$0xf]
        %v2588 = vmax.f32 %v2585, %v2587
        %s2589 = scalar_lea.vmem [#allocation2], 81
        %v2590 = vld [vmem:[%s2589] ss:$2 sm:$0xf]
        %s2591 = scalar_lea.vmem [#allocation2], 82
        %v2592 = vld [vmem:[%s2591] ss:$2 sm:$0xf]
        %v2593 = vmax.f32 %v2590, %v2592
        %v2594 = vmax.f32 %v2588, %v2593
        %v2595 = vadd.f32 %v2594, %v2551
        %v2596 = vmax.f32 %v2595, 0.0
        %2597 = vst [vmem:[#allocation4 + $0xf] sm:$0xf] %v2596
        %v2598 = vld [vmem:[%s6] sm:$0x1]
        %v2599 = vld [vmem:[#allocation4] sm:$0xff]
        %v2600 = vld [vmem:[#allocation4 + $0x8] sm:$0xff]
        %v2601 = vld [vmem:[#allocation4 + $0x10] sm:$0xff]
        %v2602 = vld [vmem:[#allocation4 + $0x18] sm:$0x1]
        %s2603 = scalar_lea.vmem %s5, 512
        %v2604 = vld [vmem:[%s2603] sm:$0xff]
        %v2605 = vld [vmem:[%s2603 + $0x8] sm:$0xff]
        %v2606 = vld [vmem:[%s2603 + $0x10] sm:$0xff]
        %v2607 = vld [vmem:[%s2603 + $0x18] sm:$0xff]
        %v2608 = vld [vmem:[%s2603 + $0x20] sm:$0xff]
        %v2609 = vld [vmem:[%s2603 + $0x28] sm:$0xff]
        %v2610 = vld [vmem:[%s2603 + $0x30] sm:$0xff]
        %v2611 = vld [vmem:[%s2603 + $0x38] sm:$0xff]
        %v2612 = vld [vmem:[%s2603 + $0x40] sm:$0xff]
        %v2613 = vld [vmem:[%s2603 + $0x48] sm:$0xff]
        %v2614 = vld [vmem:[%s2603 + $0x50] sm:$0xff]
        %v2615 = vld [vmem:[%s2603 + $0x58] sm:$0xff]
        %v2616 = vld [vmem:[%s2603 + $0x60] sm:$0xff]
        %v2617 = vld [vmem:[%s2603 + $0x68] sm:$0xff]
        %v2618 = vld [vmem:[%s2603 + $0x70] sm:$0xff]
        %v2619 = vld [vmem:[%s2603 + $0x78] sm:$0xff]
        %v2621 = vlaneseq
        %v2622 = vshrl.u32 %v2621, 7
        %v2623 = vsub.s32 0, %v2622
        %v2624 = vrot.slane %v2598, %v2623
        %2626 = vmatprep.subr.mxu0 0.0
        %2627 = vmatpush1.msra.mxu0 %v2604
        %2628 = vmatprep.subr.mxu0 0.0
        %2629 = vmatpush1.msra.mxu0 %v2605
        %2630 = vmatprep.subr.mxu0 0.0
        %2631 = vmatpush1.msra.mxu0 %v2606
        %2632 = vmatprep.subr.mxu0 0.0
        %2633 = vmatpush1.msra.mxu0 %v2607
        %2634 = vmatprep.subr.mxu0 0.0
        %2635 = vmatpush1.msra.mxu0 %v2608
        %2636 = vmatprep.subr.mxu0 0.0
        %2637 = vmatpush1.msra.mxu0 %v2609
        %2638 = vmatprep.subr.mxu0 0.0
        %2639 = vmatpush1.msra.mxu0 %v2610
        %2640 = vmatprep.subr.mxu0 0.0
        %2641 = vmatpush1.msra.mxu0 %v2611
        %2642 = vmatprep.subr.mxu0 0.0
        %2643 = vmatpush1.msra.mxu0 %v2612
        %2644 = vmatprep.subr.mxu0 0.0
        %2645 = vmatpush1.msra.mxu0 %v2613
        %2646 = vmatprep.subr.mxu0 0.0
        %2647 = vmatpush1.msra.mxu0 %v2614
        %2648 = vmatprep.subr.mxu0 0.0
        %2649 = vmatpush1.msra.mxu0 %v2615
        %2650 = vmatprep.subr.mxu0 0.0
        %2651 = vmatpush1.msra.mxu0 %v2616
        %2652 = vmatprep.subr.mxu0 0.0
        %2653 = vmatpush1.msra.mxu0 %v2617
        %2654 = vmatprep.subr.mxu0 0.0
        %2655 = vmatpush1.msra.mxu0 %v2618
        %2656 = vmatprep.subr.mxu0 0.0
        %2657 = vmatpush1.msra.mxu0 %v2619
        %2658 = vmatprep.subr.mxu0 0.0
        %2659 = vmatpush1.msra.mxu0 0.0
        %2660 = vmatprep.subr.mxu0 0.0
        %2661 = vmatpush1.msra.mxu0 0.0
        %2662 = vmatprep.subr.mxu0 0.0
        %2663 = vmatpush1.msra.mxu0 0.0
        %2664 = vmatprep.subr.mxu0 0.0
        %2665 = vmatpush1.msra.mxu0 0.0
        %2666 = vmatprep.subr.mxu0 0.0
        %2667 = vmatpush1.msra.mxu0 0.0
        %2668 = vmatprep.subr.mxu0 0.0
        %2669 = vmatpush1.msra.mxu0 0.0
        %2670 = vmatprep.subr.mxu0 0.0
        %2671 = vmatpush1.msra.mxu0 0.0
        %2672 = vmatprep.subr.mxu0 0.0
        %2673 = vmatpush1.msra.mxu0 0.0
        %2674 = vmatprep.subr.mxu0 0.0
        %2675 = vmatpush1.msra.mxu0 0.0
        %2676 = vmatprep.subr.mxu0 0.0
        %2677 = vmatpush1.msra.mxu0 0.0
        %2678 = vmatprep.subr.mxu0 0.0
        %2679 = vmatpush1.msra.mxu0 0.0
        %2680 = vmatprep.subr.mxu0 0.0
        %2681 = vmatpush1.msra.mxu0 0.0
        %2682 = vmatprep.subr.mxu0 0.0
        %2683 = vmatpush1.msra.mxu0 0.0
        %2684 = vmatprep.subr.mxu0 0.0
        %2685 = vmatpush1.msra.mxu0 0.0
        %2686 = vmatprep.subr.mxu0 0.0
        %2687 = vmatpush1.msra.mxu0 0.0
        %2688 = vmatprep.subr.mxu0 0.0
        %2689 = vmatpush1.msra.mxu0 0.0
        %2690 = vmatprep.mubr.f32.mxu0 0.0
        %2691 = vmatmul.mubr.f32.gmra.mrb[0].mxu0 %v2599
        %v2692 = vpop.f32.mrb[0].mxu0
        %v2693 = vadd.f32 %v2624, %v2692
        %v2694 = vpop.f32.mrb[0].mxu0
        %2695 = vmatprep.mubr.f32.mxu0 0.0
        %2696 = vmatmul.mubr.f32.gmra.mrb[0].mxu0 %v2600
        %v2697 = vpop.f32.mrb[0].mxu0
        %v2698 = vadd.f32 %v2624, %v2697
        %v2699 = vpop.f32.mrb[0].mxu0
        %2700 = vmatprep.mubr.f32.mxu0 0.0
        %2701 = vmatmul.mubr.f32.gmra.mrb[0].mxu0 %v2601
        %v2702 = vpop.f32.mrb[0].mxu0
        %v2703 = vadd.f32 %v2624, %v2702
        %v2704 = vpop.f32.mrb[0].mxu0
        %2705 = vmatprep.mubr.f32.mxu0 0.0
        %2706 = vmatmul.mubr.f32.gmra.mrb[0].mxu0 %v2602
        %v2707 = vpop.f32.mrb[0].mxu0
        %v2708 = vadd.f32 %v2624, %v2707
        %v2709 = vpop.f32.mrb[0].mxu0
        %2710 = vdwg.mxu0
        %v2711 = vmax.f32 %v2693, 0.0
        %v2712 = vmax.f32 %v2698, 0.0
        %v2713 = vmax.f32 %v2703, 0.0
        %v2714 = vmax.f32 %v2708, 0.0
        %2715 = vst [vmem:[#allocation2] sm:$0xff] %v2711
        %2716 = vst [vmem:[#allocation2 + $0x8] sm:$0xff] %v2712
        %2717 = vst [vmem:[#allocation2 + $0x10] sm:$0xff] %v2713
        %2718 = vst [vmem:[#allocation2 + $0x18] sm:$0x1] %v2714
        %v2719 = vld [vmem:[#allocation4] sm:$0xff]
        %v2720 = vld [vmem:[#allocation4 + $0x8] sm:$0xff]
        %v2721 = vld [vmem:[#allocation4 + $0x10] sm:$0xff]
        %v2722 = vld [vmem:[#allocation4 + $0x18] sm:$0x1]
        %s2723 = scalar_lea.vmem %s5, 640
        %v2724 = vld [vmem:[%s2723] sm:$0xff]
        %v2725 = vld [vmem:[%s2723 + $0x8] sm:$0xff]
        %v2726 = vld [vmem:[%s2723 + $0x10] sm:$0xff]
        %v2727 = vld [vmem:[%s2723 + $0x18] sm:$0xff]
        %v2728 = vld [vmem:[%s2723 + $0x20] sm:$0xff]
        %v2729 = vld [vmem:[%s2723 + $0x28] sm:$0xff]
        %v2730 = vld [vmem:[%s2723 + $0x30] sm:$0xff]
        %v2731 = vld [vmem:[%s2723 + $0x38] sm:$0xff]
        %v2732 = vld [vmem:[%s2723 + $0x40] sm:$0xff]
        %v2733 = vld [vmem:[%s2723 + $0x48] sm:$0xff]
        %v2734 = vld [vmem:[%s2723 + $0x50] sm:$0xff]
        %v2735 = vld [vmem:[%s2723 + $0x58] sm:$0xff]
        %v2736 = vld [vmem:[%s2723 + $0x60] sm:$0xff]
        %v2737 = vld [vmem:[%s2723 + $0x68] sm:$0xff]
        %v2738 = vld [vmem:[%s2723 + $0x70] sm:$0xff]
        %v2739 = vld [vmem:[%s2723 + $0x78] sm:$0xff]
        %v2740 = vld [vmem:[#allocation4 + $0x1] sm:$0xff]
        %v2741 = vld [vmem:[#allocation4 + $0x9] sm:$0xff]
        %v2742 = vld [vmem:[#allocation4 + $0x11] sm:$0xff]
        %v2743 = vld [vmem:[#allocation4 + $0x19] sm:$0x1]
        %s2744 = scalar_lea.vmem %s5, 384
        %v2745 = vld [vmem:[%s2744] sm:$0xff]
        %v2746 = vld [vmem:[%s2744 + $0x8] sm:$0xff]
        %v2747 = vld [vmem:[%s2744 + $0x10] sm:$0xff]
        %v2748 = vld [vmem:[%s2744 + $0x18] sm:$0xff]
        %v2749 = vld [vmem:[%s2744 + $0x20] sm:$0xff]
        %v2750 = vld [vmem:[%s2744 + $0x28] sm:$0xff]
        %v2751 = vld [vmem:[%s2744 + $0x30] sm:$0xff]
        %v2752 = vld [vmem:[%s2744 + $0x38] sm:$0xff]
        %v2753 = vld [vmem:[%s2744 + $0x40] sm:$0xff]
        %v2754 = vld [vmem:[%s2744 + $0x48] sm:$0xff]
        %v2755 = vld [vmem:[%s2744 + $0x50] sm:$0xff]
        %v2756 = vld [vmem:[%s2744 + $0x58] sm:$0xff]
        %v2757 = vld [vmem:[%s2744 + $0x60] sm:$0xff]
        %v2758 = vld [vmem:[%s2744 + $0x68] sm:$0xff]
        %v2759 = vld [vmem:[%s2744 + $0x70] sm:$0xff]
        %v2760 = vld [vmem:[%s2744 + $0x78] sm:$0xff]
        %2761 = vmatprep.subr.mxu0 0.0
        %2762 = vmatpush1.msra.mxu0 %v2745
        %2763 = vmatprep.subr.mxu0 0.0
        %2764 = vmatpush1.msra.mxu0 %v2746
        %2765 = vmatprep.subr.mxu0 0.0
        %2766 = vmatpush1.msra.mxu0 %v2747
        %2767 = vmatprep.subr.mxu0 0.0
        %2768 = vmatpush1.msra.mxu0 %v2748
        %2769 = vmatprep.subr.mxu0 0.0
        %2770 = vmatpush1.msra.mxu0 %v2749
        %2771 = vmatprep.subr.mxu0 0.0
        %2772 = vmatpush1.msra.mxu0 %v2750
        %2773 = vmatprep.subr.mxu0 0.0
        %2774 = vmatpush1.msra.mxu0 %v2751
        %2775 = vmatprep.subr.mxu0 0.0
        %2776 = vmatpush1.msra.mxu0 %v2752
        %2777 = vmatprep.subr.mxu0 0.0
        %2778 = vmatpush1.msra.mxu0 %v2753
        %2779 = vmatprep.subr.mxu0 0.0
        %2780 = vmatpush1.msra.mxu0 %v2754
        %2781 = vmatprep.subr.mxu0 0.0
        %2782 = vmatpush1.msra.mxu0 %v2755
        %2783 = vmatprep.subr.mxu0 0.0
        %2784 = vmatpush1.msra.mxu0 %v2756
        %2785 = vmatprep.subr.mxu0 0.0
        %2786 = vmatpush1.msra.mxu0 %v2757
        %2787 = vmatprep.subr.mxu0 0.0
        %2788 = vmatpush1.msra.mxu0 %v2758
        %2789 = vmatprep.subr.mxu0 0.0
        %2790 = vmatpush1.msra.mxu0 %v2759
        %2791 = vmatprep.subr.mxu0 0.0
        %2792 = vmatpush1.msra.mxu0 %v2760
        %2793 = vmatprep.subr.mxu0 0.0
        %2794 = vmatpush1.msra.mxu0 0.0
        %2795 = vmatprep.subr.mxu0 0.0
        %2796 = vmatpush1.msra.mxu0 0.0
        %2797 = vmatprep.subr.mxu0 0.0
        %2798 = vmatpush1.msra.mxu0 0.0
        %2799 = vmatprep.subr.mxu0 0.0
        %2800 = vmatpush1.msra.mxu0 0.0
        %2801 = vmatprep.subr.mxu0 0.0
        %2802 = vmatpush1.msra.mxu0 0.0
        %2803 = vmatprep.subr.mxu0 0.0
        %2804 = vmatpush1.msra.mxu0 0.0
        %2805 = vmatprep.subr.mxu0 0.0
        %2806 = vmatpush1.msra.mxu0 0.0
        %2807 = vmatprep.subr.mxu0 0.0
        %2808 = vmatpush1.msra.mxu0 0.0
        %2809 = vmatprep.subr.mxu0 0.0
        %2810 = vmatpush1.msra.mxu0 0.0
        %2811 = vmatprep.subr.mxu0 0.0
        %2812 = vmatpush1.msra.mxu0 0.0
        %2813 = vmatprep.subr.mxu0 0.0
        %2814 = vmatpush1.msra.mxu0 0.0
        %2815 = vmatprep.subr.mxu0 0.0
        %2816 = vmatpush1.msra.mxu0 0.0
        %2817 = vmatprep.subr.mxu0 0.0
        %2818 = vmatpush1.msra.mxu0 0.0
        %2819 = vmatprep.subr.mxu0 0.0
        %2820 = vmatpush1.msra.mxu0 0.0
        %2821 = vmatprep.subr.mxu0 0.0
        %2822 = vmatpush1.msra.mxu0 0.0
        %2823 = vmatprep.subr.mxu0 0.0
        %2824 = vmatpush1.msra.mxu0 0.0
        %2825 = vmatprep.mubr.f32.mxu0 0.0
        %2826 = vmatmul.mubr.f32.gmra.mrb[0].mxu0 %v2740
        %v2827 = vpop.f32.mrb[0].mxu0
        %v2828 = vadd.f32 0.0, %v2827
        %v2829 = vpop.f32.mrb[0].mxu0
        %2830 = vmatprep.mubr.f32.mxu0 0.0
        %2831 = vmatmul.mubr.f32.gmra.mrb[0].mxu0 %v2741
        %v2832 = vpop.f32.mrb[0].mxu0
        %v2833 = vadd.f32 0.0, %v2832
        %v2834 = vpop.f32.mrb[0].mxu0
        %2835 = vmatprep.mubr.f32.mxu0 0.0
        %2836 = vmatmul.mubr.f32.gmra.mrb[0].mxu0 %v2742
        %v2837 = vpop.f32.mrb[0].mxu0
        %v2838 = vadd.f32 0.0, %v2837
        %v2839 = vpop.f32.mrb[0].mxu0
        %2840 = vmatprep.mubr.f32.mxu0 0.0
        %2841 = vmatmul.mubr.f32.gmra.mrb[0].mxu0 %v2743
        %v2842 = vpop.f32.mrb[0].mxu0
        %v2843 = vadd.f32 0.0, %v2842
        %v2844 = vpop.f32.mrb[0].mxu0
        %2845 = vdwg.mxu0
        %2846 = vmatprep.subr.mxu0 0.0
        %2847 = vmatpush1.msra.mxu0 %v2724
        %2848 = vmatprep.subr.mxu0 0.0
        %2849 = vmatpush1.msra.mxu0 %v2725
        %2850 = vmatprep.subr.mxu0 0.0
        %2851 = vmatpush1.msra.mxu0 %v2726
        %2852 = vmatprep.subr.mxu0 0.0
        %2853 = vmatpush1.msra.mxu0 %v2727
        %2854 = vmatprep.subr.mxu0 0.0
        %2855 = vmatpush1.msra.mxu0 %v2728
        %2856 = vmatprep.subr.mxu0 0.0
        %2857 = vmatpush1.msra.mxu0 %v2729
        %2858 = vmatprep.subr.mxu0 0.0
        %2859 = vmatpush1.msra.mxu0 %v2730
        %2860 = vmatprep.subr.mxu0 0.0
        %2861 = vmatpush1.msra.mxu0 %v2731
        %2862 = vmatprep.subr.mxu0 0.0
        %2863 = vmatpush1.msra.mxu0 %v2732
        %2864 = vmatprep.subr.mxu0 0.0
        %2865 = vmatpush1.msra.mxu0 %v2733
        %2866 = vmatprep.subr.mxu0 0.0
        %2867 = vmatpush1.msra.mxu0 %v2734
        %2868 = vmatprep.subr.mxu0 0.0
        %2869 = vmatpush1.msra.mxu0 %v2735
        %2870 = vmatprep.subr.mxu0 0.0
        %2871 = vmatpush1.msra.mxu0 %v2736
        %2872 = vmatprep.subr.mxu0 0.0
        %2873 = vmatpush1.msra.mxu0 %v2737
        %2874 = vmatprep.subr.mxu0 0.0
        %2875 = vmatpush1.msra.mxu0 %v2738
        %2876 = vmatprep.subr.mxu0 0.0
        %2877 = vmatpush1.msra.mxu0 %v2739
        %2878 = vmatprep.subr.mxu0 0.0
        %2879 = vmatpush1.msra.mxu0 0.0
        %2880 = vmatprep.subr.mxu0 0.0
        %2881 = vmatpush1.msra.mxu0 0.0
        %2882 = vmatprep.subr.mxu0 0.0
        %2883 = vmatpush1.msra.mxu0 0.0
        %2884 = vmatprep.subr.mxu0 0.0
        %2885 = vmatpush1.msra.mxu0 0.0
        %2886 = vmatprep.subr.mxu0 0.0
        %2887 = vmatpush1.msra.mxu0 0.0
        %2888 = vmatprep.subr.mxu0 0.0
        %2889 = vmatpush1.msra.mxu0 0.0
        %2890 = vmatprep.subr.mxu0 0.0
        %2891 = vmatpush1.msra.mxu0 0.0
        %2892 = vmatprep.subr.mxu0 0.0
        %2893 = vmatpush1.msra.mxu0 0.0
        %2894 = vmatprep.subr.mxu0 0.0
        %2895 = vmatpush1.msra.mxu0 0.0
        %2896 = vmatprep.subr.mxu0 0.0
        %2897 = vmatpush1.msra.mxu0 0.0
        %2898 = vmatprep.subr.mxu0 0.0
        %2899 = vmatpush1.msra.mxu0 0.0
        %2900 = vmatprep.subr.mxu0 0.0
        %2901 = vmatpush1.msra.mxu0 0.0
        %2902 = vmatprep.subr.mxu0 0.0
        %2903 = vmatpush1.msra.mxu0 0.0
        %2904 = vmatprep.subr.mxu0 0.0
        %2905 = vmatpush1.msra.mxu0 0.0
        %2906 = vmatprep.subr.mxu0 0.0
        %2907 = vmatpush1.msra.mxu0 0.0
        %2908 = vmatprep.subr.mxu0 0.0
        %2909 = vmatpush1.msra.mxu0 0.0
        %2910 = vmatprep.mubr.f32.mxu0 0.0
        %2911 = vmatmul.mubr.f32.gmra.mrb[0].mxu0 %v2719
        %v2912 = vpop.f32.mrb[0].mxu0
        %v2913 = vadd.f32 %v2828, %v2912
        %v2914 = vpop.f32.mrb[0].mxu0
        %2915 = vmatprep.mubr.f32.mxu0 0.0
        %2916 = vmatmul.mubr.f32.gmra.mrb[0].mxu0 %v2720
        %v2917 = vpop.f32.mrb[0].mxu0
        %v2918 = vadd.f32 %v2833, %v2917
        %v2919 = vpop.f32.mrb[0].mxu0
        %2920 = vmatprep.mubr.f32.mxu0 0.0
        %2921 = vmatmul.mubr.f32.gmra.mrb[0].mxu0 %v2721
        %v2922 = vpop.f32.mrb[0].mxu0
        %v2923 = vadd.f32 %v2838, %v2922
        %v2924 = vpop.f32.mrb[0].mxu0
        %2925 = vmatprep.mubr.f32.mxu0 0.0
        %2926 = vmatmul.mubr.f32.gmra.mrb[0].mxu0 %v2722
        %v2927 = vpop.f32.mrb[0].mxu0
        %v2928 = vadd.f32 %v2843, %v2927
        %v2929 = vpop.f32.mrb[0].mxu0
        %2930 = vdwg.mxu0
        %v2931 = vadd.f32 %v2913, %v2624
        %v2932 = vadd.f32 %v2918, %v2624
        %v2933 = vadd.f32 %v2923, %v2624
        %v2934 = vadd.f32 %v2928, %v2624
        %v2935 = vmax.f32 %v2931, 0.0
        %v2936 = vmax.f32 %v2932, 0.0
        %v2937 = vmax.f32 %v2933, 0.0
        %v2938 = vmax.f32 %v2934, 0.0
        %2939 = vst [vmem:[#allocation2 + $0x20] sm:$0xff] %v2935
        %2940 = vst [vmem:[#allocation2 + $0x28] sm:$0xff] %v2936
        %2941 = vst [vmem:[#allocation2 + $0x30] sm:$0xff] %v2937
        %2942 = vst [vmem:[#allocation2 + $0x38] sm:$0x1] %v2938
        %v2943 = vld [vmem:[#allocation4] sm:$0xff]
        %v2944 = vld [vmem:[#allocation4 + $0x8] sm:$0xff]
        %v2945 = vld [vmem:[#allocation4 + $0x10] sm:$0xff]
        %v2946 = vld [vmem:[#allocation4 + $0x18] sm:$0x1]
        %s2947 = scalar_lea.vmem %s5, 896
        %v2948 = vld [vmem:[%s2947] sm:$0xff]
        %v2949 = vld [vmem:[%s2947 + $0x8] sm:$0xff]
        %v2950 = vld [vmem:[%s2947 + $0x10] sm:$0xff]
        %v2951 = vld [vmem:[%s2947 + $0x18] sm:$0xff]
        %v2952 = vld [vmem:[%s2947 + $0x20] sm:$0xff]
        %v2953 = vld [vmem:[%s2947 + $0x28] sm:$0xff]
        %v2954 = vld [vmem:[%s2947 + $0x30] sm:$0xff]
        %v2955 = vld [vmem:[%s2947 + $0x38] sm:$0xff]
        %v2956 = vld [vmem:[%s2947 + $0x40] sm:$0xff]
        %v2957 = vld [vmem:[%s2947 + $0x48] sm:$0xff]
        %v2958 = vld [vmem:[%s2947 + $0x50] sm:$0xff]
        %v2959 = vld [vmem:[%s2947 + $0x58] sm:$0xff]
        %v2960 = vld [vmem:[%s2947 + $0x60] sm:$0xff]
        %v2961 = vld [vmem:[%s2947 + $0x68] sm:$0xff]
        %v2962 = vld [vmem:[%s2947 + $0x70] sm:$0xff]
        %v2963 = vld [vmem:[%s2947 + $0x78] sm:$0xff]
        %v2964 = vld [vmem:[#allocation4 + $0x5] sm:$0xff]
        %v2965 = vld [vmem:[#allocation4 + $0xd] sm:$0xff]
        %v2966 = vld [vmem:[#allocation4 + $0x15] sm:$0xff]
        %v2967 = vld [vmem:[#allocation4 + $0x1d] sm:$0x1]
        %s2968 = scalar_lea.vmem %s5, 128
        %v2969 = vld [vmem:[%s2968] sm:$0xff]
        %v2970 = vld [vmem:[%s2968 + $0x8] sm:$0xff]
        %v2971 = vld [vmem:[%s2968 + $0x10] sm:$0xff]
        %v2972 = vld [vmem:[%s2968 + $0x18] sm:$0xff]
        %v2973 = vld [vmem:[%s2968 + $0x20] sm:$0xff]
        %v2974 = vld [vmem:[%s2968 + $0x28] sm:$0xff]
        %v2975 = vld [vmem:[%s2968 + $0x30] sm:$0xff]
        %v2976 = vld [vmem:[%s2968 + $0x38] sm:$0xff]
        %v2977 = vld [vmem:[%s2968 + $0x40] sm:$0xff]
        %v2978 = vld [vmem:[%s2968 + $0x48] sm:$0xff]
        %v2979 = vld [vmem:[%s2968 + $0x50] sm:$0xff]
        %v2980 = vld [vmem:[%s2968 + $0x58] sm:$0xff]
        %v2981 = vld [vmem:[%s2968 + $0x60] sm:$0xff]
        %v2982 = vld [vmem:[%s2968 + $0x68] sm:$0xff]
        %v2983 = vld [vmem:[%s2968 + $0x70] sm:$0xff]
        %v2984 = vld [vmem:[%s2968 + $0x78] sm:$0xff]
        %2985 = vmatprep.subr.mxu0 0.0
        %2986 = vmatpush1.msra.mxu0 %v2969
        %2987 = vmatprep.subr.mxu0 0.0
        %2988 = vmatpush1.msra.mxu0 %v2970
        %2989 = vmatprep.subr.mxu0 0.0
        %2990 = vmatpush1.msra.mxu0 %v2971
        %2991 = vmatprep.subr.mxu0 0.0
        %2992 = vmatpush1.msra.mxu0 %v2972
        %2993 = vmatprep.subr.mxu0 0.0
        %2994 = vmatpush1.msra.mxu0 %v2973
        %2995 = vmatprep.subr.mxu0 0.0
        %2996 = vmatpush1.msra.mxu0 %v2974
        %2997 = vmatprep.subr.mxu0 0.0
        %2998 = vmatpush1.msra.mxu0 %v2975
        %2999 = vmatprep.subr.mxu0 0.0
        %3000 = vmatpush1.msra.mxu0 %v2976
        %3001 = vmatprep.subr.mxu0 0.0
        %3002 = vmatpush1.msra.mxu0 %v2977
        %3003 = vmatprep.subr.mxu0 0.0
        %3004 = vmatpush1.msra.mxu0 %v2978
        %3005 = vmatprep.subr.mxu0 0.0
        %3006 = vmatpush1.msra.mxu0 %v2979
        %3007 = vmatprep.subr.mxu0 0.0
        %3008 = vmatpush1.msra.mxu0 %v2980
        %3009 = vmatprep.subr.mxu0 0.0
        %3010 = vmatpush1.msra.mxu0 %v2981
        %3011 = vmatprep.subr.mxu0 0.0
        %3012 = vmatpush1.msra.mxu0 %v2982
        %3013 = vmatprep.subr.mxu0 0.0
        %3014 = vmatpush1.msra.mxu0 %v2983
        %3015 = vmatprep.subr.mxu0 0.0
        %3016 = vmatpush1.msra.mxu0 %v2984
        %3017 = vmatprep.subr.mxu0 0.0
        %3018 = vmatpush1.msra.mxu0 0.0
        %3019 = vmatprep.subr.mxu0 0.0
        %3020 = vmatpush1.msra.mxu0 0.0
        %3021 = vmatprep.subr.mxu0 0.0
        %3022 = vmatpush1.msra.mxu0 0.0
        %3023 = vmatprep.subr.mxu0 0.0
        %3024 = vmatpush1.msra.mxu0 0.0
        %3025 = vmatprep.subr.mxu0 0.0
        %3026 = vmatpush1.msra.mxu0 0.0
        %3027 = vmatprep.subr.mxu0 0.0
        %3028 = vmatpush1.msra.mxu0 0.0
        %3029 = vmatprep.subr.mxu0 0.0
        %3030 = vmatpush1.msra.mxu0 0.0
        %3031 = vmatprep.subr.mxu0 0.0
        %3032 = vmatpush1.msra.mxu0 0.0
        %3033 = vmatprep.subr.mxu0 0.0
        %3034 = vmatpush1.msra.mxu0 0.0
        %3035 = vmatprep.subr.mxu0 0.0
        %3036 = vmatpush1.msra.mxu0 0.0
        %3037 = vmatprep.subr.mxu0 0.0
        %3038 = vmatpush1.msra.mxu0 0.0
        %3039 = vmatprep.subr.mxu0 0.0
        %3040 = vmatpush1.msra.mxu0 0.0
        %3041 = vmatprep.subr.mxu0 0.0
        %3042 = vmatpush1.msra.mxu0 0.0
        %3043 = vmatprep.subr.mxu0 0.0
        %3044 = vmatpush1.msra.mxu0 0.0
        %3045 = vmatprep.subr.mxu0 0.0
        %3046 = vmatpush1.msra.mxu0 0.0
        %3047 = vmatprep.subr.mxu0 0.0
        %3048 = vmatpush1.msra.mxu0 0.0
        %3049 = vmatprep.mubr.f32.mxu0 0.0
        %3050 = vmatmul.mubr.f32.gmra.mrb[0].mxu0 %v2964
        %v3051 = vpop.f32.mrb[0].mxu0
        %v3052 = vadd.f32 0.0, %v3051
        %v3053 = vpop.f32.mrb[0].mxu0
        %3054 = vmatprep.mubr.f32.mxu0 0.0
        %3055 = vmatmul.mubr.f32.gmra.mrb[0].mxu0 %v2965
        %v3056 = vpop.f32.mrb[0].mxu0
        %v3057 = vadd.f32 0.0, %v3056
        %v3058 = vpop.f32.mrb[0].mxu0
        %3059 = vmatprep.mubr.f32.mxu0 0.0
        %3060 = vmatmul.mubr.f32.gmra.mrb[0].mxu0 %v2966
        %v3061 = vpop.f32.mrb[0].mxu0
        %v3062 = vadd.f32 0.0, %v3061
        %v3063 = vpop.f32.mrb[0].mxu0
        %3064 = vmatprep.mubr.f32.mxu0 0.0
        %3065 = vmatmul.mubr.f32.gmra.mrb[0].mxu0 %v2967
        %v3066 = vpop.f32.mrb[0].mxu0
        %v3067 = vadd.f32 0.0, %v3066
        %v3068 = vpop.f32.mrb[0].mxu0
        %3069 = vdwg.mxu0
        %3070 = vmatprep.subr.mxu0 0.0
        %3071 = vmatpush1.msra.mxu0 %v2948
        %3072 = vmatprep.subr.mxu0 0.0
        %3073 = vmatpush1.msra.mxu0 %v2949
        %3074 = vmatprep.subr.mxu0 0.0
        %3075 = vmatpush1.msra.mxu0 %v2950
        %3076 = vmatprep.subr.mxu0 0.0
        %3077 = vmatpush1.msra.mxu0 %v2951
        %3078 = vmatprep.subr.mxu0 0.0
        %3079 = vmatpush1.msra.mxu0 %v2952
        %3080 = vmatprep.subr.mxu0 0.0
        %3081 = vmatpush1.msra.mxu0 %v2953
        %3082 = vmatprep.subr.mxu0 0.0
        %3083 = vmatpush1.msra.mxu0 %v2954
        %3084 = vmatprep.subr.mxu0 0.0
        %3085 = vmatpush1.msra.mxu0 %v2955
        %3086 = vmatprep.subr.mxu0 0.0
        %3087 = vmatpush1.msra.mxu0 %v2956
        %3088 = vmatprep.subr.mxu0 0.0
        %3089 = vmatpush1.msra.mxu0 %v2957
        %3090 = vmatprep.subr.mxu0 0.0
        %3091 = vmatpush1.msra.mxu0 %v2958
        %3092 = vmatprep.subr.mxu0 0.0
        %3093 = vmatpush1.msra.mxu0 %v2959
        %3094 = vmatprep.subr.mxu0 0.0
        %3095 = vmatpush1.msra.mxu0 %v2960
        %3096 = vmatprep.subr.mxu0 0.0
        %3097 = vmatpush1.msra.mxu0 %v2961
        %3098 = vmatprep.subr.mxu0 0.0
        %3099 = vmatpush1.msra.mxu0 %v2962
        %3100 = vmatprep.subr.mxu0 0.0
        %3101 = vmatpush1.msra.mxu0 %v2963
        %3102 = vmatprep.subr.mxu0 0.0
        %3103 = vmatpush1.msra.mxu0 0.0
        %3104 = vmatprep.subr.mxu0 0.0
        %3105 = vmatpush1.msra.mxu0 0.0
        %3106 = vmatprep.subr.mxu0 0.0
        %3107 = vmatpush1.msra.mxu0 0.0
        %3108 = vmatprep.subr.mxu0 0.0
        %3109 = vmatpush1.msra.mxu0 0.0
        %3110 = vmatprep.subr.mxu0 0.0
        %3111 = vmatpush1.msra.mxu0 0.0
        %3112 = vmatprep.subr.mxu0 0.0
        %3113 = vmatpush1.msra.mxu0 0.0
        %3114 = vmatprep.subr.mxu0 0.0
        %3115 = vmatpush1.msra.mxu0 0.0
        %3116 = vmatprep.subr.mxu0 0.0
        %3117 = vmatpush1.msra.mxu0 0.0
        %3118 = vmatprep.subr.mxu0 0.0
        %3119 = vmatpush1.msra.mxu0 0.0
        %3120 = vmatprep.subr.mxu0 0.0
        %3121 = vmatpush1.msra.mxu0 0.0
        %3122 = vmatprep.subr.mxu0 0.0
        %3123 = vmatpush1.msra.mxu0 0.0
        %3124 = vmatprep.subr.mxu0 0.0
        %3125 = vmatpush1.msra.mxu0 0.0
        %3126 = vmatprep.subr.mxu0 0.0
        %3127 = vmatpush1.msra.mxu0 0.0
        %3128 = vmatprep.subr.mxu0 0.0
        %3129 = vmatpush1.msra.mxu0 0.0
        %3130 = vmatprep.subr.mxu0 0.0
        %3131 = vmatpush1.msra.mxu0 0.0
        %3132 = vmatprep.subr.mxu0 0.0
        %3133 = vmatpush1.msra.mxu0 0.0
        %3134 = vmatprep.mubr.f32.mxu0 0.0
        %3135 = vmatmul.mubr.f32.gmra.mrb[0].mxu0 %v2943
        %v3136 = vpop.f32.mrb[0].mxu0
        %v3137 = vadd.f32 %v3052, %v3136
        %v3138 = vpop.f32.mrb[0].mxu0
        %3139 = vmatprep.mubr.f32.mxu0 0.0
        %3140 = vmatmul.mubr.f32.gmra.mrb[0].mxu0 %v2944
        %v3141 = vpop.f32.mrb[0].mxu0
        %v3142 = vadd.f32 %v3057, %v3141
        %v3143 = vpop.f32.mrb[0].mxu0
        %3144 = vmatprep.mubr.f32.mxu0 0.0
        %3145 = vmatmul.mubr.f32.gmra.mrb[0].mxu0 %v2945
        %v3146 = vpop.f32.mrb[0].mxu0
        %v3147 = vadd.f32 %v3062, %v3146
        %v3148 = vpop.f32.mrb[0].mxu0
        %3149 = vmatprep.mubr.f32.mxu0 0.0
        %3150 = vmatmul.mubr.f32.gmra.mrb[0].mxu0 %v2946
        %v3151 = vpop.f32.mrb[0].mxu0
        %v3152 = vadd.f32 %v3067, %v3151
        %v3153 = vpop.f32.mrb[0].mxu0
        %3154 = vdwg.mxu0
        %v3155 = vadd.f32 %v3137, %v2624
        %v3156 = vadd.f32 %v3142, %v2624
        %v3157 = vadd.f32 %v3147, %v2624
        %v3158 = vadd.f32 %v3152, %v2624
        %v3159 = vmax.f32 %v3155, 0.0
        %v3160 = vmax.f32 %v3156, 0.0
        %v3161 = vmax.f32 %v3157, 0.0
        %v3162 = vmax.f32 %v3158, 0.0
        %3163 = vst [vmem:[#allocation2 + $0x40] sm:$0xff] %v3159
        %3164 = vst [vmem:[#allocation2 + $0x48] sm:$0xff] %v3160
        %3165 = vst [vmem:[#allocation2 + $0x50] sm:$0xff] %v3161
        %3166 = vst [vmem:[#allocation2 + $0x58] sm:$0x1] %v3162
        %v3167 = vld [vmem:[#allocation4] sm:$0xff]
        %v3168 = vld [vmem:[#allocation4 + $0x8] sm:$0xff]
        %v3169 = vld [vmem:[#allocation4 + $0x10] sm:$0xff]
        %v3170 = vld [vmem:[#allocation4 + $0x18] sm:$0x1]
        %s3171 = scalar_lea.vmem %s5, 1024
        %v3172 = vld [vmem:[%s3171] sm:$0xff]
        %v3173 = vld [vmem:[%s3171 + $0x8] sm:$0xff]
        %v3174 = vld [vmem:[%s3171 + $0x10] sm:$0xff]
        %v3175 = vld [vmem:[%s3171 + $0x18] sm:$0xff]
        %v3176 = vld [vmem:[%s3171 + $0x20] sm:$0xff]
        %v3177 = vld [vmem:[%s3171 + $0x28] sm:$0xff]
        %v3178 = vld [vmem:[%s3171 + $0x30] sm:$0xff]
        %v3179 = vld [vmem:[%s3171 + $0x38] sm:$0xff]
        %v3180 = vld [vmem:[%s3171 + $0x40] sm:$0xff]
        %v3181 = vld [vmem:[%s3171 + $0x48] sm:$0xff]
        %v3182 = vld [vmem:[%s3171 + $0x50] sm:$0xff]
        %v3183 = vld [vmem:[%s3171 + $0x58] sm:$0xff]
        %v3184 = vld [vmem:[%s3171 + $0x60] sm:$0xff]
        %v3185 = vld [vmem:[%s3171 + $0x68] sm:$0xff]
        %v3186 = vld [vmem:[%s3171 + $0x70] sm:$0xff]
        %v3187 = vld [vmem:[%s3171 + $0x78] sm:$0xff]
        %v3188 = vld [vmem:[#allocation4 + $0x1] sm:$0xff]
        %v3189 = vld [vmem:[#allocation4 + $0x9] sm:$0xff]
        %v3190 = vld [vmem:[#allocation4 + $0x11] sm:$0xff]
        %v3191 = vld [vmem:[#allocation4 + $0x19] sm:$0x1]
        %s3192 = scalar_lea.vmem %s5, 768
        %v3193 = vld [vmem:[%s3192] sm:$0xff]
        %v3194 = vld [vmem:[%s3192 + $0x8] sm:$0xff]
        %v3195 = vld [vmem:[%s3192 + $0x10] sm:$0xff]
        %v3196 = vld [vmem:[%s3192 + $0x18] sm:$0xff]
        %v3197 = vld [vmem:[%s3192 + $0x20] sm:$0xff]
        %v3198 = vld [vmem:[%s3192 + $0x28] sm:$0xff]
        %v3199 = vld [vmem:[%s3192 + $0x30] sm:$0xff]
        %v3200 = vld [vmem:[%s3192 + $0x38] sm:$0xff]
        %v3201 = vld [vmem:[%s3192 + $0x40] sm:$0xff]
        %v3202 = vld [vmem:[%s3192 + $0x48] sm:$0xff]
        %v3203 = vld [vmem:[%s3192 + $0x50] sm:$0xff]
        %v3204 = vld [vmem:[%s3192 + $0x58] sm:$0xff]
        %v3205 = vld [vmem:[%s3192 + $0x60] sm:$0xff]
        %v3206 = vld [vmem:[%s3192 + $0x68] sm:$0xff]
        %v3207 = vld [vmem:[%s3192 + $0x70] sm:$0xff]
        %v3208 = vld [vmem:[%s3192 + $0x78] sm:$0xff]
        %3209 = vmatprep.subr.mxu0 0.0
        %3210 = vmatpush1.msra.mxu0 %v3193
        %3211 = vmatprep.subr.mxu0 0.0
        %3212 = vmatpush1.msra.mxu0 %v3194
        %3213 = vmatprep.subr.mxu0 0.0
        %3214 = vmatpush1.msra.mxu0 %v3195
        %3215 = vmatprep.subr.mxu0 0.0
        %3216 = vmatpush1.msra.mxu0 %v3196
        %3217 = vmatprep.subr.mxu0 0.0
        %3218 = vmatpush1.msra.mxu0 %v3197
        %3219 = vmatprep.subr.mxu0 0.0
        %3220 = vmatpush1.msra.mxu0 %v3198
        %3221 = vmatprep.subr.mxu0 0.0
        %3222 = vmatpush1.msra.mxu0 %v3199
        %3223 = vmatprep.subr.mxu0 0.0
        %3224 = vmatpush1.msra.mxu0 %v3200
        %3225 = vmatprep.subr.mxu0 0.0
        %3226 = vmatpush1.msra.mxu0 %v3201
        %3227 = vmatprep.subr.mxu0 0.0
        %3228 = vmatpush1.msra.mxu0 %v3202
        %3229 = vmatprep.subr.mxu0 0.0
        %3230 = vmatpush1.msra.mxu0 %v3203
        %3231 = vmatprep.subr.mxu0 0.0
        %3232 = vmatpush1.msra.mxu0 %v3204
        %3233 = vmatprep.subr.mxu0 0.0
        %3234 = vmatpush1.msra.mxu0 %v3205
        %3235 = vmatprep.subr.mxu0 0.0
        %3236 = vmatpush1.msra.mxu0 %v3206
        %3237 = vmatprep.subr.mxu0 0.0
        %3238 = vmatpush1.msra.mxu0 %v3207
        %3239 = vmatprep.subr.mxu0 0.0
        %3240 = vmatpush1.msra.mxu0 %v3208
        %3241 = vmatprep.subr.mxu0 0.0
        %3242 = vmatpush1.msra.mxu0 0.0
        %3243 = vmatprep.subr.mxu0 0.0
        %3244 = vmatpush1.msra.mxu0 0.0
        %3245 = vmatprep.subr.mxu0 0.0
        %3246 = vmatpush1.msra.mxu0 0.0
        %3247 = vmatprep.subr.mxu0 0.0
        %3248 = vmatpush1.msra.mxu0 0.0
        %3249 = vmatprep.subr.mxu0 0.0
        %3250 = vmatpush1.msra.mxu0 0.0
        %3251 = vmatprep.subr.mxu0 0.0
        %3252 = vmatpush1.msra.mxu0 0.0
        %3253 = vmatprep.subr.mxu0 0.0
        %3254 = vmatpush1.msra.mxu0 0.0
        %3255 = vmatprep.subr.mxu0 0.0
        %3256 = vmatpush1.msra.mxu0 0.0
        %3257 = vmatprep.subr.mxu0 0.0
        %3258 = vmatpush1.msra.mxu0 0.0
        %3259 = vmatprep.subr.mxu0 0.0
        %3260 = vmatpush1.msra.mxu0 0.0
        %3261 = vmatprep.subr.mxu0 0.0
        %3262 = vmatpush1.msra.mxu0 0.0
        %3263 = vmatprep.subr.mxu0 0.0
        %3264 = vmatpush1.msra.mxu0 0.0
        %3265 = vmatprep.subr.mxu0 0.0
        %3266 = vmatpush1.msra.mxu0 0.0
        %3267 = vmatprep.subr.mxu0 0.0
        %3268 = vmatpush1.msra.mxu0 0.0
        %3269 = vmatprep.subr.mxu0 0.0
        %3270 = vmatpush1.msra.mxu0 0.0
        %3271 = vmatprep.subr.mxu0 0.0
        %3272 = vmatpush1.msra.mxu0 0.0
        %3273 = vmatprep.mubr.f32.mxu0 0.0
        %3274 = vmatmul.mubr.f32.gmra.mrb[0].mxu0 %v3188
        %v3275 = vpop.f32.mrb[0].mxu0
        %v3276 = vadd.f32 0.0, %v3275
        %v3277 = vpop.f32.mrb[0].mxu0
        %3278 = vmatprep.mubr.f32.mxu0 0.0
        %3279 = vmatmul.mubr.f32.gmra.mrb[0].mxu0 %v3189
        %v3280 = vpop.f32.mrb[0].mxu0
        %v3281 = vadd.f32 0.0, %v3280
        %v3282 = vpop.f32.mrb[0].mxu0
        %3283 = vmatprep.mubr.f32.mxu0 0.0
        %3284 = vmatmul.mubr.f32.gmra.mrb[0].mxu0 %v3190
        %v3285 = vpop.f32.mrb[0].mxu0
        %v3286 = vadd.f32 0.0, %v3285
        %v3287 = vpop.f32.mrb[0].mxu0
        %3288 = vmatprep.mubr.f32.mxu0 0.0
        %3289 = vmatmul.mubr.f32.gmra.mrb[0].mxu0 %v3191
        %v3290 = vpop.f32.mrb[0].mxu0
        %v3291 = vadd.f32 0.0, %v3290
        %v3292 = vpop.f32.mrb[0].mxu0
        %3293 = vdwg.mxu0
        %3294 = vmatprep.subr.mxu0 0.0
        %3295 = vmatpush1.msra.mxu0 %v3172
        %3296 = vmatprep.subr.mxu0 0.0
        %3297 = vmatpush1.msra.mxu0 %v3173
        %3298 = vmatprep.subr.mxu0 0.0
        %3299 = vmatpush1.msra.mxu0 %v3174
        %3300 = vmatprep.subr.mxu0 0.0
        %3301 = vmatpush1.msra.mxu0 %v3175
        %3302 = vmatprep.subr.mxu0 0.0
        %3303 = vmatpush1.msra.mxu0 %v3176
        %3304 = vmatprep.subr.mxu0 0.0
        %3305 = vmatpush1.msra.mxu0 %v3177
        %3306 = vmatprep.subr.mxu0 0.0
        %3307 = vmatpush1.msra.mxu0 %v3178
        %3308 = vmatprep.subr.mxu0 0.0
        %3309 = vmatpush1.msra.mxu0 %v3179
        %3310 = vmatprep.subr.mxu0 0.0
        %3311 = vmatpush1.msra.mxu0 %v3180
        %3312 = vmatprep.subr.mxu0 0.0
        %3313 = vmatpush1.msra.mxu0 %v3181
        %3314 = vmatprep.subr.mxu0 0.0
        %3315 = vmatpush1.msra.mxu0 %v3182
        %3316 = vmatprep.subr.mxu0 0.0
        %3317 = vmatpush1.msra.mxu0 %v3183
        %3318 = vmatprep.subr.mxu0 0.0
        %3319 = vmatpush1.msra.mxu0 %v3184
        %3320 = vmatprep.subr.mxu0 0.0
        %3321 = vmatpush1.msra.mxu0 %v3185
        %3322 = vmatprep.subr.mxu0 0.0
        %3323 = vmatpush1.msra.mxu0 %v3186
        %3324 = vmatprep.subr.mxu0 0.0
        %3325 = vmatpush1.msra.mxu0 %v3187
        %3326 = vmatprep.subr.mxu0 0.0
        %3327 = vmatpush1.msra.mxu0 0.0
        %3328 = vmatprep.subr.mxu0 0.0
        %3329 = vmatpush1.msra.mxu0 0.0
        %3330 = vmatprep.subr.mxu0 0.0
        %3331 = vmatpush1.msra.mxu0 0.0
        %3332 = vmatprep.subr.mxu0 0.0
        %3333 = vmatpush1.msra.mxu0 0.0
        %3334 = vmatprep.subr.mxu0 0.0
        %3335 = vmatpush1.msra.mxu0 0.0
        %3336 = vmatprep.subr.mxu0 0.0
        %3337 = vmatpush1.msra.mxu0 0.0
        %3338 = vmatprep.subr.mxu0 0.0
        %3339 = vmatpush1.msra.mxu0 0.0
        %3340 = vmatprep.subr.mxu0 0.0
        %3341 = vmatpush1.msra.mxu0 0.0
        %3342 = vmatprep.subr.mxu0 0.0
        %3343 = vmatpush1.msra.mxu0 0.0
        %3344 = vmatprep.subr.mxu0 0.0
        %3345 = vmatpush1.msra.mxu0 0.0
        %3346 = vmatprep.subr.mxu0 0.0
        %3347 = vmatpush1.msra.mxu0 0.0
        %3348 = vmatprep.subr.mxu0 0.0
        %3349 = vmatpush1.msra.mxu0 0.0
        %3350 = vmatprep.subr.mxu0 0.0
        %3351 = vmatpush1.msra.mxu0 0.0
        %3352 = vmatprep.subr.mxu0 0.0
        %3353 = vmatpush1.msra.mxu0 0.0
        %3354 = vmatprep.subr.mxu0 0.0
        %3355 = vmatpush1.msra.mxu0 0.0
        %3356 = vmatprep.subr.mxu0 0.0
        %3357 = vmatpush1.msra.mxu0 0.0
        %3358 = vmatprep.mubr.f32.mxu0 0.0
        %3359 = vmatmul.mubr.f32.gmra.mrb[0].mxu0 %v3167
        %v3360 = vpop.f32.mrb[0].mxu0
        %v3361 = vadd.f32 %v3276, %v3360
        %v3362 = vpop.f32.mrb[0].mxu0
        %3363 = vmatprep.mubr.f32.mxu0 0.0
        %3364 = vmatmul.mubr.f32.gmra.mrb[0].mxu0 %v3168
        %v3365 = vpop.f32.mrb[0].mxu0
        %v3366 = vadd.f32 %v3281, %v3365
        %v3367 = vpop.f32.mrb[0].mxu0
        %3368 = vmatprep.mubr.f32.mxu0 0.0
        %3369 = vmatmul.mubr.f32.gmra.mrb[0].mxu0 %v3169
        %v3370 = vpop.f32.mrb[0].mxu0
        %v3371 = vadd.f32 %v3286, %v3370
        %v3372 = vpop.f32.mrb[0].mxu0
        %3373 = vmatprep.mubr.f32.mxu0 0.0
        %3374 = vmatmul.mubr.f32.gmra.mrb[0].mxu0 %v3170
        %v3375 = vpop.f32.mrb[0].mxu0
        %v3376 = vadd.f32 %v3291, %v3375
        %v3377 = vpop.f32.mrb[0].mxu0
        %3378 = vdwg.mxu0
        %v3379 = vld [vmem:[#allocation4 + $0x5] sm:$0xff]
        %v3380 = vld [vmem:[#allocation4 + $0xd] sm:$0xff]
        %v3381 = vld [vmem:[#allocation4 + $0x15] sm:$0xff]
        %v3382 = vld [vmem:[#allocation4 + $0x1d] sm:$0x1]
        %s3383 = scalar_lea.vmem %s5, 256
        %v3384 = vld [vmem:[%s3383] sm:$0xff]
        %v3385 = vld [vmem:[%s3383 + $0x8] sm:$0xff]
        %v3386 = vld [vmem:[%s3383 + $0x10] sm:$0xff]
        %v3387 = vld [vmem:[%s3383 + $0x18] sm:$0xff]
        %v3388 = vld [vmem:[%s3383 + $0x20] sm:$0xff]
        %v3389 = vld [vmem:[%s3383 + $0x28] sm:$0xff]
        %v3390 = vld [vmem:[%s3383 + $0x30] sm:$0xff]
        %v3391 = vld [vmem:[%s3383 + $0x38] sm:$0xff]
        %v3392 = vld [vmem:[%s3383 + $0x40] sm:$0xff]
        %v3393 = vld [vmem:[%s3383 + $0x48] sm:$0xff]
        %v3394 = vld [vmem:[%s3383 + $0x50] sm:$0xff]
        %v3395 = vld [vmem:[%s3383 + $0x58] sm:$0xff]
        %v3396 = vld [vmem:[%s3383 + $0x60] sm:$0xff]
        %v3397 = vld [vmem:[%s3383 + $0x68] sm:$0xff]
        %v3398 = vld [vmem:[%s3383 + $0x70] sm:$0xff]
        %v3399 = vld [vmem:[%s3383 + $0x78] sm:$0xff]
        %3400 = vmatprep.subr.mxu0 0.0
        %3401 = vmatpush1.msra.mxu0 %v3384
        %3402 = vmatprep.subr.mxu0 0.0
        %3403 = vmatpush1.msra.mxu0 %v3385
        %3404 = vmatprep.subr.mxu0 0.0
        %3405 = vmatpush1.msra.mxu0 %v3386
        %3406 = vmatprep.subr.mxu0 0.0
        %3407 = vmatpush1.msra.mxu0 %v3387
        %3408 = vmatprep.subr.mxu0 0.0
        %3409 = vmatpush1.msra.mxu0 %v3388
        %3410 = vmatprep.subr.mxu0 0.0
        %3411 = vmatpush1.msra.mxu0 %v3389
        %3412 = vmatprep.subr.mxu0 0.0
        %3413 = vmatpush1.msra.mxu0 %v3390
        %3414 = vmatprep.subr.mxu0 0.0
        %3415 = vmatpush1.msra.mxu0 %v3391
        %3416 = vmatprep.subr.mxu0 0.0
        %3417 = vmatpush1.msra.mxu0 %v3392
        %3418 = vmatprep.subr.mxu0 0.0
        %3419 = vmatpush1.msra.mxu0 %v3393
        %3420 = vmatprep.subr.mxu0 0.0
        %3421 = vmatpush1.msra.mxu0 %v3394
        %3422 = vmatprep.subr.mxu0 0.0
        %3423 = vmatpush1.msra.mxu0 %v3395
        %3424 = vmatprep.subr.mxu0 0.0
        %3425 = vmatpush1.msra.mxu0 %v3396
        %3426 = vmatprep.subr.mxu0 0.0
        %3427 = vmatpush1.msra.mxu0 %v3397
        %3428 = vmatprep.subr.mxu0 0.0
        %3429 = vmatpush1.msra.mxu0 %v3398
        %3430 = vmatprep.subr.mxu0 0.0
        %3431 = vmatpush1.msra.mxu0 %v3399
        %3432 = vmatprep.subr.mxu0 0.0
        %3433 = vmatpush1.msra.mxu0 0.0
        %3434 = vmatprep.subr.mxu0 0.0
        %3435 = vmatpush1.msra.mxu0 0.0
        %3436 = vmatprep.subr.mxu0 0.0
        %3437 = vmatpush1.msra.mxu0 0.0
        %3438 = vmatprep.subr.mxu0 0.0
        %3439 = vmatpush1.msra.mxu0 0.0
        %3440 = vmatprep.subr.mxu0 0.0
        %3441 = vmatpush1.msra.mxu0 0.0
        %3442 = vmatprep.subr.mxu0 0.0
        %3443 = vmatpush1.msra.mxu0 0.0
        %3444 = vmatprep.subr.mxu0 0.0
        %3445 = vmatpush1.msra.mxu0 0.0
        %3446 = vmatprep.subr.mxu0 0.0
        %3447 = vmatpush1.msra.mxu0 0.0
        %3448 = vmatprep.subr.mxu0 0.0
        %3449 = vmatpush1.msra.mxu0 0.0
        %3450 = vmatprep.subr.mxu0 0.0
        %3451 = vmatpush1.msra.mxu0 0.0
        %3452 = vmatprep.subr.mxu0 0.0
        %3453 = vmatpush1.msra.mxu0 0.0
        %3454 = vmatprep.subr.mxu0 0.0
        %3455 = vmatpush1.msra.mxu0 0.0
        %3456 = vmatprep.subr.mxu0 0.0
        %3457 = vmatpush1.msra.mxu0 0.0
        %3458 = vmatprep.subr.mxu0 0.0
        %3459 = vmatpush1.msra.mxu0 0.0
        %3460 = vmatprep.subr.mxu0 0.0
        %3461 = vmatpush1.msra.mxu0 0.0
        %3462 = vmatprep.subr.mxu0 0.0
        %3463 = vmatpush1.msra.mxu0 0.0
        %3464 = vmatprep.mubr.f32.mxu0 0.0
        %3465 = vmatmul.mubr.f32.gmra.mrb[0].mxu0 %v3379
        %v3466 = vpop.f32.mrb[0].mxu0
        %v3467 = vadd.f32 0.0, %v3466
        %v3468 = vpop.f32.mrb[0].mxu0
        %3469 = vmatprep.mubr.f32.mxu0 0.0
        %3470 = vmatmul.mubr.f32.gmra.mrb[0].mxu0 %v3380
        %v3471 = vpop.f32.mrb[0].mxu0
        %v3472 = vadd.f32 0.0, %v3471
        %v3473 = vpop.f32.mrb[0].mxu0
        %3474 = vmatprep.mubr.f32.mxu0 0.0
        %3475 = vmatmul.mubr.f32.gmra.mrb[0].mxu0 %v3381
        %v3476 = vpop.f32.mrb[0].mxu0
        %v3477 = vadd.f32 0.0, %v3476
        %v3478 = vpop.f32.mrb[0].mxu0
        %3479 = vmatprep.mubr.f32.mxu0 0.0
        %3480 = vmatmul.mubr.f32.gmra.mrb[0].mxu0 %v3382
        %v3481 = vpop.f32.mrb[0].mxu0
        %v3482 = vadd.f32 0.0, %v3481
        %v3483 = vpop.f32.mrb[0].mxu0
        %3484 = vdwg.mxu0
        %v3485 = vadd.f32 %v3361, %v3467
        %v3486 = vadd.f32 %v3366, %v3472
        %v3487 = vadd.f32 %v3371, %v3477
        %v3488 = vadd.f32 %v3376, %v3482
        %v3489 = vld [vmem:[#allocation4 + $0x6] sm:$0xff]
        %v3490 = vld [vmem:[#allocation4 + $0xe] sm:$0xff]
        %v3491 = vld [vmem:[#allocation4 + $0x16] sm:$0xff]
        %v3492 = vld [vmem:[#allocation4 + $0x1e] sm:$0x1]
        %v3493 = vld [vmem:[%s5] sm:$0xff]
        %v3494 = vld [vmem:[%s5 + $0x8] sm:$0xff]
        %v3495 = vld [vmem:[%s5 + $0x10] sm:$0xff]
        %v3496 = vld [vmem:[%s5 + $0x18] sm:$0xff]
        %v3497 = vld [vmem:[%s5 + $0x20] sm:$0xff]
        %v3498 = vld [vmem:[%s5 + $0x28] sm:$0xff]
        %v3499 = vld [vmem:[%s5 + $0x30] sm:$0xff]
        %v3500 = vld [vmem:[%s5 + $0x38] sm:$0xff]
        %v3501 = vld [vmem:[%s5 + $0x40] sm:$0xff]
        %v3502 = vld [vmem:[%s5 + $0x48] sm:$0xff]
        %v3503 = vld [vmem:[%s5 + $0x50] sm:$0xff]
        %v3504 = vld [vmem:[%s5 + $0x58] sm:$0xff]
        %v3505 = vld [vmem:[%s5 + $0x60] sm:$0xff]
        %v3506 = vld [vmem:[%s5 + $0x68] sm:$0xff]
        %v3507 = vld [vmem:[%s5 + $0x70] sm:$0xff]
        %v3508 = vld [vmem:[%s5 + $0x78] sm:$0xff]
        %3509 = vmatprep.subr.mxu0 0.0
        %3510 = vmatpush1.msra.mxu0 %v3493
        %3511 = vmatprep.subr.mxu0 0.0
        %3512 = vmatpush1.msra.mxu0 %v3494
        %3513 = vmatprep.subr.mxu0 0.0
        %3514 = vmatpush1.msra.mxu0 %v3495
        %3515 = vmatprep.subr.mxu0 0.0
        %3516 = vmatpush1.msra.mxu0 %v3496
        %3517 = vmatprep.subr.mxu0 0.0
        %3518 = vmatpush1.msra.mxu0 %v3497
        %3519 = vmatprep.subr.mxu0 0.0
        %3520 = vmatpush1.msra.mxu0 %v3498
        %3521 = vmatprep.subr.mxu0 0.0
        %3522 = vmatpush1.msra.mxu0 %v3499
        %3523 = vmatprep.subr.mxu0 0.0
        %3524 = vmatpush1.msra.mxu0 %v3500
        %3525 = vmatprep.subr.mxu0 0.0
        %3526 = vmatpush1.msra.mxu0 %v3501
        %3527 = vmatprep.subr.mxu0 0.0
        %3528 = vmatpush1.msra.mxu0 %v3502
        %3529 = vmatprep.subr.mxu0 0.0
        %3530 = vmatpush1.msra.mxu0 %v3503
        %3531 = vmatprep.subr.mxu0 0.0
        %3532 = vmatpush1.msra.mxu0 %v3504
        %3533 = vmatprep.subr.mxu0 0.0
        %3534 = vmatpush1.msra.mxu0 %v3505
        %3535 = vmatprep.subr.mxu0 0.0
        %3536 = vmatpush1.msra.mxu0 %v3506
        %3537 = vmatprep.subr.mxu0 0.0
        %3538 = vmatpush1.msra.mxu0 %v3507
        %3539 = vmatprep.subr.mxu0 0.0
        %3540 = vmatpush1.msra.mxu0 %v3508
        %3541 = vmatprep.subr.mxu0 0.0
        %3542 = vmatpush1.msra.mxu0 0.0
        %3543 = vmatprep.subr.mxu0 0.0
        %3544 = vmatpush1.msra.mxu0 0.0
        %3545 = vmatprep.subr.mxu0 0.0
        %3546 = vmatpush1.msra.mxu0 0.0
        %3547 = vmatprep.subr.mxu0 0.0
        %3548 = vmatpush1.msra.mxu0 0.0
        %3549 = vmatprep.subr.mxu0 0.0
        %3550 = vmatpush1.msra.mxu0 0.0
        %3551 = vmatprep.subr.mxu0 0.0
        %3552 = vmatpush1.msra.mxu0 0.0
        %3553 = vmatprep.subr.mxu0 0.0
        %3554 = vmatpush1.msra.mxu0 0.0
        %3555 = vmatprep.subr.mxu0 0.0
        %3556 = vmatpush1.msra.mxu0 0.0
        %3557 = vmatprep.subr.mxu0 0.0
        %3558 = vmatpush1.msra.mxu0 0.0
        %3559 = vmatprep.subr.mxu0 0.0
        %3560 = vmatpush1.msra.mxu0 0.0
        %3561 = vmatprep.subr.mxu0 0.0
        %3562 = vmatpush1.msra.mxu0 0.0
        %3563 = vmatprep.subr.mxu0 0.0
        %3564 = vmatpush1.msra.mxu0 0.0
        %3565 = vmatprep.subr.mxu0 0.0
        %3566 = vmatpush1.msra.mxu0 0.0
        %3567 = vmatprep.subr.mxu0 0.0
        %3568 = vmatpush1.msra.mxu0 0.0
        %3569 = vmatprep.subr.mxu0 0.0
        %3570 = vmatpush1.msra.mxu0 0.0
        %3571 = vmatprep.subr.mxu0 0.0
        %3572 = vmatpush1.msra.mxu0 0.0
        %3573 = vmatprep.mubr.f32.mxu0 0.0
        %3574 = vmatmul.mubr.f32.gmra.mrb[0].mxu0 %v3489
        %v3575 = vpop.f32.mrb[0].mxu0
        %v3576 = vadd.f32 0.0, %v3575
        %v3577 = vpop.f32.mrb[0].mxu0
        %3578 = vmatprep.mubr.f32.mxu0 0.0
        %3579 = vmatmul.mubr.f32.gmra.mrb[0].mxu0 %v3490
        %v3580 = vpop.f32.mrb[0].mxu0
        %v3581 = vadd.f32 0.0, %v3580
        %v3582 = vpop.f32.mrb[0].mxu0
        %3583 = vmatprep.mubr.f32.mxu0 0.0
        %3584 = vmatmul.mubr.f32.gmra.mrb[0].mxu0 %v3491
        %v3585 = vpop.f32.mrb[0].mxu0
        %v3586 = vadd.f32 0.0, %v3585
        %v3587 = vpop.f32.mrb[0].mxu0
        %3588 = vmatprep.mubr.f32.mxu0 0.0
        %3589 = vmatmul.mubr.f32.gmra.mrb[0].mxu0 %v3492
        %v3590 = vpop.f32.mrb[0].mxu0
        %v3591 = vadd.f32 0.0, %v3590
        %v3592 = vpop.f32.mrb[0].mxu0
        %3593 = vdwg.mxu0
        %v3594 = vadd.f32 %v3485, %v3576
        %v3595 = vadd.f32 %v3486, %v3581
        %v3596 = vadd.f32 %v3487, %v3586
        %v3597 = vadd.f32 %v3488, %v3591
        %v3598 = vadd.f32 %v3594, %v2624
        %v3599 = vadd.f32 %v3595, %v2624
        %v3600 = vadd.f32 %v3596, %v2624
        %v3601 = vadd.f32 %v3597, %v2624
        %v3602 = vmax.f32 %v3598, 0.0
        %v3603 = vmax.f32 %v3599, 0.0
        %v3604 = vmax.f32 %v3600, 0.0
        %v3605 = vmax.f32 %v3601, 0.0
        %3606 = vst [vmem:[#allocation2 + $0x60] sm:$0xff] %v3602
        %3607 = vst [vmem:[#allocation2 + $0x68] sm:$0xff] %v3603
        %3608 = vst [vmem:[#allocation2 + $0x70] sm:$0xff] %v3604
        %3609 = vst [vmem:[#allocation2 + $0x78] sm:$0x1] %v3605
        %v3610 = vld [vmem:[#allocation2] sm:$0x1]
        %3611 = vst [vmem:[#allocation5] sm:$0x1] %v3610
        %v3612 = vld [vmem:[#allocation2 + $0x1] sm:$0x1]
        %3613 = vst [vmem:[#allocation5 + $0x2] sm:$0x1] %v3612
        %v3614 = vld [vmem:[#allocation2 + $0x2] sm:$0x1]
        %3615 = vst [vmem:[#allocation5 + $0x4] sm:$0x1] %v3614
        %v3616 = vld [vmem:[#allocation2 + $0x3] sm:$0x1]
        %3617 = vst [vmem:[#allocation5 + $0x6] sm:$0x1] %v3616
        %v3618 = vld [vmem:[#allocation2 + $0x5] sm:$0x1]
        %3619 = vst [vmem:[#allocation5 + $0x12] sm:$0x1] %v3618
        %v3620 = vld [vmem:[#allocation2 + $0x6] sm:$0x1]
        %3621 = vst [vmem:[#allocation5 + $0x14] sm:$0x1] %v3620
        %v3622 = vld [vmem:[#allocation2 + $0x7] sm:$0x1]
        %3623 = vst [vmem:[#allocation5 + $0x16] sm:$0x1] %v3622
        %v3624 = vld [vmem:[#allocation2 + $0x8] sm:$0x1]
        %3625 = vst [vmem:[#allocation5 + $0x18] sm:$0x1] %v3624
        %v3626 = vld [vmem:[#allocation2 + $0xa] sm:$0x1]
        %3627 = vst [vmem:[#allocation5 + $0x24] sm:$0x1] %v3626
        %v3628 = vld [vmem:[#allocation2 + $0xb] sm:$0x1]
        %3629 = vst [vmem:[#allocation5 + $0x26] sm:$0x1] %v3628
        %v3630 = vld [vmem:[#allocation2 + $0xc] sm:$0x1]
        %3631 = vst [vmem:[#allocation5 + $0x28] sm:$0x1] %v3630
        %v3632 = vld [vmem:[#allocation2 + $0xd] sm:$0x1]
        %3633 = vst [vmem:[#allocation5 + $0x2a] sm:$0x1] %v3632
        %v3634 = vld [vmem:[#allocation2 + $0xf] sm:$0x1]
        %3635 = vst [vmem:[#allocation5 + $0x36] sm:$0x1] %v3634
        %v3636 = vld [vmem:[#allocation2 + $0x10] sm:$0x1]
        %3637 = vst [vmem:[#allocation5 + $0x38] sm:$0x1] %v3636
        %v3638 = vld [vmem:[#allocation2 + $0x11] sm:$0x1]
        %3639 = vst [vmem:[#allocation5 + $0x3a] sm:$0x1] %v3638
        %v3640 = vld [vmem:[#allocation2 + $0x12] sm:$0x1]
        %3641 = vst [vmem:[#allocation5 + $0x3c] sm:$0x1] %v3640
        %v3642 = vld [vmem:[#allocation2 + $0x20] sm:$0x1]
        %3643 = vst [vmem:[#allocation5 + $0x1] sm:$0x1] %v3642
        %v3644 = vld [vmem:[#allocation2 + $0x21] sm:$0x1]
        %3645 = vst [vmem:[#allocation5 + $0x3] sm:$0x1] %v3644
        %v3646 = vld [vmem:[#allocation2 + $0x22] sm:$0x1]
        %3647 = vst [vmem:[#allocation5 + $0x5] sm:$0x1] %v3646
        %v3648 = vld [vmem:[#allocation2 + $0x23] sm:$0x1]
        %3649 = vst [vmem:[#allocation5 + $0x7] sm:$0x1] %v3648
        %v3650 = vld [vmem:[#allocation2 + $0x25] sm:$0x1]
        %3651 = vst [vmem:[#allocation5 + $0x13] sm:$0x1] %v3650
        %v3652 = vld [vmem:[#allocation2 + $0x26] sm:$0x1]
        %3653 = vst [vmem:[#allocation5 + $0x15] sm:$0x1] %v3652
        %v3654 = vld [vmem:[#allocation2 + $0x27] sm:$0x1]
        %3655 = vst [vmem:[#allocation5 + $0x17] sm:$0x1] %v3654
        %v3656 = vld [vmem:[#allocation2 + $0x28] sm:$0x1]
        %3657 = vst [vmem:[#allocation5 + $0x19] sm:$0x1] %v3656
        %v3658 = vld [vmem:[#allocation2 + $0x2a] sm:$0x1]
        %3659 = vst [vmem:[#allocation5 + $0x25] sm:$0x1] %v3658
        %v3660 = vld [vmem:[#allocation2 + $0x2b] sm:$0x1]
        %3661 = vst [vmem:[#allocation5 + $0x27] sm:$0x1] %v3660
        %v3662 = vld [vmem:[#allocation2 + $0x2c] sm:$0x1]
        %3663 = vst [vmem:[#allocation5 + $0x29] sm:$0x1] %v3662
        %v3664 = vld [vmem:[#allocation2 + $0x2d] sm:$0x1]
        %3665 = vst [vmem:[#allocation5 + $0x2b] sm:$0x1] %v3664
        %v3666 = vld [vmem:[#allocation2 + $0x2f] sm:$0x1]
        %3667 = vst [vmem:[#allocation5 + $0x37] sm:$0x1] %v3666
        %v3668 = vld [vmem:[#allocation2 + $0x30] sm:$0x1]
        %3669 = vst [vmem:[#allocation5 + $0x39] sm:$0x1] %v3668
        %v3670 = vld [vmem:[#allocation2 + $0x31] sm:$0x1]
        %3671 = vst [vmem:[#allocation5 + $0x3b] sm:$0x1] %v3670
        %v3672 = vld [vmem:[#allocation2 + $0x32] sm:$0x1]
        %3673 = vst [vmem:[#allocation5 + $0x3d] sm:$0x1] %v3672
        %v3674 = vld [vmem:[#allocation2 + $0x40] sm:$0x1]
        %3675 = vst [vmem:[#allocation5 + $0x9] sm:$0x1] %v3674
        %v3676 = vld [vmem:[#allocation2 + $0x41] sm:$0x1]
        %3677 = vst [vmem:[#allocation5 + $0xb] sm:$0x1] %v3676
        %v3678 = vld [vmem:[#allocation2 + $0x42] sm:$0x1]
        %3679 = vst [vmem:[#allocation5 + $0xd] sm:$0x1] %v3678
        %v3680 = vld [vmem:[#allocation2 + $0x43] sm:$0x1]
        %3681 = vst [vmem:[#allocation5 + $0xf] sm:$0x1] %v3680
        %v3682 = vld [vmem:[#allocation2 + $0x45] sm:$0x1]
        %3683 = vst [vmem:[#allocation5 + $0x1b] sm:$0x1] %v3682
        %v3684 = vld [vmem:[#allocation2 + $0x46] sm:$0x1]
        %3685 = vst [vmem:[#allocation5 + $0x1d] sm:$0x1] %v3684
        %v3686 = vld [vmem:[#allocation2 + $0x47] sm:$0x1]
        %3687 = vst [vmem:[#allocation5 + $0x1f] sm:$0x1] %v3686
        %v3688 = vld [vmem:[#allocation2 + $0x48] sm:$0x1]
        %3689 = vst [vmem:[#allocation5 + $0x21] sm:$0x1] %v3688
        %v3690 = vld [vmem:[#allocation2 + $0x4a] sm:$0x1]
        %3691 = vst [vmem:[#allocation5 + $0x2d] sm:$0x1] %v3690
        %v3692 = vld [vmem:[#allocation2 + $0x4b] sm:$0x1]
        %3693 = vst [vmem:[#allocation5 + $0x2f] sm:$0x1] %v3692
        %v3694 = vld [vmem:[#allocation2 + $0x4c] sm:$0x1]
        %3695 = vst [vmem:[#allocation5 + $0x31] sm:$0x1] %v3694
        %v3696 = vld [vmem:[#allocation2 + $0x4d] sm:$0x1]
        %3697 = vst [vmem:[#allocation5 + $0x33] sm:$0x1] %v3696
        %v3698 = vld [vmem:[#allocation2 + $0x4f] sm:$0x1]
        %3699 = vst [vmem:[#allocation5 + $0x3f] sm:$0x1] %v3698
        %v3700 = vld [vmem:[#allocation2 + $0x50] sm:$0x1]
        %3701 = vst [vmem:[#allocation5 + $0x41] sm:$0x1] %v3700
        %v3702 = vld [vmem:[#allocation2 + $0x51] sm:$0x1]
        %3703 = vst [vmem:[#allocation5 + $0x43] sm:$0x1] %v3702
        %v3704 = vld [vmem:[#allocation2 + $0x52] sm:$0x1]
        %3705 = vst [vmem:[#allocation5 + $0x45] sm:$0x1] %v3704
        %v3706 = vld [vmem:[#allocation2 + $0x60] sm:$0x1]
        %3707 = vst [vmem:[#allocation5 + $0xa] sm:$0x1] %v3706
        %v3708 = vld [vmem:[#allocation2 + $0x61] sm:$0x1]
        %3709 = vst [vmem:[#allocation5 + $0xc] sm:$0x1] %v3708
        %v3710 = vld [vmem:[#allocation2 + $0x62] sm:$0x1]
        %3711 = vst [vmem:[#allocation5 + $0xe] sm:$0x1] %v3710
        %v3712 = vld [vmem:[#allocation2 + $0x63] sm:$0x1]
        %3713 = vst [vmem:[#allocation5 + $0x10] sm:$0x1] %v3712
        %v3714 = vld [vmem:[#allocation2 + $0x65] sm:$0x1]
        %3715 = vst [vmem:[#allocation5 + $0x1c] sm:$0x1] %v3714
        %v3716 = vld [vmem:[#allocation2 + $0x66] sm:$0x1]
        %3717 = vst [vmem:[#allocation5 + $0x1e] sm:$0x1] %v3716
        %v3718 = vld [vmem:[#allocation2 + $0x67] sm:$0x1]
        %3719 = vst [vmem:[#allocation5 + $0x20] sm:$0x1] %v3718
        %v3720 = vld [vmem:[#allocation2 + $0x68] sm:$0x1]
        %3721 = vst [vmem:[#allocation5 + $0x22] sm:$0x1] %v3720
        %v3722 = vld [vmem:[#allocation2 + $0x6a] sm:$0x1]
        %3723 = vst [vmem:[#allocation5 + $0x2e] sm:$0x1] %v3722
        %v3724 = vld [vmem:[#allocation2 + $0x6b] sm:$0x1]
        %3725 = vst [vmem:[#allocation5 + $0x30] sm:$0x1] %v3724
        %v3726 = vld [vmem:[#allocation2 + $0x6c] sm:$0x1]
        %3727 = vst [vmem:[#allocation5 + $0x32] sm:$0x1] %v3726
        %v3728 = vld [vmem:[#allocation2 + $0x6d] sm:$0x1]
        %3729 = vst [vmem:[#allocation5 + $0x34] sm:$0x1] %v3728
        %v3730 = vld [vmem:[#allocation2 + $0x6f] sm:$0x1]
        %3731 = vst [vmem:[#allocation5 + $0x40] sm:$0x1] %v3730
        %v3732 = vld [vmem:[#allocation2 + $0x70] sm:$0x1]
        %3733 = vst [vmem:[#allocation5 + $0x42] sm:$0x1] %v3732
        %v3734 = vld [vmem:[#allocation2 + $0x71] sm:$0x1]
        %3735 = vst [vmem:[#allocation5 + $0x44] sm:$0x1] %v3734
        %v3736 = vld [vmem:[#allocation2 + $0x72] sm:$0x1]
        %3737 = vst [vmem:[#allocation5 + $0x46] sm:$0x1] %v3736
        %v3738 = vld [vmem:[%s8] sm:$0x1]
        %v3739 = vld [vmem:[#allocation5] sm:$0xff]
        %v3740 = vld [vmem:[#allocation5 + $0x8] sm:$0xff]
        %v3741 = vld [vmem:[#allocation5 + $0x10] sm:$0xff]
        %v3742 = vld [vmem:[#allocation5 + $0x18] sm:$0xff]
        %v3743 = vld [vmem:[#allocation5 + $0x20] sm:$0xff]
        %v3744 = vld [vmem:[#allocation5 + $0x28] sm:$0xff]
        %v3745 = vld [vmem:[#allocation5 + $0x30] sm:$0xff]
        %v3746 = vld [vmem:[#allocation5 + $0x38] sm:$0xff]
        %v3747 = vld [vmem:[#allocation5 + $0x40] sm:$0xff]
        %v3748 = vld [vmem:[#allocation5 + $0x48] sm:$0xff]
        %v3749 = vld [vmem:[#allocation5 + $0x50] sm:$0x1]
        %s3750 = scalar_lea.vmem [#allocation8], 512
        %v3751 = vld [vmem:[%s3750] sm:$0xff]
        %v3752 = vld [vmem:[%s3750 + $0x8] sm:$0xff]
        %v3753 = vld [vmem:[%s3750 + $0x10] sm:$0xff]
        %v3754 = vld [vmem:[%s3750 + $0x18] sm:$0xff]
        %v3755 = vld [vmem:[%s3750 + $0x20] sm:$0xff]
        %v3756 = vld [vmem:[%s3750 + $0x28] sm:$0xff]
        %v3757 = vld [vmem:[%s3750 + $0x30] sm:$0xff]
        %v3758 = vld [vmem:[%s3750 + $0x38] sm:$0xff]
        %v3759 = vld [vmem:[%s3750 + $0x40] sm:$0xff]
        %v3760 = vld [vmem:[%s3750 + $0x48] sm:$0xff]
        %v3761 = vld [vmem:[%s3750 + $0x50] sm:$0xff]
        %v3762 = vld [vmem:[%s3750 + $0x58] sm:$0xff]
        %v3763 = vld [vmem:[%s3750 + $0x60] sm:$0xff]
        %v3764 = vld [vmem:[%s3750 + $0x68] sm:$0xff]
        %v3765 = vld [vmem:[%s3750 + $0x70] sm:$0xff]
        %v3766 = vld [vmem:[%s3750 + $0x78] sm:$0xff]
        %v3768 = vlaneseq
        %v3769 = vshrl.u32 %v3768, 7
        %v3770 = vsub.s32 0, %v3769
        %v3771 = vrot.slane %v3738, %v3770
        %3773 = vmatprep.subr.mxu0 0.0
        %3774 = vmatpush1.msra.mxu0 %v3751
        %3775 = vmatprep.subr.mxu0 0.0
        %3776 = vmatpush1.msra.mxu0 %v3752
        %3777 = vmatprep.subr.mxu0 0.0
        %3778 = vmatpush1.msra.mxu0 %v3753
        %3779 = vmatprep.subr.mxu0 0.0
        %3780 = vmatpush1.msra.mxu0 %v3754
        %3781 = vmatprep.subr.mxu0 0.0
        %3782 = vmatpush1.msra.mxu0 %v3755
        %3783 = vmatprep.subr.mxu0 0.0
        %3784 = vmatpush1.msra.mxu0 %v3756
        %3785 = vmatprep.subr.mxu0 0.0
        %3786 = vmatpush1.msra.mxu0 %v3757
        %3787 = vmatprep.subr.mxu0 0.0
        %3788 = vmatpush1.msra.mxu0 %v3758
        %3789 = vmatprep.subr.mxu0 0.0
        %3790 = vmatpush1.msra.mxu0 %v3759
        %3791 = vmatprep.subr.mxu0 0.0
        %3792 = vmatpush1.msra.mxu0 %v3760
        %3793 = vmatprep.subr.mxu0 0.0
        %3794 = vmatpush1.msra.mxu0 %v3761
        %3795 = vmatprep.subr.mxu0 0.0
        %3796 = vmatpush1.msra.mxu0 %v3762
        %3797 = vmatprep.subr.mxu0 0.0
        %3798 = vmatpush1.msra.mxu0 %v3763
        %3799 = vmatprep.subr.mxu0 0.0
        %3800 = vmatpush1.msra.mxu0 %v3764
        %3801 = vmatprep.subr.mxu0 0.0
        %3802 = vmatpush1.msra.mxu0 %v3765
        %3803 = vmatprep.subr.mxu0 0.0
        %3804 = vmatpush1.msra.mxu0 %v3766
        %3805 = vmatprep.subr.mxu0 0.0
        %3806 = vmatpush1.msra.mxu0 0.0
        %3807 = vmatprep.subr.mxu0 0.0
        %3808 = vmatpush1.msra.mxu0 0.0
        %3809 = vmatprep.subr.mxu0 0.0
        %3810 = vmatpush1.msra.mxu0 0.0
        %3811 = vmatprep.subr.mxu0 0.0
        %3812 = vmatpush1.msra.mxu0 0.0
        %3813 = vmatprep.subr.mxu0 0.0
        %3814 = vmatpush1.msra.mxu0 0.0
        %3815 = vmatprep.subr.mxu0 0.0
        %3816 = vmatpush1.msra.mxu0 0.0
        %3817 = vmatprep.subr.mxu0 0.0
        %3818 = vmatpush1.msra.mxu0 0.0
        %3819 = vmatprep.subr.mxu0 0.0
        %3820 = vmatpush1.msra.mxu0 0.0
        %3821 = vmatprep.subr.mxu0 0.0
        %3822 = vmatpush1.msra.mxu0 0.0
        %3823 = vmatprep.subr.mxu0 0.0
        %3824 = vmatpush1.msra.mxu0 0.0
        %3825 = vmatprep.subr.mxu0 0.0
        %3826 = vmatpush1.msra.mxu0 0.0
        %3827 = vmatprep.subr.mxu0 0.0
        %3828 = vmatpush1.msra.mxu0 0.0
        %3829 = vmatprep.subr.mxu0 0.0
        %3830 = vmatpush1.msra.mxu0 0.0
        %3831 = vmatprep.subr.mxu0 0.0
        %3832 = vmatpush1.msra.mxu0 0.0
        %3833 = vmatprep.subr.mxu0 0.0
        %3834 = vmatpush1.msra.mxu0 0.0
        %3835 = vmatprep.subr.mxu0 0.0
        %3836 = vmatpush1.msra.mxu0 0.0
        %3837 = vmatprep.mubr.f32.mxu0 0.0
        %3838 = vmatmul.mubr.f32.gmra.mrb[0].mxu0 %v3739
        %v3839 = vpop.f32.mrb[0].mxu0
        %v3840 = vadd.f32 %v3771, %v3839
        %v3841 = vpop.f32.mrb[0].mxu0
        %3842 = vmatprep.mubr.f32.mxu0 0.0
        %3843 = vmatmul.mubr.f32.gmra.mrb[0].mxu0 %v3740
        %v3844 = vpop.f32.mrb[0].mxu0
        %v3845 = vadd.f32 %v3771, %v3844
        %v3846 = vpop.f32.mrb[0].mxu0
        %3847 = vmatprep.mubr.f32.mxu0 0.0
        %3848 = vmatmul.mubr.f32.gmra.mrb[0].mxu0 %v3741
        %v3849 = vpop.f32.mrb[0].mxu0
        %v3850 = vadd.f32 %v3771, %v3849
        %v3851 = vpop.f32.mrb[0].mxu0
        %3852 = vmatprep.mubr.f32.mxu0 0.0
        %3853 = vmatmul.mubr.f32.gmra.mrb[0].mxu0 %v3742
        %v3854 = vpop.f32.mrb[0].mxu0
        %v3855 = vadd.f32 %v3771, %v3854
        %v3856 = vpop.f32.mrb[0].mxu0
        %3857 = vmatprep.mubr.f32.mxu0 0.0
        %3858 = vmatmul.mubr.f32.gmra.mrb[0].mxu0 %v3743
        %v3859 = vpop.f32.mrb[0].mxu0
        %v3860 = vadd.f32 %v3771, %v3859
        %v3861 = vpop.f32.mrb[0].mxu0
        %3862 = vmatprep.mubr.f32.mxu0 0.0
        %3863 = vmatmul.mubr.f32.gmra.mrb[0].mxu0 %v3744
        %v3864 = vpop.f32.mrb[0].mxu0
        %v3865 = vadd.f32 %v3771, %v3864
        %v3866 = vpop.f32.mrb[0].mxu0
        %3867 = vmatprep.mubr.f32.mxu0 0.0
        %3868 = vmatmul.mubr.f32.gmra.mrb[0].mxu0 %v3745
        %v3869 = vpop.f32.mrb[0].mxu0
        %v3870 = vadd.f32 %v3771, %v3869
        %v3871 = vpop.f32.mrb[0].mxu0
        %3872 = vmatprep.mubr.f32.mxu0 0.0
        %3873 = vmatmul.mubr.f32.gmra.mrb[0].mxu0 %v3746
        %v3874 = vpop.f32.mrb[0].mxu0
        %v3875 = vadd.f32 %v3771, %v3874
        %v3876 = vpop.f32.mrb[0].mxu0
        %3877 = vmatprep.mubr.f32.mxu0 0.0
        %3878 = vmatmul.mubr.f32.gmra.mrb[0].mxu0 %v3747
        %v3879 = vpop.f32.mrb[0].mxu0
        %v3880 = vadd.f32 %v3771, %v3879
        %v3881 = vpop.f32.mrb[0].mxu0
        %3882 = vmatprep.mubr.f32.mxu0 0.0
        %3883 = vmatmul.mubr.f32.gmra.mrb[0].mxu0 %v3748
        %v3884 = vpop.f32.mrb[0].mxu0
        %v3885 = vadd.f32 %v3771, %v3884
        %v3886 = vpop.f32.mrb[0].mxu0
        %3887 = vmatprep.mubr.f32.mxu0 0.0
        %3888 = vmatmul.mubr.f32.gmra.mrb[0].mxu0 %v3749
        %v3889 = vpop.f32.mrb[0].mxu0
        %v3890 = vadd.f32 %v3771, %v3889
        %v3891 = vpop.f32.mrb[0].mxu0
        %3892 = vdwg.mxu0
        %v3893 = vsub.f32 0.0, %v3840
        %v3894 = vsub.f32 0.0, %v3845
        %v3895 = vsub.f32 0.0, %v3850
        %v3896 = vsub.f32 0.0, %v3855
        %v3897 = vsub.f32 0.0, %v3860
        %v3898 = vsub.f32 0.0, %v3865
        %v3899 = vsub.f32 0.0, %v3870
        %v3900 = vsub.f32 0.0, %v3875
        %v3901 = vsub.f32 0.0, %v3880
        %v3902 = vsub.f32 0.0, %v3885
        %v3903 = vsub.f32 0.0, %v3890
        %v3904 = vmul.f32 %v3893, 1.442695
        %v3905 = vpow.pop %v3904
        %v3906 = vmul.f32 %v3894, 1.442695
        %v3907 = vpow.pop %v3906
        %v3908 = vmul.f32 %v3895, 1.442695
        %v3909 = vpow.pop %v3908
        %v3910 = vmul.f32 %v3896, 1.442695
        %v3911 = vpow.pop %v3910
        %v3912 = vmul.f32 %v3897, 1.442695
        %v3913 = vpow.pop %v3912
        %v3914 = vmul.f32 %v3898, 1.442695
        %v3915 = vpow.pop %v3914
        %v3916 = vmul.f32 %v3899, 1.442695
        %v3917 = vpow.pop %v3916
        %v3918 = vmul.f32 %v3900, 1.442695
        %v3919 = vpow.pop %v3918
        %v3920 = vmul.f32 %v3901, 1.442695
        %v3921 = vpow.pop %v3920
        %v3922 = vmul.f32 %v3902, 1.442695
        %v3923 = vpow.pop %v3922
        %v3924 = vmul.f32 %v3903, 1.442695
        %v3925 = vpow.pop %v3924
        %v3926 = vadd.f32 %v3905, 1.0
        %v3927 = vadd.f32 %v3907, 1.0
        %v3928 = vadd.f32 %v3909, 1.0
        %v3929 = vadd.f32 %v3911, 1.0
        %v3930 = vadd.f32 %v3913, 1.0
        %v3931 = vadd.f32 %v3915, 1.0
        %v3932 = vadd.f32 %v3917, 1.0
        %v3933 = vadd.f32 %v3919, 1.0
        %v3934 = vadd.f32 %v3921, 1.0
        %v3935 = vadd.f32 %v3923, 1.0
        %v3936 = vadd.f32 %v3925, 1.0
        %v3937 = vrcp.pop %v3926
        %v3938 = vmul.f32 1.0, %v3937
        %v3939 = vrcp.pop %v3927
        %v3940 = vmul.f32 1.0, %v3939
        %v3941 = vrcp.pop %v3928
        %v3942 = vmul.f32 1.0, %v3941
        %v3943 = vrcp.pop %v3929
        %v3944 = vmul.f32 1.0, %v3943
        %v3945 = vrcp.pop %v3930
        %v3946 = vmul.f32 1.0, %v3945
        %v3947 = vrcp.pop %v3931
        %v3948 = vmul.f32 1.0, %v3947
        %v3949 = vrcp.pop %v3932
        %v3950 = vmul.f32 1.0, %v3949
        %v3951 = vrcp.pop %v3933
        %v3952 = vmul.f32 1.0, %v3951
        %v3953 = vrcp.pop %v3934
        %v3954 = vmul.f32 1.0, %v3953
        %v3955 = vrcp.pop %v3935
        %v3956 = vmul.f32 1.0, %v3955
        %v3957 = vrcp.pop %v3936
        %v3958 = vmul.f32 1.0, %v3957
        %vm3959 = vcmask 7168
        %3960 = vst.msk [vmem:[%s362] sm:$0xff] %vm3959, %v3938
        %3961 = vst.msk [vmem:[%s362 + $0x8] sm:$0xff] %vm3959, %v3940
        %3962 = vst.msk [vmem:[%s362 + $0x10] sm:$0xff] %vm3959, %v3942
        %3963 = vst.msk [vmem:[%s362 + $0x18] sm:$0xff] %vm3959, %v3944
        %3964 = vst.msk [vmem:[%s362 + $0x20] sm:$0xff] %vm3959, %v3946
        %3965 = vst.msk [vmem:[%s362 + $0x28] sm:$0xff] %vm3959, %v3948
        %3966 = vst.msk [vmem:[%s362 + $0x30] sm:$0xff] %vm3959, %v3950
        %3967 = vst.msk [vmem:[%s362 + $0x38] sm:$0xff] %vm3959, %v3952
        %3968 = vst.msk [vmem:[%s362 + $0x40] sm:$0xff] %vm3959, %v3954
        %3969 = vst.msk [vmem:[%s362 + $0x48] sm:$0xff] %vm3959, %v3956
        %vm3970 = vcmask 0
        %3971 = vst.msk [vmem:[%s362 + $0x50] sm:$0x1] %vm3970, %v3958
        %v3972 = vld [vmem:[#allocation5] sm:$0xff]
        %v3973 = vld [vmem:[#allocation5 + $0x8] sm:$0xff]
        %v3974 = vld [vmem:[#allocation5 + $0x10] sm:$0xff]
        %v3975 = vld [vmem:[#allocation5 + $0x18] sm:$0xff]
        %v3976 = vld [vmem:[#allocation5 + $0x20] sm:$0xff]
        %v3977 = vld [vmem:[#allocation5 + $0x28] sm:$0xff]
        %v3978 = vld [vmem:[#allocation5 + $0x30] sm:$0xff]
        %v3979 = vld [vmem:[#allocation5 + $0x38] sm:$0xff]
        %v3980 = vld [vmem:[#allocation5 + $0x40] sm:$0xff]
        %v3981 = vld [vmem:[#allocation5 + $0x48] sm:$0xff]
        %v3982 = vld [vmem:[#allocation5 + $0x50] sm:$0x1]
        %s3983 = scalar_lea.vmem [#allocation8], 640
        %v3984 = vld [vmem:[%s3983] sm:$0xff]
        %v3985 = vld [vmem:[%s3983 + $0x8] sm:$0xff]
        %v3986 = vld [vmem:[%s3983 + $0x10] sm:$0xff]
        %v3987 = vld [vmem:[%s3983 + $0x18] sm:$0xff]
        %v3988 = vld [vmem:[%s3983 + $0x20] sm:$0xff]
        %v3989 = vld [vmem:[%s3983 + $0x28] sm:$0xff]
        %v3990 = vld [vmem:[%s3983 + $0x30] sm:$0xff]
        %v3991 = vld [vmem:[%s3983 + $0x38] sm:$0xff]
        %v3992 = vld [vmem:[%s3983 + $0x40] sm:$0xff]
        %v3993 = vld [vmem:[%s3983 + $0x48] sm:$0xff]
        %v3994 = vld [vmem:[%s3983 + $0x50] sm:$0xff]
        %v3995 = vld [vmem:[%s3983 + $0x58] sm:$0xff]
        %v3996 = vld [vmem:[%s3983 + $0x60] sm:$0xff]
        %v3997 = vld [vmem:[%s3983 + $0x68] sm:$0xff]
        %v3998 = vld [vmem:[%s3983 + $0x70] sm:$0xff]
        %v3999 = vld [vmem:[%s3983 + $0x78] sm:$0xff]
        %v4000 = vld [vmem:[#allocation5 + $0x1] sm:$0xff]
        %v4001 = vld [vmem:[#allocation5 + $0x9] sm:$0xff]
        %v4002 = vld [vmem:[#allocation5 + $0x11] sm:$0xff]
        %v4003 = vld [vmem:[#allocation5 + $0x19] sm:$0xff]
        %v4004 = vld [vmem:[#allocation5 + $0x21] sm:$0xff]
        %v4005 = vld [vmem:[#allocation5 + $0x29] sm:$0xff]
        %v4006 = vld [vmem:[#allocation5 + $0x31] sm:$0xff]
        %v4007 = vld [vmem:[#allocation5 + $0x39] sm:$0xff]
        %v4008 = vld [vmem:[#allocation5 + $0x41] sm:$0xff]
        %v4009 = vld [vmem:[#allocation5 + $0x49] sm:$0xff]
        %v4010 = vld [vmem:[#allocation5 + $0x51] sm:$0x1]
        %s4011 = scalar_lea.vmem [#allocation8], 384
        %v4012 = vld [vmem:[%s4011] sm:$0xff]
        %v4013 = vld [vmem:[%s4011 + $0x8] sm:$0xff]
        %v4014 = vld [vmem:[%s4011 + $0x10] sm:$0xff]
        %v4015 = vld [vmem:[%s4011 + $0x18] sm:$0xff]
        %v4016 = vld [vmem:[%s4011 + $0x20] sm:$0xff]
        %v4017 = vld [vmem:[%s4011 + $0x28] sm:$0xff]
        %v4018 = vld [vmem:[%s4011 + $0x30] sm:$0xff]
        %v4019 = vld [vmem:[%s4011 + $0x38] sm:$0xff]
        %v4020 = vld [vmem:[%s4011 + $0x40] sm:$0xff]
        %v4021 = vld [vmem:[%s4011 + $0x48] sm:$0xff]
        %v4022 = vld [vmem:[%s4011 + $0x50] sm:$0xff]
        %v4023 = vld [vmem:[%s4011 + $0x58] sm:$0xff]
        %v4024 = vld [vmem:[%s4011 + $0x60] sm:$0xff]
        %v4025 = vld [vmem:[%s4011 + $0x68] sm:$0xff]
        %v4026 = vld [vmem:[%s4011 + $0x70] sm:$0xff]
        %v4027 = vld [vmem:[%s4011 + $0x78] sm:$0xff]
        %4028 = vmatprep.subr.mxu0 0.0
        %4029 = vmatpush1.msra.mxu0 %v4012
        %4030 = vmatprep.subr.mxu0 0.0
        %4031 = vmatpush1.msra.mxu0 %v4013
        %4032 = vmatprep.subr.mxu0 0.0
        %4033 = vmatpush1.msra.mxu0 %v4014
        %4034 = vmatprep.subr.mxu0 0.0
        %4035 = vmatpush1.msra.mxu0 %v4015
        %4036 = vmatprep.subr.mxu0 0.0
        %4037 = vmatpush1.msra.mxu0 %v4016
        %4038 = vmatprep.subr.mxu0 0.0
        %4039 = vmatpush1.msra.mxu0 %v4017
        %4040 = vmatprep.subr.mxu0 0.0
        %4041 = vmatpush1.msra.mxu0 %v4018
        %4042 = vmatprep.subr.mxu0 0.0
        %4043 = vmatpush1.msra.mxu0 %v4019
        %4044 = vmatprep.subr.mxu0 0.0
        %4045 = vmatpush1.msra.mxu0 %v4020
        %4046 = vmatprep.subr.mxu0 0.0
        %4047 = vmatpush1.msra.mxu0 %v4021
        %4048 = vmatprep.subr.mxu0 0.0
        %4049 = vmatpush1.msra.mxu0 %v4022
        %4050 = vmatprep.subr.mxu0 0.0
        %4051 = vmatpush1.msra.mxu0 %v4023
        %4052 = vmatprep.subr.mxu0 0.0
        %4053 = vmatpush1.msra.mxu0 %v4024
        %4054 = vmatprep.subr.mxu0 0.0
        %4055 = vmatpush1.msra.mxu0 %v4025
        %4056 = vmatprep.subr.mxu0 0.0
        %4057 = vmatpush1.msra.mxu0 %v4026
        %4058 = vmatprep.subr.mxu0 0.0
        %4059 = vmatpush1.msra.mxu0 %v4027
        %4060 = vmatprep.subr.mxu0 0.0
        %4061 = vmatpush1.msra.mxu0 0.0
        %4062 = vmatprep.subr.mxu0 0.0
        %4063 = vmatpush1.msra.mxu0 0.0
        %4064 = vmatprep.subr.mxu0 0.0
        %4065 = vmatpush1.msra.mxu0 0.0
        %4066 = vmatprep.subr.mxu0 0.0
        %4067 = vmatpush1.msra.mxu0 0.0
        %4068 = vmatprep.subr.mxu0 0.0
        %4069 = vmatpush1.msra.mxu0 0.0
        %4070 = vmatprep.subr.mxu0 0.0
        %4071 = vmatpush1.msra.mxu0 0.0
        %4072 = vmatprep.subr.mxu0 0.0
        %4073 = vmatpush1.msra.mxu0 0.0
        %4074 = vmatprep.subr.mxu0 0.0
        %4075 = vmatpush1.msra.mxu0 0.0
        %4076 = vmatprep.subr.mxu0 0.0
        %4077 = vmatpush1.msra.mxu0 0.0
        %4078 = vmatprep.subr.mxu0 0.0
        %4079 = vmatpush1.msra.mxu0 0.0
        %4080 = vmatprep.subr.mxu0 0.0
        %4081 = vmatpush1.msra.mxu0 0.0
        %4082 = vmatprep.subr.mxu0 0.0
        %4083 = vmatpush1.msra.mxu0 0.0
        %4084 = vmatprep.subr.mxu0 0.0
        %4085 = vmatpush1.msra.mxu0 0.0
        %4086 = vmatprep.subr.mxu0 0.0
        %4087 = vmatpush1.msra.mxu0 0.0
        %4088 = vmatprep.subr.mxu0 0.0
        %4089 = vmatpush1.msra.mxu0 0.0
        %4090 = vmatprep.subr.mxu0 0.0
        %4091 = vmatpush1.msra.mxu0 0.0
        %4092 = vmatprep.mubr.f32.mxu0 0.0
        %4093 = vmatmul.mubr.f32.gmra.mrb[0].mxu0 %v4000
        %v4094 = vpop.f32.mrb[0].mxu0
        %v4095 = vadd.f32 0.0, %v4094
        %v4096 = vpop.f32.mrb[0].mxu0
        %4097 = vmatprep.mubr.f32.mxu0 0.0
        %4098 = vmatmul.mubr.f32.gmra.mrb[0].mxu0 %v4001
        %v4099 = vpop.f32.mrb[0].mxu0
        %v4100 = vadd.f32 0.0, %v4099
        %v4101 = vpop.f32.mrb[0].mxu0
        %4102 = vmatprep.mubr.f32.mxu0 0.0
        %4103 = vmatmul.mubr.f32.gmra.mrb[0].mxu0 %v4002
        %v4104 = vpop.f32.mrb[0].mxu0
        %v4105 = vadd.f32 0.0, %v4104
        %v4106 = vpop.f32.mrb[0].mxu0
        %4107 = vmatprep.mubr.f32.mxu0 0.0
        %4108 = vmatmul.mubr.f32.gmra.mrb[0].mxu0 %v4003
        %v4109 = vpop.f32.mrb[0].mxu0
        %v4110 = vadd.f32 0.0, %v4109
        %v4111 = vpop.f32.mrb[0].mxu0
        %4112 = vmatprep.mubr.f32.mxu0 0.0
        %4113 = vmatmul.mubr.f32.gmra.mrb[0].mxu0 %v4004
        %v4114 = vpop.f32.mrb[0].mxu0
        %v4115 = vadd.f32 0.0, %v4114
        %v4116 = vpop.f32.mrb[0].mxu0
        %4117 = vmatprep.mubr.f32.mxu0 0.0
        %4118 = vmatmul.mubr.f32.gmra.mrb[0].mxu0 %v4005
        %v4119 = vpop.f32.mrb[0].mxu0
        %v4120 = vadd.f32 0.0, %v4119
        %v4121 = vpop.f32.mrb[0].mxu0
        %4122 = vmatprep.mubr.f32.mxu0 0.0
        %4123 = vmatmul.mubr.f32.gmra.mrb[0].mxu0 %v4006
        %v4124 = vpop.f32.mrb[0].mxu0
        %v4125 = vadd.f32 0.0, %v4124
        %v4126 = vpop.f32.mrb[0].mxu0
        %4127 = vmatprep.mubr.f32.mxu0 0.0
        %4128 = vmatmul.mubr.f32.gmra.mrb[0].mxu0 %v4007
        %v4129 = vpop.f32.mrb[0].mxu0
        %v4130 = vadd.f32 0.0, %v4129
        %v4131 = vpop.f32.mrb[0].mxu0
        %4132 = vmatprep.mubr.f32.mxu0 0.0
        %4133 = vmatmul.mubr.f32.gmra.mrb[0].mxu0 %v4008
        %v4134 = vpop.f32.mrb[0].mxu0
        %v4135 = vadd.f32 0.0, %v4134
        %v4136 = vpop.f32.mrb[0].mxu0
        %4137 = vmatprep.mubr.f32.mxu0 0.0
        %4138 = vmatmul.mubr.f32.gmra.mrb[0].mxu0 %v4009
        %v4139 = vpop.f32.mrb[0].mxu0
        %v4140 = vadd.f32 0.0, %v4139
        %v4141 = vpop.f32.mrb[0].mxu0
        %4142 = vmatprep.mubr.f32.mxu0 0.0
        %4143 = vmatmul.mubr.f32.gmra.mrb[0].mxu0 %v4010
        %v4144 = vpop.f32.mrb[0].mxu0
        %v4145 = vadd.f32 0.0, %v4144
        %v4146 = vpop.f32.mrb[0].mxu0
        %4147 = vdwg.mxu0
        %4148 = vmatprep.subr.mxu0 0.0
        %4149 = vmatpush1.msra.mxu0 %v3984
        %4150 = vmatprep.subr.mxu0 0.0
        %4151 = vmatpush1.msra.mxu0 %v3985
        %4152 = vmatprep.subr.mxu0 0.0
        %4153 = vmatpush1.msra.mxu0 %v3986
        %4154 = vmatprep.subr.mxu0 0.0
        %4155 = vmatpush1.msra.mxu0 %v3987
        %4156 = vmatprep.subr.mxu0 0.0
        %4157 = vmatpush1.msra.mxu0 %v3988
        %4158 = vmatprep.subr.mxu0 0.0
        %4159 = vmatpush1.msra.mxu0 %v3989
        %4160 = vmatprep.subr.mxu0 0.0
        %4161 = vmatpush1.msra.mxu0 %v3990
        %4162 = vmatprep.subr.mxu0 0.0
        %4163 = vmatpush1.msra.mxu0 %v3991
        %4164 = vmatprep.subr.mxu0 0.0
        %4165 = vmatpush1.msra.mxu0 %v3992
        %4166 = vmatprep.subr.mxu0 0.0
        %4167 = vmatpush1.msra.mxu0 %v3993
        %4168 = vmatprep.subr.mxu0 0.0
        %4169 = vmatpush1.msra.mxu0 %v3994
        %4170 = vmatprep.subr.mxu0 0.0
        %4171 = vmatpush1.msra.mxu0 %v3995
        %4172 = vmatprep.subr.mxu0 0.0
        %4173 = vmatpush1.msra.mxu0 %v3996
        %4174 = vmatprep.subr.mxu0 0.0
        %4175 = vmatpush1.msra.mxu0 %v3997
        %4176 = vmatprep.subr.mxu0 0.0
        %4177 = vmatpush1.msra.mxu0 %v3998
        %4178 = vmatprep.subr.mxu0 0.0
        %4179 = vmatpush1.msra.mxu0 %v3999
        %4180 = vmatprep.subr.mxu0 0.0
        %4181 = vmatpush1.msra.mxu0 0.0
        %4182 = vmatprep.subr.mxu0 0.0
        %4183 = vmatpush1.msra.mxu0 0.0
        %4184 = vmatprep.subr.mxu0 0.0
        %4185 = vmatpush1.msra.mxu0 0.0
        %4186 = vmatprep.subr.mxu0 0.0
        %4187 = vmatpush1.msra.mxu0 0.0
        %4188 = vmatprep.subr.mxu0 0.0
        %4189 = vmatpush1.msra.mxu0 0.0
        %4190 = vmatprep.subr.mxu0 0.0
        %4191 = vmatpush1.msra.mxu0 0.0
        %4192 = vmatprep.subr.mxu0 0.0
        %4193 = vmatpush1.msra.mxu0 0.0
        %4194 = vmatprep.subr.mxu0 0.0
        %4195 = vmatpush1.msra.mxu0 0.0
        %4196 = vmatprep.subr.mxu0 0.0
        %4197 = vmatpush1.msra.mxu0 0.0
        %4198 = vmatprep.subr.mxu0 0.0
        %4199 = vmatpush1.msra.mxu0 0.0
        %4200 = vmatprep.subr.mxu0 0.0
        %4201 = vmatpush1.msra.mxu0 0.0
        %4202 = vmatprep.subr.mxu0 0.0
        %4203 = vmatpush1.msra.mxu0 0.0
        %4204 = vmatprep.subr.mxu0 0.0
        %4205 = vmatpush1.msra.mxu0 0.0
        %4206 = vmatprep.subr.mxu0 0.0
        %4207 = vmatpush1.msra.mxu0 0.0
        %4208 = vmatprep.subr.mxu0 0.0
        %4209 = vmatpush1.msra.mxu0 0.0
        %4210 = vmatprep.subr.mxu0 0.0
        %4211 = vmatpush1.msra.mxu0 0.0
        %4212 = vmatprep.mubr.f32.mxu0 0.0
        %4213 = vmatmul.mubr.f32.gmra.mrb[0].mxu0 %v3972
        %v4214 = vpop.f32.mrb[0].mxu0
        %v4215 = vadd.f32 %v4095, %v4214
        %v4216 = vpop.f32.mrb[0].mxu0
        %4217 = vmatprep.mubr.f32.mxu0 0.0
        %4218 = vmatmul.mubr.f32.gmra.mrb[0].mxu0 %v3973
        %v4219 = vpop.f32.mrb[0].mxu0
        %v4220 = vadd.f32 %v4100, %v4219
        %v4221 = vpop.f32.mrb[0].mxu0
        %4222 = vmatprep.mubr.f32.mxu0 0.0
        %4223 = vmatmul.mubr.f32.gmra.mrb[0].mxu0 %v3974
        %v4224 = vpop.f32.mrb[0].mxu0
        %v4225 = vadd.f32 %v4105, %v4224
        %v4226 = vpop.f32.mrb[0].mxu0
        %4227 = vmatprep.mubr.f32.mxu0 0.0
        %4228 = vmatmul.mubr.f32.gmra.mrb[0].mxu0 %v3975
        %v4229 = vpop.f32.mrb[0].mxu0
        %v4230 = vadd.f32 %v4110, %v4229
        %v4231 = vpop.f32.mrb[0].mxu0
        %4232 = vmatprep.mubr.f32.mxu0 0.0
        %4233 = vmatmul.mubr.f32.gmra.mrb[0].mxu0 %v3976
        %v4234 = vpop.f32.mrb[0].mxu0
        %v4235 = vadd.f32 %v4115, %v4234
        %v4236 = vpop.f32.mrb[0].mxu0
        %4237 = vmatprep.mubr.f32.mxu0 0.0
        %4238 = vmatmul.mubr.f32.gmra.mrb[0].mxu0 %v3977
        %v4239 = vpop.f32.mrb[0].mxu0
        %v4240 = vadd.f32 %v4120, %v4239
        %v4241 = vpop.f32.mrb[0].mxu0
        %4242 = vmatprep.mubr.f32.mxu0 0.0
        %4243 = vmatmul.mubr.f32.gmra.mrb[0].mxu0 %v3978
        %v4244 = vpop.f32.mrb[0].mxu0
        %v4245 = vadd.f32 %v4125, %v4244
        %v4246 = vpop.f32.mrb[0].mxu0
        %4247 = vmatprep.mubr.f32.mxu0 0.0
        %4248 = vmatmul.mubr.f32.gmra.mrb[0].mxu0 %v3979
        %v4249 = vpop.f32.mrb[0].mxu0
        %v4250 = vadd.f32 %v4130, %v4249
        %v4251 = vpop.f32.mrb[0].mxu0
        %4252 = vmatprep.mubr.f32.mxu0 0.0
        %4253 = vmatmul.mubr.f32.gmra.mrb[0].mxu0 %v3980
        %v4254 = vpop.f32.mrb[0].mxu0
        %v4255 = vadd.f32 %v4135, %v4254
        %v4256 = vpop.f32.mrb[0].mxu0
        %4257 = vmatprep.mubr.f32.mxu0 0.0
        %4258 = vmatmul.mubr.f32.gmra.mrb[0].mxu0 %v3981
        %v4259 = vpop.f32.mrb[0].mxu0
        %v4260 = vadd.f32 %v4140, %v4259
        %v4261 = vpop.f32.mrb[0].mxu0
        %4262 = vmatprep.mubr.f32.mxu0 0.0
        %4263 = vmatmul.mubr.f32.gmra.mrb[0].mxu0 %v3982
        %v4264 = vpop.f32.mrb[0].mxu0
        %v4265 = vadd.f32 %v4145, %v4264
        %v4266 = vpop.f32.mrb[0].mxu0
        %4267 = vdwg.mxu0
        %v4268 = vadd.f32 %v4215, %v3771
        %v4269 = vadd.f32 %v4220, %v3771
        %v4270 = vadd.f32 %v4225, %v3771
        %v4271 = vadd.f32 %v4230, %v3771
        %v4272 = vadd.f32 %v4235, %v3771
        %v4273 = vadd.f32 %v4240, %v3771
        %v4274 = vadd.f32 %v4245, %v3771
        %v4275 = vadd.f32 %v4250, %v3771
        %v4276 = vadd.f32 %v4255, %v3771
        %v4277 = vadd.f32 %v4260, %v3771
        %v4278 = vadd.f32 %v4265, %v3771
        %v4279 = vsub.f32 0.0, %v4268
        %v4280 = vsub.f32 0.0, %v4269
        %v4281 = vsub.f32 0.0, %v4270
        %v4282 = vsub.f32 0.0, %v4271
        %v4283 = vsub.f32 0.0, %v4272
        %v4284 = vsub.f32 0.0, %v4273
        %v4285 = vsub.f32 0.0, %v4274
        %v4286 = vsub.f32 0.0, %v4275
        %v4287 = vsub.f32 0.0, %v4276
        %v4288 = vsub.f32 0.0, %v4277
        %v4289 = vsub.f32 0.0, %v4278
        %v4290 = vmul.f32 %v4279, 1.442695
        %v4291 = vpow.pop %v4290
        %v4292 = vmul.f32 %v4280, 1.442695
        %v4293 = vpow.pop %v4292
        %v4294 = vmul.f32 %v4281, 1.442695
        %v4295 = vpow.pop %v4294
        %v4296 = vmul.f32 %v4282, 1.442695
        %v4297 = vpow.pop %v4296
        %v4298 = vmul.f32 %v4283, 1.442695
        %v4299 = vpow.pop %v4298
        %v4300 = vmul.f32 %v4284, 1.442695
        %v4301 = vpow.pop %v4300
        %v4302 = vmul.f32 %v4285, 1.442695
        %v4303 = vpow.pop %v4302
        %v4304 = vmul.f32 %v4286, 1.442695
        %v4305 = vpow.pop %v4304
        %v4306 = vmul.f32 %v4287, 1.442695
        %v4307 = vpow.pop %v4306
        %v4308 = vmul.f32 %v4288, 1.442695
        %v4309 = vpow.pop %v4308
        %v4310 = vmul.f32 %v4289, 1.442695
        %v4311 = vpow.pop %v4310
        %v4312 = vadd.f32 %v4291, 1.0
        %v4313 = vadd.f32 %v4293, 1.0
        %v4314 = vadd.f32 %v4295, 1.0
        %v4315 = vadd.f32 %v4297, 1.0
        %v4316 = vadd.f32 %v4299, 1.0
        %v4317 = vadd.f32 %v4301, 1.0
        %v4318 = vadd.f32 %v4303, 1.0
        %v4319 = vadd.f32 %v4305, 1.0
        %v4320 = vadd.f32 %v4307, 1.0
        %v4321 = vadd.f32 %v4309, 1.0
        %v4322 = vadd.f32 %v4311, 1.0
        %v4323 = vrcp.pop %v4312
        %v4324 = vmul.f32 1.0, %v4323
        %v4325 = vrcp.pop %v4313
        %v4326 = vmul.f32 1.0, %v4325
        %v4327 = vrcp.pop %v4314
        %v4328 = vmul.f32 1.0, %v4327
        %v4329 = vrcp.pop %v4315
        %v4330 = vmul.f32 1.0, %v4329
        %v4331 = vrcp.pop %v4316
        %v4332 = vmul.f32 1.0, %v4331
        %v4333 = vrcp.pop %v4317
        %v4334 = vmul.f32 1.0, %v4333
        %v4335 = vrcp.pop %v4318
        %v4336 = vmul.f32 1.0, %v4335
        %v4337 = vrcp.pop %v4319
        %v4338 = vmul.f32 1.0, %v4337
        %v4339 = vrcp.pop %v4320
        %v4340 = vmul.f32 1.0, %v4339
        %v4341 = vrcp.pop %v4321
        %v4342 = vmul.f32 1.0, %v4341
        %v4343 = vrcp.pop %v4322
        %v4344 = vmul.f32 1.0, %v4343
        %s4345 = scalar_lea.vmem %s362, 88
        %4346 = vst.msk [vmem:[%s4345] sm:$0xff] %vm3959, %v4324
        %4347 = vst.msk [vmem:[%s4345 + $0x8] sm:$0xff] %vm3959, %v4326
        %4348 = vst.msk [vmem:[%s4345 + $0x10] sm:$0xff] %vm3959, %v4328
        %4349 = vst.msk [vmem:[%s4345 + $0x18] sm:$0xff] %vm3959, %v4330
        %4350 = vst.msk [vmem:[%s4345 + $0x20] sm:$0xff] %vm3959, %v4332
        %4351 = vst.msk [vmem:[%s4345 + $0x28] sm:$0xff] %vm3959, %v4334
        %4352 = vst.msk [vmem:[%s4345 + $0x30] sm:$0xff] %vm3959, %v4336
        %4353 = vst.msk [vmem:[%s4345 + $0x38] sm:$0xff] %vm3959, %v4338
        %4354 = vst.msk [vmem:[%s4345 + $0x40] sm:$0xff] %vm3959, %v4340
        %4355 = vst.msk [vmem:[%s4345 + $0x48] sm:$0xff] %vm3959, %v4342
        %4356 = vst.msk [vmem:[%s4345 + $0x50] sm:$0x1] %vm3970, %v4344
        %v4357 = vld [vmem:[#allocation5] sm:$0xff]
        %v4358 = vld [vmem:[#allocation5 + $0x8] sm:$0xff]
        %v4359 = vld [vmem:[#allocation5 + $0x10] sm:$0xff]
        %v4360 = vld [vmem:[#allocation5 + $0x18] sm:$0xff]
        %v4361 = vld [vmem:[#allocation5 + $0x20] sm:$0xff]
        %v4362 = vld [vmem:[#allocation5 + $0x28] sm:$0xff]
        %v4363 = vld [vmem:[#allocation5 + $0x30] sm:$0xff]
        %v4364 = vld [vmem:[#allocation5 + $0x38] sm:$0xff]
        %v4365 = vld [vmem:[#allocation5 + $0x40] sm:$0xff]
        %v4366 = vld [vmem:[#allocation5 + $0x48] sm:$0xff]
        %v4367 = vld [vmem:[#allocation5 + $0x50] sm:$0x1]
        %s4368 = scalar_lea.vmem [#allocation8], 896
        %v4369 = vld [vmem:[%s4368] sm:$0xff]
        %v4370 = vld [vmem:[%s4368 + $0x8] sm:$0xff]
        %v4371 = vld [vmem:[%s4368 + $0x10] sm:$0xff]
        %v4372 = vld [vmem:[%s4368 + $0x18] sm:$0xff]
        %v4373 = vld [vmem:[%s4368 + $0x20] sm:$0xff]
        %v4374 = vld [vmem:[%s4368 + $0x28] sm:$0xff]
        %v4375 = vld [vmem:[%s4368 + $0x30] sm:$0xff]
        %v4376 = vld [vmem:[%s4368 + $0x38] sm:$0xff]
        %v4377 = vld [vmem:[%s4368 + $0x40] sm:$0xff]
        %v4378 = vld [vmem:[%s4368 + $0x48] sm:$0xff]
        %v4379 = vld [vmem:[%s4368 + $0x50] sm:$0xff]
        %v4380 = vld [vmem:[%s4368 + $0x58] sm:$0xff]
        %v4381 = vld [vmem:[%s4368 + $0x60] sm:$0xff]
        %v4382 = vld [vmem:[%s4368 + $0x68] sm:$0xff]
        %v4383 = vld [vmem:[%s4368 + $0x70] sm:$0xff]
        %v4384 = vld [vmem:[%s4368 + $0x78] sm:$0xff]
        %v4385 = vld [vmem:[#allocation5 + $0x9] sm:$0xff]
        %v4386 = vld [vmem:[#allocation5 + $0x11] sm:$0xff]
        %v4387 = vld [vmem:[#allocation5 + $0x19] sm:$0xff]
        %v4388 = vld [vmem:[#allocation5 + $0x21] sm:$0xff]
        %v4389 = vld [vmem:[#allocation5 + $0x29] sm:$0xff]
        %v4390 = vld [vmem:[#allocation5 + $0x31] sm:$0xff]
        %v4391 = vld [vmem:[#allocation5 + $0x39] sm:$0xff]
        %v4392 = vld [vmem:[#allocation5 + $0x41] sm:$0xff]
        %v4393 = vld [vmem:[#allocation5 + $0x49] sm:$0xff]
        %v4394 = vld [vmem:[#allocation5 + $0x51] sm:$0xff]
        %v4395 = vld [vmem:[#allocation5 + $0x59] sm:$0x1]
        %s4396 = scalar_lea.vmem [#allocation8], 128
        %v4397 = vld [vmem:[%s4396] sm:$0xff]
        %v4398 = vld [vmem:[%s4396 + $0x8] sm:$0xff]
        %v4399 = vld [vmem:[%s4396 + $0x10] sm:$0xff]
        %v4400 = vld [vmem:[%s4396 + $0x18] sm:$0xff]
        %v4401 = vld [vmem:[%s4396 + $0x20] sm:$0xff]
        %v4402 = vld [vmem:[%s4396 + $0x28] sm:$0xff]
        %v4403 = vld [vmem:[%s4396 + $0x30] sm:$0xff]
        %v4404 = vld [vmem:[%s4396 + $0x38] sm:$0xff]
        %v4405 = vld [vmem:[%s4396 + $0x40] sm:$0xff]
        %v4406 = vld [vmem:[%s4396 + $0x48] sm:$0xff]
        %v4407 = vld [vmem:[%s4396 + $0x50] sm:$0xff]
        %v4408 = vld [vmem:[%s4396 + $0x58] sm:$0xff]
        %v4409 = vld [vmem:[%s4396 + $0x60] sm:$0xff]
        %v4410 = vld [vmem:[%s4396 + $0x68] sm:$0xff]
        %v4411 = vld [vmem:[%s4396 + $0x70] sm:$0xff]
        %v4412 = vld [vmem:[%s4396 + $0x78] sm:$0xff]
        %4413 = vmatprep.subr.mxu0 0.0
        %4414 = vmatpush1.msra.mxu0 %v4397
        %4415 = vmatprep.subr.mxu0 0.0
        %4416 = vmatpush1.msra.mxu0 %v4398
        %4417 = vmatprep.subr.mxu0 0.0
        %4418 = vmatpush1.msra.mxu0 %v4399
        %4419 = vmatprep.subr.mxu0 0.0
        %4420 = vmatpush1.msra.mxu0 %v4400
        %4421 = vmatprep.subr.mxu0 0.0
        %4422 = vmatpush1.msra.mxu0 %v4401
        %4423 = vmatprep.subr.mxu0 0.0
        %4424 = vmatpush1.msra.mxu0 %v4402
        %4425 = vmatprep.subr.mxu0 0.0
        %4426 = vmatpush1.msra.mxu0 %v4403
        %4427 = vmatprep.subr.mxu0 0.0
        %4428 = vmatpush1.msra.mxu0 %v4404
        %4429 = vmatprep.subr.mxu0 0.0
        %4430 = vmatpush1.msra.mxu0 %v4405
        %4431 = vmatprep.subr.mxu0 0.0
        %4432 = vmatpush1.msra.mxu0 %v4406
        %4433 = vmatprep.subr.mxu0 0.0
        %4434 = vmatpush1.msra.mxu0 %v4407
        %4435 = vmatprep.subr.mxu0 0.0
        %4436 = vmatpush1.msra.mxu0 %v4408
        %4437 = vmatprep.subr.mxu0 0.0
        %4438 = vmatpush1.msra.mxu0 %v4409
        %4439 = vmatprep.subr.mxu0 0.0
        %4440 = vmatpush1.msra.mxu0 %v4410
        %4441 = vmatprep.subr.mxu0 0.0
        %4442 = vmatpush1.msra.mxu0 %v4411
        %4443 = vmatprep.subr.mxu0 0.0
        %4444 = vmatpush1.msra.mxu0 %v4412
        %4445 = vmatprep.subr.mxu0 0.0
        %4446 = vmatpush1.msra.mxu0 0.0
        %4447 = vmatprep.subr.mxu0 0.0
        %4448 = vmatpush1.msra.mxu0 0.0
        %4449 = vmatprep.subr.mxu0 0.0
        %4450 = vmatpush1.msra.mxu0 0.0
        %4451 = vmatprep.subr.mxu0 0.0
        %4452 = vmatpush1.msra.mxu0 0.0
        %4453 = vmatprep.subr.mxu0 0.0
        %4454 = vmatpush1.msra.mxu0 0.0
        %4455 = vmatprep.subr.mxu0 0.0
        %4456 = vmatpush1.msra.mxu0 0.0
        %4457 = vmatprep.subr.mxu0 0.0
        %4458 = vmatpush1.msra.mxu0 0.0
        %4459 = vmatprep.subr.mxu0 0.0
        %4460 = vmatpush1.msra.mxu0 0.0
        %4461 = vmatprep.subr.mxu0 0.0
        %4462 = vmatpush1.msra.mxu0 0.0
        %4463 = vmatprep.subr.mxu0 0.0
        %4464 = vmatpush1.msra.mxu0 0.0
        %4465 = vmatprep.subr.mxu0 0.0
        %4466 = vmatpush1.msra.mxu0 0.0
        %4467 = vmatprep.subr.mxu0 0.0
        %4468 = vmatpush1.msra.mxu0 0.0
        %4469 = vmatprep.subr.mxu0 0.0
        %4470 = vmatpush1.msra.mxu0 0.0
        %4471 = vmatprep.subr.mxu0 0.0
        %4472 = vmatpush1.msra.mxu0 0.0
        %4473 = vmatprep.subr.mxu0 0.0
        %4474 = vmatpush1.msra.mxu0 0.0
        %4475 = vmatprep.subr.mxu0 0.0
        %4476 = vmatpush1.msra.mxu0 0.0
        %4477 = vmatprep.mubr.f32.mxu0 0.0
        %4478 = vmatmul.mubr.f32.gmra.mrb[0].mxu0 %v4385
        %v4479 = vpop.f32.mrb[0].mxu0
        %v4480 = vadd.f32 0.0, %v4479
        %v4481 = vpop.f32.mrb[0].mxu0
        %4482 = vmatprep.mubr.f32.mxu0 0.0
        %4483 = vmatmul.mubr.f32.gmra.mrb[0].mxu0 %v4386
        %v4484 = vpop.f32.mrb[0].mxu0
        %v4485 = vadd.f32 0.0, %v4484
        %v4486 = vpop.f32.mrb[0].mxu0
        %4487 = vmatprep.mubr.f32.mxu0 0.0
        %4488 = vmatmul.mubr.f32.gmra.mrb[0].mxu0 %v4387
        %v4489 = vpop.f32.mrb[0].mxu0
        %v4490 = vadd.f32 0.0, %v4489
        %v4491 = vpop.f32.mrb[0].mxu0
        %4492 = vmatprep.mubr.f32.mxu0 0.0
        %4493 = vmatmul.mubr.f32.gmra.mrb[0].mxu0 %v4388
        %v4494 = vpop.f32.mrb[0].mxu0
        %v4495 = vadd.f32 0.0, %v4494
        %v4496 = vpop.f32.mrb[0].mxu0
        %4497 = vmatprep.mubr.f32.mxu0 0.0
        %4498 = vmatmul.mubr.f32.gmra.mrb[0].mxu0 %v4389
        %v4499 = vpop.f32.mrb[0].mxu0
        %v4500 = vadd.f32 0.0, %v4499
        %v4501 = vpop.f32.mrb[0].mxu0
        %4502 = vmatprep.mubr.f32.mxu0 0.0
        %4503 = vmatmul.mubr.f32.gmra.mrb[0].mxu0 %v4390
        %v4504 = vpop.f32.mrb[0].mxu0
        %v4505 = vadd.f32 0.0, %v4504
        %v4506 = vpop.f32.mrb[0].mxu0
        %4507 = vmatprep.mubr.f32.mxu0 0.0
        %4508 = vmatmul.mubr.f32.gmra.mrb[0].mxu0 %v4391
        %v4509 = vpop.f32.mrb[0].mxu0
        %v4510 = vadd.f32 0.0, %v4509
        %v4511 = vpop.f32.mrb[0].mxu0
        %4512 = vmatprep.mubr.f32.mxu0 0.0
        %4513 = vmatmul.mubr.f32.gmra.mrb[0].mxu0 %v4392
        %v4514 = vpop.f32.mrb[0].mxu0
        %v4515 = vadd.f32 0.0, %v4514
        %v4516 = vpop.f32.mrb[0].mxu0
        %4517 = vmatprep.mubr.f32.mxu0 0.0
        %4518 = vmatmul.mubr.f32.gmra.mrb[0].mxu0 %v4393
        %v4519 = vpop.f32.mrb[0].mxu0
        %v4520 = vadd.f32 0.0, %v4519
        %v4521 = vpop.f32.mrb[0].mxu0
        %4522 = vmatprep.mubr.f32.mxu0 0.0
        %4523 = vmatmul.mubr.f32.gmra.mrb[0].mxu0 %v4394
        %v4524 = vpop.f32.mrb[0].mxu0
        %v4525 = vadd.f32 0.0, %v4524
        %v4526 = vpop.f32.mrb[0].mxu0
        %4527 = vmatprep.mubr.f32.mxu0 0.0
        %4528 = vmatmul.mubr.f32.gmra.mrb[0].mxu0 %v4395
        %v4529 = vpop.f32.mrb[0].mxu0
        %v4530 = vadd.f32 0.0, %v4529
        %v4531 = vpop.f32.mrb[0].mxu0
        %4532 = vdwg.mxu0
        %4533 = vmatprep.subr.mxu0 0.0
        %4534 = vmatpush1.msra.mxu0 %v4369
        %4535 = vmatprep.subr.mxu0 0.0
        %4536 = vmatpush1.msra.mxu0 %v4370
        %4537 = vmatprep.subr.mxu0 0.0
        %4538 = vmatpush1.msra.mxu0 %v4371
        %4539 = vmatprep.subr.mxu0 0.0
        %4540 = vmatpush1.msra.mxu0 %v4372
        %4541 = vmatprep.subr.mxu0 0.0
        %4542 = vmatpush1.msra.mxu0 %v4373
        %4543 = vmatprep.subr.mxu0 0.0
        %4544 = vmatpush1.msra.mxu0 %v4374
        %4545 = vmatprep.subr.mxu0 0.0
        %4546 = vmatpush1.msra.mxu0 %v4375
        %4547 = vmatprep.subr.mxu0 0.0
        %4548 = vmatpush1.msra.mxu0 %v4376
        %4549 = vmatprep.subr.mxu0 0.0
        %4550 = vmatpush1.msra.mxu0 %v4377
        %4551 = vmatprep.subr.mxu0 0.0
        %4552 = vmatpush1.msra.mxu0 %v4378
        %4553 = vmatprep.subr.mxu0 0.0
        %4554 = vmatpush1.msra.mxu0 %v4379
        %4555 = vmatprep.subr.mxu0 0.0
        %4556 = vmatpush1.msra.mxu0 %v4380
        %4557 = vmatprep.subr.mxu0 0.0
        %4558 = vmatpush1.msra.mxu0 %v4381
        %4559 = vmatprep.subr.mxu0 0.0
        %4560 = vmatpush1.msra.mxu0 %v4382
        %4561 = vmatprep.subr.mxu0 0.0
        %4562 = vmatpush1.msra.mxu0 %v4383
        %4563 = vmatprep.subr.mxu0 0.0
        %4564 = vmatpush1.msra.mxu0 %v4384
        %4565 = vmatprep.subr.mxu0 0.0
        %4566 = vmatpush1.msra.mxu0 0.0
        %4567 = vmatprep.subr.mxu0 0.0
        %4568 = vmatpush1.msra.mxu0 0.0
        %4569 = vmatprep.subr.mxu0 0.0
        %4570 = vmatpush1.msra.mxu0 0.0
        %4571 = vmatprep.subr.mxu0 0.0
        %4572 = vmatpush1.msra.mxu0 0.0
        %4573 = vmatprep.subr.mxu0 0.0
        %4574 = vmatpush1.msra.mxu0 0.0
        %4575 = vmatprep.subr.mxu0 0.0
        %4576 = vmatpush1.msra.mxu0 0.0
        %4577 = vmatprep.subr.mxu0 0.0
        %4578 = vmatpush1.msra.mxu0 0.0
        %4579 = vmatprep.subr.mxu0 0.0
        %4580 = vmatpush1.msra.mxu0 0.0
        %4581 = vmatprep.subr.mxu0 0.0
        %4582 = vmatpush1.msra.mxu0 0.0
        %4583 = vmatprep.subr.mxu0 0.0
        %4584 = vmatpush1.msra.mxu0 0.0
        %4585 = vmatprep.subr.mxu0 0.0
        %4586 = vmatpush1.msra.mxu0 0.0
        %4587 = vmatprep.subr.mxu0 0.0
        %4588 = vmatpush1.msra.mxu0 0.0
        %4589 = vmatprep.subr.mxu0 0.0
        %4590 = vmatpush1.msra.mxu0 0.0
        %4591 = vmatprep.subr.mxu0 0.0
        %4592 = vmatpush1.msra.mxu0 0.0
        %4593 = vmatprep.subr.mxu0 0.0
        %4594 = vmatpush1.msra.mxu0 0.0
        %4595 = vmatprep.subr.mxu0 0.0
        %4596 = vmatpush1.msra.mxu0 0.0
        %4597 = vmatprep.mubr.f32.mxu0 0.0
        %4598 = vmatmul.mubr.f32.gmra.mrb[0].mxu0 %v4357
        %v4599 = vpop.f32.mrb[0].mxu0
        %v4600 = vadd.f32 %v4480, %v4599
        %v4601 = vpop.f32.mrb[0].mxu0
        %4602 = vmatprep.mubr.f32.mxu0 0.0
        %4603 = vmatmul.mubr.f32.gmra.mrb[0].mxu0 %v4358
        %v4604 = vpop.f32.mrb[0].mxu0
        %v4605 = vadd.f32 %v4485, %v4604
        %v4606 = vpop.f32.mrb[0].mxu0
        %4607 = vmatprep.mubr.f32.mxu0 0.0
        %4608 = vmatmul.mubr.f32.gmra.mrb[0].mxu0 %v4359
        %v4609 = vpop.f32.mrb[0].mxu0
        %v4610 = vadd.f32 %v4490, %v4609
        %v4611 = vpop.f32.mrb[0].mxu0
        %4612 = vmatprep.mubr.f32.mxu0 0.0
        %4613 = vmatmul.mubr.f32.gmra.mrb[0].mxu0 %v4360
        %v4614 = vpop.f32.mrb[0].mxu0
        %v4615 = vadd.f32 %v4495, %v4614
        %v4616 = vpop.f32.mrb[0].mxu0
        %4617 = vmatprep.mubr.f32.mxu0 0.0
        %4618 = vmatmul.mubr.f32.gmra.mrb[0].mxu0 %v4361
        %v4619 = vpop.f32.mrb[0].mxu0
        %v4620 = vadd.f32 %v4500, %v4619
        %v4621 = vpop.f32.mrb[0].mxu0
        %4622 = vmatprep.mubr.f32.mxu0 0.0
        %4623 = vmatmul.mubr.f32.gmra.mrb[0].mxu0 %v4362
        %v4624 = vpop.f32.mrb[0].mxu0
        %v4625 = vadd.f32 %v4505, %v4624
        %v4626 = vpop.f32.mrb[0].mxu0
        %4627 = vmatprep.mubr.f32.mxu0 0.0
        %4628 = vmatmul.mubr.f32.gmra.mrb[0].mxu0 %v4363
        %v4629 = vpop.f32.mrb[0].mxu0
        %v4630 = vadd.f32 %v4510, %v4629
        %v4631 = vpop.f32.mrb[0].mxu0
        %4632 = vmatprep.mubr.f32.mxu0 0.0
        %4633 = vmatmul.mubr.f32.gmra.mrb[0].mxu0 %v4364
        %v4634 = vpop.f32.mrb[0].mxu0
        %v4635 = vadd.f32 %v4515, %v4634
        %v4636 = vpop.f32.mrb[0].mxu0
        %4637 = vmatprep.mubr.f32.mxu0 0.0
        %4638 = vmatmul.mubr.f32.gmra.mrb[0].mxu0 %v4365
        %v4639 = vpop.f32.mrb[0].mxu0
        %v4640 = vadd.f32 %v4520, %v4639
        %v4641 = vpop.f32.mrb[0].mxu0
        %4642 = vmatprep.mubr.f32.mxu0 0.0
        %4643 = vmatmul.mubr.f32.gmra.mrb[0].mxu0 %v4366
        %v4644 = vpop.f32.mrb[0].mxu0
        %v4645 = vadd.f32 %v4525, %v4644
        %v4646 = vpop.f32.mrb[0].mxu0
        %4647 = vmatprep.mubr.f32.mxu0 0.0
        %4648 = vmatmul.mubr.f32.gmra.mrb[0].mxu0 %v4367
        %v4649 = vpop.f32.mrb[0].mxu0
        %v4650 = vadd.f32 %v4530, %v4649
        %v4651 = vpop.f32.mrb[0].mxu0
        %4652 = vdwg.mxu0
        %v4653 = vadd.f32 %v4600, %v3771
        %v4654 = vadd.f32 %v4605, %v3771
        %v4655 = vadd.f32 %v4610, %v3771
        %v4656 = vadd.f32 %v4615, %v3771
        %v4657 = vadd.f32 %v4620, %v3771
        %v4658 = vadd.f32 %v4625, %v3771
        %v4659 = vadd.f32 %v4630, %v3771
        %v4660 = vadd.f32 %v4635, %v3771
        %v4661 = vadd.f32 %v4640, %v3771
        %v4662 = vadd.f32 %v4645, %v3771
        %v4663 = vadd.f32 %v4650, %v3771
        %v4664 = vsub.f32 0.0, %v4653
        %v4665 = vsub.f32 0.0, %v4654
        %v4666 = vsub.f32 0.0, %v4655
        %v4667 = vsub.f32 0.0, %v4656
        %v4668 = vsub.f32 0.0, %v4657
        %v4669 = vsub.f32 0.0, %v4658
        %v4670 = vsub.f32 0.0, %v4659
        %v4671 = vsub.f32 0.0, %v4660
        %v4672 = vsub.f32 0.0, %v4661
        %v4673 = vsub.f32 0.0, %v4662
        %v4674 = vsub.f32 0.0, %v4663
        %v4675 = vmul.f32 %v4664, 1.442695
        %v4676 = vpow.pop %v4675
        %v4677 = vmul.f32 %v4665, 1.442695
        %v4678 = vpow.pop %v4677
        %v4679 = vmul.f32 %v4666, 1.442695
        %v4680 = vpow.pop %v4679
        %v4681 = vmul.f32 %v4667, 1.442695
        %v4682 = vpow.pop %v4681
        %v4683 = vmul.f32 %v4668, 1.442695
        %v4684 = vpow.pop %v4683
        %v4685 = vmul.f32 %v4669, 1.442695
        %v4686 = vpow.pop %v4685
        %v4687 = vmul.f32 %v4670, 1.442695
        %v4688 = vpow.pop %v4687
        %v4689 = vmul.f32 %v4671, 1.442695
        %v4690 = vpow.pop %v4689
        %v4691 = vmul.f32 %v4672, 1.442695
        %v4692 = vpow.pop %v4691
        %v4693 = vmul.f32 %v4673, 1.442695
        %v4694 = vpow.pop %v4693
        %v4695 = vmul.f32 %v4674, 1.442695
        %v4696 = vpow.pop %v4695
        %v4697 = vadd.f32 %v4676, 1.0
        %v4698 = vadd.f32 %v4678, 1.0
        %v4699 = vadd.f32 %v4680, 1.0
        %v4700 = vadd.f32 %v4682, 1.0
        %v4701 = vadd.f32 %v4684, 1.0
        %v4702 = vadd.f32 %v4686, 1.0
        %v4703 = vadd.f32 %v4688, 1.0
        %v4704 = vadd.f32 %v4690, 1.0
        %v4705 = vadd.f32 %v4692, 1.0
        %v4706 = vadd.f32 %v4694, 1.0
        %v4707 = vadd.f32 %v4696, 1.0
        %v4708 = vrcp.pop %v4697
        %v4709 = vmul.f32 1.0, %v4708
        %v4710 = vrcp.pop %v4698
        %v4711 = vmul.f32 1.0, %v4710
        %v4712 = vrcp.pop %v4699
        %v4713 = vmul.f32 1.0, %v4712
        %v4714 = vrcp.pop %v4700
        %v4715 = vmul.f32 1.0, %v4714
        %v4716 = vrcp.pop %v4701
        %v4717 = vmul.f32 1.0, %v4716
        %v4718 = vrcp.pop %v4702
        %v4719 = vmul.f32 1.0, %v4718
        %v4720 = vrcp.pop %v4703
        %v4721 = vmul.f32 1.0, %v4720
        %v4722 = vrcp.pop %v4704
        %v4723 = vmul.f32 1.0, %v4722
        %v4724 = vrcp.pop %v4705
        %v4725 = vmul.f32 1.0, %v4724
        %v4726 = vrcp.pop %v4706
        %v4727 = vmul.f32 1.0, %v4726
        %v4728 = vrcp.pop %v4707
        %v4729 = vmul.f32 1.0, %v4728
        %s4730 = scalar_lea.vmem %s362, 176
        %4731 = vst.msk [vmem:[%s4730] sm:$0xff] %vm3959, %v4709
        %4732 = vst.msk [vmem:[%s4730 + $0x8] sm:$0xff] %vm3959, %v4711
        %4733 = vst.msk [vmem:[%s4730 + $0x10] sm:$0xff] %vm3959, %v4713
        %4734 = vst.msk [vmem:[%s4730 + $0x18] sm:$0xff] %vm3959, %v4715
        %4735 = vst.msk [vmem:[%s4730 + $0x20] sm:$0xff] %vm3959, %v4717
        %4736 = vst.msk [vmem:[%s4730 + $0x28] sm:$0xff] %vm3959, %v4719
        %4737 = vst.msk [vmem:[%s4730 + $0x30] sm:$0xff] %vm3959, %v4721
        %4738 = vst.msk [vmem:[%s4730 + $0x38] sm:$0xff] %vm3959, %v4723
        %4739 = vst.msk [vmem:[%s4730 + $0x40] sm:$0xff] %vm3959, %v4725
        %4740 = vst.msk [vmem:[%s4730 + $0x48] sm:$0xff] %vm3959, %v4727
        %4741 = vst.msk [vmem:[%s4730 + $0x50] sm:$0x1] %vm3970, %v4729
        %v4742 = vld [vmem:[#allocation5] sm:$0xff]
        %v4743 = vld [vmem:[#allocation5 + $0x8] sm:$0xff]
        %v4744 = vld [vmem:[#allocation5 + $0x10] sm:$0xff]
        %v4745 = vld [vmem:[#allocation5 + $0x18] sm:$0xff]
        %v4746 = vld [vmem:[#allocation5 + $0x20] sm:$0xff]
        %v4747 = vld [vmem:[#allocation5 + $0x28] sm:$0xff]
        %v4748 = vld [vmem:[#allocation5 + $0x30] sm:$0xff]
        %v4749 = vld [vmem:[#allocation5 + $0x38] sm:$0xff]
        %v4750 = vld [vmem:[#allocation5 + $0x40] sm:$0xff]
        %v4751 = vld [vmem:[#allocation5 + $0x48] sm:$0xff]
        %v4752 = vld [vmem:[#allocation5 + $0x50] sm:$0x1]
        %s4753 = scalar_lea.vmem [#allocation8], 1024
        %v4754 = vld [vmem:[%s4753] sm:$0xff]
        %v4755 = vld [vmem:[%s4753 + $0x8] sm:$0xff]
        %v4756 = vld [vmem:[%s4753 + $0x10] sm:$0xff]
        %v4757 = vld [vmem:[%s4753 + $0x18] sm:$0xff]
        %v4758 = vld [vmem:[%s4753 + $0x20] sm:$0xff]
        %v4759 = vld [vmem:[%s4753 + $0x28] sm:$0xff]
        %v4760 = vld [vmem:[%s4753 + $0x30] sm:$0xff]
        %v4761 = vld [vmem:[%s4753 + $0x38] sm:$0xff]
        %v4762 = vld [vmem:[%s4753 + $0x40] sm:$0xff]
        %v4763 = vld [vmem:[%s4753 + $0x48] sm:$0xff]
        %v4764 = vld [vmem:[%s4753 + $0x50] sm:$0xff]
        %v4765 = vld [vmem:[%s4753 + $0x58] sm:$0xff]
        %v4766 = vld [vmem:[%s4753 + $0x60] sm:$0xff]
        %v4767 = vld [vmem:[%s4753 + $0x68] sm:$0xff]
        %v4768 = vld [vmem:[%s4753 + $0x70] sm:$0xff]
        %v4769 = vld [vmem:[%s4753 + $0x78] sm:$0xff]
        %v4770 = vld [vmem:[#allocation5 + $0x1] sm:$0xff]
        %v4771 = vld [vmem:[#allocation5 + $0x9] sm:$0xff]
        %v4772 = vld [vmem:[#allocation5 + $0x11] sm:$0xff]
        %v4773 = vld [vmem:[#allocation5 + $0x19] sm:$0xff]
        %v4774 = vld [vmem:[#allocation5 + $0x21] sm:$0xff]
        %v4775 = vld [vmem:[#allocation5 + $0x29] sm:$0xff]
        %v4776 = vld [vmem:[#allocation5 + $0x31] sm:$0xff]
        %v4777 = vld [vmem:[#allocation5 + $0x39] sm:$0xff]
        %v4778 = vld [vmem:[#allocation5 + $0x41] sm:$0xff]
        %v4779 = vld [vmem:[#allocation5 + $0x49] sm:$0xff]
        %v4780 = vld [vmem:[#allocation5 + $0x51] sm:$0x1]
        %s4781 = scalar_lea.vmem [#allocation8], 768
        %v4782 = vld [vmem:[%s4781] sm:$0xff]
        %v4783 = vld [vmem:[%s4781 + $0x8] sm:$0xff]
        %v4784 = vld [vmem:[%s4781 + $0x10] sm:$0xff]
        %v4785 = vld [vmem:[%s4781 + $0x18] sm:$0xff]
        %v4786 = vld [vmem:[%s4781 + $0x20] sm:$0xff]
        %v4787 = vld [vmem:[%s4781 + $0x28] sm:$0xff]
        %v4788 = vld [vmem:[%s4781 + $0x30] sm:$0xff]
        %v4789 = vld [vmem:[%s4781 + $0x38] sm:$0xff]
        %v4790 = vld [vmem:[%s4781 + $0x40] sm:$0xff]
        %v4791 = vld [vmem:[%s4781 + $0x48] sm:$0xff]
        %v4792 = vld [vmem:[%s4781 + $0x50] sm:$0xff]
        %v4793 = vld [vmem:[%s4781 + $0x58] sm:$0xff]
        %v4794 = vld [vmem:[%s4781 + $0x60] sm:$0xff]
        %v4795 = vld [vmem:[%s4781 + $0x68] sm:$0xff]
        %v4796 = vld [vmem:[%s4781 + $0x70] sm:$0xff]
        %v4797 = vld [vmem:[%s4781 + $0x78] sm:$0xff]
        %4798 = vmatprep.subr.mxu0 0.0
        %4799 = vmatpush1.msra.mxu0 %v4782
        %4800 = vmatprep.subr.mxu0 0.0
        %4801 = vmatpush1.msra.mxu0 %v4783
        %4802 = vmatprep.subr.mxu0 0.0
        %4803 = vmatpush1.msra.mxu0 %v4784
        %4804 = vmatprep.subr.mxu0 0.0
        %4805 = vmatpush1.msra.mxu0 %v4785
        %4806 = vmatprep.subr.mxu0 0.0
        %4807 = vmatpush1.msra.mxu0 %v4786
        %4808 = vmatprep.subr.mxu0 0.0
        %4809 = vmatpush1.msra.mxu0 %v4787
        %4810 = vmatprep.subr.mxu0 0.0
        %4811 = vmatpush1.msra.mxu0 %v4788
        %4812 = vmatprep.subr.mxu0 0.0
        %4813 = vmatpush1.msra.mxu0 %v4789
        %4814 = vmatprep.subr.mxu0 0.0
        %4815 = vmatpush1.msra.mxu0 %v4790
        %4816 = vmatprep.subr.mxu0 0.0
        %4817 = vmatpush1.msra.mxu0 %v4791
        %4818 = vmatprep.subr.mxu0 0.0
        %4819 = vmatpush1.msra.mxu0 %v4792
        %4820 = vmatprep.subr.mxu0 0.0
        %4821 = vmatpush1.msra.mxu0 %v4793
        %4822 = vmatprep.subr.mxu0 0.0
        %4823 = vmatpush1.msra.mxu0 %v4794
        %4824 = vmatprep.subr.mxu0 0.0
        %4825 = vmatpush1.msra.mxu0 %v4795
        %4826 = vmatprep.subr.mxu0 0.0
        %4827 = vmatpush1.msra.mxu0 %v4796
        %4828 = vmatprep.subr.mxu0 0.0
        %4829 = vmatpush1.msra.mxu0 %v4797
        %4830 = vmatprep.subr.mxu0 0.0
        %4831 = vmatpush1.msra.mxu0 0.0
        %4832 = vmatprep.subr.mxu0 0.0
        %4833 = vmatpush1.msra.mxu0 0.0
        %4834 = vmatprep.subr.mxu0 0.0
        %4835 = vmatpush1.msra.mxu0 0.0
        %4836 = vmatprep.subr.mxu0 0.0
        %4837 = vmatpush1.msra.mxu0 0.0
        %4838 = vmatprep.subr.mxu0 0.0
        %4839 = vmatpush1.msra.mxu0 0.0
        %4840 = vmatprep.subr.mxu0 0.0
        %4841 = vmatpush1.msra.mxu0 0.0
        %4842 = vmatprep.subr.mxu0 0.0
        %4843 = vmatpush1.msra.mxu0 0.0
        %4844 = vmatprep.subr.mxu0 0.0
        %4845 = vmatpush1.msra.mxu0 0.0
        %4846 = vmatprep.subr.mxu0 0.0
        %4847 = vmatpush1.msra.mxu0 0.0
        %4848 = vmatprep.subr.mxu0 0.0
        %4849 = vmatpush1.msra.mxu0 0.0
        %4850 = vmatprep.subr.mxu0 0.0
        %4851 = vmatpush1.msra.mxu0 0.0
        %4852 = vmatprep.subr.mxu0 0.0
        %4853 = vmatpush1.msra.mxu0 0.0
        %4854 = vmatprep.subr.mxu0 0.0
        %4855 = vmatpush1.msra.mxu0 0.0
        %4856 = vmatprep.subr.mxu0 0.0
        %4857 = vmatpush1.msra.mxu0 0.0
        %4858 = vmatprep.subr.mxu0 0.0
        %4859 = vmatpush1.msra.mxu0 0.0
        %4860 = vmatprep.subr.mxu0 0.0
        %4861 = vmatpush1.msra.mxu0 0.0
        %4862 = vmatprep.mubr.f32.mxu0 0.0
        %4863 = vmatmul.mubr.f32.gmra.mrb[0].mxu0 %v4770
        %v4864 = vpop.f32.mrb[0].mxu0
        %v4865 = vadd.f32 0.0, %v4864
        %v4866 = vpop.f32.mrb[0].mxu0
        %4867 = vmatprep.mubr.f32.mxu0 0.0
        %4868 = vmatmul.mubr.f32.gmra.mrb[0].mxu0 %v4771
        %v4869 = vpop.f32.mrb[0].mxu0
        %v4870 = vadd.f32 0.0, %v4869
        %v4871 = vpop.f32.mrb[0].mxu0
        %4872 = vmatprep.mubr.f32.mxu0 0.0
        %4873 = vmatmul.mubr.f32.gmra.mrb[0].mxu0 %v4772
        %v4874 = vpop.f32.mrb[0].mxu0
        %v4875 = vadd.f32 0.0, %v4874
        %v4876 = vpop.f32.mrb[0].mxu0
        %4877 = vmatprep.mubr.f32.mxu0 0.0
        %4878 = vmatmul.mubr.f32.gmra.mrb[0].mxu0 %v4773
        %v4879 = vpop.f32.mrb[0].mxu0
        %v4880 = vadd.f32 0.0, %v4879
        %v4881 = vpop.f32.mrb[0].mxu0
        %4882 = vmatprep.mubr.f32.mxu0 0.0
        %4883 = vmatmul.mubr.f32.gmra.mrb[0].mxu0 %v4774
        %v4884 = vpop.f32.mrb[0].mxu0
        %v4885 = vadd.f32 0.0, %v4884
        %v4886 = vpop.f32.mrb[0].mxu0
        %4887 = vmatprep.mubr.f32.mxu0 0.0
        %4888 = vmatmul.mubr.f32.gmra.mrb[0].mxu0 %v4775
        %v4889 = vpop.f32.mrb[0].mxu0
        %v4890 = vadd.f32 0.0, %v4889
        %v4891 = vpop.f32.mrb[0].mxu0
        %4892 = vmatprep.mubr.f32.mxu0 0.0
        %4893 = vmatmul.mubr.f32.gmra.mrb[0].mxu0 %v4776
        %v4894 = vpop.f32.mrb[0].mxu0
        %v4895 = vadd.f32 0.0, %v4894
        %v4896 = vpop.f32.mrb[0].mxu0
        %4897 = vmatprep.mubr.f32.mxu0 0.0
        %4898 = vmatmul.mubr.f32.gmra.mrb[0].mxu0 %v4777
        %v4899 = vpop.f32.mrb[0].mxu0
        %v4900 = vadd.f32 0.0, %v4899
        %v4901 = vpop.f32.mrb[0].mxu0
        %4902 = vmatprep.mubr.f32.mxu0 0.0
        %4903 = vmatmul.mubr.f32.gmra.mrb[0].mxu0 %v4778
        %v4904 = vpop.f32.mrb[0].mxu0
        %v4905 = vadd.f32 0.0, %v4904
        %v4906 = vpop.f32.mrb[0].mxu0
        %4907 = vmatprep.mubr.f32.mxu0 0.0
        %4908 = vmatmul.mubr.f32.gmra.mrb[0].mxu0 %v4779
        %v4909 = vpop.f32.mrb[0].mxu0
        %v4910 = vadd.f32 0.0, %v4909
        %v4911 = vpop.f32.mrb[0].mxu0
        %4912 = vmatprep.mubr.f32.mxu0 0.0
        %4913 = vmatmul.mubr.f32.gmra.mrb[0].mxu0 %v4780
        %v4914 = vpop.f32.mrb[0].mxu0
        %v4915 = vadd.f32 0.0, %v4914
        %v4916 = vpop.f32.mrb[0].mxu0
        %4917 = vdwg.mxu0
        %4918 = vmatprep.subr.mxu0 0.0
        %4919 = vmatpush1.msra.mxu0 %v4754
        %4920 = vmatprep.subr.mxu0 0.0
        %4921 = vmatpush1.msra.mxu0 %v4755
        %4922 = vmatprep.subr.mxu0 0.0
        %4923 = vmatpush1.msra.mxu0 %v4756
        %4924 = vmatprep.subr.mxu0 0.0
        %4925 = vmatpush1.msra.mxu0 %v4757
        %4926 = vmatprep.subr.mxu0 0.0
        %4927 = vmatpush1.msra.mxu0 %v4758
        %4928 = vmatprep.subr.mxu0 0.0
        %4929 = vmatpush1.msra.mxu0 %v4759
        %4930 = vmatprep.subr.mxu0 0.0
        %4931 = vmatpush1.msra.mxu0 %v4760
        %4932 = vmatprep.subr.mxu0 0.0
        %4933 = vmatpush1.msra.mxu0 %v4761
        %4934 = vmatprep.subr.mxu0 0.0
        %4935 = vmatpush1.msra.mxu0 %v4762
        %4936 = vmatprep.subr.mxu0 0.0
        %4937 = vmatpush1.msra.mxu0 %v4763
        %4938 = vmatprep.subr.mxu0 0.0
        %4939 = vmatpush1.msra.mxu0 %v4764
        %4940 = vmatprep.subr.mxu0 0.0
        %4941 = vmatpush1.msra.mxu0 %v4765
        %4942 = vmatprep.subr.mxu0 0.0
        %4943 = vmatpush1.msra.mxu0 %v4766
        %4944 = vmatprep.subr.mxu0 0.0
        %4945 = vmatpush1.msra.mxu0 %v4767
        %4946 = vmatprep.subr.mxu0 0.0
        %4947 = vmatpush1.msra.mxu0 %v4768
        %4948 = vmatprep.subr.mxu0 0.0
        %4949 = vmatpush1.msra.mxu0 %v4769
        %4950 = vmatprep.subr.mxu0 0.0
        %4951 = vmatpush1.msra.mxu0 0.0
        %4952 = vmatprep.subr.mxu0 0.0
        %4953 = vmatpush1.msra.mxu0 0.0
        %4954 = vmatprep.subr.mxu0 0.0
        %4955 = vmatpush1.msra.mxu0 0.0
        %4956 = vmatprep.subr.mxu0 0.0
        %4957 = vmatpush1.msra.mxu0 0.0
        %4958 = vmatprep.subr.mxu0 0.0
        %4959 = vmatpush1.msra.mxu0 0.0
        %4960 = vmatprep.subr.mxu0 0.0
        %4961 = vmatpush1.msra.mxu0 0.0
        %4962 = vmatprep.subr.mxu0 0.0
        %4963 = vmatpush1.msra.mxu0 0.0
        %4964 = vmatprep.subr.mxu0 0.0
        %4965 = vmatpush1.msra.mxu0 0.0
        %4966 = vmatprep.subr.mxu0 0.0
        %4967 = vmatpush1.msra.mxu0 0.0
        %4968 = vmatprep.subr.mxu0 0.0
        %4969 = vmatpush1.msra.mxu0 0.0
        %4970 = vmatprep.subr.mxu0 0.0
        %4971 = vmatpush1.msra.mxu0 0.0
        %4972 = vmatprep.subr.mxu0 0.0
        %4973 = vmatpush1.msra.mxu0 0.0
        %4974 = vmatprep.subr.mxu0 0.0
        %4975 = vmatpush1.msra.mxu0 0.0
        %4976 = vmatprep.subr.mxu0 0.0
        %4977 = vmatpush1.msra.mxu0 0.0
        %4978 = vmatprep.subr.mxu0 0.0
        %4979 = vmatpush1.msra.mxu0 0.0
        %4980 = vmatprep.subr.mxu0 0.0
        %4981 = vmatpush1.msra.mxu0 0.0
        %4982 = vmatprep.mubr.f32.mxu0 0.0
        %4983 = vmatmul.mubr.f32.gmra.mrb[0].mxu0 %v4742
        %v4984 = vpop.f32.mrb[0].mxu0
        %v4985 = vadd.f32 %v4865, %v4984
        %v4986 = vpop.f32.mrb[0].mxu0
        %4987 = vmatprep.mubr.f32.mxu0 0.0
        %4988 = vmatmul.mubr.f32.gmra.mrb[0].mxu0 %v4743
        %v4989 = vpop.f32.mrb[0].mxu0
        %v4990 = vadd.f32 %v4870, %v4989
        %v4991 = vpop.f32.mrb[0].mxu0
        %4992 = vmatprep.mubr.f32.mxu0 0.0
        %4993 = vmatmul.mubr.f32.gmra.mrb[0].mxu0 %v4744
        %v4994 = vpop.f32.mrb[0].mxu0
        %v4995 = vadd.f32 %v4875, %v4994
        %v4996 = vpop.f32.mrb[0].mxu0
        %4997 = vmatprep.mubr.f32.mxu0 0.0
        %4998 = vmatmul.mubr.f32.gmra.mrb[0].mxu0 %v4745
        %v4999 = vpop.f32.mrb[0].mxu0
        %v5000 = vadd.f32 %v4880, %v4999
        %v5001 = vpop.f32.mrb[0].mxu0
        %5002 = vmatprep.mubr.f32.mxu0 0.0
        %5003 = vmatmul.mubr.f32.gmra.mrb[0].mxu0 %v4746
        %v5004 = vpop.f32.mrb[0].mxu0
        %v5005 = vadd.f32 %v4885, %v5004
        %v5006 = vpop.f32.mrb[0].mxu0
        %5007 = vmatprep.mubr.f32.mxu0 0.0
        %5008 = vmatmul.mubr.f32.gmra.mrb[0].mxu0 %v4747
        %v5009 = vpop.f32.mrb[0].mxu0
        %v5010 = vadd.f32 %v4890, %v5009
        %v5011 = vpop.f32.mrb[0].mxu0
        %5012 = vmatprep.mubr.f32.mxu0 0.0
        %5013 = vmatmul.mubr.f32.gmra.mrb[0].mxu0 %v4748
        %v5014 = vpop.f32.mrb[0].mxu0
        %v5015 = vadd.f32 %v4895, %v5014
        %v5016 = vpop.f32.mrb[0].mxu0
        %5017 = vmatprep.mubr.f32.mxu0 0.0
        %5018 = vmatmul.mubr.f32.gmra.mrb[0].mxu0 %v4749
        %v5019 = vpop.f32.mrb[0].mxu0
        %v5020 = vadd.f32 %v4900, %v5019
        %v5021 = vpop.f32.mrb[0].mxu0
        %5022 = vmatprep.mubr.f32.mxu0 0.0
        %5023 = vmatmul.mubr.f32.gmra.mrb[0].mxu0 %v4750
        %v5024 = vpop.f32.mrb[0].mxu0
        %v5025 = vadd.f32 %v4905, %v5024
        %v5026 = vpop.f32.mrb[0].mxu0
        %5027 = vmatprep.mubr.f32.mxu0 0.0
        %5028 = vmatmul.mubr.f32.gmra.mrb[0].mxu0 %v4751
        %v5029 = vpop.f32.mrb[0].mxu0
        %v5030 = vadd.f32 %v4910, %v5029
        %v5031 = vpop.f32.mrb[0].mxu0
        %5032 = vmatprep.mubr.f32.mxu0 0.0
        %5033 = vmatmul.mubr.f32.gmra.mrb[0].mxu0 %v4752
        %v5034 = vpop.f32.mrb[0].mxu0
        %v5035 = vadd.f32 %v4915, %v5034
        %v5036 = vpop.f32.mrb[0].mxu0
        %5037 = vdwg.mxu0
        %v5038 = vld [vmem:[#allocation5 + $0x9] sm:$0xff]
        %v5039 = vld [vmem:[#allocation5 + $0x11] sm:$0xff]
        %v5040 = vld [vmem:[#allocation5 + $0x19] sm:$0xff]
        %v5041 = vld [vmem:[#allocation5 + $0x21] sm:$0xff]
        %v5042 = vld [vmem:[#allocation5 + $0x29] sm:$0xff]
        %v5043 = vld [vmem:[#allocation5 + $0x31] sm:$0xff]
        %v5044 = vld [vmem:[#allocation5 + $0x39] sm:$0xff]
        %v5045 = vld [vmem:[#allocation5 + $0x41] sm:$0xff]
        %v5046 = vld [vmem:[#allocation5 + $0x49] sm:$0xff]
        %v5047 = vld [vmem:[#allocation5 + $0x51] sm:$0xff]
        %v5048 = vld [vmem:[#allocation5 + $0x59] sm:$0x1]
        %s5049 = scalar_lea.vmem [#allocation8], 256
        %v5050 = vld [vmem:[%s5049] sm:$0xff]
        %v5051 = vld [vmem:[%s5049 + $0x8] sm:$0xff]
        %v5052 = vld [vmem:[%s5049 + $0x10] sm:$0xff]
        %v5053 = vld [vmem:[%s5049 + $0x18] sm:$0xff]
        %v5054 = vld [vmem:[%s5049 + $0x20] sm:$0xff]
        %v5055 = vld [vmem:[%s5049 + $0x28] sm:$0xff]
        %v5056 = vld [vmem:[%s5049 + $0x30] sm:$0xff]
        %v5057 = vld [vmem:[%s5049 + $0x38] sm:$0xff]
        %v5058 = vld [vmem:[%s5049 + $0x40] sm:$0xff]
        %v5059 = vld [vmem:[%s5049 + $0x48] sm:$0xff]
        %v5060 = vld [vmem:[%s5049 + $0x50] sm:$0xff]
        %v5061 = vld [vmem:[%s5049 + $0x58] sm:$0xff]
        %v5062 = vld [vmem:[%s5049 + $0x60] sm:$0xff]
        %v5063 = vld [vmem:[%s5049 + $0x68] sm:$0xff]
        %v5064 = vld [vmem:[%s5049 + $0x70] sm:$0xff]
        %v5065 = vld [vmem:[%s5049 + $0x78] sm:$0xff]
        %5066 = vmatprep.subr.mxu0 0.0
        %5067 = vmatpush1.msra.mxu0 %v5050
        %5068 = vmatprep.subr.mxu0 0.0
        %5069 = vmatpush1.msra.mxu0 %v5051
        %5070 = vmatprep.subr.mxu0 0.0
        %5071 = vmatpush1.msra.mxu0 %v5052
        %5072 = vmatprep.subr.mxu0 0.0
        %5073 = vmatpush1.msra.mxu0 %v5053
        %5074 = vmatprep.subr.mxu0 0.0
        %5075 = vmatpush1.msra.mxu0 %v5054
        %5076 = vmatprep.subr.mxu0 0.0
        %5077 = vmatpush1.msra.mxu0 %v5055
        %5078 = vmatprep.subr.mxu0 0.0
        %5079 = vmatpush1.msra.mxu0 %v5056
        %5080 = vmatprep.subr.mxu0 0.0
        %5081 = vmatpush1.msra.mxu0 %v5057
        %5082 = vmatprep.subr.mxu0 0.0
        %5083 = vmatpush1.msra.mxu0 %v5058
        %5084 = vmatprep.subr.mxu0 0.0
        %5085 = vmatpush1.msra.mxu0 %v5059
        %5086 = vmatprep.subr.mxu0 0.0
        %5087 = vmatpush1.msra.mxu0 %v5060
        %5088 = vmatprep.subr.mxu0 0.0
        %5089 = vmatpush1.msra.mxu0 %v5061
        %5090 = vmatprep.subr.mxu0 0.0
        %5091 = vmatpush1.msra.mxu0 %v5062
        %5092 = vmatprep.subr.mxu0 0.0
        %5093 = vmatpush1.msra.mxu0 %v5063
        %5094 = vmatprep.subr.mxu0 0.0
        %5095 = vmatpush1.msra.mxu0 %v5064
        %5096 = vmatprep.subr.mxu0 0.0
        %5097 = vmatpush1.msra.mxu0 %v5065
        %5098 = vmatprep.subr.mxu0 0.0
        %5099 = vmatpush1.msra.mxu0 0.0
        %5100 = vmatprep.subr.mxu0 0.0
        %5101 = vmatpush1.msra.mxu0 0.0
        %5102 = vmatprep.subr.mxu0 0.0
        %5103 = vmatpush1.msra.mxu0 0.0
        %5104 = vmatprep.subr.mxu0 0.0
        %5105 = vmatpush1.msra.mxu0 0.0
        %5106 = vmatprep.subr.mxu0 0.0
        %5107 = vmatpush1.msra.mxu0 0.0
        %5108 = vmatprep.subr.mxu0 0.0
        %5109 = vmatpush1.msra.mxu0 0.0
        %5110 = vmatprep.subr.mxu0 0.0
        %5111 = vmatpush1.msra.mxu0 0.0
        %5112 = vmatprep.subr.mxu0 0.0
        %5113 = vmatpush1.msra.mxu0 0.0
        %5114 = vmatprep.subr.mxu0 0.0
        %5115 = vmatpush1.msra.mxu0 0.0
        %5116 = vmatprep.subr.mxu0 0.0
        %5117 = vmatpush1.msra.mxu0 0.0
        %5118 = vmatprep.subr.mxu0 0.0
        %5119 = vmatpush1.msra.mxu0 0.0
        %5120 = vmatprep.subr.mxu0 0.0
        %5121 = vmatpush1.msra.mxu0 0.0
        %5122 = vmatprep.subr.mxu0 0.0
        %5123 = vmatpush1.msra.mxu0 0.0
        %5124 = vmatprep.subr.mxu0 0.0
        %5125 = vmatpush1.msra.mxu0 0.0
        %5126 = vmatprep.subr.mxu0 0.0
        %5127 = vmatpush1.msra.mxu0 0.0
        %5128 = vmatprep.subr.mxu0 0.0
        %5129 = vmatpush1.msra.mxu0 0.0
        %5130 = vmatprep.mubr.f32.mxu0 0.0
        %5131 = vmatmul.mubr.f32.gmra.mrb[0].mxu0 %v5038
        %v5132 = vpop.f32.mrb[0].mxu0
        %v5133 = vadd.f32 0.0, %v5132
        %v5134 = vpop.f32.mrb[0].mxu0
        %5135 = vmatprep.mubr.f32.mxu0 0.0
        %5136 = vmatmul.mubr.f32.gmra.mrb[0].mxu0 %v5039
        %v5137 = vpop.f32.mrb[0].mxu0
        %v5138 = vadd.f32 0.0, %v5137
        %v5139 = vpop.f32.mrb[0].mxu0
        %5140 = vmatprep.mubr.f32.mxu0 0.0
        %5141 = vmatmul.mubr.f32.gmra.mrb[0].mxu0 %v5040
        %v5142 = vpop.f32.mrb[0].mxu0
        %v5143 = vadd.f32 0.0, %v5142
        %v5144 = vpop.f32.mrb[0].mxu0
        %5145 = vmatprep.mubr.f32.mxu0 0.0
        %5146 = vmatmul.mubr.f32.gmra.mrb[0].mxu0 %v5041
        %v5147 = vpop.f32.mrb[0].mxu0
        %v5148 = vadd.f32 0.0, %v5147
        %v5149 = vpop.f32.mrb[0].mxu0
        %5150 = vmatprep.mubr.f32.mxu0 0.0
        %5151 = vmatmul.mubr.f32.gmra.mrb[0].mxu0 %v5042
        %v5152 = vpop.f32.mrb[0].mxu0
        %v5153 = vadd.f32 0.0, %v5152
        %v5154 = vpop.f32.mrb[0].mxu0
        %5155 = vmatprep.mubr.f32.mxu0 0.0
        %5156 = vmatmul.mubr.f32.gmra.mrb[0].mxu0 %v5043
        %v5157 = vpop.f32.mrb[0].mxu0
        %v5158 = vadd.f32 0.0, %v5157
        %v5159 = vpop.f32.mrb[0].mxu0
        %5160 = vmatprep.mubr.f32.mxu0 0.0
        %5161 = vmatmul.mubr.f32.gmra.mrb[0].mxu0 %v5044
        %v5162 = vpop.f32.mrb[0].mxu0
        %v5163 = vadd.f32 0.0, %v5162
        %v5164 = vpop.f32.mrb[0].mxu0
        %5165 = vmatprep.mubr.f32.mxu0 0.0
        %5166 = vmatmul.mubr.f32.gmra.mrb[0].mxu0 %v5045
        %v5167 = vpop.f32.mrb[0].mxu0
        %v5168 = vadd.f32 0.0, %v5167
        %v5169 = vpop.f32.mrb[0].mxu0
        %5170 = vmatprep.mubr.f32.mxu0 0.0
        %5171 = vmatmul.mubr.f32.gmra.mrb[0].mxu0 %v5046
        %v5172 = vpop.f32.mrb[0].mxu0
        %v5173 = vadd.f32 0.0, %v5172
        %v5174 = vpop.f32.mrb[0].mxu0
        %5175 = vmatprep.mubr.f32.mxu0 0.0
        %5176 = vmatmul.mubr.f32.gmra.mrb[0].mxu0 %v5047
        %v5177 = vpop.f32.mrb[0].mxu0
        %v5178 = vadd.f32 0.0, %v5177
        %v5179 = vpop.f32.mrb[0].mxu0
        %5180 = vmatprep.mubr.f32.mxu0 0.0
        %5181 = vmatmul.mubr.f32.gmra.mrb[0].mxu0 %v5048
        %v5182 = vpop.f32.mrb[0].mxu0
        %v5183 = vadd.f32 0.0, %v5182
        %v5184 = vpop.f32.mrb[0].mxu0
        %5185 = vdwg.mxu0
        %v5186 = vadd.f32 %v4985, %v5133
        %v5187 = vadd.f32 %v4990, %v5138
        %v5188 = vadd.f32 %v4995, %v5143
        %v5189 = vadd.f32 %v5000, %v5148
        %v5190 = vadd.f32 %v5005, %v5153
        %v5191 = vadd.f32 %v5010, %v5158
        %v5192 = vadd.f32 %v5015, %v5163
        %v5193 = vadd.f32 %v5020, %v5168
        %v5194 = vadd.f32 %v5025, %v5173
        %v5195 = vadd.f32 %v5030, %v5178
        %v5196 = vadd.f32 %v5035, %v5183
        %v5197 = vld [vmem:[#allocation5 + $0xa] sm:$0xff]
        %v5198 = vld [vmem:[#allocation5 + $0x12] sm:$0xff]
        %v5199 = vld [vmem:[#allocation5 + $0x1a] sm:$0xff]
        %v5200 = vld [vmem:[#allocation5 + $0x22] sm:$0xff]
        %v5201 = vld [vmem:[#allocation5 + $0x2a] sm:$0xff]
        %v5202 = vld [vmem:[#allocation5 + $0x32] sm:$0xff]
        %v5203 = vld [vmem:[#allocation5 + $0x3a] sm:$0xff]
        %v5204 = vld [vmem:[#allocation5 + $0x42] sm:$0xff]
        %v5205 = vld [vmem:[#allocation5 + $0x4a] sm:$0xff]
        %v5206 = vld [vmem:[#allocation5 + $0x52] sm:$0xff]
        %v5207 = vld [vmem:[#allocation5 + $0x5a] sm:$0x1]
        %v5208 = vld [vmem:[#allocation8] sm:$0xff]
        %v5209 = vld [vmem:[#allocation8 + $0x8] sm:$0xff]
        %v5210 = vld [vmem:[#allocation8 + $0x10] sm:$0xff]
        %v5211 = vld [vmem:[#allocation8 + $0x18] sm:$0xff]
        %v5212 = vld [vmem:[#allocation8 + $0x20] sm:$0xff]
        %v5213 = vld [vmem:[#allocation8 + $0x28] sm:$0xff]
        %v5214 = vld [vmem:[#allocation8 + $0x30] sm:$0xff]
        %v5215 = vld [vmem:[#allocation8 + $0x38] sm:$0xff]
        %v5216 = vld [vmem:[#allocation8 + $0x40] sm:$0xff]
        %v5217 = vld [vmem:[#allocation8 + $0x48] sm:$0xff]
        %v5218 = vld [vmem:[#allocation8 + $0x50] sm:$0xff]
        %v5219 = vld [vmem:[#allocation8 + $0x58] sm:$0xff]
        %v5220 = vld [vmem:[#allocation8 + $0x60] sm:$0xff]
        %v5221 = vld [vmem:[#allocation8 + $0x68] sm:$0xff]
        %v5222 = vld [vmem:[#allocation8 + $0x70] sm:$0xff]
        %v5223 = vld [vmem:[#allocation8 + $0x78] sm:$0xff]
        %5224 = vmatprep.subr.mxu0 0.0
        %5225 = vmatpush1.msra.mxu0 %v5208
        %5226 = vmatprep.subr.mxu0 0.0
        %5227 = vmatpush1.msra.mxu0 %v5209
        %5228 = vmatprep.subr.mxu0 0.0
        %5229 = vmatpush1.msra.mxu0 %v5210
        %5230 = vmatprep.subr.mxu0 0.0
        %5231 = vmatpush1.msra.mxu0 %v5211
        %5232 = vmatprep.subr.mxu0 0.0
        %5233 = vmatpush1.msra.mxu0 %v5212
        %5234 = vmatprep.subr.mxu0 0.0
        %5235 = vmatpush1.msra.mxu0 %v5213
        %5236 = vmatprep.subr.mxu0 0.0
        %5237 = vmatpush1.msra.mxu0 %v5214
        %5238 = vmatprep.subr.mxu0 0.0
        %5239 = vmatpush1.msra.mxu0 %v5215
        %5240 = vmatprep.subr.mxu0 0.0
        %5241 = vmatpush1.msra.mxu0 %v5216
        %5242 = vmatprep.subr.mxu0 0.0
        %5243 = vmatpush1.msra.mxu0 %v5217
        %5244 = vmatprep.subr.mxu0 0.0
        %5245 = vmatpush1.msra.mxu0 %v5218
        %5246 = vmatprep.subr.mxu0 0.0
        %5247 = vmatpush1.msra.mxu0 %v5219
        %5248 = vmatprep.subr.mxu0 0.0
        %5249 = vmatpush1.msra.mxu0 %v5220
        %5250 = vmatprep.subr.mxu0 0.0
        %5251 = vmatpush1.msra.mxu0 %v5221
        %5252 = vmatprep.subr.mxu0 0.0
        %5253 = vmatpush1.msra.mxu0 %v5222
        %5254 = vmatprep.subr.mxu0 0.0
        %5255 = vmatpush1.msra.mxu0 %v5223
        %5256 = vmatprep.subr.mxu0 0.0
        %5257 = vmatpush1.msra.mxu0 0.0
        %5258 = vmatprep.subr.mxu0 0.0
        %5259 = vmatpush1.msra.mxu0 0.0
        %5260 = vmatprep.subr.mxu0 0.0
        %5261 = vmatpush1.msra.mxu0 0.0
        %5262 = vmatprep.subr.mxu0 0.0
        %5263 = vmatpush1.msra.mxu0 0.0
        %5264 = vmatprep.subr.mxu0 0.0
        %5265 = vmatpush1.msra.mxu0 0.0
        %5266 = vmatprep.subr.mxu0 0.0
        %5267 = vmatpush1.msra.mxu0 0.0
        %5268 = vmatprep.subr.mxu0 0.0
        %5269 = vmatpush1.msra.mxu0 0.0
        %5270 = vmatprep.subr.mxu0 0.0
        %5271 = vmatpush1.msra.mxu0 0.0
        %5272 = vmatprep.subr.mxu0 0.0
        %5273 = vmatpush1.msra.mxu0 0.0
        %5274 = vmatprep.subr.mxu0 0.0
        %5275 = vmatpush1.msra.mxu0 0.0
        %5276 = vmatprep.subr.mxu0 0.0
        %5277 = vmatpush1.msra.mxu0 0.0
        %5278 = vmatprep.subr.mxu0 0.0
        %5279 = vmatpush1.msra.mxu0 0.0
        %5280 = vmatprep.subr.mxu0 0.0
        %5281 = vmatpush1.msra.mxu0 0.0
        %5282 = vmatprep.subr.mxu0 0.0
        %5283 = vmatpush1.msra.mxu0 0.0
        %5284 = vmatprep.subr.mxu0 0.0
        %5285 = vmatpush1.msra.mxu0 0.0
        %5286 = vmatprep.subr.mxu0 0.0
        %5287 = vmatpush1.msra.mxu0 0.0
        %5288 = vmatprep.mubr.f32.mxu0 0.0
        %5289 = vmatmul.mubr.f32.gmra.mrb[0].mxu0 %v5197
        %v5290 = vpop.f32.mrb[0].mxu0
        %v5291 = vadd.f32 0.0, %v5290
        %v5292 = vpop.f32.mrb[0].mxu0
        %5293 = vmatprep.mubr.f32.mxu0 0.0
        %5294 = vmatmul.mubr.f32.gmra.mrb[0].mxu0 %v5198
        %v5295 = vpop.f32.mrb[0].mxu0
        %v5296 = vadd.f32 0.0, %v5295
        %v5297 = vpop.f32.mrb[0].mxu0
        %5298 = vmatprep.mubr.f32.mxu0 0.0
        %5299 = vmatmul.mubr.f32.gmra.mrb[0].mxu0 %v5199
        %v5300 = vpop.f32.mrb[0].mxu0
        %v5301 = vadd.f32 0.0, %v5300
        %v5302 = vpop.f32.mrb[0].mxu0
        %5303 = vmatprep.mubr.f32.mxu0 0.0
        %5304 = vmatmul.mubr.f32.gmra.mrb[0].mxu0 %v5200
        %v5305 = vpop.f32.mrb[0].mxu0
        %v5306 = vadd.f32 0.0, %v5305
        %v5307 = vpop.f32.mrb[0].mxu0
        %5308 = vmatprep.mubr.f32.mxu0 0.0
        %5309 = vmatmul.mubr.f32.gmra.mrb[0].mxu0 %v5201
        %v5310 = vpop.f32.mrb[0].mxu0
        %v5311 = vadd.f32 0.0, %v5310
        %v5312 = vpop.f32.mrb[0].mxu0
        %5313 = vmatprep.mubr.f32.mxu0 0.0
        %5314 = vmatmul.mubr.f32.gmra.mrb[0].mxu0 %v5202
        %v5315 = vpop.f32.mrb[0].mxu0
        %v5316 = vadd.f32 0.0, %v5315
        %v5317 = vpop.f32.mrb[0].mxu0
        %5318 = vmatprep.mubr.f32.mxu0 0.0
        %5319 = vmatmul.mubr.f32.gmra.mrb[0].mxu0 %v5203
        %v5320 = vpop.f32.mrb[0].mxu0
        %v5321 = vadd.f32 0.0, %v5320
        %v5322 = vpop.f32.mrb[0].mxu0
        %5323 = vmatprep.mubr.f32.mxu0 0.0
        %5324 = vmatmul.mubr.f32.gmra.mrb[0].mxu0 %v5204
        %v5325 = vpop.f32.mrb[0].mxu0
        %v5326 = vadd.f32 0.0, %v5325
        %v5327 = vpop.f32.mrb[0].mxu0
        %5328 = vmatprep.mubr.f32.mxu0 0.0
        %5329 = vmatmul.mubr.f32.gmra.mrb[0].mxu0 %v5205
        %v5330 = vpop.f32.mrb[0].mxu0
        %v5331 = vadd.f32 0.0, %v5330
        %v5332 = vpop.f32.mrb[0].mxu0
        %5333 = vmatprep.mubr.f32.mxu0 0.0
        %5334 = vmatmul.mubr.f32.gmra.mrb[0].mxu0 %v5206
        %v5335 = vpop.f32.mrb[0].mxu0
        %v5336 = vadd.f32 0.0, %v5335
        %v5337 = vpop.f32.mrb[0].mxu0
        %5338 = vmatprep.mubr.f32.mxu0 0.0
        %5339 = vmatmul.mubr.f32.gmra.mrb[0].mxu0 %v5207
        %v5340 = vpop.f32.mrb[0].mxu0
        %v5341 = vadd.f32 0.0, %v5340
        %v5342 = vpop.f32.mrb[0].mxu0
        %5343 = vdwg.mxu0
        %v5344 = vadd.f32 %v5186, %v5291
        %v5345 = vadd.f32 %v5187, %v5296
        %v5346 = vadd.f32 %v5188, %v5301
        %v5347 = vadd.f32 %v5189, %v5306
        %v5348 = vadd.f32 %v5190, %v5311
        %v5349 = vadd.f32 %v5191, %v5316
        %v5350 = vadd.f32 %v5192, %v5321
        %v5351 = vadd.f32 %v5193, %v5326
        %v5352 = vadd.f32 %v5194, %v5331
        %v5353 = vadd.f32 %v5195, %v5336
        %v5354 = vadd.f32 %v5196, %v5341
        %v5355 = vadd.f32 %v5344, %v3771
        %v5356 = vadd.f32 %v5345, %v3771
        %v5357 = vadd.f32 %v5346, %v3771
        %v5358 = vadd.f32 %v5347, %v3771
        %v5359 = vadd.f32 %v5348, %v3771
        %v5360 = vadd.f32 %v5349, %v3771
        %v5361 = vadd.f32 %v5350, %v3771
        %v5362 = vadd.f32 %v5351, %v3771
        %v5363 = vadd.f32 %v5352, %v3771
        %v5364 = vadd.f32 %v5353, %v3771
        %v5365 = vadd.f32 %v5354, %v3771
        %v5366 = vsub.f32 0.0, %v5355
        %v5367 = vsub.f32 0.0, %v5356
        %v5368 = vsub.f32 0.0, %v5357
        %v5369 = vsub.f32 0.0, %v5358
        %v5370 = vsub.f32 0.0, %v5359
        %v5371 = vsub.f32 0.0, %v5360
        %v5372 = vsub.f32 0.0, %v5361
        %v5373 = vsub.f32 0.0, %v5362
        %v5374 = vsub.f32 0.0, %v5363
        %v5375 = vsub.f32 0.0, %v5364
        %v5376 = vsub.f32 0.0, %v5365
        %v5377 = vmul.f32 %v5366, 1.442695
        %v5378 = vpow.pop %v5377
        %v5379 = vmul.f32 %v5367, 1.442695
        %v5380 = vpow.pop %v5379
        %v5381 = vmul.f32 %v5368, 1.442695
        %v5382 = vpow.pop %v5381
        %v5383 = vmul.f32 %v5369, 1.442695
        %v5384 = vpow.pop %v5383
        %v5385 = vmul.f32 %v5370, 1.442695
        %v5386 = vpow.pop %v5385
        %v5387 = vmul.f32 %v5371, 1.442695
        %v5388 = vpow.pop %v5387
        %v5389 = vmul.f32 %v5372, 1.442695
        %v5390 = vpow.pop %v5389
        %v5391 = vmul.f32 %v5373, 1.442695
        %v5392 = vpow.pop %v5391
        %v5393 = vmul.f32 %v5374, 1.442695
        %v5394 = vpow.pop %v5393
        %v5395 = vmul.f32 %v5375, 1.442695
        %v5396 = vpow.pop %v5395
        %v5397 = vmul.f32 %v5376, 1.442695
        %v5398 = vpow.pop %v5397
        %v5399 = vadd.f32 %v5378, 1.0
        %v5400 = vadd.f32 %v5380, 1.0
        %v5401 = vadd.f32 %v5382, 1.0
        %v5402 = vadd.f32 %v5384, 1.0
        %v5403 = vadd.f32 %v5386, 1.0
        %v5404 = vadd.f32 %v5388, 1.0
        %v5405 = vadd.f32 %v5390, 1.0
        %v5406 = vadd.f32 %v5392, 1.0
        %v5407 = vadd.f32 %v5394, 1.0
        %v5408 = vadd.f32 %v5396, 1.0
        %v5409 = vadd.f32 %v5398, 1.0
        %v5410 = vrcp.pop %v5399
        %v5411 = vmul.f32 1.0, %v5410
        %v5412 = vrcp.pop %v5400
        %v5413 = vmul.f32 1.0, %v5412
        %v5414 = vrcp.pop %v5401
        %v5415 = vmul.f32 1.0, %v5414
        %v5416 = vrcp.pop %v5402
        %v5417 = vmul.f32 1.0, %v5416
        %v5418 = vrcp.pop %v5403
        %v5419 = vmul.f32 1.0, %v5418
        %v5420 = vrcp.pop %v5404
        %v5421 = vmul.f32 1.0, %v5420
        %v5422 = vrcp.pop %v5405
        %v5423 = vmul.f32 1.0, %v5422
        %v5424 = vrcp.pop %v5406
        %v5425 = vmul.f32 1.0, %v5424
        %v5426 = vrcp.pop %v5407
        %v5427 = vmul.f32 1.0, %v5426
        %v5428 = vrcp.pop %v5408
        %v5429 = vmul.f32 1.0, %v5428
        %v5430 = vrcp.pop %v5409
        %v5431 = vmul.f32 1.0, %v5430
        %s5432 = scalar_lea.vmem %s362, 264
        %5433 = vst.msk [vmem:[%s5432] sm:$0xff] %vm3959, %v5411
        %5434 = vst.msk [vmem:[%s5432 + $0x8] sm:$0xff] %vm3959, %v5413
        %5435 = vst.msk [vmem:[%s5432 + $0x10] sm:$0xff] %vm3959, %v5415
        %5436 = vst.msk [vmem:[%s5432 + $0x18] sm:$0xff] %vm3959, %v5417
        %5437 = vst.msk [vmem:[%s5432 + $0x20] sm:$0xff] %vm3959, %v5419
        %5438 = vst.msk [vmem:[%s5432 + $0x28] sm:$0xff] %vm3959, %v5421
        %5439 = vst.msk [vmem:[%s5432 + $0x30] sm:$0xff] %vm3959, %v5423
        %5440 = vst.msk [vmem:[%s5432 + $0x38] sm:$0xff] %vm3959, %v5425
        %5441 = vst.msk [vmem:[%s5432 + $0x40] sm:$0xff] %vm3959, %v5427
        %5442 = vst.msk [vmem:[%s5432 + $0x48] sm:$0xff] %vm3959, %v5429
        %5443 = vst.msk [vmem:[%s5432 + $0x50] sm:$0x1] %vm3970, %v5431
        %p5444 = scmp.lt.s32.totalorder %s22, 1
        %s5445 = scalar_select %p5444, %s22, 1
        %s5446 = smul.addr %s5445, 44
        %s5447 = smul.addr %s5446, 8
        %s5448 = scalar_lea.vmem %s9, %s5447
        // Predicated region
        $region65: #{autoencoder_forward.1} parent=55 // pred_check
          %p5449 = pneg %p234
        $region66: #{autoencoder_forward.1} parent=55 // pred_check_branch
          %5451 = sbr.rel (%p5449) target = $region68
        $region67: #{autoencoder_forward.1} parent=55 // pred_region
          _
        $region68: #{autoencoder_forward.1} parent=55 // pred_fallthru
          _
      $region56: #{autoencoder_forward.1} parent=5 // pred_fallthru
        _
      %p5452 = scmp.le.s32.totalorder 2, %s17
      // Predicated region
      $region69: #{autoencoder_forward.1} parent=5 // pred_check
        %p5453 = pneg %p5452
      $region70: #{autoencoder_forward.1} parent=5 // pred_check_branch
        %5455 = sbr.rel (%p5453) target = $region72
      $region71: #{autoencoder_forward.1} parent=5 // pred_region
        %s5456 = ssub.s32 %s17, 2
        // Predicated region
        $region73: #{autoencoder_forward.1} parent=71 // pred_check
          %p5457 = pneg %p240
        $region74: #{autoencoder_forward.1} parent=71 // pred_check_branch
          %5459 = sbr.rel (%p5457) target = $region76
        $region75: #{autoencoder_forward.1} parent=71 // pred_region
          %p5460 = scmp.lt.s32.totalorder %s23, 1
          %s5461 = scalar_select %p5460, %s23, 1
          %s5462 = smul.addr %s5461, 44
          %s5463 = smul.addr %s5462, 8
          %s5464 = scalar_lea.vmem %s9, %s5463
        $region76: #{autoencoder_forward.1} parent=71 // pred_fallthru
          _
      $region72: #{autoencoder_forward.1} parent=5 // pred_fallthru
        _
    $region6: #{autoencoder_forward.1} parent=1 // loop_footer
      %s21 = sadd.s32 1, %s17
    $region7: #{autoencoder_forward.1} parent=1 // loop_footer_branch
      %16 = sbr.rel target = $region3
    $region8: #{autoencoder_forward.1} parent=1 // loop_exit
      _
    %5465 = vsyncpa [#allocation7], 1
    %s5466 = scalar_lea.sflag [#allocation7], 1
    %5467 = vsyncpa %s5466, 1
    %5468 = vsyncpa [#allocation9], 1

</llo_original>
